<compile_context>
chip_gen: v7x
topology: tpu7x:2x2x1
jax: 0.10.0
libtpu: 0.0.40
codegen_flags: <defaults>
</compile_context>

<pallas_src>
import jax
import jax.numpy as jnp
from jax.experimental import pallas as pl
from jax.experimental.pallas import tpu as pltpu


# ---------------------------------------------------------------------------
# Fused conv (valid, stride 1) + bias + ReLU + 2x2/2 max-pool
# ---------------------------------------------------------------------------
# patches[n, k, d*Qp + q] = x[n, ci, 2*ph + d1 + i, 2*pw + d0 + j]
#   k = (i*KW + j)*Cin + ci,  q = ph*PW + pw,  d = 2*d1 + d0,
#   Qp = Q rounded up to a multiple of 128 (zero padded).
# Per image the kernel does ONE dense (Cout,K)x(K,4*Qp) bf16 matmul (f32
# accumulation), a 4-way max over the lane-aligned Qp chunks (the pool), one
# bias add and one ReLU.  Pooling before bias/ReLU is exact:
# max(a+c, b+c) = max(a,b)+c and ReLU is monotone.

def _conv_pool_kernel(p_ref, w_ref, b_ref, o_ref):
    qp = o_ref.shape[2]                                         # static int
    m4 = jnp.dot(w_ref[...], p_ref[0],
                 preferred_element_type=jnp.float32)            # (Cout, 4*Qp)
    m = jnp.maximum(jnp.maximum(m4[:, :qp], m4[:, qp:2 * qp]),
                    jnp.maximum(m4[:, 2 * qp:3 * qp], m4[:, 3 * qp:]))
    o_ref[0, :, :] = jnp.maximum(m + b_ref[...], 0.0).astype(o_ref.dtype)


def _im2col_pool_major(x_nchw, KH, KW, q_pad):
    """XLA glue: im2col with rows = kernel taps (k) and cols = pooled output
    pixels, with the 4 pool offsets d laid out as 4 contiguous lane chunks of
    q_pad lanes each (zero padded).  Output (N, K, 4*q_pad) bfloat16."""
    # TODO(synk): window extraction stays in XLA glue for now; the in-kernel
    # stride-2 ref-slice version (pl.ANY input) needs bundle verification.
    Nb, C, H, W = x_nchw.shape
    OH, OW = H - KH + 1, W - KW + 1
    PH, PW = OH // 2, OW // 2
    Q = PH * PW
    per_d = []
    for d1 in (0, 1):
        for d0 in (0, 1):
            taps = []
            for i in range(KH):
                for j in range(KW):
                    r0, c0 = d1 + i, d0 + j
                    sl = x_nchw[:, :, r0:r0 + 2 * PH - 1:2, c0:c0 + 2 * PW - 1:2]
                    taps.append(sl.reshape(Nb, C, Q))
            blk = jnp.concatenate(taps, axis=1)                 # (N, K, Q)
            if q_pad != Q:
                blk = jnp.pad(blk, ((0, 0), (0, 0), (0, q_pad - Q)))
            per_d.append(blk)
    return jnp.concatenate(per_d, axis=2).astype(jnp.bfloat16)  # (N, K, 4*Qp)


def conv_relu_pool(x_nchw, w, b):
    """x: (N, Cin, H, W) f32; w: (Cout, KH, KW, Cin) f32; b: (Cout,) f32.
    Returns pooled activations (N, Cout, Qp) f32 in (C, H, W) order, where the
    first PH*PW lanes are valid and the rest are lane padding (slice off)."""
    Nb, Cin, H, W = x_nchw.shape
    Cout, KH, KW, _ = w.shape
    OH, OW = H - KH + 1, W - KW + 1
    PH, PW = OH // 2, OW // 2
    Q = PH * PW
    Qp = ((Q + 127) // 128) * 128
    K = KH * KW * Cin

    patches = _im2col_pool_major(x_nchw, KH, KW, Qp)            # (N, K, 4*Qp) bf16
    w2 = w.reshape(Cout, K).astype(jnp.bfloat16)
    b2 = b.reshape(Cout, 1)

    flops = 2 * Nb * Cout * K * 4 * Qp
    bytes_accessed = (Nb * K * 4 * Qp * 2 + Cout * K * 2 + Cout * 4
                      + Nb * Cout * Qp * 4)

    return pl.pallas_call(
        _conv_pool_kernel,
        out_shape=jax.ShapeDtypeStruct((Nb, Cout, Qp), jnp.float32),
        grid_spec=pltpu.PrefetchScalarGridSpec(
            num_scalar_prefetch=0,
            grid=(Nb,),
            in_specs=[
                pl.BlockSpec((1, K, 4 * Qp), lambda n: (n, 0, 0)),
                pl.BlockSpec((Cout, K), lambda n: (0, 0)),
                pl.BlockSpec((Cout, 1), lambda n: (0, 0)),
            ],
            out_specs=pl.BlockSpec((1, Cout, Qp), lambda n: (n, 0, 0)),
        ),
        compiler_params=pltpu.CompilerParams(
            dimension_semantics=("parallel",)),   # v7x: one image per TensorCore
        cost_estimate=pl.CostEstimate(flops=flops, transcendentals=0,
                                      bytes_accessed=bytes_accessed),
    )(patches, w2, b2)


# ---------------------------------------------------------------------------
# Fused fc1 -> ReLU -> fc2 -> ReLU -> fc3 (single pallas_call, K-tiled fc1)
# ---------------------------------------------------------------------------

def _fc_fused_kernel(x_ref, w1_ref, b1_ref, w2_ref, b2_ref, w3_ref, b3_ref,
                     o_ref, acc_ref):
    k = pl.program_id(0)

    @pl.when(k == 0)
    def _():
        acc_ref[...] = jnp.zeros_like(acc_ref)

    # fc1 partial product: bf16 weight streaming, f32 accumulation.
    acc_ref[...] += jnp.dot(x_ref[...].astype(jnp.bfloat16), w1_ref[...],
                            preferred_element_type=jnp.float32)

    @pl.when(k == pl.num_programs(0) - 1)
    def _():
        h1 = jnp.maximum(acc_ref[...] + b1_ref[...], 0.0)               # (M, 896)
        h2 = jnp.dot(h1.astype(jnp.bfloat16), w2_ref[...],
                     preferred_element_type=jnp.float32) + b2_ref[...]  # (M, 120)
        h2 = jnp.maximum(h2, 0.0)
        y = jnp.dot(h2, w3_ref[...],
                    preferred_element_type=jnp.float32) + b3_ref[...]   # (M, 2)
        o_ref[...] = y.astype(o_ref.dtype)


def fc_fused(x, w1, b1, w2, b2, w3, b3, *, tk=1792):
    """x: (M, 7056) f32; w1: (7168, 896) bf16 (row/col padded at init);
    b1: (896,); w2: (896, 120) bf16 (rows padded); w3: (120, 2) f32.
    tk=1792 (4 K-steps) keeps double-buffered w1 tiles ~6.4 MB, inside v5e's
    16 MiB default scoped-VMEM limit while staying HBM-bandwidth-bound."""
    M, K = x.shape
    Kp, N1 = w1.shape
    _, N2 = w2.shape
    _, N3 = w3.shape
    assert Kp % tk == 0 and Kp >= K
    if Kp != K:
        # Only the tiny (M, 7056) activation is padded per call; the weight
        # was padded once in init_params.
        x = jnp.pad(x, ((0, 0), (0, Kp - K)))
    b1 = b1.reshape(1, N1)
    b2 = b2.reshape(1, N2)
    b3 = b3.reshape(1, N3)

    flops = 2 * M * (Kp * N1 + N1 * N2 + N2 * N3)
    bytes_accessed = (M * Kp * 4 + Kp * N1 * 2 + N1 * 4 + N1 * N2 * 2 + N2 * 4
                      + N2 * N3 * 4 + N3 * 4 + M * N3 * 4)

    # TODO(synk): P10 cross-call prefetch of w1 (start the HBM->VMEM DMA while
    # the conv stages run, return sem + VMEM ref) would hide ~4-14 us of the
    # dominant weight stream; needs on-hardware verification before landing.
    return pl.pallas_call(
        _fc_fused_kernel,
        out_shape=jax.ShapeDtypeStruct((M, N3), jnp.float32),
        grid_spec=pltpu.PrefetchScalarGridSpec(
            num_scalar_prefetch=0,
            grid=(Kp // tk,),
            in_specs=[
                pl.BlockSpec((M, tk), lambda k: (0, k)),
                pl.BlockSpec((tk, N1), lambda k: (k, 0)),
                pl.BlockSpec((1, N1), lambda k: (0, 0)),
                pl.BlockSpec((N1, N2), lambda k: (0, 0)),
                pl.BlockSpec((1, N2), lambda k: (0, 0)),
                pl.BlockSpec((N2, N3), lambda k: (0, 0)),
                pl.BlockSpec((1, N3), lambda k: (0, 0)),
            ],
            out_specs=pl.BlockSpec((M, N3), lambda k: (0, 0)),
            scratch_shapes=[pltpu.VMEM((M, N1), jnp.float32)],
        ),
        compiler_params=pltpu.CompilerParams(
            dimension_semantics=("arbitrary",)),   # K is a reduction axis
        cost_estimate=pl.CostEstimate(flops=flops, transcendentals=0,
                                      bytes_accessed=bytes_accessed),
    )(x, w1, b1, w2, b2, w3, b3)


# ---------------------------------------------------------------------------
# Parameters (deterministic synthetic init, PyTorch-default-style uniform)
# ---------------------------------------------------------------------------

def init_params(key):
    ks = jax.random.split(key, 10)

    def u(k, shape, fan_in, dtype=jnp.float32):
        bound = 1.0 / float(fan_in) ** 0.5
        return jax.random.uniform(k, shape, jnp.float32, -bound, bound).astype(dtype)

    K1, K1P = 7056, 7168      # fc1 in-features, padded once to 4 * tk (tk=1792)
    N1, N1P = 800, 896        # fc1 out-features, padded once to a multiple of 128

    # One-time padding; all pad entries are zero so results are exact:
    #   fc1_w extra rows see zero-padded x columns, fc1_w/fc1_b extra columns
    #   produce h1 columns of relu(0)=0 which hit zero rows of fc2_w.
    fc1_w = u(ks[4], (K1, N1), K1, jnp.bfloat16)
    fc1_w = jnp.pad(fc1_w, ((0, K1P - K1), (0, N1P - N1)))        # (7168, 896) bf16
    fc1_b = jnp.pad(u(ks[5], (N1,), K1), (0, N1P - N1))           # (896,) f32
    fc2_w = u(ks[6], (N1, 120), N1, jnp.bfloat16)
    fc2_w = jnp.pad(fc2_w, ((0, N1P - N1), (0, 0)))               # (896, 120) bf16

    return {
        # conv weights (Cout, KH, KW, Cin) == torch (Cout,Cin,KH,KW).permute(0,2,3,1)
        "conv1_w": u(ks[0], (6, 3, 3, 3), 3 * 3 * 3),
        "conv1_b": u(ks[1], (6,), 3 * 3 * 3),
        "conv2_w": u(ks[2], (16, 5, 5, 6), 5 * 5 * 6),
        "conv2_b": u(ks[3], (16,), 5 * 5 * 6),
        # fc weights (in, out) == torch weight.T ; fc1/fc2 streamed as bf16
        "fc1_w": fc1_w,
        "fc1_b": fc1_b,
        "fc2_w": fc2_w,
        "fc2_b": u(ks[7], (120,), N1),
        "fc3_w": u(ks[8], (120, 2), 120),
        "fc3_b": u(ks[9], (2,), 120),
    }


# ---------------------------------------------------------------------------
# Forward pass (matches Net.forward)
# ---------------------------------------------------------------------------

@jax.jit
def net_forward(params, x_nchw):
    # x_nchw: (N, 3, 94, 94) float32, PyTorch NCHW convention.
    Nb, _, H, _ = x_nchw.shape
    x = conv_relu_pool(x_nchw, params["conv1_w"], params["conv1_b"])   # (N, 6, Qp1)
    s1 = (H - 3 + 1) // 2                                              # 46
    x = x[:, :, : s1 * s1].reshape(Nb, 6, s1, s1)                      # drop lane pad
    x = conv_relu_pool(x, params["conv2_w"], params["conv2_b"])        # (N, 16, Qp2)
    s2 = (s1 - 5 + 1) // 2                                             # 21
    # Output is (C, H, W)-ordered, so this flatten == torch's x.view(N, -1).
    x = x[:, :, : s2 * s2].reshape(Nb, -1)                             # (N, 7056)
    return fc_fused(x,
                    params["fc1_w"], params["fc1_b"],
                    params["fc2_w"], params["fc2_b"],
                    params["fc3_w"], params["fc3_b"])                  # (N, 2)


if __name__ == "__main__":
    key = jax.random.PRNGKey(0)
    pkey, xkey = jax.random.split(key)
    params = init_params(pkey)
    # batch=2; spatial 94x94 is forced by fc1's 7056 = 16*21*21 input features.
    x = jax.random.normal(xkey, (2, 3, 94, 94), jnp.float32)
    out = net_forward(params, x)
    out = jax.block_until_ready(out)
    assert out.shape == (2, 2) and out.dtype == jnp.float32
    assert bool(jnp.all(jnp.isfinite(out)))
    print("KERNEL_OK")
</pallas_src>

<mosaic_0001>
module attributes {stable_mosaic.version = 11 : i64} {
  func.func @_conv_pool_kernel(%arg0: i32, %arg1: memref<1x27x8704xbf16, #tpu.memory_space<vmem>>, %arg2: memref<6x27xbf16, #tpu.memory_space<vmem>>, %arg3: memref<6x1xf32, #tpu.memory_space<vmem>>, %arg4: memref<1x6x2176xf32, #tpu.memory_space<vmem>>) attributes {dimension_semantics = [#tpu.dimension_semantics<parallel>], iteration_bounds = array<i64: 2>, scalar_prefetch = 0 : i64, scratch_operands = 0 : i64, tpu.core_type = #tpu.core_type<tc>, window_params = [{transform_indices = @transform_0, window_bounds = array<i64: 1, 27, 8704>}, {pipeline_mode = #tpu.pipeline_mode<synchronous>, transform_indices = @transform_1, window_bounds = array<i64: 6, 27>}, {pipeline_mode = #tpu.pipeline_mode<synchronous>, transform_indices = @transform_2, window_bounds = array<i64: 6, 1>}, {transform_indices = @transform_3, window_bounds = array<i64: 1, 6, 2176>}]} {
    %c0 = arith.constant 0 : index
    %c0_0 = arith.constant 0 : index
    %0 = vector.load %arg2[%c0, %c0_0] : memref<6x27xbf16, #tpu.memory_space<vmem>>, vector<6x27xbf16>
    %c0_1 = arith.constant 0 : index
    %c0_2 = arith.constant 0 : index
    %c0_3 = arith.constant 0 : index
    %1 = vector.load %arg1[%c0_1, %c0_2, %c0_3] : memref<1x27x8704xbf16, #tpu.memory_space<vmem>>, vector<1x27x8704xbf16>
    %2 = vector.shape_cast %1 : vector<1x27x8704xbf16> to vector<27x8704xbf16>
    %cst = arith.constant dense<0.000000e+00> : vector<6x8704xf32>
    %3 = tpu.matmul %0, %2, %cst {dimension_numbers = #tpu.dot_dimension_numbers<[1], [0], [0], [1], [0, 0, 1, 1], [], []>} : vector<6x27xbf16>, vector<27x8704xbf16>, vector<6x8704xf32> -> vector<6x8704xf32>
    %4 = vector.extract_strided_slice %3 {offsets = [0, 0], sizes = [6, 2176], strides = [1, 1]} : vector<6x8704xf32> to vector<6x2176xf32>
    %5 = vector.extract_strided_slice %3 {offsets = [0, 2176], sizes = [6, 2176], strides = [1, 1]} : vector<6x8704xf32> to vector<6x2176xf32>
    %6 = arith.maximumf %4, %5 : vector<6x2176xf32>
    %7 = vector.extract_strided_slice %3 {offsets = [0, 4352], sizes = [6, 2176], strides = [1, 1]} : vector<6x8704xf32> to vector<6x2176xf32>
    %8 = vector.extract_strided_slice %3 {offsets = [0, 6528], sizes = [6, 2176], strides = [1, 1]} : vector<6x8704xf32> to vector<6x2176xf32>
    %9 = arith.maximumf %7, %8 : vector<6x2176xf32>
    %10 = arith.maximumf %6, %9 : vector<6x2176xf32>
    %c0_4 = arith.constant 0 : index
    %c0_5 = arith.constant 0 : index
    %11 = vector.load %arg3[%c0_4, %c0_5] : memref<6x1xf32, #tpu.memory_space<vmem>>, vector<6x1xf32>
    %12 = vector.broadcast %11 : vector<6x1xf32> to vector<6x2176xf32>
    %13 = arith.addf %10, %12 : vector<6x2176xf32>
    %cst_6 = arith.constant 0.000000e+00 : f32
    %14 = vector.broadcast %cst_6 : f32 to vector<6x2176xf32>
    %15 = arith.maximumf %13, %14 : vector<6x2176xf32>
    %c0_7 = arith.constant 0 : index
    %c0_8 = arith.constant 0 : index
    %c0_9 = arith.constant 0 : index
    %16 = vector.load %arg4[%c0_7, %c0_8, %c0_9] : memref<1x6x2176xf32, #tpu.memory_space<vmem>>, vector<1x6x2176xf32>
    %17 = vector.shape_cast %16 : vector<1x6x2176xf32> to vector<6x2176xf32>
    %18 = vector.shape_cast %15 : vector<6x2176xf32> to vector<1x6x2176xf32>
    tpu.vector_store %arg4[%c0_7, %c0_8, %c0_9], %18 {strides = array<i32>} : memref<1x6x2176xf32, #tpu.memory_space<vmem>>, vector<1x6x2176xf32>,
    return
  }
  func.func @transform_0(%arg0: i32) -> (i32, i32, i32) {
    %c0_i32 = arith.constant 0 : i32
    %c0_i32_0 = arith.constant 0 : i32
    %c0_i32_1 = arith.constant 0 : i32
    return %arg0, %c0_i32, %c0_i32_0 : i32, i32, i32
  }
  func.func @transform_1(%arg0: i32) -> (i32, i32) {
    %c0_i32 = arith.constant 0 : i32
    %c0_i32_0 = arith.constant 0 : i32
    %c0_i32_1 = arith.constant 0 : i32
    return %c0_i32, %c0_i32_0 : i32, i32
  }
  func.func @transform_2(%arg0: i32) -> (i32, i32) {
    %c0_i32 = arith.constant 0 : i32
    %c0_i32_0 = arith.constant 0 : i32
    %c0_i32_1 = arith.constant 0 : i32
    return %c0_i32, %c0_i32_0 : i32, i32
  }
  func.func @transform_3(%arg0: i32) -> (i32, i32, i32) {
    %c0_i32 = arith.constant 0 : i32
    %c0_i32_0 = arith.constant 0 : i32
    %c0_i32_1 = arith.constant 0 : i32
    return %arg0, %c0_i32, %c0_i32_0 : i32, i32, i32
  }
}

module attributes {stable_mosaic.version = 11 : i64} {
  func.func @_conv_pool_kernel(%arg0: i32, %arg1: memref<1x150x2048xbf16, #tpu.memory_space<vmem>>, %arg2: memref<16x150xbf16, #tpu.memory_space<vmem>>, %arg3: memref<16x1xf32, #tpu.memory_space<vmem>>, %arg4: memref<1x16x512xf32, #tpu.memory_space<vmem>>) attributes {dimension_semantics = [#tpu.dimension_semantics<parallel>], iteration_bounds = array<i64: 2>, scalar_prefetch = 0 : i64, scratch_operands = 0 : i64, tpu.core_type = #tpu.core_type<tc>, window_params = [{transform_indices = @transform_0, window_bounds = array<i64: 1, 150, 2048>}, {pipeline_mode = #tpu.pipeline_mode<synchronous>, transform_indices = @transform_1, window_bounds = array<i64: 16, 150>}, {pipeline_mode = #tpu.pipeline_mode<synchronous>, transform_indices = @transform_2, window_bounds = array<i64: 16, 1>}, {transform_indices = @transform_3, window_bounds = array<i64: 1, 16, 512>}]} {
    %c0 = arith.constant 0 : index
    %c0_0 = arith.constant 0 : index
    %0 = vector.load %arg2[%c0, %c0_0] : memref<16x150xbf16, #tpu.memory_space<vmem>>, vector<16x150xbf16>
    %c0_1 = arith.constant 0 : index
    %c0_2 = arith.constant 0 : index
    %c0_3 = arith.constant 0 : index
    %1 = vector.load %arg1[%c0_1, %c0_2, %c0_3] : memref<1x150x2048xbf16, #tpu.memory_space<vmem>>, vector<1x150x2048xbf16>
    %2 = vector.shape_cast %1 : vector<1x150x2048xbf16> to vector<150x2048xbf16>
    %cst = arith.constant dense<0.000000e+00> : vector<16x2048xf32>
    %3 = tpu.matmul %0, %2, %cst {dimension_numbers = #tpu.dot_dimension_numbers<[1], [0], [0], [1], [0, 0, 1, 1], [], []>} : vector<16x150xbf16>, vector<150x2048xbf16>, vector<16x2048xf32> -> vector<16x2048xf32>
    %4 = vector.extract_strided_slice %3 {offsets = [0, 0], sizes = [16, 512], strides = [1, 1]} : vector<16x2048xf32> to vector<16x512xf32>
    %5 = vector.extract_strided_slice %3 {offsets = [0, 512], sizes = [16, 512], strides = [1, 1]} : vector<16x2048xf32> to vector<16x512xf32>
    %6 = arith.maximumf %4, %5 : vector<16x512xf32>
    %7 = vector.extract_strided_slice %3 {offsets = [0, 1024], sizes = [16, 512], strides = [1, 1]} : vector<16x2048xf32> to vector<16x512xf32>
    %8 = vector.extract_strided_slice %3 {offsets = [0, 1536], sizes = [16, 512], strides = [1, 1]} : vector<16x2048xf32> to vector<16x512xf32>
    %9 = arith.maximumf %7, %8 : vector<16x512xf32>
    %10 = arith.maximumf %6, %9 : vector<16x512xf32>
    %c0_4 = arith.constant 0 : index
    %c0_5 = arith.constant 0 : index
    %11 = vector.load %arg3[%c0_4, %c0_5] : memref<16x1xf32, #tpu.memory_space<vmem>>, vector<16x1xf32>
    %12 = vector.broadcast %11 : vector<16x1xf32> to vector<16x512xf32>
    %13 = arith.addf %10, %12 : vector<16x512xf32>
    %cst_6 = arith.constant 0.000000e+00 : f32
    %14 = vector.broadcast %cst_6 : f32 to vector<16x512xf32>
    %15 = arith.maximumf %13, %14 : vector<16x512xf32>
    %c0_7 = arith.constant 0 : index
    %c0_8 = arith.constant 0 : index
    %c0_9 = arith.constant 0 : index
    %16 = vector.load %arg4[%c0_7, %c0_8, %c0_9] : memref<1x16x512xf32, #tpu.memory_space<vmem>>, vector<1x16x512xf32>
    %17 = vector.shape_cast %16 : vector<1x16x512xf32> to vector<16x512xf32>
    %18 = vector.shape_cast %15 : vector<16x512xf32> to vector<1x16x512xf32>
    tpu.vector_store %arg4[%c0_7, %c0_8, %c0_9], %18 {strides = array<i32>} : memref<1x16x512xf32, #tpu.memory_space<vmem>>, vector<1x16x512xf32>,
    return
  }
  func.func @transform_0(%arg0: i32) -> (i32, i32, i32) {
    %c0_i32 = arith.constant 0 : i32
    %c0_i32_0 = arith.constant 0 : i32
    %c0_i32_1 = arith.constant 0 : i32
    return %arg0, %c0_i32, %c0_i32_0 : i32, i32, i32
  }
  func.func @transform_1(%arg0: i32) -> (i32, i32) {
    %c0_i32 = arith.constant 0 : i32
    %c0_i32_0 = arith.constant 0 : i32
    %c0_i32_1 = arith.constant 0 : i32
    return %c0_i32, %c0_i32_0 : i32, i32
  }
  func.func @transform_2(%arg0: i32) -> (i32, i32) {
    %c0_i32 = arith.constant 0 : i32
    %c0_i32_0 = arith.constant 0 : i32
    %c0_i32_1 = arith.constant 0 : i32
    return %c0_i32, %c0_i32_0 : i32, i32
  }
  func.func @transform_3(%arg0: i32) -> (i32, i32, i32) {
    %c0_i32 = arith.constant 0 : i32
    %c0_i32_0 = arith.constant 0 : i32
    %c0_i32_1 = arith.constant 0 : i32
    return %arg0, %c0_i32, %c0_i32_0 : i32, i32, i32
  }
}

module attributes {stable_mosaic.version = 11 : i64} {
  func.func @_fc_fused_kernel(%arg0: i32, %arg1: memref<2x1792xf32, #tpu.memory_space<vmem>>, %arg2: memref<1792x896xbf16, #tpu.memory_space<vmem>>, %arg3: memref<1x896xf32, #tpu.memory_space<vmem>>, %arg4: memref<896x120xbf16, #tpu.memory_space<vmem>>, %arg5: memref<1x120xf32, #tpu.memory_space<vmem>>, %arg6: memref<120x2xf32, #tpu.memory_space<vmem>>, %arg7: memref<1x2xf32, #tpu.memory_space<vmem>>, %arg8: memref<2x2xf32, #tpu.memory_space<vmem>>, %arg9: memref<2x896xf32, #tpu.memory_space<vmem>>) attributes {dimension_semantics = [#tpu.dimension_semantics<arbitrary>], iteration_bounds = array<i64: 4>, scalar_prefetch = 0 : i64, scratch_operands = 1 : i64, tpu.core_type = #tpu.core_type<tc>, window_params = [{transform_indices = @transform_0, window_bounds = array<i64: 2, 1792>}, {transform_indices = @transform_1, window_bounds = array<i64: 1792, 896>}, {pipeline_mode = #tpu.pipeline_mode<synchronous>, transform_indices = @transform_2, window_bounds = array<i64: 1, 896>}, {pipeline_mode = #tpu.pipeline_mode<synchronous>, transform_indices = @transform_3, window_bounds = array<i64: 896, 120>}, {pipeline_mode = #tpu.pipeline_mode<synchronous>, transform_indices = @transform_4, window_bounds = array<i64: 1, 120>}, {pipeline_mode = #tpu.pipeline_mode<synchronous>, transform_indices = @transform_5, window_bounds = array<i64: 120, 2>}, {pipeline_mode = #tpu.pipeline_mode<synchronous>, transform_indices = @transform_6, window_bounds = array<i64: 1, 2>}, {pipeline_mode = #tpu.pipeline_mode<synchronous>, transform_indices = @transform_7, window_bounds = array<i64: 2, 2>}]} {
    %c0_i32 = arith.constant 0 : i32
    %0 = arith.cmpi eq, %arg0, %c0_i32 : i32
    %1 = arith.extui %0 : i1 to i32
    %c0_i32_0 = arith.constant 0 : i32
    %2 = arith.cmpi ne, %1, %c0_i32_0 : i32
    scf.if %2 {
      %cst_9 = arith.constant 0.000000e+00 : f32
      %13 = vector.broadcast %cst_9 : f32 to vector<2x896xf32>
      %c0_10 = arith.constant 0 : index
      %c0_11 = arith.constant 0 : index
      %14 = vector.load %arg9[%c0_10, %c0_11] : memref<2x896xf32, #tpu.memory_space<vmem>>, vector<2x896xf32>
      tpu.vector_store %arg9[%c0_10, %c0_11], %13 {strides = array<i32>} : memref<2x896xf32, #tpu.memory_space<vmem>>, vector<2x896xf32>,
    } else {
    }
    %c0 = arith.constant 0 : index
    %c0_1 = arith.constant 0 : index
    %3 = vector.load %arg9[%c0, %c0_1] : memref<2x896xf32, #tpu.memory_space<vmem>>, vector<2x896xf32>
    %c0_2 = arith.constant 0 : index
    %c0_3 = arith.constant 0 : index
    %4 = vector.load %arg1[%c0_2, %c0_3] : memref<2x1792xf32, #tpu.memory_space<vmem>>, vector<2x1792xf32>
    %5 = arith.truncf %4 : vector<2x1792xf32> to vector<2x1792xbf16>
    %c0_4 = arith.constant 0 : index
    %c0_5 = arith.constant 0 : index
    %6 = vector.load %arg2[%c0_4, %c0_5] : memref<1792x896xbf16, #tpu.memory_space<vmem>>, vector<1792x896xbf16>
    %cst = arith.constant dense<0.000000e+00> : vector<2x896xf32>
    %7 = tpu.matmul %5, %6, %cst {dimension_numbers = #tpu.dot_dimension_numbers<[1], [0], [0], [1], [0, 0, 1, 1], [], []>} : vector<2x1792xbf16>, vector<1792x896xbf16>, vector<2x896xf32> -> vector<2x896xf32>
    %8 = arith.addf %3, %7 : vector<2x896xf32>
    %c0_6 = arith.constant 0 : index
    %c0_7 = arith.constant 0 : index
    %9 = vector.load %arg9[%c0_6, %c0_7] : memref<2x896xf32, #tpu.memory_space<vmem>>, vector<2x896xf32>
    tpu.vector_store %arg9[%c0_6, %c0_7], %8 {strides = array<i32>} : memref<2x896xf32, #tpu.memory_space<vmem>>, vector<2x896xf32>,
    %c3_i32 = arith.constant 3 : i32
    %10 = arith.cmpi eq, %arg0, %c3_i32 : i32
    %11 = arith.extui %10 : i1 to i32
    %c0_i32_8 = arith.constant 0 : i32
    %12 = arith.cmpi ne, %11, %c0_i32_8 : i32
    scf.if %12 {
      %c0_9 = arith.constant 0 : index
      %c0_10 = arith.constant 0 : index
      %13 = vector.load %arg9[%c0_9, %c0_10] : memref<2x896xf32, #tpu.memory_space<vmem>>, vector<2x896xf32>
      %c0_11 = arith.constant 0 : index
      %c0_12 = arith.constant 0 : index
      %14 = vector.load %arg3[%c0_11, %c0_12] : memref<1x896xf32, #tpu.memory_space<vmem>>, vector<1x896xf32>
      %15 = vector.broadcast %14 : vector<1x896xf32> to vector<2x896xf32>
      %16 = arith.addf %13, %15 : vector<2x896xf32>
      %cst_13 = arith.constant 0.000000e+00 : f32
      %17 = vector.broadcast %cst_13 : f32 to vector<2x896xf32>
      %18 = arith.maximumf %16, %17 : vector<2x896xf32>
      %19 = arith.truncf %18 : vector<2x896xf32> to vector<2x896xbf16>
      %c0_14 = arith.constant 0 : index
      %c0_15 = arith.constant 0 : index
      %20 = vector.load %arg4[%c0_14, %c0_15] : memref<896x120xbf16, #tpu.memory_space<vmem>>, vector<896x120xbf16>
      %cst_16 = arith.constant dense<0.000000e+00> : vector<2x120xf32>
      %21 = tpu.matmul %19, %20, %cst_16 {dimension_numbers = #tpu.dot_dimension_numbers<[1], [0], [0], [1], [0, 0, 1, 1], [], []>} : vector<2x896xbf16>, vector<896x120xbf16>, vector<2x120xf32> -> vector<2x120xf32>
      %c0_17 = arith.constant 0 : index
      %c0_18 = arith.constant 0 : index
      %22 = vector.load %arg5[%c0_17, %c0_18] : memref<1x120xf32, #tpu.memory_space<vmem>>, vector<1x120xf32>
      %23 = vector.broadcast %22 : vector<1x120xf32> to vector<2x120xf32>
      %24 = arith.addf %21, %23 : vector<2x120xf32>
      %cst_19 = arith.constant 0.000000e+00 : f32
      %25 = vector.broadcast %cst_19 : f32 to vector<2x120xf32>
      %26 = arith.maximumf %24, %25 : vector<2x120xf32>
      %c0_20 = arith.constant 0 : index
      %c0_21 = arith.constant 0 : index
      %27 = vector.load %arg6[%c0_20, %c0_21] : memref<120x2xf32, #tpu.memory_space<vmem>>, vector<120x2xf32>
      %cst_22 = arith.constant dense<0.000000e+00> : vector<2x2xf32>
      %28 = tpu.matmul %26, %27, %cst_22 {dimension_numbers = #tpu.dot_dimension_numbers<[1], [0], [0], [1], [0, 0, 1, 1], [], []>} : vector<2x120xf32>, vector<120x2xf32>, vector<2x2xf32> -> vector<2x2xf32>
      %c0_23 = arith.constant 0 : index
      %c0_24 = arith.constant 0 : index
      %29 = vector.load %arg7[%c0_23, %c0_24] : memref<1x2xf32, #tpu.memory_space<vmem>>, vector<1x2xf32>
      %30 = vector.broadcast %29 : vector<1x2xf32> to vector<2x2xf32>
      %31 = arith.addf %28, %30 : vector<2x2xf32>
      %c0_25 = arith.constant 0 : index
      %c0_26 = arith.constant 0 : index
      %32 = vector.load %arg8[%c0_25, %c0_26] : memref<2x2xf32, #tpu.memory_space<vmem>>, vector<2x2xf32>
      tpu.vector_store %arg8[%c0_25, %c0_26], %31 {strides = array<i32>} : memref<2x2xf32, #tpu.memory_space<vmem>>, vector<2x2xf32>,
    } else {
    }
    return
  }
  func.func @transform_0(%arg0: i32) -> (i32, i32) {
    %c0_i32 = arith.constant 0 : i32
    %c0_i32_0 = arith.constant 0 : i32
    return %c0_i32, %arg0 : i32, i32
  }
  func.func @transform_1(%arg0: i32) -> (i32, i32) {
    %c0_i32 = arith.constant 0 : i32
    %c0_i32_0 = arith.constant 0 : i32
    return %arg0, %c0_i32 : i32, i32
  }
  func.func @transform_2(%arg0: i32) -> (i32, i32) {
    %c0_i32 = arith.constant 0 : i32
    %c0_i32_0 = arith.constant 0 : i32
    %c0_i32_1 = arith.constant 0 : i32
    return %c0_i32, %c0_i32_0 : i32, i32
  }
  func.func @transform_3(%arg0: i32) -> (i32, i32) {
    %c0_i32 = arith.constant 0 : i32
    %c0_i32_0 = arith.constant 0 : i32
    %c0_i32_1 = arith.constant 0 : i32
    return %c0_i32, %c0_i32_0 : i32, i32
  }
  func.func @transform_4(%arg0: i32) -> (i32, i32) {
    %c0_i32 = arith.constant 0 : i32
    %c0_i32_0 = arith.constant 0 : i32
    %c0_i32_1 = arith.constant 0 : i32
    return %c0_i32, %c0_i32_0 : i32, i32
  }
  func.func @transform_5(%arg0: i32) -> (i32, i32) {
    %c0_i32 = arith.constant 0 : i32
    %c0_i32_0 = arith.constant 0 : i32
    %c0_i32_1 = arith.constant 0 : i32
    return %c0_i32, %c0_i32_0 : i32, i32
  }
  func.func @transform_6(%arg0: i32) -> (i32, i32) {
    %c0_i32 = arith.constant 0 : i32
    %c0_i32_0 = arith.constant 0 : i32
    %c0_i32_1 = arith.constant 0 : i32
    return %c0_i32, %c0_i32_0 : i32, i32
  }
  func.func @transform_7(%arg0: i32) -> (i32, i32) {
    %c0_i32 = arith.constant 0 : i32
    %c0_i32_0 = arith.constant 0 : i32
    %c0_i32_1 = arith.constant 0 : i32
    return %c0_i32, %c0_i32_0 : i32, i32
  }
}

</mosaic_0001>

<llo_original>
// kernel: net_forward.3
$region0: #{net_forward.3}
  #allocation0 [shape = 'u32[]', space=smem, size = 0x4, offset = 0x4, fixed_abs, tag = 'smem constant byte address 0x4 - core index']
  #allocation1 [shape = 'u32[144,128]{1,0:T(1,128)}', space=vmem, size = 0x12000, scoped, tag = 'internal scratch']
  %s0 = inlined_call_operand.vmem [shape: bf16[2,27,8704], index: 0, kind: input, shape index: {}]
  %s1 = inlined_call_operand.vmem [shape: bf16[6,27], index: 1, kind: input, shape index: {}]
  %s2 = inlined_call_operand.vmem [shape: f32[6,1], index: 2, kind: input, shape index: {}]
  %s3 = inlined_call_operand.vmem [shape: f32[2,6,2176], index: 3, kind: output, shape index: {}]
  %s4 = sld [smem:[#allocation0]]
  $region45: #{net_forward.3} parent=0
    _
  %s6 = ssub.s32 1, %s4
  %s7 = scalar_select 0, %s6, %s4
  loop: start=0, step=1, limit=4
  $region2: #{net_forward.3} parent=0 // loop_pre_header
    _
  $region3: #{net_forward.3} parent=0 // loop_header
    %s9 = sphi 0, %s13
    %p10 = scmp.ge.s32.totalorder %s9, 4
    %s19 = sphi 0, %s21
    %s22 = sphi 0, %s19
    %s23 = sphi 0, %s22
    %s39 = sphi 0, %s23
    %s43 = sphi 0, %s43
    %s45 = sphi 0, %s43
    %s46 = sphi 0, %s45
    %s60 = sphi 0, %s46
    %s64 = sphi 0, %s64
    %s66 = sphi 0, %s64
    %s67 = sphi 0, %s66
    %s81 = sphi 0, %s67
    %s87 = sphi 0, %s89
    %s90 = sphi 0, %s87
    %s91 = sphi 0, %s90
    %s107 = sphi 0, %s91
  $region4: #{net_forward.3} parent=0 // loop_header_branch
    %12 = sbr.rel (%p10) target = $region8
  $region5: #{net_forward.3} parent=0 // loop_body
    %s14 = ssub.s32 %s9, 1
    %s15 = ssub.s32 %s9, 2
    %s16 = sadd.s32 %s9, 1
    %s17 = ssub.s32 %s9, %s16
    %p18 = scmp.eq.s32.totalorder %s17, 0
    %s20 = sadd.s32 %s19, 1
    %s21 = scalar_select %p18, %s19, %s20
    %p24 = pneg %p18
    %p25 = scmp.eq.s32.totalorder %s9, 1
    %p26 = por %p24, %p25
    %p27 = scmp.ne.s32.totalorder %s19, %s22
    %p28 = scmp.eq.s32.totalorder %s9, 0
    %p29 = por %p27, %p28
    %p30 = scmp.ne.s32.totalorder %s19, %s22
    %p31 = scmp.eq.s32.totalorder %s14, 1
    %p32 = por %p30, %p31
    %p33 = scmp.ne.s32.totalorder %s22, %s23
    %p34 = scmp.eq.s32.totalorder %s14, 0
    %p35 = por %p33, %p34
    %p36 = scmp.ne.s32.totalorder %s22, %s23
    %p37 = scmp.eq.s32.totalorder %s15, 1
    %p38 = por %p36, %p37
    %p40 = scmp.ne.s32.totalorder %s23, %s39
    %p41 = scmp.eq.s32.totalorder %s15, 0
    %p42 = por %p40, %p41
    %s44 = sadd.s32 %s43, 1
    %p47 = scmp.eq.s32.totalorder %s9, 1
    %p48 = scmp.ne.s32.totalorder %s43, %s45
    %p49 = scmp.eq.s32.totalorder %s9, 0
    %p50 = por %p48, %p49
    %p51 = scmp.ne.s32.totalorder %s43, %s45
    %p52 = scmp.eq.s32.totalorder %s14, 1
    %p53 = por %p51, %p52
    %p54 = scmp.ne.s32.totalorder %s45, %s46
    %p55 = scmp.eq.s32.totalorder %s14, 0
    %p56 = por %p54, %p55
    %p57 = scmp.ne.s32.totalorder %s45, %s46
    %p58 = scmp.eq.s32.totalorder %s15, 1
    %p59 = por %p57, %p58
    %p61 = scmp.ne.s32.totalorder %s46, %s60
    %p62 = scmp.eq.s32.totalorder %s15, 0
    %p63 = por %p61, %p62
    %s65 = sadd.s32 %s64, 1
    %p68 = scmp.eq.s32.totalorder %s9, 1
    %p69 = scmp.ne.s32.totalorder %s64, %s66
    %p70 = scmp.eq.s32.totalorder %s9, 0
    %p71 = por %p69, %p70
    %p72 = scmp.ne.s32.totalorder %s64, %s66
    %p73 = scmp.eq.s32.totalorder %s14, 1
    %p74 = por %p72, %p73
    %p75 = scmp.ne.s32.totalorder %s66, %s67
    %p76 = scmp.eq.s32.totalorder %s14, 0
    %p77 = por %p75, %p76
    %p78 = scmp.ne.s32.totalorder %s66, %s67
    %p79 = scmp.eq.s32.totalorder %s15, 1
    %p80 = por %p78, %p79
    %p82 = scmp.ne.s32.totalorder %s67, %s81
    %p83 = scmp.eq.s32.totalorder %s15, 0
    %p84 = por %p82, %p83
    %s85 = ssub.s32 %s9, %s16
    %p86 = scmp.eq.s32.totalorder %s85, 0
    %s88 = sadd.s32 %s87, 1
    %s89 = scalar_select %p86, %s87, %s88
    %p92 = pneg %p86
    %p93 = scmp.eq.s32.totalorder %s9, 1
    %p94 = por %p92, %p93
    %p95 = scmp.ne.s32.totalorder %s87, %s90
    %p96 = scmp.eq.s32.totalorder %s9, 0
    %p97 = por %p95, %p96
    %p98 = scmp.ne.s32.totalorder %s87, %s90
    %p99 = scmp.eq.s32.totalorder %s14, 1
    %p100 = por %p98, %p99
    %p101 = scmp.ne.s32.totalorder %s90, %s91
    %p102 = scmp.eq.s32.totalorder %s14, 0
    %p103 = por %p101, %p102
    %p104 = scmp.ne.s32.totalorder %s90, %s91
    %p105 = scmp.eq.s32.totalorder %s15, 1
    %p106 = por %p104, %p105
    %p108 = scmp.ne.s32.totalorder %s91, %s107
    %p109 = scmp.eq.s32.totalorder %s15, 0
    %p110 = por %p108, %p109
    %p111 = scmp.le.s32.totalorder 1, %s9
    %p112 = scmp.lt.s32.totalorder %s9, 3
    %p113 = pnand %p111, %p112
    %p114 = pneg %p113
    // Predicated region
    $region9: #{net_forward.3} parent=5 // pred_check
      _
    $region10: #{net_forward.3} parent=5 // pred_check_branch
      %116 = sbr.rel (%p113) target = $region12
    $region11: #{net_forward.3} parent=5 // pred_region
      %s117 = ssub.s32 %s9, 1
      // Predicated region
      $region13: #{net_forward.3} parent=11 // pred_check
        %p118 = pneg %p56
      $region14: #{net_forward.3} parent=11 // pred_check_branch
        %120 = sbr.rel (%p118) target = $region16
      $region15: #{net_forward.3} parent=11 // pred_region
        _
      $region16: #{net_forward.3} parent=11 // pred_fallthru
        _
      // Predicated region
      $region17: #{net_forward.3} parent=11 // pred_check
        %p121 = pneg %p77
      $region18: #{net_forward.3} parent=11 // pred_check_branch
        %123 = sbr.rel (%p121) target = $region20
      $region19: #{net_forward.3} parent=11 // pred_region
        _
      $region20: #{net_forward.3} parent=11 // pred_fallthru
        _
    $region12: #{net_forward.3} parent=5 // pred_fallthru
      _
    %p124 = scmp.lt.s32.totalorder %s9, 2
    // Predicated region
    $region21: #{net_forward.3} parent=5 // pred_check
      %p125 = pneg %p124
    $region22: #{net_forward.3} parent=5 // pred_check_branch
      %127 = sbr.rel (%p125) target = $region24
    $region23: #{net_forward.3} parent=5 // pred_region
      // Predicated region
      $region25: #{net_forward.3} parent=23 // pred_check
        %p128 = pneg %p29
      $region26: #{net_forward.3} parent=23 // pred_check_branch
        %130 = sbr.rel (%p128) target = $region28
      $region27: #{net_forward.3} parent=23 // pred_region
        %p131 = scmp.lt.s32.totalorder %s9, 1
        %s132 = scalar_select %p131, %s9, 1
        %s133 = smul.addr %s132, 272
        %s134 = smul.addr %s133, 4
        %s135 = scalar_lea.vmem %s0, %s134
      $region28: #{net_forward.3} parent=23 // pred_fallthru
        _
    $region24: #{net_forward.3} parent=5 // pred_fallthru
      _
    %p136 = scmp.le.s32.totalorder 1, %s9
    %p137 = scmp.lt.s32.totalorder %s9, 3
    %p138 = pnand %p136, %p137
    %p139 = pneg %p138
    // Predicated region
    $region29: #{net_forward.3} parent=5 // pred_check
      _
    $region30: #{net_forward.3} parent=5 // pred_check_branch
      %141 = sbr.rel (%p138) target = $region32
    $region31: #{net_forward.3} parent=5 // pred_region
      %s142 = ssub.s32 %s9, 1
      %p143 = scmp.lt.s32.totalorder %s14, 1
      %s144 = scalar_select %p143, %s14, 1
      %s145 = smul.addr %s144, 272
      %s146 = smul.addr %s145, 4
      %s147 = scalar_lea.vmem %s0, %s146
      %p148 = pneg %p35
      %p149 = pneg %p32
      %p150 = pneg %p56
      %p151 = pneg %p53
      %p152 = pneg %p77
      %p153 = pneg %p74
      %p154 = pneg %p103
      %p155 = pneg %p100
      %p156 = scmp.lt.s32.totalorder %s14, 1
      %s157 = scalar_select %p156, %s14, 1
      %s158 = smul.addr %s157, 17
      %s159 = smul.addr %s158, 8
      %s160 = scalar_lea.vmem %s3, %s159
      %p161 = scmp.lt.s32.totalorder %s14, 1
      %s162 = scalar_select %p161, %s14, 1
      %s163 = smul.addr %s162, 272
      %s164 = smul.addr %s163, 4
      %s165 = scalar_lea.vmem %s0, %s164
      %p166 = scmp.lt.s32.totalorder %s14, 1
      %s167 = scalar_select %p166, %s14, 1
      %s168 = smul.addr %s167, 17
      %s169 = smul.addr %s168, 8
      %s170 = scalar_lea.vmem %s3, %s169
      %v172 = vld [vmem:[%s1] sm:$0x7]
      %v173 = vld [vmem:[%s165] sm:$0xff]
      %v174 = vld [vmem:[%s165 + $0x8] sm:$0xff]
      %v175 = vld [vmem:[%s165 + $0x10] sm:$0xff]
      %v176 = vld [vmem:[%s165 + $0x18] sm:$0xff]
      %v177 = vld [vmem:[%s165 + $0x20] sm:$0xff]
      %v178 = vld [vmem:[%s165 + $0x28] sm:$0xff]
      %v179 = vld [vmem:[%s165 + $0x30] sm:$0xff]
      %v180 = vld [vmem:[%s165 + $0x38] sm:$0xff]
      %v181 = vld [vmem:[%s165 + $0x40] sm:$0xff]
      %v182 = vld [vmem:[%s165 + $0x48] sm:$0xff]
      %v183 = vld [vmem:[%s165 + $0x50] sm:$0xff]
      %v184 = vld [vmem:[%s165 + $0x58] sm:$0xff]
      %v185 = vld [vmem:[%s165 + $0x60] sm:$0xff]
      %v186 = vld [vmem:[%s165 + $0x68] sm:$0xff]
      %v187 = vld [vmem:[%s165 + $0x70] sm:$0xff]
      %v188 = vld [vmem:[%s165 + $0x78] sm:$0xff]
      %v189 = vld [vmem:[%s165 + $0x80] sm:$0xff]
      %v190 = vld [vmem:[%s165 + $0x88] sm:$0xff]
      %v191 = vld [vmem:[%s165 + $0x90] sm:$0xff]
      %v192 = vld [vmem:[%s165 + $0x98] sm:$0xff]
      %v193 = vld [vmem:[%s165 + $0xa0] sm:$0xff]
      %v194 = vld [vmem:[%s165 + $0xa8] sm:$0xff]
      %v195 = vld [vmem:[%s165 + $0xb0] sm:$0xff]
      %v196 = vld [vmem:[%s165 + $0xb8] sm:$0xff]
      %v197 = vld [vmem:[%s165 + $0xc0] sm:$0xff]
      %v198 = vld [vmem:[%s165 + $0xc8] sm:$0xff]
      %v199 = vld [vmem:[%s165 + $0xd0] sm:$0xff]
      %v200 = vld [vmem:[%s165 + $0xd8] sm:$0xff]
      %v201 = vld [vmem:[%s165 + $0xe0] sm:$0xff]
      %v202 = vld [vmem:[%s165 + $0xe8] sm:$0xff]
      %v203 = vld [vmem:[%s165 + $0xf0] sm:$0xff]
      %v204 = vld [vmem:[%s165 + $0xf8] sm:$0xff]
      %v205 = vld [vmem:[%s165 + $0x100] sm:$0xff]
      %v206 = vld [vmem:[%s165 + $0x108] sm:$0xff]
      %v207 = vld [vmem:[%s165 + $0x110] sm:$0xff]
      %v208 = vld [vmem:[%s165 + $0x118] sm:$0xff]
      %v209 = vld [vmem:[%s165 + $0x120] sm:$0xff]
      %v210 = vld [vmem:[%s165 + $0x128] sm:$0xff]
      %v211 = vld [vmem:[%s165 + $0x130] sm:$0xff]
      %v212 = vld [vmem:[%s165 + $0x138] sm:$0xff]
      %v213 = vld [vmem:[%s165 + $0x140] sm:$0xff]
      %v214 = vld [vmem:[%s165 + $0x148] sm:$0xff]
      %v215 = vld [vmem:[%s165 + $0x150] sm:$0xff]
      %v216 = vld [vmem:[%s165 + $0x158] sm:$0xff]
      %v217 = vld [vmem:[%s165 + $0x160] sm:$0xff]
      %v218 = vld [vmem:[%s165 + $0x168] sm:$0xff]
      %v219 = vld [vmem:[%s165 + $0x170] sm:$0xff]
      %v220 = vld [vmem:[%s165 + $0x178] sm:$0xff]
      %v221 = vld [vmem:[%s165 + $0x180] sm:$0xff]
      %v222 = vld [vmem:[%s165 + $0x188] sm:$0xff]
      %v223 = vld [vmem:[%s165 + $0x190] sm:$0xff]
      %v224 = vld [vmem:[%s165 + $0x198] sm:$0xff]
      %v225 = vld [vmem:[%s165 + $0x1a0] sm:$0xff]
      %v226 = vld [vmem:[%s165 + $0x1a8] sm:$0xff]
      %v227 = vld [vmem:[%s165 + $0x1b0] sm:$0xff]
      %v228 = vld [vmem:[%s165 + $0x1b8] sm:$0xff]
      %v229 = vld [vmem:[%s165 + $0x1c0] sm:$0xff]
      %v230 = vld [vmem:[%s165 + $0x1c8] sm:$0xff]
      %v231 = vld [vmem:[%s165 + $0x1d0] sm:$0xff]
      %v232 = vld [vmem:[%s165 + $0x1d8] sm:$0xff]
      %v233 = vld [vmem:[%s165 + $0x1e0] sm:$0xff]
      %v234 = vld [vmem:[%s165 + $0x1e8] sm:$0xff]
      %v235 = vld [vmem:[%s165 + $0x1f0] sm:$0xff]
      %v236 = vld [vmem:[%s165 + $0x1f8] sm:$0xff]
      %v237 = vld [vmem:[%s165 + $0x200] sm:$0xff]
      %v238 = vld [vmem:[%s165 + $0x208] sm:$0xff]
      %v239 = vld [vmem:[%s165 + $0x210] sm:$0xff]
      %v240 = vld [vmem:[%s165 + $0x218] sm:$0xff]
      %v241 = vld [vmem:[%s165 + $0x220] sm:$0xff]
      %v242 = vld [vmem:[%s165 + $0x228] sm:$0xff]
      %v243 = vld [vmem:[%s165 + $0x230] sm:$0xff]
      %v244 = vld [vmem:[%s165 + $0x238] sm:$0xff]
      %v245 = vld [vmem:[%s165 + $0x240] sm:$0xff]
      %v246 = vld [vmem:[%s165 + $0x248] sm:$0xff]
      %v247 = vld [vmem:[%s165 + $0x250] sm:$0xff]
      %v248 = vld [vmem:[%s165 + $0x258] sm:$0xff]
      %v249 = vld [vmem:[%s165 + $0x260] sm:$0xff]
      %v250 = vld [vmem:[%s165 + $0x268] sm:$0xff]
      %v251 = vld [vmem:[%s165 + $0x270] sm:$0xff]
      %v252 = vld [vmem:[%s165 + $0x278] sm:$0xff]
      %v253 = vld [vmem:[%s165 + $0x280] sm:$0xff]
      %v254 = vld [vmem:[%s165 + $0x288] sm:$0xff]
      %v255 = vld [vmem:[%s165 + $0x290] sm:$0xff]
      %v256 = vld [vmem:[%s165 + $0x298] sm:$0xff]
      %v257 = vld [vmem:[%s165 + $0x2a0] sm:$0xff]
      %v258 = vld [vmem:[%s165 + $0x2a8] sm:$0xff]
      %v259 = vld [vmem:[%s165 + $0x2b0] sm:$0xff]
      %v260 = vld [vmem:[%s165 + $0x2b8] sm:$0xff]
      %v261 = vld [vmem:[%s165 + $0x2c0] sm:$0xff]
      %v262 = vld [vmem:[%s165 + $0x2c8] sm:$0xff]
      %v263 = vld [vmem:[%s165 + $0x2d0] sm:$0xff]
      %v264 = vld [vmem:[%s165 + $0x2d8] sm:$0xff]
      %v265 = vld [vmem:[%s165 + $0x2e0] sm:$0xff]
      %v266 = vld [vmem:[%s165 + $0x2e8] sm:$0xff]
      %v267 = vld [vmem:[%s165 + $0x2f0] sm:$0xff]
      %v268 = vld [vmem:[%s165 + $0x2f8] sm:$0xff]
      %v269 = vld [vmem:[%s165 + $0x300] sm:$0xff]
      %v270 = vld [vmem:[%s165 + $0x308] sm:$0xff]
      %v271 = vld [vmem:[%s165 + $0x310] sm:$0xff]
      %v272 = vld [vmem:[%s165 + $0x318] sm:$0xff]
      %v273 = vld [vmem:[%s165 + $0x320] sm:$0xff]
      %v274 = vld [vmem:[%s165 + $0x328] sm:$0xff]
      %v275 = vld [vmem:[%s165 + $0x330] sm:$0x33]
      %v276 = vld [vmem:[%s165 + $0x338] sm:$0x33]
      %v277 = vld [vmem:[%s165 + $0x340] sm:$0x33]
      %v278 = vld [vmem:[%s165 + $0x348] sm:$0x33]
      %v279 = vld [vmem:[%s165 + $0x350] sm:$0x33]
      %v280 = vld [vmem:[%s165 + $0x358] sm:$0x33]
      %v281 = vld [vmem:[%s165 + $0x360] sm:$0x33]
      %v282 = vld [vmem:[%s165 + $0x368] sm:$0x33]
      %v283 = vld [vmem:[%s165 + $0x370] sm:$0x33]
      %v284 = vld [vmem:[%s165 + $0x378] sm:$0x33]
      %v285 = vld [vmem:[%s165 + $0x380] sm:$0x33]
      %v286 = vld [vmem:[%s165 + $0x388] sm:$0x33]
      %v287 = vld [vmem:[%s165 + $0x390] sm:$0x33]
      %v288 = vld [vmem:[%s165 + $0x398] sm:$0x33]
      %v289 = vld [vmem:[%s165 + $0x3a0] sm:$0x33]
      %v290 = vld [vmem:[%s165 + $0x3a8] sm:$0x33]
      %v291 = vld [vmem:[%s165 + $0x3b0] sm:$0x33]
      %v292 = vld [vmem:[%s165 + $0x3b8] sm:$0x33]
      %v293 = vld [vmem:[%s165 + $0x3c0] sm:$0x33]
      %v294 = vld [vmem:[%s165 + $0x3c8] sm:$0x33]
      %v295 = vld [vmem:[%s165 + $0x3d0] sm:$0x33]
      %v296 = vld [vmem:[%s165 + $0x3d8] sm:$0x33]
      %v297 = vld [vmem:[%s165 + $0x3e0] sm:$0x33]
      %v298 = vld [vmem:[%s165 + $0x3e8] sm:$0x33]
      %v299 = vld [vmem:[%s165 + $0x3f0] sm:$0x33]
      %v300 = vld [vmem:[%s165 + $0x3f8] sm:$0x33]
      %v301 = vld [vmem:[%s165 + $0x400] sm:$0x33]
      %v302 = vld [vmem:[%s165 + $0x408] sm:$0x33]
      %v303 = vld [vmem:[%s165 + $0x410] sm:$0x33]
      %v304 = vld [vmem:[%s165 + $0x418] sm:$0x33]
      %v305 = vld [vmem:[%s165 + $0x420] sm:$0x33]
      %v306 = vld [vmem:[%s165 + $0x428] sm:$0x33]
      %v307 = vld [vmem:[%s165 + $0x430] sm:$0x33]
      %v308 = vld [vmem:[%s165 + $0x438] sm:$0x33]
      %v445 = vunpack.c.l.b16 %v173
      %v446 = vunpack.c.h.b16 %v173
      %v447 = vunpack.c.l.b16 %v174
      %v448 = vunpack.c.h.b16 %v174
      %v449 = vunpack.c.l.b16 %v175
      %v450 = vunpack.c.h.b16 %v175
      %v451 = vunpack.c.l.b16 %v176
      %v452 = vunpack.c.h.b16 %v176
      %v453 = vunpack.c.l.b16 %v177
      %v454 = vunpack.c.h.b16 %v177
      %v455 = vunpack.c.l.b16 %v178
      %v456 = vunpack.c.h.b16 %v178
      %v457 = vunpack.c.l.b16 %v179
      %v458 = vunpack.c.h.b16 %v179
      %v459 = vunpack.c.l.b16 %v180
      %v460 = vunpack.c.h.b16 %v180
      %v461 = vunpack.c.l.b16 %v181
      %v462 = vunpack.c.h.b16 %v181
      %v463 = vunpack.c.l.b16 %v182
      %v464 = vunpack.c.h.b16 %v182
      %v465 = vunpack.c.l.b16 %v183
      %v466 = vunpack.c.h.b16 %v183
      %v467 = vunpack.c.l.b16 %v184
      %v468 = vunpack.c.h.b16 %v184
      %v469 = vunpack.c.l.b16 %v185
      %v470 = vunpack.c.h.b16 %v185
      %v471 = vunpack.c.l.b16 %v186
      %v472 = vunpack.c.h.b16 %v186
      %v473 = vunpack.c.l.b16 %v187
      %v474 = vunpack.c.h.b16 %v187
      %v475 = vunpack.c.l.b16 %v188
      %v476 = vunpack.c.h.b16 %v188
      %v477 = vunpack.c.l.b16 %v189
      %v478 = vunpack.c.h.b16 %v189
      %v479 = vunpack.c.l.b16 %v190
      %v480 = vunpack.c.h.b16 %v190
      %v481 = vunpack.c.l.b16 %v191
      %v482 = vunpack.c.h.b16 %v191
      %v483 = vunpack.c.l.b16 %v192
      %v484 = vunpack.c.h.b16 %v192
      %v485 = vunpack.c.l.b16 %v193
      %v486 = vunpack.c.h.b16 %v193
      %v487 = vunpack.c.l.b16 %v194
      %v488 = vunpack.c.h.b16 %v194
      %v489 = vunpack.c.l.b16 %v195
      %v490 = vunpack.c.h.b16 %v195
      %v491 = vunpack.c.l.b16 %v196
      %v492 = vunpack.c.h.b16 %v196
      %v493 = vunpack.c.l.b16 %v197
      %v494 = vunpack.c.h.b16 %v197
      %v495 = vunpack.c.l.b16 %v198
      %v496 = vunpack.c.h.b16 %v198
      %v497 = vunpack.c.l.b16 %v199
      %v498 = vunpack.c.h.b16 %v199
      %v499 = vunpack.c.l.b16 %v200
      %v500 = vunpack.c.h.b16 %v200
      %v501 = vunpack.c.l.b16 %v201
      %v502 = vunpack.c.h.b16 %v201
      %v503 = vunpack.c.l.b16 %v202
      %v504 = vunpack.c.h.b16 %v202
      %v505 = vunpack.c.l.b16 %v203
      %v506 = vunpack.c.h.b16 %v203
      %v507 = vunpack.c.l.b16 %v204
      %v508 = vunpack.c.h.b16 %v204
      %v509 = vunpack.c.l.b16 %v205
      %v510 = vunpack.c.h.b16 %v205
      %v511 = vunpack.c.l.b16 %v206
      %v512 = vunpack.c.h.b16 %v206
      %v513 = vunpack.c.l.b16 %v207
      %v514 = vunpack.c.h.b16 %v207
      %v515 = vunpack.c.l.b16 %v208
      %v516 = vunpack.c.h.b16 %v208
      %v517 = vunpack.c.l.b16 %v209
      %v518 = vunpack.c.h.b16 %v209
      %v519 = vunpack.c.l.b16 %v210
      %v520 = vunpack.c.h.b16 %v210
      %v521 = vunpack.c.l.b16 %v211
      %v522 = vunpack.c.h.b16 %v211
      %v523 = vunpack.c.l.b16 %v212
      %v524 = vunpack.c.h.b16 %v212
      %v525 = vunpack.c.l.b16 %v213
      %v526 = vunpack.c.h.b16 %v213
      %v527 = vunpack.c.l.b16 %v214
      %v528 = vunpack.c.h.b16 %v214
      %v529 = vunpack.c.l.b16 %v215
      %v530 = vunpack.c.h.b16 %v215
      %v531 = vunpack.c.l.b16 %v216
      %v532 = vunpack.c.h.b16 %v216
      %v533 = vunpack.c.l.b16 %v217
      %v534 = vunpack.c.h.b16 %v217
      %v535 = vunpack.c.l.b16 %v218
      %v536 = vunpack.c.h.b16 %v218
      %v537 = vunpack.c.l.b16 %v219
      %v538 = vunpack.c.h.b16 %v219
      %v539 = vunpack.c.l.b16 %v220
      %v540 = vunpack.c.h.b16 %v220
      %v541 = vunpack.c.l.b16 %v221
      %v542 = vunpack.c.h.b16 %v221
      %v543 = vunpack.c.l.b16 %v222
      %v544 = vunpack.c.h.b16 %v222
      %v545 = vunpack.c.l.b16 %v223
      %v546 = vunpack.c.h.b16 %v223
      %v547 = vunpack.c.l.b16 %v224
      %v548 = vunpack.c.h.b16 %v224
      %v549 = vunpack.c.l.b16 %v225
      %v550 = vunpack.c.h.b16 %v225
      %v551 = vunpack.c.l.b16 %v226
      %v552 = vunpack.c.h.b16 %v226
      %v553 = vunpack.c.l.b16 %v227
      %v554 = vunpack.c.h.b16 %v227
      %v555 = vunpack.c.l.b16 %v228
      %v556 = vunpack.c.h.b16 %v228
      %v557 = vunpack.c.l.b16 %v229
      %v558 = vunpack.c.h.b16 %v229
      %v559 = vunpack.c.l.b16 %v230
      %v560 = vunpack.c.h.b16 %v230
      %v561 = vunpack.c.l.b16 %v231
      %v562 = vunpack.c.h.b16 %v231
      %v563 = vunpack.c.l.b16 %v232
      %v564 = vunpack.c.h.b16 %v232
      %v565 = vunpack.c.l.b16 %v233
      %v566 = vunpack.c.h.b16 %v233
      %v567 = vunpack.c.l.b16 %v234
      %v568 = vunpack.c.h.b16 %v234
      %v569 = vunpack.c.l.b16 %v235
      %v570 = vunpack.c.h.b16 %v235
      %v571 = vunpack.c.l.b16 %v236
      %v572 = vunpack.c.h.b16 %v236
      %v573 = vunpack.c.l.b16 %v237
      %v574 = vunpack.c.h.b16 %v237
      %v575 = vunpack.c.l.b16 %v238
      %v576 = vunpack.c.h.b16 %v238
      %v577 = vunpack.c.l.b16 %v239
      %v578 = vunpack.c.h.b16 %v239
      %v579 = vunpack.c.l.b16 %v240
      %v580 = vunpack.c.h.b16 %v240
      %v581 = vunpack.c.l.b16 %v241
      %v582 = vunpack.c.h.b16 %v241
      %v583 = vunpack.c.l.b16 %v242
      %v584 = vunpack.c.h.b16 %v242
      %v585 = vunpack.c.l.b16 %v243
      %v586 = vunpack.c.h.b16 %v243
      %v587 = vunpack.c.l.b16 %v244
      %v588 = vunpack.c.h.b16 %v244
      %v589 = vunpack.c.l.b16 %v245
      %v590 = vunpack.c.h.b16 %v245
      %v591 = vunpack.c.l.b16 %v246
      %v592 = vunpack.c.h.b16 %v246
      %v593 = vunpack.c.l.b16 %v247
      %v594 = vunpack.c.h.b16 %v247
      %v595 = vunpack.c.l.b16 %v248
      %v596 = vunpack.c.h.b16 %v248
      %v597 = vunpack.c.l.b16 %v249
      %v598 = vunpack.c.h.b16 %v249
      %v599 = vunpack.c.l.b16 %v250
      %v600 = vunpack.c.h.b16 %v250
      %v601 = vunpack.c.l.b16 %v251
      %v602 = vunpack.c.h.b16 %v251
      %v603 = vunpack.c.l.b16 %v252
      %v604 = vunpack.c.h.b16 %v252
      %v605 = vunpack.c.l.b16 %v253
      %v606 = vunpack.c.h.b16 %v253
      %v607 = vunpack.c.l.b16 %v254
      %v608 = vunpack.c.h.b16 %v254
      %v609 = vunpack.c.l.b16 %v255
      %v610 = vunpack.c.h.b16 %v255
      %v611 = vunpack.c.l.b16 %v256
      %v612 = vunpack.c.h.b16 %v256
      %v613 = vunpack.c.l.b16 %v257
      %v614 = vunpack.c.h.b16 %v257
      %v615 = vunpack.c.l.b16 %v258
      %v616 = vunpack.c.h.b16 %v258
      %v617 = vunpack.c.l.b16 %v259
      %v618 = vunpack.c.h.b16 %v259
      %v619 = vunpack.c.l.b16 %v260
      %v620 = vunpack.c.h.b16 %v260
      %v621 = vunpack.c.l.b16 %v261
      %v622 = vunpack.c.h.b16 %v261
      %v623 = vunpack.c.l.b16 %v262
      %v624 = vunpack.c.h.b16 %v262
      %v625 = vunpack.c.l.b16 %v263
      %v626 = vunpack.c.h.b16 %v263
      %v627 = vunpack.c.l.b16 %v264
      %v628 = vunpack.c.h.b16 %v264
      %v629 = vunpack.c.l.b16 %v265
      %v630 = vunpack.c.h.b16 %v265
      %v631 = vunpack.c.l.b16 %v266
      %v632 = vunpack.c.h.b16 %v266
      %v633 = vunpack.c.l.b16 %v267
      %v634 = vunpack.c.h.b16 %v267
      %v635 = vunpack.c.l.b16 %v268
      %v636 = vunpack.c.h.b16 %v268
      %v637 = vunpack.c.l.b16 %v269
      %v638 = vunpack.c.h.b16 %v269
      %v639 = vunpack.c.l.b16 %v270
      %v640 = vunpack.c.h.b16 %v270
      %v641 = vunpack.c.l.b16 %v271
      %v642 = vunpack.c.h.b16 %v271
      %v643 = vunpack.c.l.b16 %v272
      %v644 = vunpack.c.h.b16 %v272
      %v645 = vunpack.c.l.b16 %v273
      %v646 = vunpack.c.h.b16 %v273
      %v647 = vunpack.c.l.b16 %v274
      %v648 = vunpack.c.h.b16 %v274
      %v649 = vunpack.c.l.b16 %v275
      %v650 = vunpack.c.h.b16 %v275
      %v651 = vunpack.c.l.b16 %v276
      %v652 = vunpack.c.h.b16 %v276
      %v653 = vunpack.c.l.b16 %v277
      %v654 = vunpack.c.h.b16 %v277
      %v655 = vunpack.c.l.b16 %v278
      %v656 = vunpack.c.h.b16 %v278
      %v657 = vunpack.c.l.b16 %v279
      %v658 = vunpack.c.h.b16 %v279
      %v659 = vunpack.c.l.b16 %v280
      %v660 = vunpack.c.h.b16 %v280
      %v661 = vunpack.c.l.b16 %v281
      %v662 = vunpack.c.h.b16 %v281
      %v663 = vunpack.c.l.b16 %v282
      %v664 = vunpack.c.h.b16 %v282
      %v665 = vunpack.c.l.b16 %v283
      %v666 = vunpack.c.h.b16 %v283
      %v667 = vunpack.c.l.b16 %v284
      %v668 = vunpack.c.h.b16 %v284
      %v669 = vunpack.c.l.b16 %v285
      %v670 = vunpack.c.h.b16 %v285
      %v671 = vunpack.c.l.b16 %v286
      %v672 = vunpack.c.h.b16 %v286
      %v673 = vunpack.c.l.b16 %v287
      %v674 = vunpack.c.h.b16 %v287
      %v675 = vunpack.c.l.b16 %v288
      %v676 = vunpack.c.h.b16 %v288
      %v677 = vunpack.c.l.b16 %v289
      %v678 = vunpack.c.h.b16 %v289
      %v679 = vunpack.c.l.b16 %v290
      %v680 = vunpack.c.h.b16 %v290
      %v681 = vunpack.c.l.b16 %v291
      %v682 = vunpack.c.h.b16 %v291
      %v683 = vunpack.c.l.b16 %v292
      %v684 = vunpack.c.h.b16 %v292
      %v685 = vunpack.c.l.b16 %v293
      %v686 = vunpack.c.h.b16 %v293
      %v687 = vunpack.c.l.b16 %v294
      %v688 = vunpack.c.h.b16 %v294
      %v689 = vunpack.c.l.b16 %v295
      %v690 = vunpack.c.h.b16 %v295
      %v691 = vunpack.c.l.b16 %v296
      %v692 = vunpack.c.h.b16 %v296
      %v693 = vunpack.c.l.b16 %v297
      %v694 = vunpack.c.h.b16 %v297
      %v695 = vunpack.c.l.b16 %v298
      %v696 = vunpack.c.h.b16 %v298
      %v697 = vunpack.c.l.b16 %v299
      %v698 = vunpack.c.h.b16 %v299
      %v699 = vunpack.c.l.b16 %v300
      %v700 = vunpack.c.h.b16 %v300
      %v701 = vunpack.c.l.b16 %v301
      %v702 = vunpack.c.h.b16 %v301
      %v703 = vunpack.c.l.b16 %v302
      %v704 = vunpack.c.h.b16 %v302
      %v705 = vunpack.c.l.b16 %v303
      %v706 = vunpack.c.h.b16 %v303
      %v707 = vunpack.c.l.b16 %v304
      %v708 = vunpack.c.h.b16 %v304
      %v709 = vunpack.c.l.b16 %v305
      %v710 = vunpack.c.h.b16 %v305
      %v711 = vunpack.c.l.b16 %v306
      %v712 = vunpack.c.h.b16 %v306
      %v713 = vunpack.c.l.b16 %v307
      %v714 = vunpack.c.h.b16 %v307
      %v715 = vunpack.c.l.b16 %v308
      %v716 = vunpack.c.h.b16 %v308
      %v717 = vpack.c.b16 %v513, %v445
      %v718 = vpack.c.b16 %v514, %v446
      %v719 = vpack.c.b16 %v515, %v447
      %v720 = vpack.c.b16 %v516, %v448
      %v721 = vpack.c.b16 %v517, %v449
      %v722 = vpack.c.b16 %v518, %v450
      %v723 = vpack.c.b16 %v519, %v451
      %v724 = vpack.c.b16 %v520, %v452
      %v725 = vpack.c.b16 %v521, %v453
      %v726 = vpack.c.b16 %v522, %v454
      %v727 = vpack.c.b16 %v523, %v455
      %v728 = vpack.c.b16 %v524, %v456
      %v729 = vpack.c.b16 %v525, %v457
      %v730 = vpack.c.b16 %v526, %v458
      %v731 = vpack.c.b16 %v527, %v459
      %v732 = vpack.c.b16 %v528, %v460
      %v733 = vpack.c.b16 %v529, %v461
      %v734 = vpack.c.b16 %v530, %v462
      %v735 = vpack.c.b16 %v531, %v463
      %v736 = vpack.c.b16 %v532, %v464
      %v737 = vpack.c.b16 %v533, %v465
      %v738 = vpack.c.b16 %v534, %v466
      %v739 = vpack.c.b16 %v535, %v467
      %v740 = vpack.c.b16 %v536, %v468
      %v741 = vpack.c.b16 %v537, %v469
      %v742 = vpack.c.b16 %v538, %v470
      %v743 = vpack.c.b16 %v539, %v471
      %v744 = vpack.c.b16 %v540, %v472
      %v745 = vpack.c.b16 %v541, %v473
      %v746 = vpack.c.b16 %v542, %v474
      %v747 = vpack.c.b16 %v543, %v475
      %v748 = vpack.c.b16 %v544, %v476
      %v749 = vpack.c.b16 %v545, %v477
      %v750 = vpack.c.b16 %v546, %v478
      %v751 = vpack.c.b16 %v547, %v479
      %v752 = vpack.c.b16 %v548, %v480
      %v753 = vpack.c.b16 %v549, %v481
      %v754 = vpack.c.b16 %v550, %v482
      %v755 = vpack.c.b16 %v551, %v483
      %v756 = vpack.c.b16 %v552, %v484
      %v757 = vpack.c.b16 %v553, %v485
      %v758 = vpack.c.b16 %v554, %v486
      %v759 = vpack.c.b16 %v555, %v487
      %v760 = vpack.c.b16 %v556, %v488
      %v761 = vpack.c.b16 %v557, %v489
      %v762 = vpack.c.b16 %v558, %v490
      %v763 = vpack.c.b16 %v559, %v491
      %v764 = vpack.c.b16 %v560, %v492
      %v765 = vpack.c.b16 %v561, %v493
      %v766 = vpack.c.b16 %v562, %v494
      %v767 = vpack.c.b16 %v563, %v495
      %v768 = vpack.c.b16 %v564, %v496
      %v769 = vpack.c.b16 %v565, %v497
      %v770 = vpack.c.b16 %v566, %v498
      %v771 = vpack.c.b16 %v567, %v499
      %v772 = vpack.c.b16 %v568, %v500
      %v773 = vpack.c.b16 %v569, %v501
      %v774 = vpack.c.b16 %v570, %v502
      %v775 = vpack.c.b16 %v571, %v503
      %v776 = vpack.c.b16 %v572, %v504
      %v777 = vpack.c.b16 %v573, %v505
      %v778 = vpack.c.b16 %v574, %v506
      %v779 = vpack.c.b16 %v575, %v507
      %v780 = vpack.c.b16 %v576, %v508
      %v781 = vpack.c.b16 %v577, %v509
      %v782 = vpack.c.b16 %v578, %v510
      %v783 = vpack.c.b16 %v579, %v511
      %v784 = vpack.c.b16 %v580, %v512
      %v785 = vpack.c.b16 %v649, %v581
      %v786 = vpack.c.b16 %v650, %v582
      %v787 = vpack.c.b16 %v651, %v583
      %v788 = vpack.c.b16 %v652, %v584
      %v789 = vpack.c.b16 %v653, %v585
      %v790 = vpack.c.b16 %v654, %v586
      %v791 = vpack.c.b16 %v655, %v587
      %v792 = vpack.c.b16 %v656, %v588
      %v793 = vpack.c.b16 %v657, %v589
      %v794 = vpack.c.b16 %v658, %v590
      %v795 = vpack.c.b16 %v659, %v591
      %v796 = vpack.c.b16 %v660, %v592
      %v797 = vpack.c.b16 %v661, %v593
      %v798 = vpack.c.b16 %v662, %v594
      %v799 = vpack.c.b16 %v663, %v595
      %v800 = vpack.c.b16 %v664, %v596
      %v801 = vpack.c.b16 %v665, %v597
      %v802 = vpack.c.b16 %v666, %v598
      %v803 = vpack.c.b16 %v667, %v599
      %v804 = vpack.c.b16 %v668, %v600
      %v805 = vpack.c.b16 %v669, %v601
      %v806 = vpack.c.b16 %v670, %v602
      %v807 = vpack.c.b16 %v671, %v603
      %v808 = vpack.c.b16 %v672, %v604
      %v809 = vpack.c.b16 %v673, %v605
      %v810 = vpack.c.b16 %v674, %v606
      %v811 = vpack.c.b16 %v675, %v607
      %v812 = vpack.c.b16 %v676, %v608
      %v813 = vpack.c.b16 %v677, %v609
      %v814 = vpack.c.b16 %v678, %v610
      %v815 = vpack.c.b16 %v679, %v611
      %v816 = vpack.c.b16 %v680, %v612
      %v817 = vpack.c.b16 %v681, %v613
      %v818 = vpack.c.b16 %v682, %v614
      %v819 = vpack.c.b16 %v683, %v615
      %v820 = vpack.c.b16 %v684, %v616
      %v821 = vpack.c.b16 %v685, %v617
      %v822 = vpack.c.b16 %v686, %v618
      %v823 = vpack.c.b16 %v687, %v619
      %v824 = vpack.c.b16 %v688, %v620
      %v825 = vpack.c.b16 %v689, %v621
      %v826 = vpack.c.b16 %v690, %v622
      %v827 = vpack.c.b16 %v691, %v623
      %v828 = vpack.c.b16 %v692, %v624
      %v829 = vpack.c.b16 %v693, %v625
      %v830 = vpack.c.b16 %v694, %v626
      %v831 = vpack.c.b16 %v695, %v627
      %v832 = vpack.c.b16 %v696, %v628
      %v833 = vpack.c.b16 %v697, %v629
      %v834 = vpack.c.b16 %v698, %v630
      %v835 = vpack.c.b16 %v699, %v631
      %v836 = vpack.c.b16 %v700, %v632
      %v837 = vpack.c.b16 %v701, %v633
      %v838 = vpack.c.b16 %v702, %v634
      %v839 = vpack.c.b16 %v703, %v635
      %v840 = vpack.c.b16 %v704, %v636
      %v841 = vpack.c.b16 %v705, %v637
      %v842 = vpack.c.b16 %v706, %v638
      %v843 = vpack.c.b16 %v707, %v639
      %v844 = vpack.c.b16 %v708, %v640
      %v845 = vpack.c.b16 %v709, %v641
      %v846 = vpack.c.b16 %v710, %v642
      %v847 = vpack.c.b16 %v711, %v643
      %v848 = vpack.c.b16 %v712, %v644
      %v849 = vpack.c.b16 %v713, %v645
      %v850 = vpack.c.b16 %v714, %v646
      %v851 = vpack.c.b16 %v715, %v647
      %v852 = vpack.c.b16 %v716, %v648
      %vm921 = vcmask 220160
      %v923 = vsel %vm921, %v172, 0
      %vm925 = vcmask 1044480
      %vm926 = vcmask 1045504
      %v927 = vsel %vm925, 4294967295, 65535
      %v928 = vsel %vm926, %v927, 0
      %v930 = vand.u32 %v785, %v928
      %v933 = vand.u32 %v786, %v928
      %v936 = vand.u32 %v787, %v928
      %v939 = vand.u32 %v788, %v928
      %v942 = vand.u32 %v789, %v928
      %v945 = vand.u32 %v790, %v928
      %v948 = vand.u32 %v791, %v928
      %v951 = vand.u32 %v792, %v928
      %v954 = vand.u32 %v793, %v928
      %v957 = vand.u32 %v794, %v928
      %v960 = vand.u32 %v795, %v928
      %v963 = vand.u32 %v796, %v928
      %v966 = vand.u32 %v797, %v928
      %v969 = vand.u32 %v798, %v928
      %v972 = vand.u32 %v799, %v928
      %v975 = vand.u32 %v800, %v928
      %v978 = vand.u32 %v801, %v928
      %v981 = vand.u32 %v802, %v928
      %v984 = vand.u32 %v803, %v928
      %v987 = vand.u32 %v804, %v928
      %v990 = vand.u32 %v805, %v928
      %v993 = vand.u32 %v806, %v928
      %v996 = vand.u32 %v807, %v928
      %v999 = vand.u32 %v808, %v928
      %v1002 = vand.u32 %v809, %v928
      %v1005 = vand.u32 %v810, %v928
      %v1008 = vand.u32 %v811, %v928
      %v1011 = vand.u32 %v812, %v928
      %v1014 = vand.u32 %v813, %v928
      %v1017 = vand.u32 %v814, %v928
      %v1020 = vand.u32 %v815, %v928
      %v1023 = vand.u32 %v816, %v928
      %v1026 = vand.u32 %v817, %v928
      %v1029 = vand.u32 %v818, %v928
      %v1032 = vand.u32 %v819, %v928
      %v1035 = vand.u32 %v820, %v928
      %v1038 = vand.u32 %v821, %v928
      %v1041 = vand.u32 %v822, %v928
      %v1044 = vand.u32 %v823, %v928
      %v1047 = vand.u32 %v824, %v928
      %v1050 = vand.u32 %v825, %v928
      %v1053 = vand.u32 %v826, %v928
      %v1056 = vand.u32 %v827, %v928
      %v1059 = vand.u32 %v828, %v928
      %v1062 = vand.u32 %v829, %v928
      %v1065 = vand.u32 %v830, %v928
      %v1068 = vand.u32 %v831, %v928
      %v1071 = vand.u32 %v832, %v928
      %v1074 = vand.u32 %v833, %v928
      %v1077 = vand.u32 %v834, %v928
      %v1080 = vand.u32 %v835, %v928
      %v1083 = vand.u32 %v836, %v928
      %v1086 = vand.u32 %v837, %v928
      %v1089 = vand.u32 %v838, %v928
      %v1092 = vand.u32 %v839, %v928
      %v1095 = vand.u32 %v840, %v928
      %v1098 = vand.u32 %v841, %v928
      %v1101 = vand.u32 %v842, %v928
      %v1104 = vand.u32 %v843, %v928
      %v1107 = vand.u32 %v844, %v928
      %v1110 = vand.u32 %v845, %v928
      %v1113 = vand.u32 %v846, %v928
      %v1116 = vand.u32 %v847, %v928
      %v1119 = vand.u32 %v848, %v928
      %v1122 = vand.u32 %v849, %v928
      %v1125 = vand.u32 %v850, %v928
      %v1128 = vand.u32 %v851, %v928
      %v1131 = vand.u32 %v852, %v928
      %1133 = vmatprep.subr.bf16.mxu0 %v718
      %1134 = vmatpush1.bf16.msra.mxu0 %v717
      %1135 = vmatprep.subr.bf16.mxu0 %v933
      %1136 = vmatpush1.bf16.msra.mxu0 %v930
      %1137 = vmatprep.subr.bf16.mxu0 0
      %1138 = vmatpush1.bf16.msra.mxu0 0
      %1139 = vmatprep.subr.bf16.mxu0 0
      %1140 = vmatpush1.bf16.msra.mxu0 0
      %1141 = vmatprep.subr.bf16.mxu0 0
      %1142 = vmatpush1.bf16.msra.mxu0 0
      %1143 = vmatprep.subr.bf16.mxu0 0
      %1144 = vmatpush1.bf16.msra.mxu0 0
      %1145 = vmatprep.subr.bf16.mxu0 0
      %1146 = vmatpush1.bf16.msra.mxu0 0
      %1147 = vmatprep.subr.bf16.mxu0 0
      %1148 = vmatpush1.bf16.msra.mxu0 0
      %1149 = vmatprep.subr.bf16.mxu0 0
      %1150 = vmatpush1.bf16.msra.mxu0 0
      %1151 = vmatprep.subr.bf16.mxu0 0
      %1152 = vmatpush1.bf16.msra.mxu0 0
      %1153 = vmatprep.subr.bf16.mxu0 0
      %1154 = vmatpush1.bf16.msra.mxu0 0
      %1155 = vmatprep.subr.bf16.mxu0 0
      %1156 = vmatpush1.bf16.msra.mxu0 0
      %1157 = vmatprep.subr.bf16.mxu0 0
      %1158 = vmatpush1.bf16.msra.mxu0 0
      %1159 = vmatprep.subr.bf16.mxu0 0
      %1160 = vmatpush1.bf16.msra.mxu0 0
      %1161 = vmatprep.subr.bf16.mxu0 0
      %1162 = vmatpush1.bf16.msra.mxu0 0
      %1163 = vmatprep.subr.bf16.mxu0 0
      %1164 = vmatpush1.bf16.msra.mxu0 0
      %1165 = vmatprep.mubr.bf16.mxu0 0
      %1166 = vmatmul.mubr.bf16.gmra.mrb[0].mxu0 %v923
      %v1167 = vpop.f32.mrb[0].mxu0
      %v1168 = vadd.f32 0.0, %v1167
      %v1169 = vpop.f32.mrb[0].mxu0
      %v1170 = vadd.f32 0.0, %v1169
      %v1171 = vpop.f32.mrb[0].mxu0
      %v1172 = vpop.f32.mrb[0].mxu0
      %1173 = vdwg.mxu0
      %1174 = vmatprep.subr.bf16.mxu0 %v720
      %1175 = vmatpush1.bf16.msra.mxu0 %v719
      %1176 = vmatprep.subr.bf16.mxu0 %v939
      %1177 = vmatpush1.bf16.msra.mxu0 %v936
      %1178 = vmatprep.subr.bf16.mxu0 0
      %1179 = vmatpush1.bf16.msra.mxu0 0
      %1180 = vmatprep.subr.bf16.mxu0 0
      %1181 = vmatpush1.bf16.msra.mxu0 0
      %1182 = vmatprep.subr.bf16.mxu0 0
      %1183 = vmatpush1.bf16.msra.mxu0 0
      %1184 = vmatprep.subr.bf16.mxu0 0
      %1185 = vmatpush1.bf16.msra.mxu0 0
      %1186 = vmatprep.subr.bf16.mxu0 0
      %1187 = vmatpush1.bf16.msra.mxu0 0
      %1188 = vmatprep.subr.bf16.mxu0 0
      %1189 = vmatpush1.bf16.msra.mxu0 0
      %1190 = vmatprep.subr.bf16.mxu0 0
      %1191 = vmatpush1.bf16.msra.mxu0 0
      %1192 = vmatprep.subr.bf16.mxu0 0
      %1193 = vmatpush1.bf16.msra.mxu0 0
      %1194 = vmatprep.subr.bf16.mxu0 0
      %1195 = vmatpush1.bf16.msra.mxu0 0
      %1196 = vmatprep.subr.bf16.mxu0 0
      %1197 = vmatpush1.bf16.msra.mxu0 0
      %1198 = vmatprep.subr.bf16.mxu0 0
      %1199 = vmatpush1.bf16.msra.mxu0 0
      %1200 = vmatprep.subr.bf16.mxu0 0
      %1201 = vmatpush1.bf16.msra.mxu0 0
      %1202 = vmatprep.subr.bf16.mxu0 0
      %1203 = vmatpush1.bf16.msra.mxu0 0
      %1204 = vmatprep.subr.bf16.mxu0 0
      %1205 = vmatpush1.bf16.msra.mxu0 0
      %1206 = vmatprep.mubr.bf16.mxu0 0
      %1207 = vmatmul.mubr.bf16.gmra.mrb[0].mxu0 %v923
      %v1208 = vpop.f32.mrb[0].mxu0
      %v1209 = vadd.f32 0.0, %v1208
      %v1210 = vpop.f32.mrb[0].mxu0
      %v1211 = vadd.f32 0.0, %v1210
      %v1212 = vpop.f32.mrb[0].mxu0
      %v1213 = vpop.f32.mrb[0].mxu0
      %1214 = vdwg.mxu0
      %1215 = vmatprep.subr.bf16.mxu0 %v722
      %1216 = vmatpush1.bf16.msra.mxu0 %v721
      %1217 = vmatprep.subr.bf16.mxu0 %v945
      %1218 = vmatpush1.bf16.msra.mxu0 %v942
      %1219 = vmatprep.subr.bf16.mxu0 0
      %1220 = vmatpush1.bf16.msra.mxu0 0
      %1221 = vmatprep.subr.bf16.mxu0 0
      %1222 = vmatpush1.bf16.msra.mxu0 0
      %1223 = vmatprep.subr.bf16.mxu0 0
      %1224 = vmatpush1.bf16.msra.mxu0 0
      %1225 = vmatprep.subr.bf16.mxu0 0
      %1226 = vmatpush1.bf16.msra.mxu0 0
      %1227 = vmatprep.subr.bf16.mxu0 0
      %1228 = vmatpush1.bf16.msra.mxu0 0
      %1229 = vmatprep.subr.bf16.mxu0 0
      %1230 = vmatpush1.bf16.msra.mxu0 0
      %1231 = vmatprep.subr.bf16.mxu0 0
      %1232 = vmatpush1.bf16.msra.mxu0 0
      %1233 = vmatprep.subr.bf16.mxu0 0
      %1234 = vmatpush1.bf16.msra.mxu0 0
      %1235 = vmatprep.subr.bf16.mxu0 0
      %1236 = vmatpush1.bf16.msra.mxu0 0
      %1237 = vmatprep.subr.bf16.mxu0 0
      %1238 = vmatpush1.bf16.msra.mxu0 0
      %1239 = vmatprep.subr.bf16.mxu0 0
      %1240 = vmatpush1.bf16.msra.mxu0 0
      %1241 = vmatprep.subr.bf16.mxu0 0
      %1242 = vmatpush1.bf16.msra.mxu0 0
      %1243 = vmatprep.subr.bf16.mxu0 0
      %1244 = vmatpush1.bf16.msra.mxu0 0
      %1245 = vmatprep.subr.bf16.mxu0 0
      %1246 = vmatpush1.bf16.msra.mxu0 0
      %1247 = vmatprep.mubr.bf16.mxu0 0
      %1248 = vmatmul.mubr.bf16.gmra.mrb[0].mxu0 %v923
      %v1249 = vpop.f32.mrb[0].mxu0
      %v1250 = vadd.f32 0.0, %v1249
      %v1251 = vpop.f32.mrb[0].mxu0
      %v1252 = vadd.f32 0.0, %v1251
      %v1253 = vpop.f32.mrb[0].mxu0
      %v1254 = vpop.f32.mrb[0].mxu0
      %1255 = vdwg.mxu0
      %1256 = vmatprep.subr.bf16.mxu0 %v724
      %1257 = vmatpush1.bf16.msra.mxu0 %v723
      %1258 = vmatprep.subr.bf16.mxu0 %v951
      %1259 = vmatpush1.bf16.msra.mxu0 %v948
      %1260 = vmatprep.subr.bf16.mxu0 0
      %1261 = vmatpush1.bf16.msra.mxu0 0
      %1262 = vmatprep.subr.bf16.mxu0 0
      %1263 = vmatpush1.bf16.msra.mxu0 0
      %1264 = vmatprep.subr.bf16.mxu0 0
      %1265 = vmatpush1.bf16.msra.mxu0 0
      %1266 = vmatprep.subr.bf16.mxu0 0
      %1267 = vmatpush1.bf16.msra.mxu0 0
      %1268 = vmatprep.subr.bf16.mxu0 0
      %1269 = vmatpush1.bf16.msra.mxu0 0
      %1270 = vmatprep.subr.bf16.mxu0 0
      %1271 = vmatpush1.bf16.msra.mxu0 0
      %1272 = vmatprep.subr.bf16.mxu0 0
      %1273 = vmatpush1.bf16.msra.mxu0 0
      %1274 = vmatprep.subr.bf16.mxu0 0
      %1275 = vmatpush1.bf16.msra.mxu0 0
      %1276 = vmatprep.subr.bf16.mxu0 0
      %1277 = vmatpush1.bf16.msra.mxu0 0
      %1278 = vmatprep.subr.bf16.mxu0 0
      %1279 = vmatpush1.bf16.msra.mxu0 0
      %1280 = vmatprep.subr.bf16.mxu0 0
      %1281 = vmatpush1.bf16.msra.mxu0 0
      %1282 = vmatprep.subr.bf16.mxu0 0
      %1283 = vmatpush1.bf16.msra.mxu0 0
      %1284 = vmatprep.subr.bf16.mxu0 0
      %1285 = vmatpush1.bf16.msra.mxu0 0
      %1286 = vmatprep.subr.bf16.mxu0 0
      %1287 = vmatpush1.bf16.msra.mxu0 0
      %1288 = vmatprep.mubr.bf16.mxu0 0
      %1289 = vmatmul.mubr.bf16.gmra.mrb[0].mxu0 %v923
      %v1290 = vpop.f32.mrb[0].mxu0
      %v1291 = vadd.f32 0.0, %v1290
      %v1292 = vpop.f32.mrb[0].mxu0
      %v1293 = vadd.f32 0.0, %v1292
      %v1294 = vpop.f32.mrb[0].mxu0
      %v1295 = vpop.f32.mrb[0].mxu0
      %1296 = vdwg.mxu0
      %1297 = vmatprep.subr.bf16.mxu0 %v726
      %1298 = vmatpush1.bf16.msra.mxu0 %v725
      %1299 = vmatprep.subr.bf16.mxu0 %v957
      %1300 = vmatpush1.bf16.msra.mxu0 %v954
      %1301 = vmatprep.subr.bf16.mxu0 0
      %1302 = vmatpush1.bf16.msra.mxu0 0
      %1303 = vmatprep.subr.bf16.mxu0 0
      %1304 = vmatpush1.bf16.msra.mxu0 0
      %1305 = vmatprep.subr.bf16.mxu0 0
      %1306 = vmatpush1.bf16.msra.mxu0 0
      %1307 = vmatprep.subr.bf16.mxu0 0
      %1308 = vmatpush1.bf16.msra.mxu0 0
      %1309 = vmatprep.subr.bf16.mxu0 0
      %1310 = vmatpush1.bf16.msra.mxu0 0
      %1311 = vmatprep.subr.bf16.mxu0 0
      %1312 = vmatpush1.bf16.msra.mxu0 0
      %1313 = vmatprep.subr.bf16.mxu0 0
      %1314 = vmatpush1.bf16.msra.mxu0 0
      %1315 = vmatprep.subr.bf16.mxu0 0
      %1316 = vmatpush1.bf16.msra.mxu0 0
      %1317 = vmatprep.subr.bf16.mxu0 0
      %1318 = vmatpush1.bf16.msra.mxu0 0
      %1319 = vmatprep.subr.bf16.mxu0 0
      %1320 = vmatpush1.bf16.msra.mxu0 0
      %1321 = vmatprep.subr.bf16.mxu0 0
      %1322 = vmatpush1.bf16.msra.mxu0 0
      %1323 = vmatprep.subr.bf16.mxu0 0
      %1324 = vmatpush1.bf16.msra.mxu0 0
      %1325 = vmatprep.subr.bf16.mxu0 0
      %1326 = vmatpush1.bf16.msra.mxu0 0
      %1327 = vmatprep.subr.bf16.mxu0 0
      %1328 = vmatpush1.bf16.msra.mxu0 0
      %1329 = vmatprep.mubr.bf16.mxu0 0
      %1330 = vmatmul.mubr.bf16.gmra.mrb[0].mxu0 %v923
      %v1331 = vpop.f32.mrb[0].mxu0
      %v1332 = vadd.f32 0.0, %v1331
      %v1333 = vpop.f32.mrb[0].mxu0
      %v1334 = vadd.f32 0.0, %v1333
      %v1335 = vpop.f32.mrb[0].mxu0
      %v1336 = vpop.f32.mrb[0].mxu0
      %1337 = vdwg.mxu0
      %1338 = vmatprep.subr.bf16.mxu0 %v728
      %1339 = vmatpush1.bf16.msra.mxu0 %v727
      %1340 = vmatprep.subr.bf16.mxu0 %v963
      %1341 = vmatpush1.bf16.msra.mxu0 %v960
      %1342 = vmatprep.subr.bf16.mxu0 0
      %1343 = vmatpush1.bf16.msra.mxu0 0
      %1344 = vmatprep.subr.bf16.mxu0 0
      %1345 = vmatpush1.bf16.msra.mxu0 0
      %1346 = vmatprep.subr.bf16.mxu0 0
      %1347 = vmatpush1.bf16.msra.mxu0 0
      %1348 = vmatprep.subr.bf16.mxu0 0
      %1349 = vmatpush1.bf16.msra.mxu0 0
      %1350 = vmatprep.subr.bf16.mxu0 0
      %1351 = vmatpush1.bf16.msra.mxu0 0
      %1352 = vmatprep.subr.bf16.mxu0 0
      %1353 = vmatpush1.bf16.msra.mxu0 0
      %1354 = vmatprep.subr.bf16.mxu0 0
      %1355 = vmatpush1.bf16.msra.mxu0 0
      %1356 = vmatprep.subr.bf16.mxu0 0
      %1357 = vmatpush1.bf16.msra.mxu0 0
      %1358 = vmatprep.subr.bf16.mxu0 0
      %1359 = vmatpush1.bf16.msra.mxu0 0
      %1360 = vmatprep.subr.bf16.mxu0 0
      %1361 = vmatpush1.bf16.msra.mxu0 0
      %1362 = vmatprep.subr.bf16.mxu0 0
      %1363 = vmatpush1.bf16.msra.mxu0 0
      %1364 = vmatprep.subr.bf16.mxu0 0
      %1365 = vmatpush1.bf16.msra.mxu0 0
      %1366 = vmatprep.subr.bf16.mxu0 0
      %1367 = vmatpush1.bf16.msra.mxu0 0
      %1368 = vmatprep.subr.bf16.mxu0 0
      %1369 = vmatpush1.bf16.msra.mxu0 0
      %1370 = vmatprep.mubr.bf16.mxu0 0
      %1371 = vmatmul.mubr.bf16.gmra.mrb[0].mxu0 %v923
      %v1372 = vpop.f32.mrb[0].mxu0
      %v1373 = vadd.f32 0.0, %v1372
      %v1374 = vpop.f32.mrb[0].mxu0
      %v1375 = vadd.f32 0.0, %v1374
      %v1376 = vpop.f32.mrb[0].mxu0
      %v1377 = vpop.f32.mrb[0].mxu0
      %1378 = vdwg.mxu0
      %1379 = vmatprep.subr.bf16.mxu0 %v730
      %1380 = vmatpush1.bf16.msra.mxu0 %v729
      %1381 = vmatprep.subr.bf16.mxu0 %v969
      %1382 = vmatpush1.bf16.msra.mxu0 %v966
      %1383 = vmatprep.subr.bf16.mxu0 0
      %1384 = vmatpush1.bf16.msra.mxu0 0
      %1385 = vmatprep.subr.bf16.mxu0 0
      %1386 = vmatpush1.bf16.msra.mxu0 0
      %1387 = vmatprep.subr.bf16.mxu0 0
      %1388 = vmatpush1.bf16.msra.mxu0 0
      %1389 = vmatprep.subr.bf16.mxu0 0
      %1390 = vmatpush1.bf16.msra.mxu0 0
      %1391 = vmatprep.subr.bf16.mxu0 0
      %1392 = vmatpush1.bf16.msra.mxu0 0
      %1393 = vmatprep.subr.bf16.mxu0 0
      %1394 = vmatpush1.bf16.msra.mxu0 0
      %1395 = vmatprep.subr.bf16.mxu0 0
      %1396 = vmatpush1.bf16.msra.mxu0 0
      %1397 = vmatprep.subr.bf16.mxu0 0
      %1398 = vmatpush1.bf16.msra.mxu0 0
      %1399 = vmatprep.subr.bf16.mxu0 0
      %1400 = vmatpush1.bf16.msra.mxu0 0
      %1401 = vmatprep.subr.bf16.mxu0 0
      %1402 = vmatpush1.bf16.msra.mxu0 0
      %1403 = vmatprep.subr.bf16.mxu0 0
      %1404 = vmatpush1.bf16.msra.mxu0 0
      %1405 = vmatprep.subr.bf16.mxu0 0
      %1406 = vmatpush1.bf16.msra.mxu0 0
      %1407 = vmatprep.subr.bf16.mxu0 0
      %1408 = vmatpush1.bf16.msra.mxu0 0
      %1409 = vmatprep.subr.bf16.mxu0 0
      %1410 = vmatpush1.bf16.msra.mxu0 0
      %1411 = vmatprep.mubr.bf16.mxu0 0
      %1412 = vmatmul.mubr.bf16.gmra.mrb[0].mxu0 %v923
      %v1413 = vpop.f32.mrb[0].mxu0
      %v1414 = vadd.f32 0.0, %v1413
      %v1415 = vpop.f32.mrb[0].mxu0
      %v1416 = vadd.f32 0.0, %v1415
      %v1417 = vpop.f32.mrb[0].mxu0
      %v1418 = vpop.f32.mrb[0].mxu0
      %1419 = vdwg.mxu0
      %1420 = vmatprep.subr.bf16.mxu0 %v732
      %1421 = vmatpush1.bf16.msra.mxu0 %v731
      %1422 = vmatprep.subr.bf16.mxu0 %v975
      %1423 = vmatpush1.bf16.msra.mxu0 %v972
      %1424 = vmatprep.subr.bf16.mxu0 0
      %1425 = vmatpush1.bf16.msra.mxu0 0
      %1426 = vmatprep.subr.bf16.mxu0 0
      %1427 = vmatpush1.bf16.msra.mxu0 0
      %1428 = vmatprep.subr.bf16.mxu0 0
      %1429 = vmatpush1.bf16.msra.mxu0 0
      %1430 = vmatprep.subr.bf16.mxu0 0
      %1431 = vmatpush1.bf16.msra.mxu0 0
      %1432 = vmatprep.subr.bf16.mxu0 0
      %1433 = vmatpush1.bf16.msra.mxu0 0
      %1434 = vmatprep.subr.bf16.mxu0 0
      %1435 = vmatpush1.bf16.msra.mxu0 0
      %1436 = vmatprep.subr.bf16.mxu0 0
      %1437 = vmatpush1.bf16.msra.mxu0 0
      %1438 = vmatprep.subr.bf16.mxu0 0
      %1439 = vmatpush1.bf16.msra.mxu0 0
      %1440 = vmatprep.subr.bf16.mxu0 0
      %1441 = vmatpush1.bf16.msra.mxu0 0
      %1442 = vmatprep.subr.bf16.mxu0 0
      %1443 = vmatpush1.bf16.msra.mxu0 0
      %1444 = vmatprep.subr.bf16.mxu0 0
      %1445 = vmatpush1.bf16.msra.mxu0 0
      %1446 = vmatprep.subr.bf16.mxu0 0
      %1447 = vmatpush1.bf16.msra.mxu0 0
      %1448 = vmatprep.subr.bf16.mxu0 0
      %1449 = vmatpush1.bf16.msra.mxu0 0
      %1450 = vmatprep.subr.bf16.mxu0 0
      %1451 = vmatpush1.bf16.msra.mxu0 0
      %1452 = vmatprep.mubr.bf16.mxu0 0
      %1453 = vmatmul.mubr.bf16.gmra.mrb[0].mxu0 %v923
      %v1454 = vpop.f32.mrb[0].mxu0
      %v1455 = vadd.f32 0.0, %v1454
      %v1456 = vpop.f32.mrb[0].mxu0
      %v1457 = vadd.f32 0.0, %v1456
      %v1458 = vpop.f32.mrb[0].mxu0
      %v1459 = vpop.f32.mrb[0].mxu0
      %1460 = vdwg.mxu0
      %1461 = vmatprep.subr.bf16.mxu0 %v734
      %1462 = vmatpush1.bf16.msra.mxu0 %v733
      %1463 = vmatprep.subr.bf16.mxu0 %v981
      %1464 = vmatpush1.bf16.msra.mxu0 %v978
      %1465 = vmatprep.subr.bf16.mxu0 0
      %1466 = vmatpush1.bf16.msra.mxu0 0
      %1467 = vmatprep.subr.bf16.mxu0 0
      %1468 = vmatpush1.bf16.msra.mxu0 0
      %1469 = vmatprep.subr.bf16.mxu0 0
      %1470 = vmatpush1.bf16.msra.mxu0 0
      %1471 = vmatprep.subr.bf16.mxu0 0
      %1472 = vmatpush1.bf16.msra.mxu0 0
      %1473 = vmatprep.subr.bf16.mxu0 0
      %1474 = vmatpush1.bf16.msra.mxu0 0
      %1475 = vmatprep.subr.bf16.mxu0 0
      %1476 = vmatpush1.bf16.msra.mxu0 0
      %1477 = vmatprep.subr.bf16.mxu0 0
      %1478 = vmatpush1.bf16.msra.mxu0 0
      %1479 = vmatprep.subr.bf16.mxu0 0
      %1480 = vmatpush1.bf16.msra.mxu0 0
      %1481 = vmatprep.subr.bf16.mxu0 0
      %1482 = vmatpush1.bf16.msra.mxu0 0
      %1483 = vmatprep.subr.bf16.mxu0 0
      %1484 = vmatpush1.bf16.msra.mxu0 0
      %1485 = vmatprep.subr.bf16.mxu0 0
      %1486 = vmatpush1.bf16.msra.mxu0 0
      %1487 = vmatprep.subr.bf16.mxu0 0
      %1488 = vmatpush1.bf16.msra.mxu0 0
      %1489 = vmatprep.subr.bf16.mxu0 0
      %1490 = vmatpush1.bf16.msra.mxu0 0
      %1491 = vmatprep.subr.bf16.mxu0 0
      %1492 = vmatpush1.bf16.msra.mxu0 0
      %1493 = vmatprep.mubr.bf16.mxu0 0
      %1494 = vmatmul.mubr.bf16.gmra.mrb[0].mxu0 %v923
      %v1495 = vpop.f32.mrb[0].mxu0
      %v1496 = vadd.f32 0.0, %v1495
      %v1497 = vpop.f32.mrb[0].mxu0
      %v1498 = vadd.f32 0.0, %v1497
      %v1499 = vpop.f32.mrb[0].mxu0
      %v1500 = vpop.f32.mrb[0].mxu0
      %1501 = vdwg.mxu0
      %1502 = vmatprep.subr.bf16.mxu0 %v736
      %1503 = vmatpush1.bf16.msra.mxu0 %v735
      %1504 = vmatprep.subr.bf16.mxu0 %v987
      %1505 = vmatpush1.bf16.msra.mxu0 %v984
      %1506 = vmatprep.subr.bf16.mxu0 0
      %1507 = vmatpush1.bf16.msra.mxu0 0
      %1508 = vmatprep.subr.bf16.mxu0 0
      %1509 = vmatpush1.bf16.msra.mxu0 0
      %1510 = vmatprep.subr.bf16.mxu0 0
      %1511 = vmatpush1.bf16.msra.mxu0 0
      %1512 = vmatprep.subr.bf16.mxu0 0
      %1513 = vmatpush1.bf16.msra.mxu0 0
      %1514 = vmatprep.subr.bf16.mxu0 0
      %1515 = vmatpush1.bf16.msra.mxu0 0
      %1516 = vmatprep.subr.bf16.mxu0 0
      %1517 = vmatpush1.bf16.msra.mxu0 0
      %1518 = vmatprep.subr.bf16.mxu0 0
      %1519 = vmatpush1.bf16.msra.mxu0 0
      %1520 = vmatprep.subr.bf16.mxu0 0
      %1521 = vmatpush1.bf16.msra.mxu0 0
      %1522 = vmatprep.subr.bf16.mxu0 0
      %1523 = vmatpush1.bf16.msra.mxu0 0
      %1524 = vmatprep.subr.bf16.mxu0 0
      %1525 = vmatpush1.bf16.msra.mxu0 0
      %1526 = vmatprep.subr.bf16.mxu0 0
      %1527 = vmatpush1.bf16.msra.mxu0 0
      %1528 = vmatprep.subr.bf16.mxu0 0
      %1529 = vmatpush1.bf16.msra.mxu0 0
      %1530 = vmatprep.subr.bf16.mxu0 0
      %1531 = vmatpush1.bf16.msra.mxu0 0
      %1532 = vmatprep.subr.bf16.mxu0 0
      %1533 = vmatpush1.bf16.msra.mxu0 0
      %1534 = vmatprep.mubr.bf16.mxu0 0
      %1535 = vmatmul.mubr.bf16.gmra.mrb[0].mxu0 %v923
      %v1536 = vpop.f32.mrb[0].mxu0
      %v1537 = vadd.f32 0.0, %v1536
      %v1538 = vpop.f32.mrb[0].mxu0
      %v1539 = vadd.f32 0.0, %v1538
      %v1540 = vpop.f32.mrb[0].mxu0
      %v1541 = vpop.f32.mrb[0].mxu0
      %1542 = vdwg.mxu0
      %1543 = vmatprep.subr.bf16.mxu0 %v738
      %1544 = vmatpush1.bf16.msra.mxu0 %v737
      %1545 = vmatprep.subr.bf16.mxu0 %v993
      %1546 = vmatpush1.bf16.msra.mxu0 %v990
      %1547 = vmatprep.subr.bf16.mxu0 0
      %1548 = vmatpush1.bf16.msra.mxu0 0
      %1549 = vmatprep.subr.bf16.mxu0 0
      %1550 = vmatpush1.bf16.msra.mxu0 0
      %1551 = vmatprep.subr.bf16.mxu0 0
      %1552 = vmatpush1.bf16.msra.mxu0 0
      %1553 = vmatprep.subr.bf16.mxu0 0
      %1554 = vmatpush1.bf16.msra.mxu0 0
      %1555 = vmatprep.subr.bf16.mxu0 0
      %1556 = vmatpush1.bf16.msra.mxu0 0
      %1557 = vmatprep.subr.bf16.mxu0 0
      %1558 = vmatpush1.bf16.msra.mxu0 0
      %1559 = vmatprep.subr.bf16.mxu0 0
      %1560 = vmatpush1.bf16.msra.mxu0 0
      %1561 = vmatprep.subr.bf16.mxu0 0
      %1562 = vmatpush1.bf16.msra.mxu0 0
      %1563 = vmatprep.subr.bf16.mxu0 0
      %1564 = vmatpush1.bf16.msra.mxu0 0
      %1565 = vmatprep.subr.bf16.mxu0 0
      %1566 = vmatpush1.bf16.msra.mxu0 0
      %1567 = vmatprep.subr.bf16.mxu0 0
      %1568 = vmatpush1.bf16.msra.mxu0 0
      %1569 = vmatprep.subr.bf16.mxu0 0
      %1570 = vmatpush1.bf16.msra.mxu0 0
      %1571 = vmatprep.subr.bf16.mxu0 0
      %1572 = vmatpush1.bf16.msra.mxu0 0
      %1573 = vmatprep.subr.bf16.mxu0 0
      %1574 = vmatpush1.bf16.msra.mxu0 0
      %1575 = vmatprep.mubr.bf16.mxu0 0
      %1576 = vmatmul.mubr.bf16.gmra.mrb[0].mxu0 %v923
      %v1577 = vpop.f32.mrb[0].mxu0
      %v1578 = vadd.f32 0.0, %v1577
      %v1579 = vpop.f32.mrb[0].mxu0
      %v1580 = vadd.f32 0.0, %v1579
      %v1581 = vpop.f32.mrb[0].mxu0
      %v1582 = vpop.f32.mrb[0].mxu0
      %1583 = vdwg.mxu0
      %1584 = vmatprep.subr.bf16.mxu0 %v740
      %1585 = vmatpush1.bf16.msra.mxu0 %v739
      %1586 = vmatprep.subr.bf16.mxu0 %v999
      %1587 = vmatpush1.bf16.msra.mxu0 %v996
      %1588 = vmatprep.subr.bf16.mxu0 0
      %1589 = vmatpush1.bf16.msra.mxu0 0
      %1590 = vmatprep.subr.bf16.mxu0 0
      %1591 = vmatpush1.bf16.msra.mxu0 0
      %1592 = vmatprep.subr.bf16.mxu0 0
      %1593 = vmatpush1.bf16.msra.mxu0 0
      %1594 = vmatprep.subr.bf16.mxu0 0
      %1595 = vmatpush1.bf16.msra.mxu0 0
      %1596 = vmatprep.subr.bf16.mxu0 0
      %1597 = vmatpush1.bf16.msra.mxu0 0
      %1598 = vmatprep.subr.bf16.mxu0 0
      %1599 = vmatpush1.bf16.msra.mxu0 0
      %1600 = vmatprep.subr.bf16.mxu0 0
      %1601 = vmatpush1.bf16.msra.mxu0 0
      %1602 = vmatprep.subr.bf16.mxu0 0
      %1603 = vmatpush1.bf16.msra.mxu0 0
      %1604 = vmatprep.subr.bf16.mxu0 0
      %1605 = vmatpush1.bf16.msra.mxu0 0
      %1606 = vmatprep.subr.bf16.mxu0 0
      %1607 = vmatpush1.bf16.msra.mxu0 0
      %1608 = vmatprep.subr.bf16.mxu0 0
      %1609 = vmatpush1.bf16.msra.mxu0 0
      %1610 = vmatprep.subr.bf16.mxu0 0
      %1611 = vmatpush1.bf16.msra.mxu0 0
      %1612 = vmatprep.subr.bf16.mxu0 0
      %1613 = vmatpush1.bf16.msra.mxu0 0
      %1614 = vmatprep.subr.bf16.mxu0 0
      %1615 = vmatpush1.bf16.msra.mxu0 0
      %1616 = vmatprep.mubr.bf16.mxu0 0
      %1617 = vmatmul.mubr.bf16.gmra.mrb[0].mxu0 %v923
      %v1618 = vpop.f32.mrb[0].mxu0
      %v1619 = vadd.f32 0.0, %v1618
      %v1620 = vpop.f32.mrb[0].mxu0
      %v1621 = vadd.f32 0.0, %v1620
      %v1622 = vpop.f32.mrb[0].mxu0
      %v1623 = vpop.f32.mrb[0].mxu0
      %1624 = vdwg.mxu0
      %1625 = vmatprep.subr.bf16.mxu0 %v742
      %1626 = vmatpush1.bf16.msra.mxu0 %v741
      %1627 = vmatprep.subr.bf16.mxu0 %v1005
      %1628 = vmatpush1.bf16.msra.mxu0 %v1002
      %1629 = vmatprep.subr.bf16.mxu0 0
      %1630 = vmatpush1.bf16.msra.mxu0 0
      %1631 = vmatprep.subr.bf16.mxu0 0
      %1632 = vmatpush1.bf16.msra.mxu0 0
      %1633 = vmatprep.subr.bf16.mxu0 0
      %1634 = vmatpush1.bf16.msra.mxu0 0
      %1635 = vmatprep.subr.bf16.mxu0 0
      %1636 = vmatpush1.bf16.msra.mxu0 0
      %1637 = vmatprep.subr.bf16.mxu0 0
      %1638 = vmatpush1.bf16.msra.mxu0 0
      %1639 = vmatprep.subr.bf16.mxu0 0
      %1640 = vmatpush1.bf16.msra.mxu0 0
      %1641 = vmatprep.subr.bf16.mxu0 0
      %1642 = vmatpush1.bf16.msra.mxu0 0
      %1643 = vmatprep.subr.bf16.mxu0 0
      %1644 = vmatpush1.bf16.msra.mxu0 0
      %1645 = vmatprep.subr.bf16.mxu0 0
      %1646 = vmatpush1.bf16.msra.mxu0 0
      %1647 = vmatprep.subr.bf16.mxu0 0
      %1648 = vmatpush1.bf16.msra.mxu0 0
      %1649 = vmatprep.subr.bf16.mxu0 0
      %1650 = vmatpush1.bf16.msra.mxu0 0
      %1651 = vmatprep.subr.bf16.mxu0 0
      %1652 = vmatpush1.bf16.msra.mxu0 0
      %1653 = vmatprep.subr.bf16.mxu0 0
      %1654 = vmatpush1.bf16.msra.mxu0 0
      %1655 = vmatprep.subr.bf16.mxu0 0
      %1656 = vmatpush1.bf16.msra.mxu0 0
      %1657 = vmatprep.mubr.bf16.mxu0 0
      %1658 = vmatmul.mubr.bf16.gmra.mrb[0].mxu0 %v923
      %v1659 = vpop.f32.mrb[0].mxu0
      %v1660 = vadd.f32 0.0, %v1659
      %v1661 = vpop.f32.mrb[0].mxu0
      %v1662 = vadd.f32 0.0, %v1661
      %v1663 = vpop.f32.mrb[0].mxu0
      %v1664 = vpop.f32.mrb[0].mxu0
      %1665 = vdwg.mxu0
      %1666 = vmatprep.subr.bf16.mxu0 %v744
      %1667 = vmatpush1.bf16.msra.mxu0 %v743
      %1668 = vmatprep.subr.bf16.mxu0 %v1011
      %1669 = vmatpush1.bf16.msra.mxu0 %v1008
      %1670 = vmatprep.subr.bf16.mxu0 0
      %1671 = vmatpush1.bf16.msra.mxu0 0
      %1672 = vmatprep.subr.bf16.mxu0 0
      %1673 = vmatpush1.bf16.msra.mxu0 0
      %1674 = vmatprep.subr.bf16.mxu0 0
      %1675 = vmatpush1.bf16.msra.mxu0 0
      %1676 = vmatprep.subr.bf16.mxu0 0
      %1677 = vmatpush1.bf16.msra.mxu0 0
      %1678 = vmatprep.subr.bf16.mxu0 0
      %1679 = vmatpush1.bf16.msra.mxu0 0
      %1680 = vmatprep.subr.bf16.mxu0 0
      %1681 = vmatpush1.bf16.msra.mxu0 0
      %1682 = vmatprep.subr.bf16.mxu0 0
      %1683 = vmatpush1.bf16.msra.mxu0 0
      %1684 = vmatprep.subr.bf16.mxu0 0
      %1685 = vmatpush1.bf16.msra.mxu0 0
      %1686 = vmatprep.subr.bf16.mxu0 0
      %1687 = vmatpush1.bf16.msra.mxu0 0
      %1688 = vmatprep.subr.bf16.mxu0 0
      %1689 = vmatpush1.bf16.msra.mxu0 0
      %1690 = vmatprep.subr.bf16.mxu0 0
      %1691 = vmatpush1.bf16.msra.mxu0 0
      %1692 = vmatprep.subr.bf16.mxu0 0
      %1693 = vmatpush1.bf16.msra.mxu0 0
      %1694 = vmatprep.subr.bf16.mxu0 0
      %1695 = vmatpush1.bf16.msra.mxu0 0
      %1696 = vmatprep.subr.bf16.mxu0 0
      %1697 = vmatpush1.bf16.msra.mxu0 0
      %1698 = vmatprep.mubr.bf16.mxu0 0
      %1699 = vmatmul.mubr.bf16.gmra.mrb[0].mxu0 %v923
      %v1700 = vpop.f32.mrb[0].mxu0
      %v1701 = vadd.f32 0.0, %v1700
      %v1702 = vpop.f32.mrb[0].mxu0
      %v1703 = vadd.f32 0.0, %v1702
      %v1704 = vpop.f32.mrb[0].mxu0
      %v1705 = vpop.f32.mrb[0].mxu0
      %1706 = vdwg.mxu0
      %1707 = vmatprep.subr.bf16.mxu0 %v746
      %1708 = vmatpush1.bf16.msra.mxu0 %v745
      %1709 = vmatprep.subr.bf16.mxu0 %v1017
      %1710 = vmatpush1.bf16.msra.mxu0 %v1014
      %1711 = vmatprep.subr.bf16.mxu0 0
      %1712 = vmatpush1.bf16.msra.mxu0 0
      %1713 = vmatprep.subr.bf16.mxu0 0
      %1714 = vmatpush1.bf16.msra.mxu0 0
      %1715 = vmatprep.subr.bf16.mxu0 0
      %1716 = vmatpush1.bf16.msra.mxu0 0
      %1717 = vmatprep.subr.bf16.mxu0 0
      %1718 = vmatpush1.bf16.msra.mxu0 0
      %1719 = vmatprep.subr.bf16.mxu0 0
      %1720 = vmatpush1.bf16.msra.mxu0 0
      %1721 = vmatprep.subr.bf16.mxu0 0
      %1722 = vmatpush1.bf16.msra.mxu0 0
      %1723 = vmatprep.subr.bf16.mxu0 0
      %1724 = vmatpush1.bf16.msra.mxu0 0
      %1725 = vmatprep.subr.bf16.mxu0 0
      %1726 = vmatpush1.bf16.msra.mxu0 0
      %1727 = vmatprep.subr.bf16.mxu0 0
      %1728 = vmatpush1.bf16.msra.mxu0 0
      %1729 = vmatprep.subr.bf16.mxu0 0
      %1730 = vmatpush1.bf16.msra.mxu0 0
      %1731 = vmatprep.subr.bf16.mxu0 0
      %1732 = vmatpush1.bf16.msra.mxu0 0
      %1733 = vmatprep.subr.bf16.mxu0 0
      %1734 = vmatpush1.bf16.msra.mxu0 0
      %1735 = vmatprep.subr.bf16.mxu0 0
      %1736 = vmatpush1.bf16.msra.mxu0 0
      %1737 = vmatprep.subr.bf16.mxu0 0
      %1738 = vmatpush1.bf16.msra.mxu0 0
      %1739 = vmatprep.mubr.bf16.mxu0 0
      %1740 = vmatmul.mubr.bf16.gmra.mrb[0].mxu0 %v923
      %v1741 = vpop.f32.mrb[0].mxu0
      %v1742 = vadd.f32 0.0, %v1741
      %v1743 = vpop.f32.mrb[0].mxu0
      %v1744 = vadd.f32 0.0, %v1743
      %v1745 = vpop.f32.mrb[0].mxu0
      %v1746 = vpop.f32.mrb[0].mxu0
      %1747 = vdwg.mxu0
      %1748 = vmatprep.subr.bf16.mxu0 %v748
      %1749 = vmatpush1.bf16.msra.mxu0 %v747
      %1750 = vmatprep.subr.bf16.mxu0 %v1023
      %1751 = vmatpush1.bf16.msra.mxu0 %v1020
      %1752 = vmatprep.subr.bf16.mxu0 0
      %1753 = vmatpush1.bf16.msra.mxu0 0
      %1754 = vmatprep.subr.bf16.mxu0 0
      %1755 = vmatpush1.bf16.msra.mxu0 0
      %1756 = vmatprep.subr.bf16.mxu0 0
      %1757 = vmatpush1.bf16.msra.mxu0 0
      %1758 = vmatprep.subr.bf16.mxu0 0
      %1759 = vmatpush1.bf16.msra.mxu0 0
      %1760 = vmatprep.subr.bf16.mxu0 0
      %1761 = vmatpush1.bf16.msra.mxu0 0
      %1762 = vmatprep.subr.bf16.mxu0 0
      %1763 = vmatpush1.bf16.msra.mxu0 0
      %1764 = vmatprep.subr.bf16.mxu0 0
      %1765 = vmatpush1.bf16.msra.mxu0 0
      %1766 = vmatprep.subr.bf16.mxu0 0
      %1767 = vmatpush1.bf16.msra.mxu0 0
      %1768 = vmatprep.subr.bf16.mxu0 0
      %1769 = vmatpush1.bf16.msra.mxu0 0
      %1770 = vmatprep.subr.bf16.mxu0 0
      %1771 = vmatpush1.bf16.msra.mxu0 0
      %1772 = vmatprep.subr.bf16.mxu0 0
      %1773 = vmatpush1.bf16.msra.mxu0 0
      %1774 = vmatprep.subr.bf16.mxu0 0
      %1775 = vmatpush1.bf16.msra.mxu0 0
      %1776 = vmatprep.subr.bf16.mxu0 0
      %1777 = vmatpush1.bf16.msra.mxu0 0
      %1778 = vmatprep.subr.bf16.mxu0 0
      %1779 = vmatpush1.bf16.msra.mxu0 0
      %1780 = vmatprep.mubr.bf16.mxu0 0
      %1781 = vmatmul.mubr.bf16.gmra.mrb[0].mxu0 %v923
      %v1782 = vpop.f32.mrb[0].mxu0
      %v1783 = vadd.f32 0.0, %v1782
      %v1784 = vpop.f32.mrb[0].mxu0
      %v1785 = vadd.f32 0.0, %v1784
      %v1786 = vpop.f32.mrb[0].mxu0
      %v1787 = vpop.f32.mrb[0].mxu0
      %1788 = vdwg.mxu0
      %1789 = vmatprep.subr.bf16.mxu0 %v750
      %1790 = vmatpush1.bf16.msra.mxu0 %v749
      %1791 = vmatprep.subr.bf16.mxu0 %v1029
      %1792 = vmatpush1.bf16.msra.mxu0 %v1026
      %1793 = vmatprep.subr.bf16.mxu0 0
      %1794 = vmatpush1.bf16.msra.mxu0 0
      %1795 = vmatprep.subr.bf16.mxu0 0
      %1796 = vmatpush1.bf16.msra.mxu0 0
      %1797 = vmatprep.subr.bf16.mxu0 0
      %1798 = vmatpush1.bf16.msra.mxu0 0
      %1799 = vmatprep.subr.bf16.mxu0 0
      %1800 = vmatpush1.bf16.msra.mxu0 0
      %1801 = vmatprep.subr.bf16.mxu0 0
      %1802 = vmatpush1.bf16.msra.mxu0 0
      %1803 = vmatprep.subr.bf16.mxu0 0
      %1804 = vmatpush1.bf16.msra.mxu0 0
      %1805 = vmatprep.subr.bf16.mxu0 0
      %1806 = vmatpush1.bf16.msra.mxu0 0
      %1807 = vmatprep.subr.bf16.mxu0 0
      %1808 = vmatpush1.bf16.msra.mxu0 0
      %1809 = vmatprep.subr.bf16.mxu0 0
      %1810 = vmatpush1.bf16.msra.mxu0 0
      %1811 = vmatprep.subr.bf16.mxu0 0
      %1812 = vmatpush1.bf16.msra.mxu0 0
      %1813 = vmatprep.subr.bf16.mxu0 0
      %1814 = vmatpush1.bf16.msra.mxu0 0
      %1815 = vmatprep.subr.bf16.mxu0 0
      %1816 = vmatpush1.bf16.msra.mxu0 0
      %1817 = vmatprep.subr.bf16.mxu0 0
      %1818 = vmatpush1.bf16.msra.mxu0 0
      %1819 = vmatprep.subr.bf16.mxu0 0
      %1820 = vmatpush1.bf16.msra.mxu0 0
      %1821 = vmatprep.mubr.bf16.mxu0 0
      %1822 = vmatmul.mubr.bf16.gmra.mrb[0].mxu0 %v923
      %v1823 = vpop.f32.mrb[0].mxu0
      %v1824 = vadd.f32 0.0, %v1823
      %v1825 = vpop.f32.mrb[0].mxu0
      %v1826 = vadd.f32 0.0, %v1825
      %v1827 = vpop.f32.mrb[0].mxu0
      %v1828 = vpop.f32.mrb[0].mxu0
      %1829 = vdwg.mxu0
      %1830 = vmatprep.subr.bf16.mxu0 %v752
      %1831 = vmatpush1.bf16.msra.mxu0 %v751
      %1832 = vmatprep.subr.bf16.mxu0 %v1035
      %1833 = vmatpush1.bf16.msra.mxu0 %v1032
      %1834 = vmatprep.subr.bf16.mxu0 0
      %1835 = vmatpush1.bf16.msra.mxu0 0
      %1836 = vmatprep.subr.bf16.mxu0 0
      %1837 = vmatpush1.bf16.msra.mxu0 0
      %1838 = vmatprep.subr.bf16.mxu0 0
      %1839 = vmatpush1.bf16.msra.mxu0 0
      %1840 = vmatprep.subr.bf16.mxu0 0
      %1841 = vmatpush1.bf16.msra.mxu0 0
      %1842 = vmatprep.subr.bf16.mxu0 0
      %1843 = vmatpush1.bf16.msra.mxu0 0
      %1844 = vmatprep.subr.bf16.mxu0 0
      %1845 = vmatpush1.bf16.msra.mxu0 0
      %1846 = vmatprep.subr.bf16.mxu0 0
      %1847 = vmatpush1.bf16.msra.mxu0 0
      %1848 = vmatprep.subr.bf16.mxu0 0
      %1849 = vmatpush1.bf16.msra.mxu0 0
      %1850 = vmatprep.subr.bf16.mxu0 0
      %1851 = vmatpush1.bf16.msra.mxu0 0
      %1852 = vmatprep.subr.bf16.mxu0 0
      %1853 = vmatpush1.bf16.msra.mxu0 0
      %1854 = vmatprep.subr.bf16.mxu0 0
      %1855 = vmatpush1.bf16.msra.mxu0 0
      %1856 = vmatprep.subr.bf16.mxu0 0
      %1857 = vmatpush1.bf16.msra.mxu0 0
      %1858 = vmatprep.subr.bf16.mxu0 0
      %1859 = vmatpush1.bf16.msra.mxu0 0
      %1860 = vmatprep.subr.bf16.mxu0 0
      %1861 = vmatpush1.bf16.msra.mxu0 0
      %1862 = vmatprep.mubr.bf16.mxu0 0
      %1863 = vmatmul.mubr.bf16.gmra.mrb[0].mxu0 %v923
      %v1864 = vpop.f32.mrb[0].mxu0
      %v1865 = vadd.f32 0.0, %v1864
      %v1866 = vpop.f32.mrb[0].mxu0
      %v1867 = vadd.f32 0.0, %v1866
      %v1868 = vpop.f32.mrb[0].mxu0
      %v1869 = vpop.f32.mrb[0].mxu0
      %1870 = vdwg.mxu0
      %1871 = vmatprep.subr.bf16.mxu0 %v754
      %1872 = vmatpush1.bf16.msra.mxu0 %v753
      %1873 = vmatprep.subr.bf16.mxu0 %v1041
      %1874 = vmatpush1.bf16.msra.mxu0 %v1038
      %1875 = vmatprep.subr.bf16.mxu0 0
      %1876 = vmatpush1.bf16.msra.mxu0 0
      %1877 = vmatprep.subr.bf16.mxu0 0
      %1878 = vmatpush1.bf16.msra.mxu0 0
      %1879 = vmatprep.subr.bf16.mxu0 0
      %1880 = vmatpush1.bf16.msra.mxu0 0
      %1881 = vmatprep.subr.bf16.mxu0 0
      %1882 = vmatpush1.bf16.msra.mxu0 0
      %1883 = vmatprep.subr.bf16.mxu0 0
      %1884 = vmatpush1.bf16.msra.mxu0 0
      %1885 = vmatprep.subr.bf16.mxu0 0
      %1886 = vmatpush1.bf16.msra.mxu0 0
      %1887 = vmatprep.subr.bf16.mxu0 0
      %1888 = vmatpush1.bf16.msra.mxu0 0
      %1889 = vmatprep.subr.bf16.mxu0 0
      %1890 = vmatpush1.bf16.msra.mxu0 0
      %1891 = vmatprep.subr.bf16.mxu0 0
      %1892 = vmatpush1.bf16.msra.mxu0 0
      %1893 = vmatprep.subr.bf16.mxu0 0
      %1894 = vmatpush1.bf16.msra.mxu0 0
      %1895 = vmatprep.subr.bf16.mxu0 0
      %1896 = vmatpush1.bf16.msra.mxu0 0
      %1897 = vmatprep.subr.bf16.mxu0 0
      %1898 = vmatpush1.bf16.msra.mxu0 0
      %1899 = vmatprep.subr.bf16.mxu0 0
      %1900 = vmatpush1.bf16.msra.mxu0 0
      %1901 = vmatprep.subr.bf16.mxu0 0
      %1902 = vmatpush1.bf16.msra.mxu0 0
      %1903 = vmatprep.mubr.bf16.mxu0 0
      %1904 = vmatmul.mubr.bf16.gmra.mrb[0].mxu0 %v923
      %v1905 = vpop.f32.mrb[0].mxu0
      %v1906 = vadd.f32 0.0, %v1905
      %v1907 = vpop.f32.mrb[0].mxu0
      %v1908 = vadd.f32 0.0, %v1907
      %v1909 = vpop.f32.mrb[0].mxu0
      %v1910 = vpop.f32.mrb[0].mxu0
      %1911 = vdwg.mxu0
      %1912 = vmatprep.subr.bf16.mxu0 %v756
      %1913 = vmatpush1.bf16.msra.mxu0 %v755
      %1914 = vmatprep.subr.bf16.mxu0 %v1047
      %1915 = vmatpush1.bf16.msra.mxu0 %v1044
      %1916 = vmatprep.subr.bf16.mxu0 0
      %1917 = vmatpush1.bf16.msra.mxu0 0
      %1918 = vmatprep.subr.bf16.mxu0 0
      %1919 = vmatpush1.bf16.msra.mxu0 0
      %1920 = vmatprep.subr.bf16.mxu0 0
      %1921 = vmatpush1.bf16.msra.mxu0 0
      %1922 = vmatprep.subr.bf16.mxu0 0
      %1923 = vmatpush1.bf16.msra.mxu0 0
      %1924 = vmatprep.subr.bf16.mxu0 0
      %1925 = vmatpush1.bf16.msra.mxu0 0
      %1926 = vmatprep.subr.bf16.mxu0 0
      %1927 = vmatpush1.bf16.msra.mxu0 0
      %1928 = vmatprep.subr.bf16.mxu0 0
      %1929 = vmatpush1.bf16.msra.mxu0 0
      %1930 = vmatprep.subr.bf16.mxu0 0
      %1931 = vmatpush1.bf16.msra.mxu0 0
      %1932 = vmatprep.subr.bf16.mxu0 0
      %1933 = vmatpush1.bf16.msra.mxu0 0
      %1934 = vmatprep.subr.bf16.mxu0 0
      %1935 = vmatpush1.bf16.msra.mxu0 0
      %1936 = vmatprep.subr.bf16.mxu0 0
      %1937 = vmatpush1.bf16.msra.mxu0 0
      %1938 = vmatprep.subr.bf16.mxu0 0
      %1939 = vmatpush1.bf16.msra.mxu0 0
      %1940 = vmatprep.subr.bf16.mxu0 0
      %1941 = vmatpush1.bf16.msra.mxu0 0
      %1942 = vmatprep.subr.bf16.mxu0 0
      %1943 = vmatpush1.bf16.msra.mxu0 0
      %1944 = vmatprep.mubr.bf16.mxu0 0
      %1945 = vmatmul.mubr.bf16.gmra.mrb[0].mxu0 %v923
      %v1946 = vpop.f32.mrb[0].mxu0
      %v1947 = vadd.f32 0.0, %v1946
      %v1948 = vpop.f32.mrb[0].mxu0
      %v1949 = vadd.f32 0.0, %v1948
      %v1950 = vpop.f32.mrb[0].mxu0
      %v1951 = vpop.f32.mrb[0].mxu0
      %1952 = vdwg.mxu0
      %1953 = vmatprep.subr.bf16.mxu0 %v758
      %1954 = vmatpush1.bf16.msra.mxu0 %v757
      %1955 = vmatprep.subr.bf16.mxu0 %v1053
      %1956 = vmatpush1.bf16.msra.mxu0 %v1050
      %1957 = vmatprep.subr.bf16.mxu0 0
      %1958 = vmatpush1.bf16.msra.mxu0 0
      %1959 = vmatprep.subr.bf16.mxu0 0
      %1960 = vmatpush1.bf16.msra.mxu0 0
      %1961 = vmatprep.subr.bf16.mxu0 0
      %1962 = vmatpush1.bf16.msra.mxu0 0
      %1963 = vmatprep.subr.bf16.mxu0 0
      %1964 = vmatpush1.bf16.msra.mxu0 0
      %1965 = vmatprep.subr.bf16.mxu0 0
      %1966 = vmatpush1.bf16.msra.mxu0 0
      %1967 = vmatprep.subr.bf16.mxu0 0
      %1968 = vmatpush1.bf16.msra.mxu0 0
      %1969 = vmatprep.subr.bf16.mxu0 0
      %1970 = vmatpush1.bf16.msra.mxu0 0
      %1971 = vmatprep.subr.bf16.mxu0 0
      %1972 = vmatpush1.bf16.msra.mxu0 0
      %1973 = vmatprep.subr.bf16.mxu0 0
      %1974 = vmatpush1.bf16.msra.mxu0 0
      %1975 = vmatprep.subr.bf16.mxu0 0
      %1976 = vmatpush1.bf16.msra.mxu0 0
      %1977 = vmatprep.subr.bf16.mxu0 0
      %1978 = vmatpush1.bf16.msra.mxu0 0
      %1979 = vmatprep.subr.bf16.mxu0 0
      %1980 = vmatpush1.bf16.msra.mxu0 0
      %1981 = vmatprep.subr.bf16.mxu0 0
      %1982 = vmatpush1.bf16.msra.mxu0 0
      %1983 = vmatprep.subr.bf16.mxu0 0
      %1984 = vmatpush1.bf16.msra.mxu0 0
      %1985 = vmatprep.mubr.bf16.mxu0 0
      %1986 = vmatmul.mubr.bf16.gmra.mrb[0].mxu0 %v923
      %v1987 = vpop.f32.mrb[0].mxu0
      %v1988 = vadd.f32 0.0, %v1987
      %v1989 = vpop.f32.mrb[0].mxu0
      %v1990 = vadd.f32 0.0, %v1989
      %v1991 = vpop.f32.mrb[0].mxu0
      %v1992 = vpop.f32.mrb[0].mxu0
      %1993 = vdwg.mxu0
      %1994 = vmatprep.subr.bf16.mxu0 %v760
      %1995 = vmatpush1.bf16.msra.mxu0 %v759
      %1996 = vmatprep.subr.bf16.mxu0 %v1059
      %1997 = vmatpush1.bf16.msra.mxu0 %v1056
      %1998 = vmatprep.subr.bf16.mxu0 0
      %1999 = vmatpush1.bf16.msra.mxu0 0
      %2000 = vmatprep.subr.bf16.mxu0 0
      %2001 = vmatpush1.bf16.msra.mxu0 0
      %2002 = vmatprep.subr.bf16.mxu0 0
      %2003 = vmatpush1.bf16.msra.mxu0 0
      %2004 = vmatprep.subr.bf16.mxu0 0
      %2005 = vmatpush1.bf16.msra.mxu0 0
      %2006 = vmatprep.subr.bf16.mxu0 0
      %2007 = vmatpush1.bf16.msra.mxu0 0
      %2008 = vmatprep.subr.bf16.mxu0 0
      %2009 = vmatpush1.bf16.msra.mxu0 0
      %2010 = vmatprep.subr.bf16.mxu0 0
      %2011 = vmatpush1.bf16.msra.mxu0 0
      %2012 = vmatprep.subr.bf16.mxu0 0
      %2013 = vmatpush1.bf16.msra.mxu0 0
      %2014 = vmatprep.subr.bf16.mxu0 0
      %2015 = vmatpush1.bf16.msra.mxu0 0
      %2016 = vmatprep.subr.bf16.mxu0 0
      %2017 = vmatpush1.bf16.msra.mxu0 0
      %2018 = vmatprep.subr.bf16.mxu0 0
      %2019 = vmatpush1.bf16.msra.mxu0 0
      %2020 = vmatprep.subr.bf16.mxu0 0
      %2021 = vmatpush1.bf16.msra.mxu0 0
      %2022 = vmatprep.subr.bf16.mxu0 0
      %2023 = vmatpush1.bf16.msra.mxu0 0
      %2024 = vmatprep.subr.bf16.mxu0 0
      %2025 = vmatpush1.bf16.msra.mxu0 0
      %2026 = vmatprep.mubr.bf16.mxu0 0
      %2027 = vmatmul.mubr.bf16.gmra.mrb[0].mxu0 %v923
      %v2028 = vpop.f32.mrb[0].mxu0
      %v2029 = vadd.f32 0.0, %v2028
      %v2030 = vpop.f32.mrb[0].mxu0
      %v2031 = vadd.f32 0.0, %v2030
      %v2032 = vpop.f32.mrb[0].mxu0
      %v2033 = vpop.f32.mrb[0].mxu0
      %2034 = vdwg.mxu0
      %2035 = vmatprep.subr.bf16.mxu0 %v762
      %2036 = vmatpush1.bf16.msra.mxu0 %v761
      %2037 = vmatprep.subr.bf16.mxu0 %v1065
      %2038 = vmatpush1.bf16.msra.mxu0 %v1062
      %2039 = vmatprep.subr.bf16.mxu0 0
      %2040 = vmatpush1.bf16.msra.mxu0 0
      %2041 = vmatprep.subr.bf16.mxu0 0
      %2042 = vmatpush1.bf16.msra.mxu0 0
      %2043 = vmatprep.subr.bf16.mxu0 0
      %2044 = vmatpush1.bf16.msra.mxu0 0
      %2045 = vmatprep.subr.bf16.mxu0 0
      %2046 = vmatpush1.bf16.msra.mxu0 0
      %2047 = vmatprep.subr.bf16.mxu0 0
      %2048 = vmatpush1.bf16.msra.mxu0 0
      %2049 = vmatprep.subr.bf16.mxu0 0
      %2050 = vmatpush1.bf16.msra.mxu0 0
      %2051 = vmatprep.subr.bf16.mxu0 0
      %2052 = vmatpush1.bf16.msra.mxu0 0
      %2053 = vmatprep.subr.bf16.mxu0 0
      %2054 = vmatpush1.bf16.msra.mxu0 0
      %2055 = vmatprep.subr.bf16.mxu0 0
      %2056 = vmatpush1.bf16.msra.mxu0 0
      %2057 = vmatprep.subr.bf16.mxu0 0
      %2058 = vmatpush1.bf16.msra.mxu0 0
      %2059 = vmatprep.subr.bf16.mxu0 0
      %2060 = vmatpush1.bf16.msra.mxu0 0
      %2061 = vmatprep.subr.bf16.mxu0 0
      %2062 = vmatpush1.bf16.msra.mxu0 0
      %2063 = vmatprep.subr.bf16.mxu0 0
      %2064 = vmatpush1.bf16.msra.mxu0 0
      %2065 = vmatprep.subr.bf16.mxu0 0
      %2066 = vmatpush1.bf16.msra.mxu0 0
      %2067 = vmatprep.mubr.bf16.mxu0 0
      %2068 = vmatmul.mubr.bf16.gmra.mrb[0].mxu0 %v923
      %v2069 = vpop.f32.mrb[0].mxu0
      %v2070 = vadd.f32 0.0, %v2069
      %v2071 = vpop.f32.mrb[0].mxu0
      %v2072 = vadd.f32 0.0, %v2071
      %v2073 = vpop.f32.mrb[0].mxu0
      %v2074 = vpop.f32.mrb[0].mxu0
      %2075 = vdwg.mxu0
      %2076 = vmatprep.subr.bf16.mxu0 %v764
      %2077 = vmatpush1.bf16.msra.mxu0 %v763
      %2078 = vmatprep.subr.bf16.mxu0 %v1071
      %2079 = vmatpush1.bf16.msra.mxu0 %v1068
      %2080 = vmatprep.subr.bf16.mxu0 0
      %2081 = vmatpush1.bf16.msra.mxu0 0
      %2082 = vmatprep.subr.bf16.mxu0 0
      %2083 = vmatpush1.bf16.msra.mxu0 0
      %2084 = vmatprep.subr.bf16.mxu0 0
      %2085 = vmatpush1.bf16.msra.mxu0 0
      %2086 = vmatprep.subr.bf16.mxu0 0
      %2087 = vmatpush1.bf16.msra.mxu0 0
      %2088 = vmatprep.subr.bf16.mxu0 0
      %2089 = vmatpush1.bf16.msra.mxu0 0
      %2090 = vmatprep.subr.bf16.mxu0 0
      %2091 = vmatpush1.bf16.msra.mxu0 0
      %2092 = vmatprep.subr.bf16.mxu0 0
      %2093 = vmatpush1.bf16.msra.mxu0 0
      %2094 = vmatprep.subr.bf16.mxu0 0
      %2095 = vmatpush1.bf16.msra.mxu0 0
      %2096 = vmatprep.subr.bf16.mxu0 0
      %2097 = vmatpush1.bf16.msra.mxu0 0
      %2098 = vmatprep.subr.bf16.mxu0 0
      %2099 = vmatpush1.bf16.msra.mxu0 0
      %2100 = vmatprep.subr.bf16.mxu0 0
      %2101 = vmatpush1.bf16.msra.mxu0 0
      %2102 = vmatprep.subr.bf16.mxu0 0
      %2103 = vmatpush1.bf16.msra.mxu0 0
      %2104 = vmatprep.subr.bf16.mxu0 0
      %2105 = vmatpush1.bf16.msra.mxu0 0
      %2106 = vmatprep.subr.bf16.mxu0 0
      %2107 = vmatpush1.bf16.msra.mxu0 0
      %2108 = vmatprep.mubr.bf16.mxu0 0
      %2109 = vmatmul.mubr.bf16.gmra.mrb[0].mxu0 %v923
      %v2110 = vpop.f32.mrb[0].mxu0
      %v2111 = vadd.f32 0.0, %v2110
      %v2112 = vpop.f32.mrb[0].mxu0
      %v2113 = vadd.f32 0.0, %v2112
      %v2114 = vpop.f32.mrb[0].mxu0
      %v2115 = vpop.f32.mrb[0].mxu0
      %2116 = vdwg.mxu0
      %2117 = vmatprep.subr.bf16.mxu0 %v766
      %2118 = vmatpush1.bf16.msra.mxu0 %v765
      %2119 = vmatprep.subr.bf16.mxu0 %v1077
      %2120 = vmatpush1.bf16.msra.mxu0 %v1074
      %2121 = vmatprep.subr.bf16.mxu0 0
      %2122 = vmatpush1.bf16.msra.mxu0 0
      %2123 = vmatprep.subr.bf16.mxu0 0
      %2124 = vmatpush1.bf16.msra.mxu0 0
      %2125 = vmatprep.subr.bf16.mxu0 0
      %2126 = vmatpush1.bf16.msra.mxu0 0
      %2127 = vmatprep.subr.bf16.mxu0 0
      %2128 = vmatpush1.bf16.msra.mxu0 0
      %2129 = vmatprep.subr.bf16.mxu0 0
      %2130 = vmatpush1.bf16.msra.mxu0 0
      %2131 = vmatprep.subr.bf16.mxu0 0
      %2132 = vmatpush1.bf16.msra.mxu0 0
      %2133 = vmatprep.subr.bf16.mxu0 0
      %2134 = vmatpush1.bf16.msra.mxu0 0
      %2135 = vmatprep.subr.bf16.mxu0 0
      %2136 = vmatpush1.bf16.msra.mxu0 0
      %2137 = vmatprep.subr.bf16.mxu0 0
      %2138 = vmatpush1.bf16.msra.mxu0 0
      %2139 = vmatprep.subr.bf16.mxu0 0
      %2140 = vmatpush1.bf16.msra.mxu0 0
      %2141 = vmatprep.subr.bf16.mxu0 0
      %2142 = vmatpush1.bf16.msra.mxu0 0
      %2143 = vmatprep.subr.bf16.mxu0 0
      %2144 = vmatpush1.bf16.msra.mxu0 0
      %2145 = vmatprep.subr.bf16.mxu0 0
      %2146 = vmatpush1.bf16.msra.mxu0 0
      %2147 = vmatprep.subr.bf16.mxu0 0
      %2148 = vmatpush1.bf16.msra.mxu0 0
      %2149 = vmatprep.mubr.bf16.mxu0 0
      %2150 = vmatmul.mubr.bf16.gmra.mrb[0].mxu0 %v923
      %v2151 = vpop.f32.mrb[0].mxu0
      %v2152 = vadd.f32 0.0, %v2151
      %v2153 = vpop.f32.mrb[0].mxu0
      %v2154 = vadd.f32 0.0, %v2153
      %v2155 = vpop.f32.mrb[0].mxu0
      %v2156 = vpop.f32.mrb[0].mxu0
      %2157 = vdwg.mxu0
      %2158 = vmatprep.subr.bf16.mxu0 %v768
      %2159 = vmatpush1.bf16.msra.mxu0 %v767
      %2160 = vmatprep.subr.bf16.mxu0 %v1083
      %2161 = vmatpush1.bf16.msra.mxu0 %v1080
      %2162 = vmatprep.subr.bf16.mxu0 0
      %2163 = vmatpush1.bf16.msra.mxu0 0
      %2164 = vmatprep.subr.bf16.mxu0 0
      %2165 = vmatpush1.bf16.msra.mxu0 0
      %2166 = vmatprep.subr.bf16.mxu0 0
      %2167 = vmatpush1.bf16.msra.mxu0 0
      %2168 = vmatprep.subr.bf16.mxu0 0
      %2169 = vmatpush1.bf16.msra.mxu0 0
      %2170 = vmatprep.subr.bf16.mxu0 0
      %2171 = vmatpush1.bf16.msra.mxu0 0
      %2172 = vmatprep.subr.bf16.mxu0 0
      %2173 = vmatpush1.bf16.msra.mxu0 0
      %2174 = vmatprep.subr.bf16.mxu0 0
      %2175 = vmatpush1.bf16.msra.mxu0 0
      %2176 = vmatprep.subr.bf16.mxu0 0
      %2177 = vmatpush1.bf16.msra.mxu0 0
      %2178 = vmatprep.subr.bf16.mxu0 0
      %2179 = vmatpush1.bf16.msra.mxu0 0
      %2180 = vmatprep.subr.bf16.mxu0 0
      %2181 = vmatpush1.bf16.msra.mxu0 0
      %2182 = vmatprep.subr.bf16.mxu0 0
      %2183 = vmatpush1.bf16.msra.mxu0 0
      %2184 = vmatprep.subr.bf16.mxu0 0
      %2185 = vmatpush1.bf16.msra.mxu0 0
      %2186 = vmatprep.subr.bf16.mxu0 0
      %2187 = vmatpush1.bf16.msra.mxu0 0
      %2188 = vmatprep.subr.bf16.mxu0 0
      %2189 = vmatpush1.bf16.msra.mxu0 0
      %2190 = vmatprep.mubr.bf16.mxu0 0
      %2191 = vmatmul.mubr.bf16.gmra.mrb[0].mxu0 %v923
      %v2192 = vpop.f32.mrb[0].mxu0
      %v2193 = vadd.f32 0.0, %v2192
      %v2194 = vpop.f32.mrb[0].mxu0
      %v2195 = vadd.f32 0.0, %v2194
      %v2196 = vpop.f32.mrb[0].mxu0
      %v2197 = vpop.f32.mrb[0].mxu0
      %2198 = vdwg.mxu0
      %2199 = vmatprep.subr.bf16.mxu0 %v770
      %2200 = vmatpush1.bf16.msra.mxu0 %v769
      %2201 = vmatprep.subr.bf16.mxu0 %v1089
      %2202 = vmatpush1.bf16.msra.mxu0 %v1086
      %2203 = vmatprep.subr.bf16.mxu0 0
      %2204 = vmatpush1.bf16.msra.mxu0 0
      %2205 = vmatprep.subr.bf16.mxu0 0
      %2206 = vmatpush1.bf16.msra.mxu0 0
      %2207 = vmatprep.subr.bf16.mxu0 0
      %2208 = vmatpush1.bf16.msra.mxu0 0
      %2209 = vmatprep.subr.bf16.mxu0 0
      %2210 = vmatpush1.bf16.msra.mxu0 0
      %2211 = vmatprep.subr.bf16.mxu0 0
      %2212 = vmatpush1.bf16.msra.mxu0 0
      %2213 = vmatprep.subr.bf16.mxu0 0
      %2214 = vmatpush1.bf16.msra.mxu0 0
      %2215 = vmatprep.subr.bf16.mxu0 0
      %2216 = vmatpush1.bf16.msra.mxu0 0
      %2217 = vmatprep.subr.bf16.mxu0 0
      %2218 = vmatpush1.bf16.msra.mxu0 0
      %2219 = vmatprep.subr.bf16.mxu0 0
      %2220 = vmatpush1.bf16.msra.mxu0 0
      %2221 = vmatprep.subr.bf16.mxu0 0
      %2222 = vmatpush1.bf16.msra.mxu0 0
      %2223 = vmatprep.subr.bf16.mxu0 0
      %2224 = vmatpush1.bf16.msra.mxu0 0
      %2225 = vmatprep.subr.bf16.mxu0 0
      %2226 = vmatpush1.bf16.msra.mxu0 0
      %2227 = vmatprep.subr.bf16.mxu0 0
      %2228 = vmatpush1.bf16.msra.mxu0 0
      %2229 = vmatprep.subr.bf16.mxu0 0
      %2230 = vmatpush1.bf16.msra.mxu0 0
      %2231 = vmatprep.mubr.bf16.mxu0 0
      %2232 = vmatmul.mubr.bf16.gmra.mrb[0].mxu0 %v923
      %v2233 = vpop.f32.mrb[0].mxu0
      %v2234 = vadd.f32 0.0, %v2233
      %v2235 = vpop.f32.mrb[0].mxu0
      %v2236 = vadd.f32 0.0, %v2235
      %v2237 = vpop.f32.mrb[0].mxu0
      %v2238 = vpop.f32.mrb[0].mxu0
      %2239 = vdwg.mxu0
      %2240 = vmatprep.subr.bf16.mxu0 %v772
      %2241 = vmatpush1.bf16.msra.mxu0 %v771
      %2242 = vmatprep.subr.bf16.mxu0 %v1095
      %2243 = vmatpush1.bf16.msra.mxu0 %v1092
      %2244 = vmatprep.subr.bf16.mxu0 0
      %2245 = vmatpush1.bf16.msra.mxu0 0
      %2246 = vmatprep.subr.bf16.mxu0 0
      %2247 = vmatpush1.bf16.msra.mxu0 0
      %2248 = vmatprep.subr.bf16.mxu0 0
      %2249 = vmatpush1.bf16.msra.mxu0 0
      %2250 = vmatprep.subr.bf16.mxu0 0
      %2251 = vmatpush1.bf16.msra.mxu0 0
      %2252 = vmatprep.subr.bf16.mxu0 0
      %2253 = vmatpush1.bf16.msra.mxu0 0
      %2254 = vmatprep.subr.bf16.mxu0 0
      %2255 = vmatpush1.bf16.msra.mxu0 0
      %2256 = vmatprep.subr.bf16.mxu0 0
      %2257 = vmatpush1.bf16.msra.mxu0 0
      %2258 = vmatprep.subr.bf16.mxu0 0
      %2259 = vmatpush1.bf16.msra.mxu0 0
      %2260 = vmatprep.subr.bf16.mxu0 0
      %2261 = vmatpush1.bf16.msra.mxu0 0
      %2262 = vmatprep.subr.bf16.mxu0 0
      %2263 = vmatpush1.bf16.msra.mxu0 0
      %2264 = vmatprep.subr.bf16.mxu0 0
      %2265 = vmatpush1.bf16.msra.mxu0 0
      %2266 = vmatprep.subr.bf16.mxu0 0
      %2267 = vmatpush1.bf16.msra.mxu0 0
      %2268 = vmatprep.subr.bf16.mxu0 0
      %2269 = vmatpush1.bf16.msra.mxu0 0
      %2270 = vmatprep.subr.bf16.mxu0 0
      %2271 = vmatpush1.bf16.msra.mxu0 0
      %2272 = vmatprep.mubr.bf16.mxu0 0
      %2273 = vmatmul.mubr.bf16.gmra.mrb[0].mxu0 %v923
      %v2274 = vpop.f32.mrb[0].mxu0
      %v2275 = vadd.f32 0.0, %v2274
      %v2276 = vpop.f32.mrb[0].mxu0
      %v2277 = vadd.f32 0.0, %v2276
      %v2278 = vpop.f32.mrb[0].mxu0
      %v2279 = vpop.f32.mrb[0].mxu0
      %2280 = vdwg.mxu0
      %2281 = vmatprep.subr.bf16.mxu0 %v774
      %2282 = vmatpush1.bf16.msra.mxu0 %v773
      %2283 = vmatprep.subr.bf16.mxu0 %v1101
      %2284 = vmatpush1.bf16.msra.mxu0 %v1098
      %2285 = vmatprep.subr.bf16.mxu0 0
      %2286 = vmatpush1.bf16.msra.mxu0 0
      %2287 = vmatprep.subr.bf16.mxu0 0
      %2288 = vmatpush1.bf16.msra.mxu0 0
      %2289 = vmatprep.subr.bf16.mxu0 0
      %2290 = vmatpush1.bf16.msra.mxu0 0
      %2291 = vmatprep.subr.bf16.mxu0 0
      %2292 = vmatpush1.bf16.msra.mxu0 0
      %2293 = vmatprep.subr.bf16.mxu0 0
      %2294 = vmatpush1.bf16.msra.mxu0 0
      %2295 = vmatprep.subr.bf16.mxu0 0
      %2296 = vmatpush1.bf16.msra.mxu0 0
      %2297 = vmatprep.subr.bf16.mxu0 0
      %2298 = vmatpush1.bf16.msra.mxu0 0
      %2299 = vmatprep.subr.bf16.mxu0 0
      %2300 = vmatpush1.bf16.msra.mxu0 0
      %2301 = vmatprep.subr.bf16.mxu0 0
      %2302 = vmatpush1.bf16.msra.mxu0 0
      %2303 = vmatprep.subr.bf16.mxu0 0
      %2304 = vmatpush1.bf16.msra.mxu0 0
      %2305 = vmatprep.subr.bf16.mxu0 0
      %2306 = vmatpush1.bf16.msra.mxu0 0
      %2307 = vmatprep.subr.bf16.mxu0 0
      %2308 = vmatpush1.bf16.msra.mxu0 0
      %2309 = vmatprep.subr.bf16.mxu0 0
      %2310 = vmatpush1.bf16.msra.mxu0 0
      %2311 = vmatprep.subr.bf16.mxu0 0
      %2312 = vmatpush1.bf16.msra.mxu0 0
      %2313 = vmatprep.mubr.bf16.mxu0 0
      %2314 = vmatmul.mubr.bf16.gmra.mrb[0].mxu0 %v923
      %v2315 = vpop.f32.mrb[0].mxu0
      %v2316 = vadd.f32 0.0, %v2315
      %v2317 = vpop.f32.mrb[0].mxu0
      %v2318 = vadd.f32 0.0, %v2317
      %v2319 = vpop.f32.mrb[0].mxu0
      %v2320 = vpop.f32.mrb[0].mxu0
      %2321 = vdwg.mxu0
      %2322 = vmatprep.subr.bf16.mxu0 %v776
      %2323 = vmatpush1.bf16.msra.mxu0 %v775
      %2324 = vmatprep.subr.bf16.mxu0 %v1107
      %2325 = vmatpush1.bf16.msra.mxu0 %v1104
      %2326 = vmatprep.subr.bf16.mxu0 0
      %2327 = vmatpush1.bf16.msra.mxu0 0
      %2328 = vmatprep.subr.bf16.mxu0 0
      %2329 = vmatpush1.bf16.msra.mxu0 0
      %2330 = vmatprep.subr.bf16.mxu0 0
      %2331 = vmatpush1.bf16.msra.mxu0 0
      %2332 = vmatprep.subr.bf16.mxu0 0
      %2333 = vmatpush1.bf16.msra.mxu0 0
      %2334 = vmatprep.subr.bf16.mxu0 0
      %2335 = vmatpush1.bf16.msra.mxu0 0
      %2336 = vmatprep.subr.bf16.mxu0 0
      %2337 = vmatpush1.bf16.msra.mxu0 0
      %2338 = vmatprep.subr.bf16.mxu0 0
      %2339 = vmatpush1.bf16.msra.mxu0 0
      %2340 = vmatprep.subr.bf16.mxu0 0
      %2341 = vmatpush1.bf16.msra.mxu0 0
      %2342 = vmatprep.subr.bf16.mxu0 0
      %2343 = vmatpush1.bf16.msra.mxu0 0
      %2344 = vmatprep.subr.bf16.mxu0 0
      %2345 = vmatpush1.bf16.msra.mxu0 0
      %2346 = vmatprep.subr.bf16.mxu0 0
      %2347 = vmatpush1.bf16.msra.mxu0 0
      %2348 = vmatprep.subr.bf16.mxu0 0
      %2349 = vmatpush1.bf16.msra.mxu0 0
      %2350 = vmatprep.subr.bf16.mxu0 0
      %2351 = vmatpush1.bf16.msra.mxu0 0
      %2352 = vmatprep.subr.bf16.mxu0 0
      %2353 = vmatpush1.bf16.msra.mxu0 0
      %2354 = vmatprep.mubr.bf16.mxu0 0
      %2355 = vmatmul.mubr.bf16.gmra.mrb[0].mxu0 %v923
      %v2356 = vpop.f32.mrb[0].mxu0
      %v2357 = vadd.f32 0.0, %v2356
      %v2358 = vpop.f32.mrb[0].mxu0
      %v2359 = vadd.f32 0.0, %v2358
      %v2360 = vpop.f32.mrb[0].mxu0
      %v2361 = vpop.f32.mrb[0].mxu0
      %2362 = vdwg.mxu0
      %2363 = vmatprep.subr.bf16.mxu0 %v778
      %2364 = vmatpush1.bf16.msra.mxu0 %v777
      %2365 = vmatprep.subr.bf16.mxu0 %v1113
      %2366 = vmatpush1.bf16.msra.mxu0 %v1110
      %2367 = vmatprep.subr.bf16.mxu0 0
      %2368 = vmatpush1.bf16.msra.mxu0 0
      %2369 = vmatprep.subr.bf16.mxu0 0
      %2370 = vmatpush1.bf16.msra.mxu0 0
      %2371 = vmatprep.subr.bf16.mxu0 0
      %2372 = vmatpush1.bf16.msra.mxu0 0
      %2373 = vmatprep.subr.bf16.mxu0 0
      %2374 = vmatpush1.bf16.msra.mxu0 0
      %2375 = vmatprep.subr.bf16.mxu0 0
      %2376 = vmatpush1.bf16.msra.mxu0 0
      %2377 = vmatprep.subr.bf16.mxu0 0
      %2378 = vmatpush1.bf16.msra.mxu0 0
      %2379 = vmatprep.subr.bf16.mxu0 0
      %2380 = vmatpush1.bf16.msra.mxu0 0
      %2381 = vmatprep.subr.bf16.mxu0 0
      %2382 = vmatpush1.bf16.msra.mxu0 0
      %2383 = vmatprep.subr.bf16.mxu0 0
      %2384 = vmatpush1.bf16.msra.mxu0 0
      %2385 = vmatprep.subr.bf16.mxu0 0
      %2386 = vmatpush1.bf16.msra.mxu0 0
      %2387 = vmatprep.subr.bf16.mxu0 0
      %2388 = vmatpush1.bf16.msra.mxu0 0
      %2389 = vmatprep.subr.bf16.mxu0 0
      %2390 = vmatpush1.bf16.msra.mxu0 0
      %2391 = vmatprep.subr.bf16.mxu0 0
      %2392 = vmatpush1.bf16.msra.mxu0 0
      %2393 = vmatprep.subr.bf16.mxu0 0
      %2394 = vmatpush1.bf16.msra.mxu0 0
      %2395 = vmatprep.mubr.bf16.mxu0 0
      %2396 = vmatmul.mubr.bf16.gmra.mrb[0].mxu0 %v923
      %v2397 = vpop.f32.mrb[0].mxu0
      %v2398 = vadd.f32 0.0, %v2397
      %v2399 = vpop.f32.mrb[0].mxu0
      %v2400 = vadd.f32 0.0, %v2399
      %v2401 = vpop.f32.mrb[0].mxu0
      %v2402 = vpop.f32.mrb[0].mxu0
      %2403 = vdwg.mxu0
      %2404 = vmatprep.subr.bf16.mxu0 %v780
      %2405 = vmatpush1.bf16.msra.mxu0 %v779
      %2406 = vmatprep.subr.bf16.mxu0 %v1119
      %2407 = vmatpush1.bf16.msra.mxu0 %v1116
      %2408 = vmatprep.subr.bf16.mxu0 0
      %2409 = vmatpush1.bf16.msra.mxu0 0
      %2410 = vmatprep.subr.bf16.mxu0 0
      %2411 = vmatpush1.bf16.msra.mxu0 0
      %2412 = vmatprep.subr.bf16.mxu0 0
      %2413 = vmatpush1.bf16.msra.mxu0 0
      %2414 = vmatprep.subr.bf16.mxu0 0
      %2415 = vmatpush1.bf16.msra.mxu0 0
      %2416 = vmatprep.subr.bf16.mxu0 0
      %2417 = vmatpush1.bf16.msra.mxu0 0
      %2418 = vmatprep.subr.bf16.mxu0 0
      %2419 = vmatpush1.bf16.msra.mxu0 0
      %2420 = vmatprep.subr.bf16.mxu0 0
      %2421 = vmatpush1.bf16.msra.mxu0 0
      %2422 = vmatprep.subr.bf16.mxu0 0
      %2423 = vmatpush1.bf16.msra.mxu0 0
      %2424 = vmatprep.subr.bf16.mxu0 0
      %2425 = vmatpush1.bf16.msra.mxu0 0
      %2426 = vmatprep.subr.bf16.mxu0 0
      %2427 = vmatpush1.bf16.msra.mxu0 0
      %2428 = vmatprep.subr.bf16.mxu0 0
      %2429 = vmatpush1.bf16.msra.mxu0 0
      %2430 = vmatprep.subr.bf16.mxu0 0
      %2431 = vmatpush1.bf16.msra.mxu0 0
      %2432 = vmatprep.subr.bf16.mxu0 0
      %2433 = vmatpush1.bf16.msra.mxu0 0
      %2434 = vmatprep.subr.bf16.mxu0 0
      %2435 = vmatpush1.bf16.msra.mxu0 0
      %2436 = vmatprep.mubr.bf16.mxu0 0
      %2437 = vmatmul.mubr.bf16.gmra.mrb[0].mxu0 %v923
      %v2438 = vpop.f32.mrb[0].mxu0
      %v2439 = vadd.f32 0.0, %v2438
      %v2440 = vpop.f32.mrb[0].mxu0
      %v2441 = vadd.f32 0.0, %v2440
      %v2442 = vpop.f32.mrb[0].mxu0
      %v2443 = vpop.f32.mrb[0].mxu0
      %2444 = vdwg.mxu0
      %2445 = vmatprep.subr.bf16.mxu0 %v782
      %2446 = vmatpush1.bf16.msra.mxu0 %v781
      %2447 = vmatprep.subr.bf16.mxu0 %v1125
      %2448 = vmatpush1.bf16.msra.mxu0 %v1122
      %2449 = vmatprep.subr.bf16.mxu0 0
      %2450 = vmatpush1.bf16.msra.mxu0 0
      %2451 = vmatprep.subr.bf16.mxu0 0
      %2452 = vmatpush1.bf16.msra.mxu0 0
      %2453 = vmatprep.subr.bf16.mxu0 0
      %2454 = vmatpush1.bf16.msra.mxu0 0
      %2455 = vmatprep.subr.bf16.mxu0 0
      %2456 = vmatpush1.bf16.msra.mxu0 0
      %2457 = vmatprep.subr.bf16.mxu0 0
      %2458 = vmatpush1.bf16.msra.mxu0 0
      %2459 = vmatprep.subr.bf16.mxu0 0
      %2460 = vmatpush1.bf16.msra.mxu0 0
      %2461 = vmatprep.subr.bf16.mxu0 0
      %2462 = vmatpush1.bf16.msra.mxu0 0
      %2463 = vmatprep.subr.bf16.mxu0 0
      %2464 = vmatpush1.bf16.msra.mxu0 0
      %2465 = vmatprep.subr.bf16.mxu0 0
      %2466 = vmatpush1.bf16.msra.mxu0 0
      %2467 = vmatprep.subr.bf16.mxu0 0
      %2468 = vmatpush1.bf16.msra.mxu0 0
      %2469 = vmatprep.subr.bf16.mxu0 0
      %2470 = vmatpush1.bf16.msra.mxu0 0
      %2471 = vmatprep.subr.bf16.mxu0 0
      %2472 = vmatpush1.bf16.msra.mxu0 0
      %2473 = vmatprep.subr.bf16.mxu0 0
      %2474 = vmatpush1.bf16.msra.mxu0 0
      %2475 = vmatprep.subr.bf16.mxu0 0
      %2476 = vmatpush1.bf16.msra.mxu0 0
      %2477 = vmatprep.mubr.bf16.mxu0 0
      %2478 = vmatmul.mubr.bf16.gmra.mrb[0].mxu0 %v923
      %v2479 = vpop.f32.mrb[0].mxu0
      %v2480 = vadd.f32 0.0, %v2479
      %v2481 = vpop.f32.mrb[0].mxu0
      %v2482 = vadd.f32 0.0, %v2481
      %v2483 = vpop.f32.mrb[0].mxu0
      %v2484 = vpop.f32.mrb[0].mxu0
      %2485 = vdwg.mxu0
      %2486 = vmatprep.subr.bf16.mxu0 %v784
      %2487 = vmatpush1.bf16.msra.mxu0 %v783
      %2488 = vmatprep.subr.bf16.mxu0 %v1131
      %2489 = vmatpush1.bf16.msra.mxu0 %v1128
      %2490 = vmatprep.subr.bf16.mxu0 0
      %2491 = vmatpush1.bf16.msra.mxu0 0
      %2492 = vmatprep.subr.bf16.mxu0 0
      %2493 = vmatpush1.bf16.msra.mxu0 0
      %2494 = vmatprep.subr.bf16.mxu0 0
      %2495 = vmatpush1.bf16.msra.mxu0 0
      %2496 = vmatprep.subr.bf16.mxu0 0
      %2497 = vmatpush1.bf16.msra.mxu0 0
      %2498 = vmatprep.subr.bf16.mxu0 0
      %2499 = vmatpush1.bf16.msra.mxu0 0
      %2500 = vmatprep.subr.bf16.mxu0 0
      %2501 = vmatpush1.bf16.msra.mxu0 0
      %2502 = vmatprep.subr.bf16.mxu0 0
      %2503 = vmatpush1.bf16.msra.mxu0 0
      %2504 = vmatprep.subr.bf16.mxu0 0
      %2505 = vmatpush1.bf16.msra.mxu0 0
      %2506 = vmatprep.subr.bf16.mxu0 0
      %2507 = vmatpush1.bf16.msra.mxu0 0
      %2508 = vmatprep.subr.bf16.mxu0 0
      %2509 = vmatpush1.bf16.msra.mxu0 0
      %2510 = vmatprep.subr.bf16.mxu0 0
      %2511 = vmatpush1.bf16.msra.mxu0 0
      %2512 = vmatprep.subr.bf16.mxu0 0
      %2513 = vmatpush1.bf16.msra.mxu0 0
      %2514 = vmatprep.subr.bf16.mxu0 0
      %2515 = vmatpush1.bf16.msra.mxu0 0
      %2516 = vmatprep.subr.bf16.mxu0 0
      %2517 = vmatpush1.bf16.msra.mxu0 0
      %2518 = vmatprep.mubr.bf16.mxu0 0
      %2519 = vmatmul.mubr.bf16.gmra.mrb[0].mxu0 %v923
      %v2520 = vpop.f32.mrb[0].mxu0
      %v2521 = vadd.f32 0.0, %v2520
      %v2522 = vpop.f32.mrb[0].mxu0
      %v2523 = vadd.f32 0.0, %v2522
      %v2524 = vpop.f32.mrb[0].mxu0
      %v2525 = vpop.f32.mrb[0].mxu0
      %2526 = vdwg.mxu0
      %v2527 = vmax.f32 %v1168, %v1498
      %v2528 = vmax.f32 %v1170, %v1537
      %v2529 = vmax.f32 %v1209, %v1539
      %v2530 = vmax.f32 %v1211, %v1578
      %v2531 = vmax.f32 %v1250, %v1580
      %v2532 = vmax.f32 %v1252, %v1619
      %v2533 = vmax.f32 %v1291, %v1621
      %v2534 = vmax.f32 %v1293, %v1660
      %v2535 = vmax.f32 %v1332, %v1662
      %v2536 = vmax.f32 %v1334, %v1701
      %v2537 = vmax.f32 %v1373, %v1703
      %v2538 = vmax.f32 %v1375, %v1742
      %v2539 = vmax.f32 %v1414, %v1744
      %v2540 = vmax.f32 %v1416, %v1783
      %v2541 = vmax.f32 %v1455, %v1785
      %v2542 = vmax.f32 %v1457, %v1824
      %v2543 = vmax.f32 %v1496, %v1826
      %v2544 = vmax.f32 %v1865, %v2195
      %v2545 = vmax.f32 %v1867, %v2234
      %v2546 = vmax.f32 %v1906, %v2236
      %v2547 = vmax.f32 %v1908, %v2275
      %v2548 = vmax.f32 %v1947, %v2277
      %v2549 = vmax.f32 %v1949, %v2316
      %v2550 = vmax.f32 %v1988, %v2318
      %v2551 = vmax.f32 %v1990, %v2357
      %v2552 = vmax.f32 %v2029, %v2359
      %v2553 = vmax.f32 %v2031, %v2398
      %v2554 = vmax.f32 %v2070, %v2400
      %v2555 = vmax.f32 %v2072, %v2439
      %v2556 = vmax.f32 %v2111, %v2441
      %v2557 = vmax.f32 %v2113, %v2480
      %v2558 = vmax.f32 %v2152, %v2482
      %v2559 = vmax.f32 %v2154, %v2521
      %v2560 = vmax.f32 %v2193, %v2523
      %v2561 = vmax.f32 %v2527, %v2544
      %v2562 = vmax.f32 %v2528, %v2545
      %v2563 = vmax.f32 %v2529, %v2546
      %v2564 = vmax.f32 %v2530, %v2547
      %v2565 = vmax.f32 %v2531, %v2548
      %v2566 = vmax.f32 %v2532, %v2549
      %v2567 = vmax.f32 %v2533, %v2550
      %v2568 = vmax.f32 %v2534, %v2551
      %v2569 = vmax.f32 %v2535, %v2552
      %v2570 = vmax.f32 %v2536, %v2553
      %v2571 = vmax.f32 %v2537, %v2554
      %v2572 = vmax.f32 %v2538, %v2555
      %v2573 = vmax.f32 %v2539, %v2556
      %v2574 = vmax.f32 %v2540, %v2557
      %v2575 = vmax.f32 %v2541, %v2558
      %v2576 = vmax.f32 %v2542, %v2559
      %v2577 = vmax.f32 %v2543, %v2560
      %v2578 = vld [vmem:[%s2] sm:$0x3f]
      %2580 = vset.pattern.permute.xlu0 0
      %2581 = vperm.xlu0 %2580, %v2578
      %v2582 = vpop.permute.xlu0 %2581
      %v2584 = vadd.f32 %v2561, %v2582
      %v2585 = vadd.f32 %v2562, %v2582
      %v2586 = vadd.f32 %v2563, %v2582
      %v2587 = vadd.f32 %v2564, %v2582
      %v2588 = vadd.f32 %v2565, %v2582
      %v2589 = vadd.f32 %v2566, %v2582
      %v2590 = vadd.f32 %v2567, %v2582
      %v2591 = vadd.f32 %v2568, %v2582
      %v2592 = vadd.f32 %v2569, %v2582
      %v2593 = vadd.f32 %v2570, %v2582
      %v2594 = vadd.f32 %v2571, %v2582
      %v2595 = vadd.f32 %v2572, %v2582
      %v2596 = vadd.f32 %v2573, %v2582
      %v2597 = vadd.f32 %v2574, %v2582
      %v2598 = vadd.f32 %v2575, %v2582
      %v2599 = vadd.f32 %v2576, %v2582
      %v2600 = vadd.f32 %v2577, %v2582
      %v2601 = vmax.f32 %v2584, 0.0
      %v2602 = vmax.f32 %v2585, 0.0
      %v2603 = vmax.f32 %v2586, 0.0
      %v2604 = vmax.f32 %v2587, 0.0
      %v2605 = vmax.f32 %v2588, 0.0
      %v2606 = vmax.f32 %v2589, 0.0
      %v2607 = vmax.f32 %v2590, 0.0
      %v2608 = vmax.f32 %v2591, 0.0
      %v2609 = vmax.f32 %v2592, 0.0
      %v2610 = vmax.f32 %v2593, 0.0
      %v2611 = vmax.f32 %v2594, 0.0
      %v2612 = vmax.f32 %v2595, 0.0
      %v2613 = vmax.f32 %v2596, 0.0
      %v2614 = vmax.f32 %v2597, 0.0
      %v2615 = vmax.f32 %v2598, 0.0
      %v2616 = vmax.f32 %v2599, 0.0
      %v2617 = vmax.f32 %v2600, 0.0
      %2618 = vst [vmem:[%s170] sm:$0x3f] %v2601
      %2619 = vst [vmem:[%s170 + $0x8] sm:$0x3f] %v2602
      %2620 = vst [vmem:[%s170 + $0x10] sm:$0x3f] %v2603
      %2621 = vst [vmem:[%s170 + $0x18] sm:$0x3f] %v2604
      %2622 = vst [vmem:[%s170 + $0x20] sm:$0x3f] %v2605
      %2623 = vst [vmem:[%s170 + $0x28] sm:$0x3f] %v2606
      %2624 = vst [vmem:[%s170 + $0x30] sm:$0x3f] %v2607
      %2625 = vst [vmem:[%s170 + $0x38] sm:$0x3f] %v2608
      %2626 = vst [vmem:[%s170 + $0x40] sm:$0x3f] %v2609
      %2627 = vst [vmem:[%s170 + $0x48] sm:$0x3f] %v2610
      %2628 = vst [vmem:[%s170 + $0x50] sm:$0x3f] %v2611
      %2629 = vst [vmem:[%s170 + $0x58] sm:$0x3f] %v2612
      %2630 = vst [vmem:[%s170 + $0x60] sm:$0x3f] %v2613
      %2631 = vst [vmem:[%s170 + $0x68] sm:$0x3f] %v2614
      %2632 = vst [vmem:[%s170 + $0x70] sm:$0x3f] %v2615
      %2633 = vst [vmem:[%s170 + $0x78] sm:$0x3f] %v2616
      %2634 = vst [vmem:[%s170 + $0x80] sm:$0x3f] %v2617
      %p2635 = scmp.lt.s32.totalorder %s14, 1
      %s2636 = scalar_select %p2635, %s14, 1
      %s2637 = smul.addr %s2636, 17
      %s2638 = smul.addr %s2637, 8
      %s2639 = scalar_lea.vmem %s3, %s2638
      // Predicated region
      $region33: #{net_forward.3} parent=31 // pred_check
        %p2640 = pneg %p100
      $region34: #{net_forward.3} parent=31 // pred_check_branch
        %2642 = sbr.rel (%p2640) target = $region36
      $region35: #{net_forward.3} parent=31 // pred_region
        _
      $region36: #{net_forward.3} parent=31 // pred_fallthru
        _
    $region32: #{net_forward.3} parent=5 // pred_fallthru
      _
    %p2643 = scmp.le.s32.totalorder 2, %s9
    // Predicated region
    $region37: #{net_forward.3} parent=5 // pred_check
      %p2644 = pneg %p2643
    $region38: #{net_forward.3} parent=5 // pred_check_branch
      %2646 = sbr.rel (%p2644) target = $region40
    $region39: #{net_forward.3} parent=5 // pred_region
      %s2647 = ssub.s32 %s9, 2
      // Predicated region
      $region41: #{net_forward.3} parent=39 // pred_check
        %p2648 = pneg %p106
      $region42: #{net_forward.3} parent=39 // pred_check_branch
        %2650 = sbr.rel (%p2648) target = $region44
      $region43: #{net_forward.3} parent=39 // pred_region
        %p2651 = scmp.lt.s32.totalorder %s15, 1
        %s2652 = scalar_select %p2651, %s15, 1
        %s2653 = smul.addr %s2652, 17
        %s2654 = smul.addr %s2653, 8
        %s2655 = scalar_lea.vmem %s3, %s2654
      $region44: #{net_forward.3} parent=39 // pred_fallthru
        _
    $region40: #{net_forward.3} parent=5 // pred_fallthru
      _
  $region6: #{net_forward.3} parent=0 // loop_footer
    %s13 = sadd.s32 1, %s9
  $region7: #{net_forward.3} parent=0 // loop_footer_branch
    %8 = sbr.rel target = $region3
  $region8: #{net_forward.3} parent=0 // loop_exit
    _

// kernel: net_forward.4
$region0: #{net_forward.4}
  #allocation0 [shape = 'u32[]', space=smem, size = 0x4, offset = 0x4, fixed_abs, tag = 'smem constant byte address 0x4 - core index']
  #allocation1 [shape = 'u32[144,128]{1,0:T(1,128)}', space=vmem, size = 0x12000, scoped, tag = 'internal scratch']
  %s0 = inlined_call_operand.vmem [shape: bf16[2,150,2048], index: 0, kind: input, shape index: {}]
  %s1 = inlined_call_operand.vmem [shape: bf16[16,150], index: 1, kind: input, shape index: {}]
  %s2 = inlined_call_operand.vmem [shape: f32[16,1], index: 2, kind: input, shape index: {}]
  %s3 = inlined_call_operand.vmem [shape: f32[2,16,512], index: 3, kind: output, shape index: {}]
  %s4 = sld [smem:[#allocation0]]
  $region45: #{net_forward.4} parent=0
    _
  %s6 = ssub.s32 1, %s4
  %s7 = scalar_select 0, %s6, %s4
  loop: start=0, step=1, limit=4
  $region2: #{net_forward.4} parent=0 // loop_pre_header
    _
  $region3: #{net_forward.4} parent=0 // loop_header
    %s9 = sphi 0, %s13
    %p10 = scmp.ge.s32.totalorder %s9, 4
    %s19 = sphi 0, %s21
    %s22 = sphi 0, %s19
    %s23 = sphi 0, %s22
    %s39 = sphi 0, %s23
    %s43 = sphi 0, %s43
    %s45 = sphi 0, %s43
    %s46 = sphi 0, %s45
    %s60 = sphi 0, %s46
    %s64 = sphi 0, %s64
    %s66 = sphi 0, %s64
    %s67 = sphi 0, %s66
    %s81 = sphi 0, %s67
    %s87 = sphi 0, %s89
    %s90 = sphi 0, %s87
    %s91 = sphi 0, %s90
    %s107 = sphi 0, %s91
  $region4: #{net_forward.4} parent=0 // loop_header_branch
    %12 = sbr.rel (%p10) target = $region8
  $region5: #{net_forward.4} parent=0 // loop_body
    %s14 = ssub.s32 %s9, 1
    %s15 = ssub.s32 %s9, 2
    %s16 = sadd.s32 %s9, 1
    %s17 = ssub.s32 %s9, %s16
    %p18 = scmp.eq.s32.totalorder %s17, 0
    %s20 = sadd.s32 %s19, 1
    %s21 = scalar_select %p18, %s19, %s20
    %p24 = pneg %p18
    %p25 = scmp.eq.s32.totalorder %s9, 1
    %p26 = por %p24, %p25
    %p27 = scmp.ne.s32.totalorder %s19, %s22
    %p28 = scmp.eq.s32.totalorder %s9, 0
    %p29 = por %p27, %p28
    %p30 = scmp.ne.s32.totalorder %s19, %s22
    %p31 = scmp.eq.s32.totalorder %s14, 1
    %p32 = por %p30, %p31
    %p33 = scmp.ne.s32.totalorder %s22, %s23
    %p34 = scmp.eq.s32.totalorder %s14, 0
    %p35 = por %p33, %p34
    %p36 = scmp.ne.s32.totalorder %s22, %s23
    %p37 = scmp.eq.s32.totalorder %s15, 1
    %p38 = por %p36, %p37
    %p40 = scmp.ne.s32.totalorder %s23, %s39
    %p41 = scmp.eq.s32.totalorder %s15, 0
    %p42 = por %p40, %p41
    %s44 = sadd.s32 %s43, 1
    %p47 = scmp.eq.s32.totalorder %s9, 1
    %p48 = scmp.ne.s32.totalorder %s43, %s45
    %p49 = scmp.eq.s32.totalorder %s9, 0
    %p50 = por %p48, %p49
    %p51 = scmp.ne.s32.totalorder %s43, %s45
    %p52 = scmp.eq.s32.totalorder %s14, 1
    %p53 = por %p51, %p52
    %p54 = scmp.ne.s32.totalorder %s45, %s46
    %p55 = scmp.eq.s32.totalorder %s14, 0
    %p56 = por %p54, %p55
    %p57 = scmp.ne.s32.totalorder %s45, %s46
    %p58 = scmp.eq.s32.totalorder %s15, 1
    %p59 = por %p57, %p58
    %p61 = scmp.ne.s32.totalorder %s46, %s60
    %p62 = scmp.eq.s32.totalorder %s15, 0
    %p63 = por %p61, %p62
    %s65 = sadd.s32 %s64, 1
    %p68 = scmp.eq.s32.totalorder %s9, 1
    %p69 = scmp.ne.s32.totalorder %s64, %s66
    %p70 = scmp.eq.s32.totalorder %s9, 0
    %p71 = por %p69, %p70
    %p72 = scmp.ne.s32.totalorder %s64, %s66
    %p73 = scmp.eq.s32.totalorder %s14, 1
    %p74 = por %p72, %p73
    %p75 = scmp.ne.s32.totalorder %s66, %s67
    %p76 = scmp.eq.s32.totalorder %s14, 0
    %p77 = por %p75, %p76
    %p78 = scmp.ne.s32.totalorder %s66, %s67
    %p79 = scmp.eq.s32.totalorder %s15, 1
    %p80 = por %p78, %p79
    %p82 = scmp.ne.s32.totalorder %s67, %s81
    %p83 = scmp.eq.s32.totalorder %s15, 0
    %p84 = por %p82, %p83
    %s85 = ssub.s32 %s9, %s16
    %p86 = scmp.eq.s32.totalorder %s85, 0
    %s88 = sadd.s32 %s87, 1
    %s89 = scalar_select %p86, %s87, %s88
    %p92 = pneg %p86
    %p93 = scmp.eq.s32.totalorder %s9, 1
    %p94 = por %p92, %p93
    %p95 = scmp.ne.s32.totalorder %s87, %s90
    %p96 = scmp.eq.s32.totalorder %s9, 0
    %p97 = por %p95, %p96
    %p98 = scmp.ne.s32.totalorder %s87, %s90
    %p99 = scmp.eq.s32.totalorder %s14, 1
    %p100 = por %p98, %p99
    %p101 = scmp.ne.s32.totalorder %s90, %s91
    %p102 = scmp.eq.s32.totalorder %s14, 0
    %p103 = por %p101, %p102
    %p104 = scmp.ne.s32.totalorder %s90, %s91
    %p105 = scmp.eq.s32.totalorder %s15, 1
    %p106 = por %p104, %p105
    %p108 = scmp.ne.s32.totalorder %s91, %s107
    %p109 = scmp.eq.s32.totalorder %s15, 0
    %p110 = por %p108, %p109
    %p111 = scmp.le.s32.totalorder 1, %s9
    %p112 = scmp.lt.s32.totalorder %s9, 3
    %p113 = pnand %p111, %p112
    %p114 = pneg %p113
    // Predicated region
    $region9: #{net_forward.4} parent=5 // pred_check
      _
    $region10: #{net_forward.4} parent=5 // pred_check_branch
      %116 = sbr.rel (%p113) target = $region12
    $region11: #{net_forward.4} parent=5 // pred_region
      %s117 = ssub.s32 %s9, 1
      // Predicated region
      $region13: #{net_forward.4} parent=11 // pred_check
        %p118 = pneg %p56
      $region14: #{net_forward.4} parent=11 // pred_check_branch
        %120 = sbr.rel (%p118) target = $region16
      $region15: #{net_forward.4} parent=11 // pred_region
        _
      $region16: #{net_forward.4} parent=11 // pred_fallthru
        _
      // Predicated region
      $region17: #{net_forward.4} parent=11 // pred_check
        %p121 = pneg %p77
      $region18: #{net_forward.4} parent=11 // pred_check_branch
        %123 = sbr.rel (%p121) target = $region20
      $region19: #{net_forward.4} parent=11 // pred_region
        _
      $region20: #{net_forward.4} parent=11 // pred_fallthru
        _
    $region12: #{net_forward.4} parent=5 // pred_fallthru
      _
    %p124 = scmp.lt.s32.totalorder %s9, 2
    // Predicated region
    $region21: #{net_forward.4} parent=5 // pred_check
      %p125 = pneg %p124
    $region22: #{net_forward.4} parent=5 // pred_check_branch
      %127 = sbr.rel (%p125) target = $region24
    $region23: #{net_forward.4} parent=5 // pred_region
      // Predicated region
      $region25: #{net_forward.4} parent=23 // pred_check
        %p128 = pneg %p29
      $region26: #{net_forward.4} parent=23 // pred_check_branch
        %130 = sbr.rel (%p128) target = $region28
      $region27: #{net_forward.4} parent=23 // pred_region
        %p131 = scmp.lt.s32.totalorder %s9, 1
        %s132 = scalar_select %p131, %s9, 1
        %s133 = smul.addr %s132, 304
        %s134 = smul.addr %s133, 4
        %s135 = scalar_lea.vmem %s0, %s134
      $region28: #{net_forward.4} parent=23 // pred_fallthru
        _
    $region24: #{net_forward.4} parent=5 // pred_fallthru
      _
    %p136 = scmp.le.s32.totalorder 1, %s9
    %p137 = scmp.lt.s32.totalorder %s9, 3
    %p138 = pnand %p136, %p137
    %p139 = pneg %p138
    // Predicated region
    $region29: #{net_forward.4} parent=5 // pred_check
      _
    $region30: #{net_forward.4} parent=5 // pred_check_branch
      %141 = sbr.rel (%p138) target = $region32
    $region31: #{net_forward.4} parent=5 // pred_region
      %s142 = ssub.s32 %s9, 1
      %p143 = scmp.lt.s32.totalorder %s14, 1
      %s144 = scalar_select %p143, %s14, 1
      %s145 = smul.addr %s144, 304
      %s146 = smul.addr %s145, 4
      %s147 = scalar_lea.vmem %s0, %s146
      %p148 = pneg %p35
      %p149 = pneg %p32
      %p150 = pneg %p56
      %p151 = pneg %p53
      %p152 = pneg %p77
      %p153 = pneg %p74
      %p154 = pneg %p103
      %p155 = pneg %p100
      %p156 = scmp.lt.s32.totalorder %s14, 1
      %s157 = scalar_select %p156, %s14, 1
      %s158 = smul.addr %s157, 8
      %s159 = smul.addr %s158, 8
      %s160 = scalar_lea.vmem %s3, %s159
      %p161 = scmp.lt.s32.totalorder %s14, 1
      %s162 = scalar_select %p161, %s14, 1
      %s163 = smul.addr %s162, 304
      %s164 = smul.addr %s163, 4
      %s165 = scalar_lea.vmem %s0, %s164
      %p166 = scmp.lt.s32.totalorder %s14, 1
      %s167 = scalar_select %p166, %s14, 1
      %s168 = smul.addr %s167, 8
      %s169 = smul.addr %s168, 8
      %s170 = scalar_lea.vmem %s3, %s169
      %v172 = vld [vmem:[%s1] sm:$0xff]
      %v173 = vld [vmem:[%s1 + $0x8] sm:$0xff]
      %v174 = vld [vmem:[%s165] sm:$0xff]
      %v175 = vld [vmem:[%s165 + $0x8] sm:$0xff]
      %v176 = vld [vmem:[%s165 + $0x10] sm:$0xff]
      %v177 = vld [vmem:[%s165 + $0x18] sm:$0xff]
      %v178 = vld [vmem:[%s165 + $0x20] sm:$0xff]
      %v179 = vld [vmem:[%s165 + $0x28] sm:$0xff]
      %v180 = vld [vmem:[%s165 + $0x30] sm:$0xff]
      %v181 = vld [vmem:[%s165 + $0x38] sm:$0xff]
      %v182 = vld [vmem:[%s165 + $0x40] sm:$0xff]
      %v183 = vld [vmem:[%s165 + $0x48] sm:$0xff]
      %v184 = vld [vmem:[%s165 + $0x50] sm:$0xff]
      %v185 = vld [vmem:[%s165 + $0x58] sm:$0xff]
      %v186 = vld [vmem:[%s165 + $0x60] sm:$0xff]
      %v187 = vld [vmem:[%s165 + $0x68] sm:$0xff]
      %v188 = vld [vmem:[%s165 + $0x70] sm:$0xff]
      %v189 = vld [vmem:[%s165 + $0x78] sm:$0xff]
      %v190 = vld [vmem:[%s165 + $0x80] sm:$0xff]
      %v191 = vld [vmem:[%s165 + $0x88] sm:$0xff]
      %v192 = vld [vmem:[%s165 + $0x90] sm:$0xff]
      %v193 = vld [vmem:[%s165 + $0x98] sm:$0xff]
      %v194 = vld [vmem:[%s165 + $0xa0] sm:$0xff]
      %v195 = vld [vmem:[%s165 + $0xa8] sm:$0xff]
      %v196 = vld [vmem:[%s165 + $0xb0] sm:$0xff]
      %v197 = vld [vmem:[%s165 + $0xb8] sm:$0xff]
      %v198 = vld [vmem:[%s165 + $0xc0] sm:$0xff]
      %v199 = vld [vmem:[%s165 + $0xc8] sm:$0xff]
      %v200 = vld [vmem:[%s165 + $0xd0] sm:$0xff]
      %v201 = vld [vmem:[%s165 + $0xd8] sm:$0xff]
      %v202 = vld [vmem:[%s165 + $0xe0] sm:$0xff]
      %v203 = vld [vmem:[%s165 + $0xe8] sm:$0xff]
      %v204 = vld [vmem:[%s165 + $0xf0] sm:$0xff]
      %v205 = vld [vmem:[%s165 + $0xf8] sm:$0xff]
      %v206 = vld [vmem:[%s165 + $0x100] sm:$0xff]
      %v207 = vld [vmem:[%s165 + $0x108] sm:$0xff]
      %v208 = vld [vmem:[%s165 + $0x110] sm:$0xff]
      %v209 = vld [vmem:[%s165 + $0x118] sm:$0xff]
      %v210 = vld [vmem:[%s165 + $0x120] sm:$0xff]
      %v211 = vld [vmem:[%s165 + $0x128] sm:$0xff]
      %v212 = vld [vmem:[%s165 + $0x130] sm:$0xff]
      %v213 = vld [vmem:[%s165 + $0x138] sm:$0xff]
      %v214 = vld [vmem:[%s165 + $0x140] sm:$0xff]
      %v215 = vld [vmem:[%s165 + $0x148] sm:$0xff]
      %v216 = vld [vmem:[%s165 + $0x150] sm:$0xff]
      %v217 = vld [vmem:[%s165 + $0x158] sm:$0xff]
      %v218 = vld [vmem:[%s165 + $0x160] sm:$0xff]
      %v219 = vld [vmem:[%s165 + $0x168] sm:$0xff]
      %v220 = vld [vmem:[%s165 + $0x170] sm:$0xff]
      %v221 = vld [vmem:[%s165 + $0x178] sm:$0xff]
      %v222 = vld [vmem:[%s165 + $0x180] sm:$0xff]
      %v223 = vld [vmem:[%s165 + $0x188] sm:$0xff]
      %v224 = vld [vmem:[%s165 + $0x190] sm:$0xff]
      %v225 = vld [vmem:[%s165 + $0x198] sm:$0xff]
      %v226 = vld [vmem:[%s165 + $0x1a0] sm:$0xff]
      %v227 = vld [vmem:[%s165 + $0x1a8] sm:$0xff]
      %v228 = vld [vmem:[%s165 + $0x1b0] sm:$0xff]
      %v229 = vld [vmem:[%s165 + $0x1b8] sm:$0xff]
      %v230 = vld [vmem:[%s165 + $0x1c0] sm:$0xff]
      %v231 = vld [vmem:[%s165 + $0x1c8] sm:$0xff]
      %v232 = vld [vmem:[%s165 + $0x1d0] sm:$0xff]
      %v233 = vld [vmem:[%s165 + $0x1d8] sm:$0xff]
      %v234 = vld [vmem:[%s165 + $0x1e0] sm:$0xff]
      %v235 = vld [vmem:[%s165 + $0x1e8] sm:$0xff]
      %v236 = vld [vmem:[%s165 + $0x1f0] sm:$0xff]
      %v237 = vld [vmem:[%s165 + $0x1f8] sm:$0xff]
      %v238 = vld [vmem:[%s165 + $0x200] sm:$0xff]
      %v239 = vld [vmem:[%s165 + $0x208] sm:$0xff]
      %v240 = vld [vmem:[%s165 + $0x210] sm:$0xff]
      %v241 = vld [vmem:[%s165 + $0x218] sm:$0xff]
      %v242 = vld [vmem:[%s165 + $0x220] sm:$0xff]
      %v243 = vld [vmem:[%s165 + $0x228] sm:$0xff]
      %v244 = vld [vmem:[%s165 + $0x230] sm:$0xff]
      %v245 = vld [vmem:[%s165 + $0x238] sm:$0xff]
      %v246 = vld [vmem:[%s165 + $0x240] sm:$0xff]
      %v247 = vld [vmem:[%s165 + $0x248] sm:$0xff]
      %v248 = vld [vmem:[%s165 + $0x250] sm:$0xff]
      %v249 = vld [vmem:[%s165 + $0x258] sm:$0xff]
      %v250 = vld [vmem:[%s165 + $0x260] sm:$0xff]
      %v251 = vld [vmem:[%s165 + $0x268] sm:$0xff]
      %v252 = vld [vmem:[%s165 + $0x270] sm:$0xff]
      %v253 = vld [vmem:[%s165 + $0x278] sm:$0xff]
      %v254 = vld [vmem:[%s165 + $0x280] sm:$0xff]
      %v255 = vld [vmem:[%s165 + $0x288] sm:$0xff]
      %v256 = vld [vmem:[%s165 + $0x290] sm:$0xff]
      %v257 = vld [vmem:[%s165 + $0x298] sm:$0xff]
      %v258 = vld [vmem:[%s165 + $0x2a0] sm:$0xff]
      %v259 = vld [vmem:[%s165 + $0x2a8] sm:$0xff]
      %v260 = vld [vmem:[%s165 + $0x2b0] sm:$0xff]
      %v261 = vld [vmem:[%s165 + $0x2b8] sm:$0xff]
      %v262 = vld [vmem:[%s165 + $0x2c0] sm:$0xff]
      %v263 = vld [vmem:[%s165 + $0x2c8] sm:$0xff]
      %v264 = vld [vmem:[%s165 + $0x2d0] sm:$0xff]
      %v265 = vld [vmem:[%s165 + $0x2d8] sm:$0xff]
      %v266 = vld [vmem:[%s165 + $0x2e0] sm:$0xff]
      %v267 = vld [vmem:[%s165 + $0x2e8] sm:$0xff]
      %v268 = vld [vmem:[%s165 + $0x2f0] sm:$0xff]
      %v269 = vld [vmem:[%s165 + $0x2f8] sm:$0xff]
      %v270 = vld [vmem:[%s165 + $0x300] sm:$0xff]
      %v271 = vld [vmem:[%s165 + $0x308] sm:$0xff]
      %v272 = vld [vmem:[%s165 + $0x310] sm:$0xff]
      %v273 = vld [vmem:[%s165 + $0x318] sm:$0xff]
      %v274 = vld [vmem:[%s165 + $0x320] sm:$0xff]
      %v275 = vld [vmem:[%s165 + $0x328] sm:$0xff]
      %v276 = vld [vmem:[%s165 + $0x330] sm:$0xff]
      %v277 = vld [vmem:[%s165 + $0x338] sm:$0xff]
      %v278 = vld [vmem:[%s165 + $0x340] sm:$0xff]
      %v279 = vld [vmem:[%s165 + $0x348] sm:$0xff]
      %v280 = vld [vmem:[%s165 + $0x350] sm:$0xff]
      %v281 = vld [vmem:[%s165 + $0x358] sm:$0xff]
      %v282 = vld [vmem:[%s165 + $0x360] sm:$0xff]
      %v283 = vld [vmem:[%s165 + $0x368] sm:$0xff]
      %v284 = vld [vmem:[%s165 + $0x370] sm:$0xff]
      %v285 = vld [vmem:[%s165 + $0x378] sm:$0xff]
      %v286 = vld [vmem:[%s165 + $0x380] sm:$0xff]
      %v287 = vld [vmem:[%s165 + $0x388] sm:$0xff]
      %v288 = vld [vmem:[%s165 + $0x390] sm:$0xff]
      %v289 = vld [vmem:[%s165 + $0x398] sm:$0xff]
      %v290 = vld [vmem:[%s165 + $0x3a0] sm:$0xff]
      %v291 = vld [vmem:[%s165 + $0x3a8] sm:$0xff]
      %v292 = vld [vmem:[%s165 + $0x3b0] sm:$0xff]
      %v293 = vld [vmem:[%s165 + $0x3b8] sm:$0xff]
      %v294 = vld [vmem:[%s165 + $0x3c0] sm:$0xff]
      %v295 = vld [vmem:[%s165 + $0x3c8] sm:$0xff]
      %v296 = vld [vmem:[%s165 + $0x3d0] sm:$0xff]
      %v297 = vld [vmem:[%s165 + $0x3d8] sm:$0xff]
      %v298 = vld [vmem:[%s165 + $0x3e0] sm:$0xff]
      %v299 = vld [vmem:[%s165 + $0x3e8] sm:$0xff]
      %v300 = vld [vmem:[%s165 + $0x3f0] sm:$0xff]
      %v301 = vld [vmem:[%s165 + $0x3f8] sm:$0xff]
      %v302 = vld [vmem:[%s165 + $0x400] sm:$0xff]
      %v303 = vld [vmem:[%s165 + $0x408] sm:$0xff]
      %v304 = vld [vmem:[%s165 + $0x410] sm:$0xff]
      %v305 = vld [vmem:[%s165 + $0x418] sm:$0xff]
      %v306 = vld [vmem:[%s165 + $0x420] sm:$0xff]
      %v307 = vld [vmem:[%s165 + $0x428] sm:$0xff]
      %v308 = vld [vmem:[%s165 + $0x430] sm:$0xff]
      %v309 = vld [vmem:[%s165 + $0x438] sm:$0xff]
      %v310 = vld [vmem:[%s165 + $0x440] sm:$0xff]
      %v311 = vld [vmem:[%s165 + $0x448] sm:$0xff]
      %v312 = vld [vmem:[%s165 + $0x450] sm:$0xff]
      %v313 = vld [vmem:[%s165 + $0x458] sm:$0xff]
      %v314 = vld [vmem:[%s165 + $0x460] sm:$0xff]
      %v315 = vld [vmem:[%s165 + $0x468] sm:$0xff]
      %v316 = vld [vmem:[%s165 + $0x470] sm:$0xff]
      %v317 = vld [vmem:[%s165 + $0x478] sm:$0xff]
      %v318 = vld [vmem:[%s165 + $0x480] sm:$0x77]
      %v319 = vld [vmem:[%s165 + $0x488] sm:$0x77]
      %v320 = vld [vmem:[%s165 + $0x490] sm:$0x77]
      %v321 = vld [vmem:[%s165 + $0x498] sm:$0x77]
      %v322 = vld [vmem:[%s165 + $0x4a0] sm:$0x77]
      %v323 = vld [vmem:[%s165 + $0x4a8] sm:$0x77]
      %v324 = vld [vmem:[%s165 + $0x4b0] sm:$0x77]
      %v325 = vld [vmem:[%s165 + $0x4b8] sm:$0x77]
      %v328 = vunpack.c.l.b16 %v172
      %v329 = vunpack.c.h.b16 %v172
      %v330 = vunpack.c.l.b16 %v173
      %v331 = vunpack.c.h.b16 %v173
      %v332 = vpack.c.b16 %v330, %v328
      %v333 = vpack.c.b16 %v331, %v329
      %v487 = vunpack.c.l.b16 %v174
      %v488 = vunpack.c.h.b16 %v174
      %v489 = vunpack.c.l.b16 %v175
      %v490 = vunpack.c.h.b16 %v175
      %v491 = vunpack.c.l.b16 %v176
      %v492 = vunpack.c.h.b16 %v176
      %v493 = vunpack.c.l.b16 %v177
      %v494 = vunpack.c.h.b16 %v177
      %v495 = vunpack.c.l.b16 %v178
      %v496 = vunpack.c.h.b16 %v178
      %v497 = vunpack.c.l.b16 %v179
      %v498 = vunpack.c.h.b16 %v179
      %v499 = vunpack.c.l.b16 %v180
      %v500 = vunpack.c.h.b16 %v180
      %v501 = vunpack.c.l.b16 %v181
      %v502 = vunpack.c.h.b16 %v181
      %v503 = vunpack.c.l.b16 %v182
      %v504 = vunpack.c.h.b16 %v182
      %v505 = vunpack.c.l.b16 %v183
      %v506 = vunpack.c.h.b16 %v183
      %v507 = vunpack.c.l.b16 %v184
      %v508 = vunpack.c.h.b16 %v184
      %v509 = vunpack.c.l.b16 %v185
      %v510 = vunpack.c.h.b16 %v185
      %v511 = vunpack.c.l.b16 %v186
      %v512 = vunpack.c.h.b16 %v186
      %v513 = vunpack.c.l.b16 %v187
      %v514 = vunpack.c.h.b16 %v187
      %v515 = vunpack.c.l.b16 %v188
      %v516 = vunpack.c.h.b16 %v188
      %v517 = vunpack.c.l.b16 %v189
      %v518 = vunpack.c.h.b16 %v189
      %v519 = vunpack.c.l.b16 %v190
      %v520 = vunpack.c.h.b16 %v190
      %v521 = vunpack.c.l.b16 %v191
      %v522 = vunpack.c.h.b16 %v191
      %v523 = vunpack.c.l.b16 %v192
      %v524 = vunpack.c.h.b16 %v192
      %v525 = vunpack.c.l.b16 %v193
      %v526 = vunpack.c.h.b16 %v193
      %v527 = vunpack.c.l.b16 %v194
      %v528 = vunpack.c.h.b16 %v194
      %v529 = vunpack.c.l.b16 %v195
      %v530 = vunpack.c.h.b16 %v195
      %v531 = vunpack.c.l.b16 %v196
      %v532 = vunpack.c.h.b16 %v196
      %v533 = vunpack.c.l.b16 %v197
      %v534 = vunpack.c.h.b16 %v197
      %v535 = vunpack.c.l.b16 %v198
      %v536 = vunpack.c.h.b16 %v198
      %v537 = vunpack.c.l.b16 %v199
      %v538 = vunpack.c.h.b16 %v199
      %v539 = vunpack.c.l.b16 %v200
      %v540 = vunpack.c.h.b16 %v200
      %v541 = vunpack.c.l.b16 %v201
      %v542 = vunpack.c.h.b16 %v201
      %v543 = vunpack.c.l.b16 %v202
      %v544 = vunpack.c.h.b16 %v202
      %v545 = vunpack.c.l.b16 %v203
      %v546 = vunpack.c.h.b16 %v203
      %v547 = vunpack.c.l.b16 %v204
      %v548 = vunpack.c.h.b16 %v204
      %v549 = vunpack.c.l.b16 %v205
      %v550 = vunpack.c.h.b16 %v205
      %v551 = vunpack.c.l.b16 %v206
      %v552 = vunpack.c.h.b16 %v206
      %v553 = vunpack.c.l.b16 %v207
      %v554 = vunpack.c.h.b16 %v207
      %v555 = vunpack.c.l.b16 %v208
      %v556 = vunpack.c.h.b16 %v208
      %v557 = vunpack.c.l.b16 %v209
      %v558 = vunpack.c.h.b16 %v209
      %v559 = vunpack.c.l.b16 %v210
      %v560 = vunpack.c.h.b16 %v210
      %v561 = vunpack.c.l.b16 %v211
      %v562 = vunpack.c.h.b16 %v211
      %v563 = vunpack.c.l.b16 %v212
      %v564 = vunpack.c.h.b16 %v212
      %v565 = vunpack.c.l.b16 %v213
      %v566 = vunpack.c.h.b16 %v213
      %v567 = vunpack.c.l.b16 %v214
      %v568 = vunpack.c.h.b16 %v214
      %v569 = vunpack.c.l.b16 %v215
      %v570 = vunpack.c.h.b16 %v215
      %v571 = vunpack.c.l.b16 %v216
      %v572 = vunpack.c.h.b16 %v216
      %v573 = vunpack.c.l.b16 %v217
      %v574 = vunpack.c.h.b16 %v217
      %v575 = vunpack.c.l.b16 %v218
      %v576 = vunpack.c.h.b16 %v218
      %v577 = vunpack.c.l.b16 %v219
      %v578 = vunpack.c.h.b16 %v219
      %v579 = vunpack.c.l.b16 %v220
      %v580 = vunpack.c.h.b16 %v220
      %v581 = vunpack.c.l.b16 %v221
      %v582 = vunpack.c.h.b16 %v221
      %v583 = vunpack.c.l.b16 %v222
      %v584 = vunpack.c.h.b16 %v222
      %v585 = vunpack.c.l.b16 %v223
      %v586 = vunpack.c.h.b16 %v223
      %v587 = vunpack.c.l.b16 %v224
      %v588 = vunpack.c.h.b16 %v224
      %v589 = vunpack.c.l.b16 %v225
      %v590 = vunpack.c.h.b16 %v225
      %v591 = vunpack.c.l.b16 %v226
      %v592 = vunpack.c.h.b16 %v226
      %v593 = vunpack.c.l.b16 %v227
      %v594 = vunpack.c.h.b16 %v227
      %v595 = vunpack.c.l.b16 %v228
      %v596 = vunpack.c.h.b16 %v228
      %v597 = vunpack.c.l.b16 %v229
      %v598 = vunpack.c.h.b16 %v229
      %v599 = vunpack.c.l.b16 %v230
      %v600 = vunpack.c.h.b16 %v230
      %v601 = vunpack.c.l.b16 %v231
      %v602 = vunpack.c.h.b16 %v231
      %v603 = vunpack.c.l.b16 %v232
      %v604 = vunpack.c.h.b16 %v232
      %v605 = vunpack.c.l.b16 %v233
      %v606 = vunpack.c.h.b16 %v233
      %v607 = vunpack.c.l.b16 %v234
      %v608 = vunpack.c.h.b16 %v234
      %v609 = vunpack.c.l.b16 %v235
      %v610 = vunpack.c.h.b16 %v235
      %v611 = vunpack.c.l.b16 %v236
      %v612 = vunpack.c.h.b16 %v236
      %v613 = vunpack.c.l.b16 %v237
      %v614 = vunpack.c.h.b16 %v237
      %v615 = vunpack.c.l.b16 %v238
      %v616 = vunpack.c.h.b16 %v238
      %v617 = vunpack.c.l.b16 %v239
      %v618 = vunpack.c.h.b16 %v239
      %v619 = vunpack.c.l.b16 %v240
      %v620 = vunpack.c.h.b16 %v240
      %v621 = vunpack.c.l.b16 %v241
      %v622 = vunpack.c.h.b16 %v241
      %v623 = vunpack.c.l.b16 %v242
      %v624 = vunpack.c.h.b16 %v242
      %v625 = vunpack.c.l.b16 %v243
      %v626 = vunpack.c.h.b16 %v243
      %v627 = vunpack.c.l.b16 %v244
      %v628 = vunpack.c.h.b16 %v244
      %v629 = vunpack.c.l.b16 %v245
      %v630 = vunpack.c.h.b16 %v245
      %v631 = vunpack.c.l.b16 %v246
      %v632 = vunpack.c.h.b16 %v246
      %v633 = vunpack.c.l.b16 %v247
      %v634 = vunpack.c.h.b16 %v247
      %v635 = vunpack.c.l.b16 %v248
      %v636 = vunpack.c.h.b16 %v248
      %v637 = vunpack.c.l.b16 %v249
      %v638 = vunpack.c.h.b16 %v249
      %v639 = vunpack.c.l.b16 %v250
      %v640 = vunpack.c.h.b16 %v250
      %v641 = vunpack.c.l.b16 %v251
      %v642 = vunpack.c.h.b16 %v251
      %v643 = vunpack.c.l.b16 %v252
      %v644 = vunpack.c.h.b16 %v252
      %v645 = vunpack.c.l.b16 %v253
      %v646 = vunpack.c.h.b16 %v253
      %v647 = vunpack.c.l.b16 %v254
      %v648 = vunpack.c.h.b16 %v254
      %v649 = vunpack.c.l.b16 %v255
      %v650 = vunpack.c.h.b16 %v255
      %v651 = vunpack.c.l.b16 %v256
      %v652 = vunpack.c.h.b16 %v256
      %v653 = vunpack.c.l.b16 %v257
      %v654 = vunpack.c.h.b16 %v257
      %v655 = vunpack.c.l.b16 %v258
      %v656 = vunpack.c.h.b16 %v258
      %v657 = vunpack.c.l.b16 %v259
      %v658 = vunpack.c.h.b16 %v259
      %v659 = vunpack.c.l.b16 %v260
      %v660 = vunpack.c.h.b16 %v260
      %v661 = vunpack.c.l.b16 %v261
      %v662 = vunpack.c.h.b16 %v261
      %v663 = vunpack.c.l.b16 %v262
      %v664 = vunpack.c.h.b16 %v262
      %v665 = vunpack.c.l.b16 %v263
      %v666 = vunpack.c.h.b16 %v263
      %v667 = vunpack.c.l.b16 %v264
      %v668 = vunpack.c.h.b16 %v264
      %v669 = vunpack.c.l.b16 %v265
      %v670 = vunpack.c.h.b16 %v265
      %v671 = vunpack.c.l.b16 %v266
      %v672 = vunpack.c.h.b16 %v266
      %v673 = vunpack.c.l.b16 %v267
      %v674 = vunpack.c.h.b16 %v267
      %v675 = vunpack.c.l.b16 %v268
      %v676 = vunpack.c.h.b16 %v268
      %v677 = vunpack.c.l.b16 %v269
      %v678 = vunpack.c.h.b16 %v269
      %v679 = vunpack.c.l.b16 %v270
      %v680 = vunpack.c.h.b16 %v270
      %v681 = vunpack.c.l.b16 %v271
      %v682 = vunpack.c.h.b16 %v271
      %v683 = vunpack.c.l.b16 %v272
      %v684 = vunpack.c.h.b16 %v272
      %v685 = vunpack.c.l.b16 %v273
      %v686 = vunpack.c.h.b16 %v273
      %v687 = vunpack.c.l.b16 %v274
      %v688 = vunpack.c.h.b16 %v274
      %v689 = vunpack.c.l.b16 %v275
      %v690 = vunpack.c.h.b16 %v275
      %v691 = vunpack.c.l.b16 %v276
      %v692 = vunpack.c.h.b16 %v276
      %v693 = vunpack.c.l.b16 %v277
      %v694 = vunpack.c.h.b16 %v277
      %v695 = vunpack.c.l.b16 %v278
      %v696 = vunpack.c.h.b16 %v278
      %v697 = vunpack.c.l.b16 %v279
      %v698 = vunpack.c.h.b16 %v279
      %v699 = vunpack.c.l.b16 %v280
      %v700 = vunpack.c.h.b16 %v280
      %v701 = vunpack.c.l.b16 %v281
      %v702 = vunpack.c.h.b16 %v281
      %v703 = vunpack.c.l.b16 %v282
      %v704 = vunpack.c.h.b16 %v282
      %v705 = vunpack.c.l.b16 %v283
      %v706 = vunpack.c.h.b16 %v283
      %v707 = vunpack.c.l.b16 %v284
      %v708 = vunpack.c.h.b16 %v284
      %v709 = vunpack.c.l.b16 %v285
      %v710 = vunpack.c.h.b16 %v285
      %v711 = vunpack.c.l.b16 %v286
      %v712 = vunpack.c.h.b16 %v286
      %v713 = vunpack.c.l.b16 %v287
      %v714 = vunpack.c.h.b16 %v287
      %v715 = vunpack.c.l.b16 %v288
      %v716 = vunpack.c.h.b16 %v288
      %v717 = vunpack.c.l.b16 %v289
      %v718 = vunpack.c.h.b16 %v289
      %v719 = vunpack.c.l.b16 %v290
      %v720 = vunpack.c.h.b16 %v290
      %v721 = vunpack.c.l.b16 %v291
      %v722 = vunpack.c.h.b16 %v291
      %v723 = vunpack.c.l.b16 %v292
      %v724 = vunpack.c.h.b16 %v292
      %v725 = vunpack.c.l.b16 %v293
      %v726 = vunpack.c.h.b16 %v293
      %v727 = vunpack.c.l.b16 %v294
      %v728 = vunpack.c.h.b16 %v294
      %v729 = vunpack.c.l.b16 %v295
      %v730 = vunpack.c.h.b16 %v295
      %v731 = vunpack.c.l.b16 %v296
      %v732 = vunpack.c.h.b16 %v296
      %v733 = vunpack.c.l.b16 %v297
      %v734 = vunpack.c.h.b16 %v297
      %v735 = vunpack.c.l.b16 %v298
      %v736 = vunpack.c.h.b16 %v298
      %v737 = vunpack.c.l.b16 %v299
      %v738 = vunpack.c.h.b16 %v299
      %v739 = vunpack.c.l.b16 %v300
      %v740 = vunpack.c.h.b16 %v300
      %v741 = vunpack.c.l.b16 %v301
      %v742 = vunpack.c.h.b16 %v301
      %v743 = vunpack.c.l.b16 %v302
      %v744 = vunpack.c.h.b16 %v302
      %v745 = vunpack.c.l.b16 %v303
      %v746 = vunpack.c.h.b16 %v303
      %v747 = vunpack.c.l.b16 %v304
      %v748 = vunpack.c.h.b16 %v304
      %v749 = vunpack.c.l.b16 %v305
      %v750 = vunpack.c.h.b16 %v305
      %v751 = vunpack.c.l.b16 %v306
      %v752 = vunpack.c.h.b16 %v306
      %v753 = vunpack.c.l.b16 %v307
      %v754 = vunpack.c.h.b16 %v307
      %v755 = vunpack.c.l.b16 %v308
      %v756 = vunpack.c.h.b16 %v308
      %v757 = vunpack.c.l.b16 %v309
      %v758 = vunpack.c.h.b16 %v309
      %v759 = vunpack.c.l.b16 %v310
      %v760 = vunpack.c.h.b16 %v310
      %v761 = vunpack.c.l.b16 %v311
      %v762 = vunpack.c.h.b16 %v311
      %v763 = vunpack.c.l.b16 %v312
      %v764 = vunpack.c.h.b16 %v312
      %v765 = vunpack.c.l.b16 %v313
      %v766 = vunpack.c.h.b16 %v313
      %v767 = vunpack.c.l.b16 %v314
      %v768 = vunpack.c.h.b16 %v314
      %v769 = vunpack.c.l.b16 %v315
      %v770 = vunpack.c.h.b16 %v315
      %v771 = vunpack.c.l.b16 %v316
      %v772 = vunpack.c.h.b16 %v316
      %v773 = vunpack.c.l.b16 %v317
      %v774 = vunpack.c.h.b16 %v317
      %v775 = vunpack.c.l.b16 %v318
      %v776 = vunpack.c.h.b16 %v318
      %v777 = vunpack.c.l.b16 %v319
      %v778 = vunpack.c.h.b16 %v319
      %v779 = vunpack.c.l.b16 %v320
      %v780 = vunpack.c.h.b16 %v320
      %v781 = vunpack.c.l.b16 %v321
      %v782 = vunpack.c.h.b16 %v321
      %v783 = vunpack.c.l.b16 %v322
      %v784 = vunpack.c.h.b16 %v322
      %v785 = vunpack.c.l.b16 %v323
      %v786 = vunpack.c.h.b16 %v323
      %v787 = vunpack.c.l.b16 %v324
      %v788 = vunpack.c.h.b16 %v324
      %v789 = vunpack.c.l.b16 %v325
      %v790 = vunpack.c.h.b16 %v325
      %v791 = vpack.c.b16 %v503, %v487
      %v792 = vpack.c.b16 %v504, %v488
      %v793 = vpack.c.b16 %v505, %v489
      %v794 = vpack.c.b16 %v506, %v490
      %v795 = vpack.c.b16 %v507, %v491
      %v796 = vpack.c.b16 %v508, %v492
      %v797 = vpack.c.b16 %v509, %v493
      %v798 = vpack.c.b16 %v510, %v494
      %v799 = vpack.c.b16 %v511, %v495
      %v800 = vpack.c.b16 %v512, %v496
      %v801 = vpack.c.b16 %v513, %v497
      %v802 = vpack.c.b16 %v514, %v498
      %v803 = vpack.c.b16 %v515, %v499
      %v804 = vpack.c.b16 %v516, %v500
      %v805 = vpack.c.b16 %v517, %v501
      %v806 = vpack.c.b16 %v518, %v502
      %v807 = vpack.c.b16 %v535, %v519
      %v808 = vpack.c.b16 %v536, %v520
      %v809 = vpack.c.b16 %v537, %v521
      %v810 = vpack.c.b16 %v538, %v522
      %v811 = vpack.c.b16 %v539, %v523
      %v812 = vpack.c.b16 %v540, %v524
      %v813 = vpack.c.b16 %v541, %v525
      %v814 = vpack.c.b16 %v542, %v526
      %v815 = vpack.c.b16 %v543, %v527
      %v816 = vpack.c.b16 %v544, %v528
      %v817 = vpack.c.b16 %v545, %v529
      %v818 = vpack.c.b16 %v546, %v530
      %v819 = vpack.c.b16 %v547, %v531
      %v820 = vpack.c.b16 %v548, %v532
      %v821 = vpack.c.b16 %v549, %v533
      %v822 = vpack.c.b16 %v550, %v534
      %v823 = vpack.c.b16 %v567, %v551
      %v824 = vpack.c.b16 %v568, %v552
      %v825 = vpack.c.b16 %v569, %v553
      %v826 = vpack.c.b16 %v570, %v554
      %v827 = vpack.c.b16 %v571, %v555
      %v828 = vpack.c.b16 %v572, %v556
      %v829 = vpack.c.b16 %v573, %v557
      %v830 = vpack.c.b16 %v574, %v558
      %v831 = vpack.c.b16 %v575, %v559
      %v832 = vpack.c.b16 %v576, %v560
      %v833 = vpack.c.b16 %v577, %v561
      %v834 = vpack.c.b16 %v578, %v562
      %v835 = vpack.c.b16 %v579, %v563
      %v836 = vpack.c.b16 %v580, %v564
      %v837 = vpack.c.b16 %v581, %v565
      %v838 = vpack.c.b16 %v582, %v566
      %v839 = vpack.c.b16 %v599, %v583
      %v840 = vpack.c.b16 %v600, %v584
      %v841 = vpack.c.b16 %v601, %v585
      %v842 = vpack.c.b16 %v602, %v586
      %v843 = vpack.c.b16 %v603, %v587
      %v844 = vpack.c.b16 %v604, %v588
      %v845 = vpack.c.b16 %v605, %v589
      %v846 = vpack.c.b16 %v606, %v590
      %v847 = vpack.c.b16 %v607, %v591
      %v848 = vpack.c.b16 %v608, %v592
      %v849 = vpack.c.b16 %v609, %v593
      %v850 = vpack.c.b16 %v610, %v594
      %v851 = vpack.c.b16 %v611, %v595
      %v852 = vpack.c.b16 %v612, %v596
      %v853 = vpack.c.b16 %v613, %v597
      %v854 = vpack.c.b16 %v614, %v598
      %v855 = vpack.c.b16 %v631, %v615
      %v856 = vpack.c.b16 %v632, %v616
      %v857 = vpack.c.b16 %v633, %v617
      %v858 = vpack.c.b16 %v634, %v618
      %v859 = vpack.c.b16 %v635, %v619
      %v860 = vpack.c.b16 %v636, %v620
      %v861 = vpack.c.b16 %v637, %v621
      %v862 = vpack.c.b16 %v638, %v622
      %v863 = vpack.c.b16 %v639, %v623
      %v864 = vpack.c.b16 %v640, %v624
      %v865 = vpack.c.b16 %v641, %v625
      %v866 = vpack.c.b16 %v642, %v626
      %v867 = vpack.c.b16 %v643, %v627
      %v868 = vpack.c.b16 %v644, %v628
      %v869 = vpack.c.b16 %v645, %v629
      %v870 = vpack.c.b16 %v646, %v630
      %v871 = vpack.c.b16 %v663, %v647
      %v872 = vpack.c.b16 %v664, %v648
      %v873 = vpack.c.b16 %v665, %v649
      %v874 = vpack.c.b16 %v666, %v650
      %v875 = vpack.c.b16 %v667, %v651
      %v876 = vpack.c.b16 %v668, %v652
      %v877 = vpack.c.b16 %v669, %v653
      %v878 = vpack.c.b16 %v670, %v654
      %v879 = vpack.c.b16 %v671, %v655
      %v880 = vpack.c.b16 %v672, %v656
      %v881 = vpack.c.b16 %v673, %v657
      %v882 = vpack.c.b16 %v674, %v658
      %v883 = vpack.c.b16 %v675, %v659
      %v884 = vpack.c.b16 %v676, %v660
      %v885 = vpack.c.b16 %v677, %v661
      %v886 = vpack.c.b16 %v678, %v662
      %v887 = vpack.c.b16 %v695, %v679
      %v888 = vpack.c.b16 %v696, %v680
      %v889 = vpack.c.b16 %v697, %v681
      %v890 = vpack.c.b16 %v698, %v682
      %v891 = vpack.c.b16 %v699, %v683
      %v892 = vpack.c.b16 %v700, %v684
      %v893 = vpack.c.b16 %v701, %v685
      %v894 = vpack.c.b16 %v702, %v686
      %v895 = vpack.c.b16 %v703, %v687
      %v896 = vpack.c.b16 %v704, %v688
      %v897 = vpack.c.b16 %v705, %v689
      %v898 = vpack.c.b16 %v706, %v690
      %v899 = vpack.c.b16 %v707, %v691
      %v900 = vpack.c.b16 %v708, %v692
      %v901 = vpack.c.b16 %v709, %v693
      %v902 = vpack.c.b16 %v710, %v694
      %v903 = vpack.c.b16 %v727, %v711
      %v904 = vpack.c.b16 %v728, %v712
      %v905 = vpack.c.b16 %v729, %v713
      %v906 = vpack.c.b16 %v730, %v714
      %v907 = vpack.c.b16 %v731, %v715
      %v908 = vpack.c.b16 %v732, %v716
      %v909 = vpack.c.b16 %v733, %v717
      %v910 = vpack.c.b16 %v734, %v718
      %v911 = vpack.c.b16 %v735, %v719
      %v912 = vpack.c.b16 %v736, %v720
      %v913 = vpack.c.b16 %v737, %v721
      %v914 = vpack.c.b16 %v738, %v722
      %v915 = vpack.c.b16 %v739, %v723
      %v916 = vpack.c.b16 %v740, %v724
      %v917 = vpack.c.b16 %v741, %v725
      %v918 = vpack.c.b16 %v742, %v726
      %v919 = vpack.c.b16 %v759, %v743
      %v920 = vpack.c.b16 %v760, %v744
      %v921 = vpack.c.b16 %v761, %v745
      %v922 = vpack.c.b16 %v762, %v746
      %v923 = vpack.c.b16 %v763, %v747
      %v924 = vpack.c.b16 %v764, %v748
      %v925 = vpack.c.b16 %v765, %v749
      %v926 = vpack.c.b16 %v766, %v750
      %v927 = vpack.c.b16 %v767, %v751
      %v928 = vpack.c.b16 %v768, %v752
      %v929 = vpack.c.b16 %v769, %v753
      %v930 = vpack.c.b16 %v770, %v754
      %v931 = vpack.c.b16 %v771, %v755
      %v932 = vpack.c.b16 %v772, %v756
      %v933 = vpack.c.b16 %v773, %v757
      %v934 = vpack.c.b16 %v774, %v758
      %v935 = vpack.c.b16 %v775, %v775
      %v936 = vpack.c.b16 %v776, %v776
      %v937 = vpack.c.b16 %v777, %v777
      %v938 = vpack.c.b16 %v778, %v778
      %v939 = vpack.c.b16 %v779, %v779
      %v940 = vpack.c.b16 %v780, %v780
      %v941 = vpack.c.b16 %v781, %v781
      %v942 = vpack.c.b16 %v782, %v782
      %v943 = vpack.c.b16 %v783, %v783
      %v944 = vpack.c.b16 %v784, %v784
      %v945 = vpack.c.b16 %v785, %v785
      %v946 = vpack.c.b16 %v786, %v786
      %v947 = vpack.c.b16 %v787, %v787
      %v948 = vpack.c.b16 %v788, %v788
      %v949 = vpack.c.b16 %v789, %v789
      %v950 = vpack.c.b16 %v790, %v790
      %vm1095 = vcmask 179200
      %v1097 = vsel %vm1095, %v333, 0
      %vm1099 = vcmask 1042432
      %v1101 = vsel %vm1099, %v935, 0
      %v1104 = vsel %vm1099, %v936, 0
      %v1107 = vsel %vm1099, %v937, 0
      %v1110 = vsel %vm1099, %v938, 0
      %v1113 = vsel %vm1099, %v939, 0
      %v1116 = vsel %vm1099, %v940, 0
      %v1119 = vsel %vm1099, %v941, 0
      %v1122 = vsel %vm1099, %v942, 0
      %v1125 = vsel %vm1099, %v943, 0
      %v1128 = vsel %vm1099, %v944, 0
      %v1131 = vsel %vm1099, %v945, 0
      %v1134 = vsel %vm1099, %v946, 0
      %v1137 = vsel %vm1099, %v947, 0
      %v1140 = vsel %vm1099, %v948, 0
      %v1143 = vsel %vm1099, %v949, 0
      %v1146 = vsel %vm1099, %v950, 0
      %1148 = vmatprep.subr.bf16.mxu0 %v792
      %1149 = vmatpush1.bf16.msra.mxu0 %v791
      %1150 = vmatprep.subr.bf16.mxu0 %v808
      %1151 = vmatpush1.bf16.msra.mxu0 %v807
      %1152 = vmatprep.subr.bf16.mxu0 %v824
      %1153 = vmatpush1.bf16.msra.mxu0 %v823
      %1154 = vmatprep.subr.bf16.mxu0 %v840
      %1155 = vmatpush1.bf16.msra.mxu0 %v839
      %1156 = vmatprep.subr.bf16.mxu0 %v856
      %1157 = vmatpush1.bf16.msra.mxu0 %v855
      %1158 = vmatprep.subr.bf16.mxu0 %v872
      %1159 = vmatpush1.bf16.msra.mxu0 %v871
      %1160 = vmatprep.subr.bf16.mxu0 %v888
      %1161 = vmatpush1.bf16.msra.mxu0 %v887
      %1162 = vmatprep.subr.bf16.mxu0 %v904
      %1163 = vmatpush1.bf16.msra.mxu0 %v903
      %1164 = vmatprep.subr.bf16.mxu0 %v920
      %1165 = vmatpush1.bf16.msra.mxu0 %v919
      %1166 = vmatprep.subr.bf16.mxu0 %v1104
      %1167 = vmatpush1.bf16.msra.mxu0 %v1101
      %1168 = vmatprep.subr.bf16.mxu0 0
      %1169 = vmatpush1.bf16.msra.mxu0 0
      %1170 = vmatprep.subr.bf16.mxu0 0
      %1171 = vmatpush1.bf16.msra.mxu0 0
      %1172 = vmatprep.subr.bf16.mxu0 0
      %1173 = vmatpush1.bf16.msra.mxu0 0
      %1174 = vmatprep.subr.bf16.mxu0 0
      %1175 = vmatpush1.bf16.msra.mxu0 0
      %1176 = vmatprep.subr.bf16.mxu0 0
      %1177 = vmatpush1.bf16.msra.mxu0 0
      %1178 = vmatprep.subr.bf16.mxu0 0
      %1179 = vmatpush1.bf16.msra.mxu0 0
      %1180 = vmatprep.mubr.bf16.mxu0 %v1097
      %1181 = vmatmul.mubr.bf16.gmra.mrb[0].mxu0 %v332
      %v1182 = vpop.f32.mrb[0].mxu0
      %v1183 = vadd.f32 0.0, %v1182
      %v1184 = vpop.f32.mrb[0].mxu0
      %v1185 = vadd.f32 0.0, %v1184
      %v1186 = vpop.f32.mrb[0].mxu0
      %v1187 = vadd.f32 0.0, %v1186
      %v1188 = vpop.f32.mrb[0].mxu0
      %v1189 = vadd.f32 0.0, %v1188
      %1190 = vdwg.mxu0
      %1191 = vmatprep.subr.bf16.mxu0 %v794
      %1192 = vmatpush1.bf16.msra.mxu0 %v793
      %1193 = vmatprep.subr.bf16.mxu0 %v810
      %1194 = vmatpush1.bf16.msra.mxu0 %v809
      %1195 = vmatprep.subr.bf16.mxu0 %v826
      %1196 = vmatpush1.bf16.msra.mxu0 %v825
      %1197 = vmatprep.subr.bf16.mxu0 %v842
      %1198 = vmatpush1.bf16.msra.mxu0 %v841
      %1199 = vmatprep.subr.bf16.mxu0 %v858
      %1200 = vmatpush1.bf16.msra.mxu0 %v857
      %1201 = vmatprep.subr.bf16.mxu0 %v874
      %1202 = vmatpush1.bf16.msra.mxu0 %v873
      %1203 = vmatprep.subr.bf16.mxu0 %v890
      %1204 = vmatpush1.bf16.msra.mxu0 %v889
      %1205 = vmatprep.subr.bf16.mxu0 %v906
      %1206 = vmatpush1.bf16.msra.mxu0 %v905
      %1207 = vmatprep.subr.bf16.mxu0 %v922
      %1208 = vmatpush1.bf16.msra.mxu0 %v921
      %1209 = vmatprep.subr.bf16.mxu0 %v1110
      %1210 = vmatpush1.bf16.msra.mxu0 %v1107
      %1211 = vmatprep.subr.bf16.mxu0 0
      %1212 = vmatpush1.bf16.msra.mxu0 0
      %1213 = vmatprep.subr.bf16.mxu0 0
      %1214 = vmatpush1.bf16.msra.mxu0 0
      %1215 = vmatprep.subr.bf16.mxu0 0
      %1216 = vmatpush1.bf16.msra.mxu0 0
      %1217 = vmatprep.subr.bf16.mxu0 0
      %1218 = vmatpush1.bf16.msra.mxu0 0
      %1219 = vmatprep.subr.bf16.mxu0 0
      %1220 = vmatpush1.bf16.msra.mxu0 0
      %1221 = vmatprep.subr.bf16.mxu0 0
      %1222 = vmatpush1.bf16.msra.mxu0 0
      %1223 = vmatprep.mubr.bf16.mxu0 %v1097
      %1224 = vmatmul.mubr.bf16.gmra.mrb[0].mxu0 %v332
      %v1225 = vpop.f32.mrb[0].mxu0
      %v1226 = vadd.f32 0.0, %v1225
      %v1227 = vpop.f32.mrb[0].mxu0
      %v1228 = vadd.f32 0.0, %v1227
      %v1229 = vpop.f32.mrb[0].mxu0
      %v1230 = vadd.f32 0.0, %v1229
      %v1231 = vpop.f32.mrb[0].mxu0
      %v1232 = vadd.f32 0.0, %v1231
      %1233 = vdwg.mxu0
      %1234 = vmatprep.subr.bf16.mxu0 %v796
      %1235 = vmatpush1.bf16.msra.mxu0 %v795
      %1236 = vmatprep.subr.bf16.mxu0 %v812
      %1237 = vmatpush1.bf16.msra.mxu0 %v811
      %1238 = vmatprep.subr.bf16.mxu0 %v828
      %1239 = vmatpush1.bf16.msra.mxu0 %v827
      %1240 = vmatprep.subr.bf16.mxu0 %v844
      %1241 = vmatpush1.bf16.msra.mxu0 %v843
      %1242 = vmatprep.subr.bf16.mxu0 %v860
      %1243 = vmatpush1.bf16.msra.mxu0 %v859
      %1244 = vmatprep.subr.bf16.mxu0 %v876
      %1245 = vmatpush1.bf16.msra.mxu0 %v875
      %1246 = vmatprep.subr.bf16.mxu0 %v892
      %1247 = vmatpush1.bf16.msra.mxu0 %v891
      %1248 = vmatprep.subr.bf16.mxu0 %v908
      %1249 = vmatpush1.bf16.msra.mxu0 %v907
      %1250 = vmatprep.subr.bf16.mxu0 %v924
      %1251 = vmatpush1.bf16.msra.mxu0 %v923
      %1252 = vmatprep.subr.bf16.mxu0 %v1116
      %1253 = vmatpush1.bf16.msra.mxu0 %v1113
      %1254 = vmatprep.subr.bf16.mxu0 0
      %1255 = vmatpush1.bf16.msra.mxu0 0
      %1256 = vmatprep.subr.bf16.mxu0 0
      %1257 = vmatpush1.bf16.msra.mxu0 0
      %1258 = vmatprep.subr.bf16.mxu0 0
      %1259 = vmatpush1.bf16.msra.mxu0 0
      %1260 = vmatprep.subr.bf16.mxu0 0
      %1261 = vmatpush1.bf16.msra.mxu0 0
      %1262 = vmatprep.subr.bf16.mxu0 0
      %1263 = vmatpush1.bf16.msra.mxu0 0
      %1264 = vmatprep.subr.bf16.mxu0 0
      %1265 = vmatpush1.bf16.msra.mxu0 0
      %1266 = vmatprep.mubr.bf16.mxu0 %v1097
      %1267 = vmatmul.mubr.bf16.gmra.mrb[0].mxu0 %v332
      %v1268 = vpop.f32.mrb[0].mxu0
      %v1269 = vadd.f32 0.0, %v1268
      %v1270 = vpop.f32.mrb[0].mxu0
      %v1271 = vadd.f32 0.0, %v1270
      %v1272 = vpop.f32.mrb[0].mxu0
      %v1273 = vadd.f32 0.0, %v1272
      %v1274 = vpop.f32.mrb[0].mxu0
      %v1275 = vadd.f32 0.0, %v1274
      %1276 = vdwg.mxu0
      %1277 = vmatprep.subr.bf16.mxu0 %v798
      %1278 = vmatpush1.bf16.msra.mxu0 %v797
      %1279 = vmatprep.subr.bf16.mxu0 %v814
      %1280 = vmatpush1.bf16.msra.mxu0 %v813
      %1281 = vmatprep.subr.bf16.mxu0 %v830
      %1282 = vmatpush1.bf16.msra.mxu0 %v829
      %1283 = vmatprep.subr.bf16.mxu0 %v846
      %1284 = vmatpush1.bf16.msra.mxu0 %v845
      %1285 = vmatprep.subr.bf16.mxu0 %v862
      %1286 = vmatpush1.bf16.msra.mxu0 %v861
      %1287 = vmatprep.subr.bf16.mxu0 %v878
      %1288 = vmatpush1.bf16.msra.mxu0 %v877
      %1289 = vmatprep.subr.bf16.mxu0 %v894
      %1290 = vmatpush1.bf16.msra.mxu0 %v893
      %1291 = vmatprep.subr.bf16.mxu0 %v910
      %1292 = vmatpush1.bf16.msra.mxu0 %v909
      %1293 = vmatprep.subr.bf16.mxu0 %v926
      %1294 = vmatpush1.bf16.msra.mxu0 %v925
      %1295 = vmatprep.subr.bf16.mxu0 %v1122
      %1296 = vmatpush1.bf16.msra.mxu0 %v1119
      %1297 = vmatprep.subr.bf16.mxu0 0
      %1298 = vmatpush1.bf16.msra.mxu0 0
      %1299 = vmatprep.subr.bf16.mxu0 0
      %1300 = vmatpush1.bf16.msra.mxu0 0
      %1301 = vmatprep.subr.bf16.mxu0 0
      %1302 = vmatpush1.bf16.msra.mxu0 0
      %1303 = vmatprep.subr.bf16.mxu0 0
      %1304 = vmatpush1.bf16.msra.mxu0 0
      %1305 = vmatprep.subr.bf16.mxu0 0
      %1306 = vmatpush1.bf16.msra.mxu0 0
      %1307 = vmatprep.subr.bf16.mxu0 0
      %1308 = vmatpush1.bf16.msra.mxu0 0
      %1309 = vmatprep.mubr.bf16.mxu0 %v1097
      %1310 = vmatmul.mubr.bf16.gmra.mrb[0].mxu0 %v332
      %v1311 = vpop.f32.mrb[0].mxu0
      %v1312 = vadd.f32 0.0, %v1311
      %v1313 = vpop.f32.mrb[0].mxu0
      %v1314 = vadd.f32 0.0, %v1313
      %v1315 = vpop.f32.mrb[0].mxu0
      %v1316 = vadd.f32 0.0, %v1315
      %v1317 = vpop.f32.mrb[0].mxu0
      %v1318 = vadd.f32 0.0, %v1317
      %1319 = vdwg.mxu0
      %1320 = vmatprep.subr.bf16.mxu0 %v800
      %1321 = vmatpush1.bf16.msra.mxu0 %v799
      %1322 = vmatprep.subr.bf16.mxu0 %v816
      %1323 = vmatpush1.bf16.msra.mxu0 %v815
      %1324 = vmatprep.subr.bf16.mxu0 %v832
      %1325 = vmatpush1.bf16.msra.mxu0 %v831
      %1326 = vmatprep.subr.bf16.mxu0 %v848
      %1327 = vmatpush1.bf16.msra.mxu0 %v847
      %1328 = vmatprep.subr.bf16.mxu0 %v864
      %1329 = vmatpush1.bf16.msra.mxu0 %v863
      %1330 = vmatprep.subr.bf16.mxu0 %v880
      %1331 = vmatpush1.bf16.msra.mxu0 %v879
      %1332 = vmatprep.subr.bf16.mxu0 %v896
      %1333 = vmatpush1.bf16.msra.mxu0 %v895
      %1334 = vmatprep.subr.bf16.mxu0 %v912
      %1335 = vmatpush1.bf16.msra.mxu0 %v911
      %1336 = vmatprep.subr.bf16.mxu0 %v928
      %1337 = vmatpush1.bf16.msra.mxu0 %v927
      %1338 = vmatprep.subr.bf16.mxu0 %v1128
      %1339 = vmatpush1.bf16.msra.mxu0 %v1125
      %1340 = vmatprep.subr.bf16.mxu0 0
      %1341 = vmatpush1.bf16.msra.mxu0 0
      %1342 = vmatprep.subr.bf16.mxu0 0
      %1343 = vmatpush1.bf16.msra.mxu0 0
      %1344 = vmatprep.subr.bf16.mxu0 0
      %1345 = vmatpush1.bf16.msra.mxu0 0
      %1346 = vmatprep.subr.bf16.mxu0 0
      %1347 = vmatpush1.bf16.msra.mxu0 0
      %1348 = vmatprep.subr.bf16.mxu0 0
      %1349 = vmatpush1.bf16.msra.mxu0 0
      %1350 = vmatprep.subr.bf16.mxu0 0
      %1351 = vmatpush1.bf16.msra.mxu0 0
      %1352 = vmatprep.mubr.bf16.mxu0 %v1097
      %1353 = vmatmul.mubr.bf16.gmra.mrb[0].mxu0 %v332
      %v1354 = vpop.f32.mrb[0].mxu0
      %v1355 = vadd.f32 0.0, %v1354
      %v1356 = vpop.f32.mrb[0].mxu0
      %v1357 = vadd.f32 0.0, %v1356
      %v1358 = vpop.f32.mrb[0].mxu0
      %v1359 = vadd.f32 0.0, %v1358
      %v1360 = vpop.f32.mrb[0].mxu0
      %v1361 = vadd.f32 0.0, %v1360
      %1362 = vdwg.mxu0
      %1363 = vmatprep.subr.bf16.mxu0 %v802
      %1364 = vmatpush1.bf16.msra.mxu0 %v801
      %1365 = vmatprep.subr.bf16.mxu0 %v818
      %1366 = vmatpush1.bf16.msra.mxu0 %v817
      %1367 = vmatprep.subr.bf16.mxu0 %v834
      %1368 = vmatpush1.bf16.msra.mxu0 %v833
      %1369 = vmatprep.subr.bf16.mxu0 %v850
      %1370 = vmatpush1.bf16.msra.mxu0 %v849
      %1371 = vmatprep.subr.bf16.mxu0 %v866
      %1372 = vmatpush1.bf16.msra.mxu0 %v865
      %1373 = vmatprep.subr.bf16.mxu0 %v882
      %1374 = vmatpush1.bf16.msra.mxu0 %v881
      %1375 = vmatprep.subr.bf16.mxu0 %v898
      %1376 = vmatpush1.bf16.msra.mxu0 %v897
      %1377 = vmatprep.subr.bf16.mxu0 %v914
      %1378 = vmatpush1.bf16.msra.mxu0 %v913
      %1379 = vmatprep.subr.bf16.mxu0 %v930
      %1380 = vmatpush1.bf16.msra.mxu0 %v929
      %1381 = vmatprep.subr.bf16.mxu0 %v1134
      %1382 = vmatpush1.bf16.msra.mxu0 %v1131
      %1383 = vmatprep.subr.bf16.mxu0 0
      %1384 = vmatpush1.bf16.msra.mxu0 0
      %1385 = vmatprep.subr.bf16.mxu0 0
      %1386 = vmatpush1.bf16.msra.mxu0 0
      %1387 = vmatprep.subr.bf16.mxu0 0
      %1388 = vmatpush1.bf16.msra.mxu0 0
      %1389 = vmatprep.subr.bf16.mxu0 0
      %1390 = vmatpush1.bf16.msra.mxu0 0
      %1391 = vmatprep.subr.bf16.mxu0 0
      %1392 = vmatpush1.bf16.msra.mxu0 0
      %1393 = vmatprep.subr.bf16.mxu0 0
      %1394 = vmatpush1.bf16.msra.mxu0 0
      %1395 = vmatprep.mubr.bf16.mxu0 %v1097
      %1396 = vmatmul.mubr.bf16.gmra.mrb[0].mxu0 %v332
      %v1397 = vpop.f32.mrb[0].mxu0
      %v1398 = vadd.f32 0.0, %v1397
      %v1399 = vpop.f32.mrb[0].mxu0
      %v1400 = vadd.f32 0.0, %v1399
      %v1401 = vpop.f32.mrb[0].mxu0
      %v1402 = vadd.f32 0.0, %v1401
      %v1403 = vpop.f32.mrb[0].mxu0
      %v1404 = vadd.f32 0.0, %v1403
      %1405 = vdwg.mxu0
      %1406 = vmatprep.subr.bf16.mxu0 %v804
      %1407 = vmatpush1.bf16.msra.mxu0 %v803
      %1408 = vmatprep.subr.bf16.mxu0 %v820
      %1409 = vmatpush1.bf16.msra.mxu0 %v819
      %1410 = vmatprep.subr.bf16.mxu0 %v836
      %1411 = vmatpush1.bf16.msra.mxu0 %v835
      %1412 = vmatprep.subr.bf16.mxu0 %v852
      %1413 = vmatpush1.bf16.msra.mxu0 %v851
      %1414 = vmatprep.subr.bf16.mxu0 %v868
      %1415 = vmatpush1.bf16.msra.mxu0 %v867
      %1416 = vmatprep.subr.bf16.mxu0 %v884
      %1417 = vmatpush1.bf16.msra.mxu0 %v883
      %1418 = vmatprep.subr.bf16.mxu0 %v900
      %1419 = vmatpush1.bf16.msra.mxu0 %v899
      %1420 = vmatprep.subr.bf16.mxu0 %v916
      %1421 = vmatpush1.bf16.msra.mxu0 %v915
      %1422 = vmatprep.subr.bf16.mxu0 %v932
      %1423 = vmatpush1.bf16.msra.mxu0 %v931
      %1424 = vmatprep.subr.bf16.mxu0 %v1140
      %1425 = vmatpush1.bf16.msra.mxu0 %v1137
      %1426 = vmatprep.subr.bf16.mxu0 0
      %1427 = vmatpush1.bf16.msra.mxu0 0
      %1428 = vmatprep.subr.bf16.mxu0 0
      %1429 = vmatpush1.bf16.msra.mxu0 0
      %1430 = vmatprep.subr.bf16.mxu0 0
      %1431 = vmatpush1.bf16.msra.mxu0 0
      %1432 = vmatprep.subr.bf16.mxu0 0
      %1433 = vmatpush1.bf16.msra.mxu0 0
      %1434 = vmatprep.subr.bf16.mxu0 0
      %1435 = vmatpush1.bf16.msra.mxu0 0
      %1436 = vmatprep.subr.bf16.mxu0 0
      %1437 = vmatpush1.bf16.msra.mxu0 0
      %1438 = vmatprep.mubr.bf16.mxu0 %v1097
      %1439 = vmatmul.mubr.bf16.gmra.mrb[0].mxu0 %v332
      %v1440 = vpop.f32.mrb[0].mxu0
      %v1441 = vadd.f32 0.0, %v1440
      %v1442 = vpop.f32.mrb[0].mxu0
      %v1443 = vadd.f32 0.0, %v1442
      %v1444 = vpop.f32.mrb[0].mxu0
      %v1445 = vadd.f32 0.0, %v1444
      %v1446 = vpop.f32.mrb[0].mxu0
      %v1447 = vadd.f32 0.0, %v1446
      %1448 = vdwg.mxu0
      %1449 = vmatprep.subr.bf16.mxu0 %v806
      %1450 = vmatpush1.bf16.msra.mxu0 %v805
      %1451 = vmatprep.subr.bf16.mxu0 %v822
      %1452 = vmatpush1.bf16.msra.mxu0 %v821
      %1453 = vmatprep.subr.bf16.mxu0 %v838
      %1454 = vmatpush1.bf16.msra.mxu0 %v837
      %1455 = vmatprep.subr.bf16.mxu0 %v854
      %1456 = vmatpush1.bf16.msra.mxu0 %v853
      %1457 = vmatprep.subr.bf16.mxu0 %v870
      %1458 = vmatpush1.bf16.msra.mxu0 %v869
      %1459 = vmatprep.subr.bf16.mxu0 %v886
      %1460 = vmatpush1.bf16.msra.mxu0 %v885
      %1461 = vmatprep.subr.bf16.mxu0 %v902
      %1462 = vmatpush1.bf16.msra.mxu0 %v901
      %1463 = vmatprep.subr.bf16.mxu0 %v918
      %1464 = vmatpush1.bf16.msra.mxu0 %v917
      %1465 = vmatprep.subr.bf16.mxu0 %v934
      %1466 = vmatpush1.bf16.msra.mxu0 %v933
      %1467 = vmatprep.subr.bf16.mxu0 %v1146
      %1468 = vmatpush1.bf16.msra.mxu0 %v1143
      %1469 = vmatprep.subr.bf16.mxu0 0
      %1470 = vmatpush1.bf16.msra.mxu0 0
      %1471 = vmatprep.subr.bf16.mxu0 0
      %1472 = vmatpush1.bf16.msra.mxu0 0
      %1473 = vmatprep.subr.bf16.mxu0 0
      %1474 = vmatpush1.bf16.msra.mxu0 0
      %1475 = vmatprep.subr.bf16.mxu0 0
      %1476 = vmatpush1.bf16.msra.mxu0 0
      %1477 = vmatprep.subr.bf16.mxu0 0
      %1478 = vmatpush1.bf16.msra.mxu0 0
      %1479 = vmatprep.subr.bf16.mxu0 0
      %1480 = vmatpush1.bf16.msra.mxu0 0
      %1481 = vmatprep.mubr.bf16.mxu0 %v1097
      %1482 = vmatmul.mubr.bf16.gmra.mrb[0].mxu0 %v332
      %v1483 = vpop.f32.mrb[0].mxu0
      %v1484 = vadd.f32 0.0, %v1483
      %v1485 = vpop.f32.mrb[0].mxu0
      %v1486 = vadd.f32 0.0, %v1485
      %v1487 = vpop.f32.mrb[0].mxu0
      %v1488 = vadd.f32 0.0, %v1487
      %v1489 = vpop.f32.mrb[0].mxu0
      %v1490 = vadd.f32 0.0, %v1489
      %1491 = vdwg.mxu0
      %v1492 = vmax.f32 %v1183, %v1269
      %v1493 = vmax.f32 %v1185, %v1271
      %v1494 = vmax.f32 %v1226, %v1312
      %v1495 = vmax.f32 %v1228, %v1314
      %v1496 = vmax.f32 %v1187, %v1273
      %v1497 = vmax.f32 %v1189, %v1275
      %v1498 = vmax.f32 %v1230, %v1316
      %v1499 = vmax.f32 %v1232, %v1318
      %v1500 = vmax.f32 %v1355, %v1441
      %v1501 = vmax.f32 %v1357, %v1443
      %v1502 = vmax.f32 %v1398, %v1484
      %v1503 = vmax.f32 %v1400, %v1486
      %v1504 = vmax.f32 %v1359, %v1445
      %v1505 = vmax.f32 %v1361, %v1447
      %v1506 = vmax.f32 %v1402, %v1488
      %v1507 = vmax.f32 %v1404, %v1490
      %v1508 = vmax.f32 %v1492, %v1500
      %v1509 = vmax.f32 %v1493, %v1501
      %v1510 = vmax.f32 %v1494, %v1502
      %v1511 = vmax.f32 %v1495, %v1503
      %v1512 = vmax.f32 %v1496, %v1504
      %v1513 = vmax.f32 %v1497, %v1505
      %v1514 = vmax.f32 %v1498, %v1506
      %v1515 = vmax.f32 %v1499, %v1507
      %v1516 = vld [vmem:[%s2] sm:$0xff]
      %v1517 = vld [vmem:[%s2 + $0x8] sm:$0xff]
      %1519 = vset.pattern.permute.xlu0 0
      %1520 = vperm.xlu0 %1519, %v1516
      %v1521 = vpop.permute.xlu0 %1520
      %1524 = vset.pattern.permute.xlu0 0
      %1525 = vperm.xlu0 %1524, %v1517
      %v1526 = vpop.permute.xlu0 %1525
      %v1528 = vadd.f32 %v1508, %v1521
      %v1529 = vadd.f32 %v1509, %v1521
      %v1530 = vadd.f32 %v1510, %v1521
      %v1531 = vadd.f32 %v1511, %v1521
      %v1532 = vadd.f32 %v1512, %v1526
      %v1533 = vadd.f32 %v1513, %v1526
      %v1534 = vadd.f32 %v1514, %v1526
      %v1535 = vadd.f32 %v1515, %v1526
      %v1536 = vmax.f32 %v1528, 0.0
      %v1537 = vmax.f32 %v1529, 0.0
      %v1538 = vmax.f32 %v1530, 0.0
      %v1539 = vmax.f32 %v1531, 0.0
      %v1540 = vmax.f32 %v1532, 0.0
      %v1541 = vmax.f32 %v1533, 0.0
      %v1542 = vmax.f32 %v1534, 0.0
      %v1543 = vmax.f32 %v1535, 0.0
      %1544 = vst [vmem:[%s170] sm:$0xff] %v1536
      %1545 = vst [vmem:[%s170 + $0x8] sm:$0xff] %v1537
      %1546 = vst [vmem:[%s170 + $0x10] sm:$0xff] %v1538
      %1547 = vst [vmem:[%s170 + $0x18] sm:$0xff] %v1539
      %1548 = vst [vmem:[%s170 + $0x20] sm:$0xff] %v1540
      %1549 = vst [vmem:[%s170 + $0x28] sm:$0xff] %v1541
      %1550 = vst [vmem:[%s170 + $0x30] sm:$0xff] %v1542
      %1551 = vst [vmem:[%s170 + $0x38] sm:$0xff] %v1543
      %p1552 = scmp.lt.s32.totalorder %s14, 1
      %s1553 = scalar_select %p1552, %s14, 1
      %s1554 = smul.addr %s1553, 8
      %s1555 = smul.addr %s1554, 8
      %s1556 = scalar_lea.vmem %s3, %s1555
      // Predicated region
      $region33: #{net_forward.4} parent=31 // pred_check
        %p1557 = pneg %p100
      $region34: #{net_forward.4} parent=31 // pred_check_branch
        %1559 = sbr.rel (%p1557) target = $region36
      $region35: #{net_forward.4} parent=31 // pred_region
        _
      $region36: #{net_forward.4} parent=31 // pred_fallthru
        _
    $region32: #{net_forward.4} parent=5 // pred_fallthru
      _
    %p1560 = scmp.le.s32.totalorder 2, %s9
    // Predicated region
    $region37: #{net_forward.4} parent=5 // pred_check
      %p1561 = pneg %p1560
    $region38: #{net_forward.4} parent=5 // pred_check_branch
      %1563 = sbr.rel (%p1561) target = $region40
    $region39: #{net_forward.4} parent=5 // pred_region
      %s1564 = ssub.s32 %s9, 2
      // Predicated region
      $region41: #{net_forward.4} parent=39 // pred_check
        %p1565 = pneg %p106
      $region42: #{net_forward.4} parent=39 // pred_check_branch
        %1567 = sbr.rel (%p1565) target = $region44
      $region43: #{net_forward.4} parent=39 // pred_region
        %p1568 = scmp.lt.s32.totalorder %s15, 1
        %s1569 = scalar_select %p1568, %s15, 1
        %s1570 = smul.addr %s1569, 8
        %s1571 = smul.addr %s1570, 8
        %s1572 = scalar_lea.vmem %s3, %s1571
      $region44: #{net_forward.4} parent=39 // pred_fallthru
        _
    $region40: #{net_forward.4} parent=5 // pred_fallthru
      _
  $region6: #{net_forward.4} parent=0 // loop_footer
    %s13 = sadd.s32 1, %s9
  $region7: #{net_forward.4} parent=0 // loop_footer_branch
    %8 = sbr.rel target = $region3
  $region8: #{net_forward.4} parent=0 // loop_exit
    _

// kernel: net_forward.5
$region0: #{net_forward.5}
  #allocation0 [shape = 'u32[]', space=smem, size = 0x4, offset = 0x4, fixed_abs, tag = 'smem constant byte address 0x4 - core index']
  #allocation1 [shape = 'u32[144,128]{1,0:T(1,128)}', space=vmem, size = 0x12000, scoped, tag = 'internal scratch']
  #allocation2 [shape = 'f32[2,896]{1,0:T(2,128)}', space=vmem, size = 0x1c00, scoped, tag = 'scratch operand']
  %s0 = inlined_call_operand.vmem [shape: f32[2,7168], index: 0, kind: input, shape index: {}]
  %s1 = inlined_call_operand.vmem [shape: bf16[7168,896], index: 1, kind: input, shape index: {}]
  %s2 = inlined_call_operand.vmem [shape: f32[1,896], index: 2, kind: input, shape index: {}]
  %s3 = inlined_call_operand.vmem [shape: bf16[896,120], index: 3, kind: input, shape index: {}]
  %s4 = inlined_call_operand.vmem [shape: f32[1,120], index: 4, kind: input, shape index: {}]
  %s5 = inlined_call_operand.vmem [shape: f32[120,2], index: 5, kind: input, shape index: {}]
  %s6 = inlined_call_operand.vmem [shape: f32[1,2], index: 6, kind: input, shape index: {}]
  %s7 = inlined_call_operand.hbm [shape: f32[2,2], index: 7, kind: output, shape index: {}]
  %s8 = sld [smem:[#allocation0]]
  $region69: #{net_forward.5} parent=0
    _
  %s10 = ssub.s32 1, %s8
  %s11 = scalar_select 0, %s10, %s8
  $region1: #{net_forward.5} parent=0
    #allocation3 [shape = 'u8[1024]{0}', space=vmem, size = 0x400, scoped, tag = 'output window, operand 0, single buffered']
    #allocation4 [shape = 's32[2]{0}', space=sflag, size = 0x8, scoped, tag = 'scoped memory for net_forward.5']
    %12 = vsyncpa [#allocation4], 0
    loop: start=0, step=1, limit=6
    $region2: #{net_forward.5} parent=1 // loop_pre_header
      _
    $region3: #{net_forward.5} parent=1 // loop_header
      %s14 = sphi 0, %s18
      %p15 = scmp.ge.s32.totalorder %s14, 6
      %s24 = sphi 0, %s26
      %s27 = sphi 0, %s24
      %s28 = sphi 0, %s27
      %s44 = sphi 0, %s28
      %s50 = sphi 0, %s52
      %s53 = sphi 0, %s50
      %s54 = sphi 0, %s53
      %s70 = sphi 0, %s54
      %s74 = sphi 0, %s74
      %s76 = sphi 0, %s74
      %s77 = sphi 0, %s76
      %s91 = sphi 0, %s77
      %s95 = sphi 0, %s95
      %s97 = sphi 0, %s95
      %s98 = sphi 0, %s97
      %s112 = sphi 0, %s98
      %s116 = sphi 0, %s116
      %s118 = sphi 0, %s116
      %s119 = sphi 0, %s118
      %s133 = sphi 0, %s119
      %s137 = sphi 0, %s137
      %s139 = sphi 0, %s137
      %s140 = sphi 0, %s139
      %s154 = sphi 0, %s140
      %s158 = sphi 0, %s158
      %s160 = sphi 0, %s158
      %s161 = sphi 0, %s160
      %s175 = sphi 0, %s161
      %s179 = sphi 0, %s179
      %s181 = sphi 0, %s179
      %s182 = sphi 0, %s181
      %s196 = sphi 0, %s182
    $region4: #{net_forward.5} parent=1 // loop_header_branch
      %17 = sbr.rel (%p15) target = $region8
    $region5: #{net_forward.5} parent=1 // loop_body
      %s19 = ssub.s32 %s14, 1
      %s20 = ssub.s32 %s14, 2
      %s21 = sadd.s32 %s14, 1
      %s22 = ssub.s32 %s14, %s21
      %p23 = scmp.eq.s32.totalorder %s22, 0
      %s25 = sadd.s32 %s24, 1
      %s26 = scalar_select %p23, %s24, %s25
      %p29 = pneg %p23
      %p30 = scmp.eq.s32.totalorder %s14, 3
      %p31 = por %p29, %p30
      %p32 = scmp.ne.s32.totalorder %s24, %s27
      %p33 = scmp.eq.s32.totalorder %s14, 0
      %p34 = por %p32, %p33
      %p35 = scmp.ne.s32.totalorder %s24, %s27
      %p36 = scmp.eq.s32.totalorder %s19, 3
      %p37 = por %p35, %p36
      %p38 = scmp.ne.s32.totalorder %s27, %s28
      %p39 = scmp.eq.s32.totalorder %s19, 0
      %p40 = por %p38, %p39
      %p41 = scmp.ne.s32.totalorder %s27, %s28
      %p42 = scmp.eq.s32.totalorder %s20, 3
      %p43 = por %p41, %p42
      %p45 = scmp.ne.s32.totalorder %s28, %s44
      %p46 = scmp.eq.s32.totalorder %s20, 0
      %p47 = por %p45, %p46
      %s48 = ssub.s32 %s14, %s21
      %p49 = scmp.eq.s32.totalorder %s48, 0
      %s51 = sadd.s32 %s50, 1
      %s52 = scalar_select %p49, %s50, %s51
      %p55 = pneg %p49
      %p56 = scmp.eq.s32.totalorder %s14, 3
      %p57 = por %p55, %p56
      %p58 = scmp.ne.s32.totalorder %s50, %s53
      %p59 = scmp.eq.s32.totalorder %s14, 0
      %p60 = por %p58, %p59
      %p61 = scmp.ne.s32.totalorder %s50, %s53
      %p62 = scmp.eq.s32.totalorder %s19, 3
      %p63 = por %p61, %p62
      %p64 = scmp.ne.s32.totalorder %s53, %s54
      %p65 = scmp.eq.s32.totalorder %s19, 0
      %p66 = por %p64, %p65
      %p67 = scmp.ne.s32.totalorder %s53, %s54
      %p68 = scmp.eq.s32.totalorder %s20, 3
      %p69 = por %p67, %p68
      %p71 = scmp.ne.s32.totalorder %s54, %s70
      %p72 = scmp.eq.s32.totalorder %s20, 0
      %p73 = por %p71, %p72
      %s75 = sadd.s32 %s74, 1
      %p78 = scmp.eq.s32.totalorder %s14, 3
      %p79 = scmp.ne.s32.totalorder %s74, %s76
      %p80 = scmp.eq.s32.totalorder %s14, 0
      %p81 = por %p79, %p80
      %p82 = scmp.ne.s32.totalorder %s74, %s76
      %p83 = scmp.eq.s32.totalorder %s19, 3
      %p84 = por %p82, %p83
      %p85 = scmp.ne.s32.totalorder %s76, %s77
      %p86 = scmp.eq.s32.totalorder %s19, 0
      %p87 = por %p85, %p86
      %p88 = scmp.ne.s32.totalorder %s76, %s77
      %p89 = scmp.eq.s32.totalorder %s20, 3
      %p90 = por %p88, %p89
      %p92 = scmp.ne.s32.totalorder %s77, %s91
      %p93 = scmp.eq.s32.totalorder %s20, 0
      %p94 = por %p92, %p93
      %s96 = sadd.s32 %s95, 1
      %p99 = scmp.eq.s32.totalorder %s14, 3
      %p100 = scmp.ne.s32.totalorder %s95, %s97
      %p101 = scmp.eq.s32.totalorder %s14, 0
      %p102 = por %p100, %p101
      %p103 = scmp.ne.s32.totalorder %s95, %s97
      %p104 = scmp.eq.s32.totalorder %s19, 3
      %p105 = por %p103, %p104
      %p106 = scmp.ne.s32.totalorder %s97, %s98
      %p107 = scmp.eq.s32.totalorder %s19, 0
      %p108 = por %p106, %p107
      %p109 = scmp.ne.s32.totalorder %s97, %s98
      %p110 = scmp.eq.s32.totalorder %s20, 3
      %p111 = por %p109, %p110
      %p113 = scmp.ne.s32.totalorder %s98, %s112
      %p114 = scmp.eq.s32.totalorder %s20, 0
      %p115 = por %p113, %p114
      %s117 = sadd.s32 %s116, 1
      %p120 = scmp.eq.s32.totalorder %s14, 3
      %p121 = scmp.ne.s32.totalorder %s116, %s118
      %p122 = scmp.eq.s32.totalorder %s14, 0
      %p123 = por %p121, %p122
      %p124 = scmp.ne.s32.totalorder %s116, %s118
      %p125 = scmp.eq.s32.totalorder %s19, 3
      %p126 = por %p124, %p125
      %p127 = scmp.ne.s32.totalorder %s118, %s119
      %p128 = scmp.eq.s32.totalorder %s19, 0
      %p129 = por %p127, %p128
      %p130 = scmp.ne.s32.totalorder %s118, %s119
      %p131 = scmp.eq.s32.totalorder %s20, 3
      %p132 = por %p130, %p131
      %p134 = scmp.ne.s32.totalorder %s119, %s133
      %p135 = scmp.eq.s32.totalorder %s20, 0
      %p136 = por %p134, %p135
      %s138 = sadd.s32 %s137, 1
      %p141 = scmp.eq.s32.totalorder %s14, 3
      %p142 = scmp.ne.s32.totalorder %s137, %s139
      %p143 = scmp.eq.s32.totalorder %s14, 0
      %p144 = por %p142, %p143
      %p145 = scmp.ne.s32.totalorder %s137, %s139
      %p146 = scmp.eq.s32.totalorder %s19, 3
      %p147 = por %p145, %p146
      %p148 = scmp.ne.s32.totalorder %s139, %s140
      %p149 = scmp.eq.s32.totalorder %s19, 0
      %p150 = por %p148, %p149
      %p151 = scmp.ne.s32.totalorder %s139, %s140
      %p152 = scmp.eq.s32.totalorder %s20, 3
      %p153 = por %p151, %p152
      %p155 = scmp.ne.s32.totalorder %s140, %s154
      %p156 = scmp.eq.s32.totalorder %s20, 0
      %p157 = por %p155, %p156
      %s159 = sadd.s32 %s158, 1
      %p162 = scmp.eq.s32.totalorder %s14, 3
      %p163 = scmp.ne.s32.totalorder %s158, %s160
      %p164 = scmp.eq.s32.totalorder %s14, 0
      %p165 = por %p163, %p164
      %p166 = scmp.ne.s32.totalorder %s158, %s160
      %p167 = scmp.eq.s32.totalorder %s19, 3
      %p168 = por %p166, %p167
      %p169 = scmp.ne.s32.totalorder %s160, %s161
      %p170 = scmp.eq.s32.totalorder %s19, 0
      %p171 = por %p169, %p170
      %p172 = scmp.ne.s32.totalorder %s160, %s161
      %p173 = scmp.eq.s32.totalorder %s20, 3
      %p174 = por %p172, %p173
      %p176 = scmp.ne.s32.totalorder %s161, %s175
      %p177 = scmp.eq.s32.totalorder %s20, 0
      %p178 = por %p176, %p177
      %s180 = sadd.s32 %s179, 1
      %p183 = scmp.eq.s32.totalorder %s14, 3
      %p184 = scmp.ne.s32.totalorder %s179, %s181
      %p185 = scmp.eq.s32.totalorder %s14, 0
      %p186 = por %p184, %p185
      %p187 = scmp.ne.s32.totalorder %s179, %s181
      %p188 = scmp.eq.s32.totalorder %s19, 3
      %p189 = por %p187, %p188
      %p190 = scmp.ne.s32.totalorder %s181, %s182
      %p191 = scmp.eq.s32.totalorder %s19, 0
      %p192 = por %p190, %p191
      %p193 = scmp.ne.s32.totalorder %s181, %s182
      %p194 = scmp.eq.s32.totalorder %s20, 3
      %p195 = por %p193, %p194
      %p197 = scmp.ne.s32.totalorder %s182, %s196
      %p198 = scmp.eq.s32.totalorder %s20, 0
      %p199 = por %p197, %p198
      %p200 = scmp.le.s32.totalorder 1, %s14
      %p201 = scmp.lt.s32.totalorder %s14, 5
      %p202 = pnand %p200, %p201
      %p203 = pneg %p202
      // Predicated region
      $region9: #{net_forward.5} parent=5 // pred_check
        _
      $region10: #{net_forward.5} parent=5 // pred_check_branch
        %205 = sbr.rel (%p202) target = $region12
      $region11: #{net_forward.5} parent=5 // pred_region
        %s206 = ssub.s32 %s14, 1
        // Predicated region
        $region13: #{net_forward.5} parent=11 // pred_check
          %p207 = pneg %p87
        $region14: #{net_forward.5} parent=11 // pred_check_branch
          %209 = sbr.rel (%p207) target = $region16
        $region15: #{net_forward.5} parent=11 // pred_region
          _
        $region16: #{net_forward.5} parent=11 // pred_fallthru
          _
        // Predicated region
        $region17: #{net_forward.5} parent=11 // pred_check
          %p210 = pneg %p108
        $region18: #{net_forward.5} parent=11 // pred_check_branch
          %212 = sbr.rel (%p210) target = $region20
        $region19: #{net_forward.5} parent=11 // pred_region
          _
        $region20: #{net_forward.5} parent=11 // pred_fallthru
          _
        // Predicated region
        $region21: #{net_forward.5} parent=11 // pred_check
          %p213 = pneg %p129
        $region22: #{net_forward.5} parent=11 // pred_check_branch
          %215 = sbr.rel (%p213) target = $region24
        $region23: #{net_forward.5} parent=11 // pred_region
          _
        $region24: #{net_forward.5} parent=11 // pred_fallthru
          _
        // Predicated region
        $region25: #{net_forward.5} parent=11 // pred_check
          %p216 = pneg %p150
        $region26: #{net_forward.5} parent=11 // pred_check_branch
          %218 = sbr.rel (%p216) target = $region28
        $region27: #{net_forward.5} parent=11 // pred_region
          _
        $region28: #{net_forward.5} parent=11 // pred_fallthru
          _
        // Predicated region
        $region29: #{net_forward.5} parent=11 // pred_check
          %p219 = pneg %p171
        $region30: #{net_forward.5} parent=11 // pred_check_branch
          %221 = sbr.rel (%p219) target = $region32
        $region31: #{net_forward.5} parent=11 // pred_region
          _
        $region32: #{net_forward.5} parent=11 // pred_fallthru
          _
      $region12: #{net_forward.5} parent=5 // pred_fallthru
        _
      %p222 = scmp.lt.s32.totalorder %s14, 4
      // Predicated region
      $region33: #{net_forward.5} parent=5 // pred_check
        %p223 = pneg %p222
      $region34: #{net_forward.5} parent=5 // pred_check_branch
        %225 = sbr.rel (%p223) target = $region36
      $region35: #{net_forward.5} parent=5 // pred_region
        // Predicated region
        $region37: #{net_forward.5} parent=35 // pred_check
          %p226 = pneg %p34
        $region38: #{net_forward.5} parent=35 // pred_check_branch
          %228 = sbr.rel (%p226) target = $region40
        $region39: #{net_forward.5} parent=35 // pred_region
          %s229 = smul.u32 14, %s14
          %p230 = scmp.lt.s32.totalorder %s229, 55
          %s231 = scalar_select %p230, %s229, 55
          %s232 = smul.addr %s231, 2
          %s233 = scalar_lea.vmem %s0, %s232
          %s234 = smul.u32 14, %s14
        $region40: #{net_forward.5} parent=35 // pred_fallthru
          _
        // Predicated region
        $region41: #{net_forward.5} parent=35 // pred_check
          %p235 = pneg %p60
        $region42: #{net_forward.5} parent=35 // pred_check_branch
          %237 = sbr.rel (%p235) target = $region44
        $region43: #{net_forward.5} parent=35 // pred_region
          %s238 = smul.u32 224, %s14
          %p239 = scmp.lt.s32.totalorder %s238, 895
          %s240 = scalar_select %p239, %s238, 895
          %s241 = smul.addr %s240, 7
          %s242 = smul.addr %s241, 4
          %s243 = scalar_lea.vmem %s1, %s242
          %s244 = smul.u32 224, %s14
        $region44: #{net_forward.5} parent=35 // pred_fallthru
          _
      $region36: #{net_forward.5} parent=5 // pred_fallthru
        _
      %p245 = scmp.le.s32.totalorder 1, %s14
      %p246 = scmp.lt.s32.totalorder %s14, 5
      %p247 = pnand %p245, %p246
      %p248 = pneg %p247
      // Predicated region
      $region45: #{net_forward.5} parent=5 // pred_check
        _
      $region46: #{net_forward.5} parent=5 // pred_check_branch
        %250 = sbr.rel (%p247) target = $region48
      $region47: #{net_forward.5} parent=5 // pred_region
        %s251 = ssub.s32 %s14, 1
        %s252 = smul.u32 14, %s19
        %p253 = scmp.lt.s32.totalorder %s252, 55
        %s254 = scalar_select %p253, %s252, 55
        %s255 = smul.addr %s254, 2
        %s256 = scalar_lea.vmem %s0, %s255
        %p257 = pneg %p40
        %p258 = pneg %p37
        %s259 = smul.u32 224, %s19
        %p260 = scmp.lt.s32.totalorder %s259, 895
        %s261 = scalar_select %p260, %s259, 895
        %s262 = smul.addr %s261, 7
        %s263 = smul.addr %s262, 4
        %s264 = scalar_lea.vmem %s1, %s263
        %p265 = pneg %p66
        %p266 = pneg %p63
        %p267 = pneg %p87
        %p268 = pneg %p84
        %p269 = pneg %p108
        %p270 = pneg %p105
        %p271 = pneg %p129
        %p272 = pneg %p126
        %p273 = pneg %p150
        %p274 = pneg %p147
        %p275 = pneg %p171
        %p276 = pneg %p168
        %p277 = pneg %p192
        %p278 = pneg %p189
        %s279 = smul.u32 14, %s19
        %p280 = scmp.lt.s32.totalorder %s279, 55
        %s281 = scalar_select %p280, %s279, 55
        %s282 = smul.addr %s281, 2
        %s283 = scalar_lea.vmem %s0, %s282
        %s284 = smul.u32 14, %s19
        %s285 = smul.u32 224, %s19
        %p286 = scmp.lt.s32.totalorder %s285, 895
        %s287 = scalar_select %p286, %s285, 895
        %s288 = smul.addr %s287, 7
        %s289 = smul.addr %s288, 4
        %s290 = scalar_lea.vmem %s1, %s289
        %s291 = smul.u32 224, %s19
        %p293 = scmp.eq.s32.totalorder %s19, 0
        // Predicated region
        $region49: #{net_forward.5} parent=47 // pred_check
          %p294 = pneg %p293
        $region50: #{net_forward.5} parent=47 // pred_check_branch
          %296 = sbr.rel (%p294) target = $region52
        $region51: #{net_forward.5} parent=47 // pred_region
          %297 = vst [vmem:[#allocation2] sm:$0xff] 0.0
          %298 = vst [vmem:[#allocation2 + $0x8] sm:$0x3f] 0.0
        $region52: #{net_forward.5} parent=47 // pred_fallthru
          _
        %v299 = vld [vmem:[#allocation2] sm:$0xff]
        %v300 = vld [vmem:[#allocation2 + $0x8] sm:$0x3f]
        %v301 = vld [vmem:[%s283] sm:$0xff]
        %v302 = vld [vmem:[%s283 + $0x8] sm:$0xff]
        %v303 = vld [vmem:[%s283 + $0x10] sm:$0xff]
        %v304 = vld [vmem:[%s283 + $0x18] sm:$0xf]
        %v309 = vcombine.high %v301, %v301
        %v311 = vunpack.c.l.s4 1983009808
        %v312 = vunpack.c.0.s8 %v311
        %v313 = vlaneseq
        %v314 = vshrl.u32 %v313, 7
        %v315 = vsub.s32 %v312, %v314
        %v316 = vrot.slane %v301, %v315
        %v318 = vunpack.c.l.s4 1983009808
        %v319 = vunpack.c.0.s8 %v318
        %v320 = vlaneseq
        %v321 = vshrl.u32 %v320, 7
        %v322 = vsub.s32 %v319, %v321
        %v323 = vrot.slane %v309, %v322
        %v324 = vcombine.high %v316, %v316
        %v325 = vcombine.high %v323, %v323
        %v326 = vcombine.high %v302, %v302
        %v328 = vunpack.c.l.s4 1983009808
        %v329 = vunpack.c.0.s8 %v328
        %v330 = vlaneseq
        %v331 = vshrl.u32 %v330, 7
        %v332 = vsub.s32 %v329, %v331
        %v333 = vrot.slane %v302, %v332
        %v335 = vunpack.c.l.s4 1983009808
        %v336 = vunpack.c.0.s8 %v335
        %v337 = vlaneseq
        %v338 = vshrl.u32 %v337, 7
        %v339 = vsub.s32 %v336, %v338
        %v340 = vrot.slane %v326, %v339
        %v341 = vcombine.high %v333, %v333
        %v342 = vcombine.high %v340, %v340
        %v343 = vcombine.high %v303, %v303
        %v345 = vunpack.c.l.s4 1983009808
        %v346 = vunpack.c.0.s8 %v345
        %v347 = vlaneseq
        %v348 = vshrl.u32 %v347, 7
        %v349 = vsub.s32 %v346, %v348
        %v350 = vrot.slane %v303, %v349
        %v352 = vunpack.c.l.s4 1983009808
        %v353 = vunpack.c.0.s8 %v352
        %v354 = vlaneseq
        %v355 = vshrl.u32 %v354, 7
        %v356 = vsub.s32 %v353, %v355
        %v357 = vrot.slane %v343, %v356
        %v358 = vcombine.high %v350, %v350
        %v359 = vcombine.high %v357, %v357
        %v361 = vunpack.c.l.s4 1983009808
        %v362 = vunpack.c.0.s8 %v361
        %v363 = vlaneseq
        %v364 = vshrl.u32 %v363, 7
        %v365 = vsub.s32 %v362, %v364
        %v366 = vrot.slane %v304, %v365
        %v367 = vcombine.high %v366, %v366
        %v382 = vpack.c.bf16 %v316, %v316
        %v383 = vpack.c.bf16 %v324, %v324
        %v384 = vpack.c.bf16 %v323, %v323
        %v385 = vpack.c.bf16 %v325, %v325
        %v386 = vpack.c.bf16 %v333, %v333
        %v387 = vpack.c.bf16 %v341, %v341
        %v388 = vpack.c.bf16 %v340, %v340
        %v389 = vpack.c.bf16 %v342, %v342
        %v390 = vpack.c.bf16 %v350, %v350
        %v391 = vpack.c.bf16 %v358, %v358
        %v392 = vpack.c.bf16 %v357, %v357
        %v393 = vpack.c.bf16 %v359, %v359
        %v394 = vpack.c.bf16 %v366, %v366
        %v395 = vpack.c.bf16 %v367, %v367
        %v396 = vld [vmem:[%s290] sm:$0xff]
        %v397 = vld [vmem:[%s290 + $0x8] sm:$0xff]
        %v398 = vld [vmem:[%s290 + $0x10] sm:$0xff]
        %v399 = vld [vmem:[%s290 + $0x18] sm:$0xf]
        %v400 = vld [vmem:[%s290 + $0x1c] sm:$0xff]
        %v401 = vld [vmem:[%s290 + $0x24] sm:$0xff]
        %v402 = vld [vmem:[%s290 + $0x2c] sm:$0xff]
        %v403 = vld [vmem:[%s290 + $0x34] sm:$0xf]
        %v404 = vld [vmem:[%s290 + $0x38] sm:$0xff]
        %v405 = vld [vmem:[%s290 + $0x40] sm:$0xff]
        %v406 = vld [vmem:[%s290 + $0x48] sm:$0xff]
        %v407 = vld [vmem:[%s290 + $0x50] sm:$0xf]
        %v408 = vld [vmem:[%s290 + $0x54] sm:$0xff]
        %v409 = vld [vmem:[%s290 + $0x5c] sm:$0xff]
        %v410 = vld [vmem:[%s290 + $0x64] sm:$0xff]
        %v411 = vld [vmem:[%s290 + $0x6c] sm:$0xf]
        %v412 = vld [vmem:[%s290 + $0x70] sm:$0xff]
        %v413 = vld [vmem:[%s290 + $0x78] sm:$0xff]
        %v414 = vld [vmem:[%s290 + $0x80] sm:$0xff]
        %v415 = vld [vmem:[%s290 + $0x88] sm:$0xf]
        %v416 = vld [vmem:[%s290 + $0x8c] sm:$0xff]
        %v417 = vld [vmem:[%s290 + $0x94] sm:$0xff]
        %v418 = vld [vmem:[%s290 + $0x9c] sm:$0xff]
        %v419 = vld [vmem:[%s290 + $0xa4] sm:$0xf]
        %v420 = vld [vmem:[%s290 + $0xa8] sm:$0xff]
        %v421 = vld [vmem:[%s290 + $0xb0] sm:$0xff]
        %v422 = vld [vmem:[%s290 + $0xb8] sm:$0xff]
        %v423 = vld [vmem:[%s290 + $0xc0] sm:$0xf]
        %v424 = vld [vmem:[%s290 + $0xc4] sm:$0xff]
        %v425 = vld [vmem:[%s290 + $0xcc] sm:$0xff]
        %v426 = vld [vmem:[%s290 + $0xd4] sm:$0xff]
        %v427 = vld [vmem:[%s290 + $0xdc] sm:$0xf]
        %v428 = vld [vmem:[%s290 + $0xe0] sm:$0xff]
        %v429 = vld [vmem:[%s290 + $0xe8] sm:$0xff]
        %v430 = vld [vmem:[%s290 + $0xf0] sm:$0xff]
        %v431 = vld [vmem:[%s290 + $0xf8] sm:$0xf]
        %v432 = vld [vmem:[%s290 + $0xfc] sm:$0xff]
        %v433 = vld [vmem:[%s290 + $0x104] sm:$0xff]
        %v434 = vld [vmem:[%s290 + $0x10c] sm:$0xff]
        %v435 = vld [vmem:[%s290 + $0x114] sm:$0xf]
        %v436 = vld [vmem:[%s290 + $0x118] sm:$0xff]
        %v437 = vld [vmem:[%s290 + $0x120] sm:$0xff]
        %v438 = vld [vmem:[%s290 + $0x128] sm:$0xff]
        %v439 = vld [vmem:[%s290 + $0x130] sm:$0xf]
        %v440 = vld [vmem:[%s290 + $0x134] sm:$0xff]
        %v441 = vld [vmem:[%s290 + $0x13c] sm:$0xff]
        %v442 = vld [vmem:[%s290 + $0x144] sm:$0xff]
        %v443 = vld [vmem:[%s290 + $0x14c] sm:$0xf]
        %v444 = vld [vmem:[%s290 + $0x150] sm:$0xff]
        %v445 = vld [vmem:[%s290 + $0x158] sm:$0xff]
        %v446 = vld [vmem:[%s290 + $0x160] sm:$0xff]
        %v447 = vld [vmem:[%s290 + $0x168] sm:$0xf]
        %v448 = vld [vmem:[%s290 + $0x16c] sm:$0xff]
        %v449 = vld [vmem:[%s290 + $0x174] sm:$0xff]
        %v450 = vld [vmem:[%s290 + $0x17c] sm:$0xff]
        %v451 = vld [vmem:[%s290 + $0x184] sm:$0xf]
        %v452 = vld [vmem:[%s290 + $0x188] sm:$0xff]
        %v453 = vld [vmem:[%s290 + $0x190] sm:$0xff]
        %v454 = vld [vmem:[%s290 + $0x198] sm:$0xff]
        %v455 = vld [vmem:[%s290 + $0x1a0] sm:$0xf]
        %v456 = vld [vmem:[%s290 + $0x1a4] sm:$0xff]
        %v457 = vld [vmem:[%s290 + $0x1ac] sm:$0xff]
        %v458 = vld [vmem:[%s290 + $0x1b4] sm:$0xff]
        %v459 = vld [vmem:[%s290 + $0x1bc] sm:$0xf]
        %v460 = vld [vmem:[%s290 + $0x1c0] sm:$0xff]
        %v461 = vld [vmem:[%s290 + $0x1c8] sm:$0xff]
        %v462 = vld [vmem:[%s290 + $0x1d0] sm:$0xff]
        %v463 = vld [vmem:[%s290 + $0x1d8] sm:$0xf]
        %v464 = vld [vmem:[%s290 + $0x1dc] sm:$0xff]
        %v465 = vld [vmem:[%s290 + $0x1e4] sm:$0xff]
        %v466 = vld [vmem:[%s290 + $0x1ec] sm:$0xff]
        %v467 = vld [vmem:[%s290 + $0x1f4] sm:$0xf]
        %v468 = vld [vmem:[%s290 + $0x1f8] sm:$0xff]
        %v469 = vld [vmem:[%s290 + $0x200] sm:$0xff]
        %v470 = vld [vmem:[%s290 + $0x208] sm:$0xff]
        %v471 = vld [vmem:[%s290 + $0x210] sm:$0xf]
        %v472 = vld [vmem:[%s290 + $0x214] sm:$0xff]
        %v473 = vld [vmem:[%s290 + $0x21c] sm:$0xff]
        %v474 = vld [vmem:[%s290 + $0x224] sm:$0xff]
        %v475 = vld [vmem:[%s290 + $0x22c] sm:$0xf]
        %v476 = vld [vmem:[%s290 + $0x230] sm:$0xff]
        %v477 = vld [vmem:[%s290 + $0x238] sm:$0xff]
        %v478 = vld [vmem:[%s290 + $0x240] sm:$0xff]
        %v479 = vld [vmem:[%s290 + $0x248] sm:$0xf]
        %v480 = vld [vmem:[%s290 + $0x24c] sm:$0xff]
        %v481 = vld [vmem:[%s290 + $0x254] sm:$0xff]
        %v482 = vld [vmem:[%s290 + $0x25c] sm:$0xff]
        %v483 = vld [vmem:[%s290 + $0x264] sm:$0xf]
        %v484 = vld [vmem:[%s290 + $0x268] sm:$0xff]
        %v485 = vld [vmem:[%s290 + $0x270] sm:$0xff]
        %v486 = vld [vmem:[%s290 + $0x278] sm:$0xff]
        %v487 = vld [vmem:[%s290 + $0x280] sm:$0xf]
        %v488 = vld [vmem:[%s290 + $0x284] sm:$0xff]
        %v489 = vld [vmem:[%s290 + $0x28c] sm:$0xff]
        %v490 = vld [vmem:[%s290 + $0x294] sm:$0xff]
        %v491 = vld [vmem:[%s290 + $0x29c] sm:$0xf]
        %v492 = vld [vmem:[%s290 + $0x2a0] sm:$0xff]
        %v493 = vld [vmem:[%s290 + $0x2a8] sm:$0xff]
        %v494 = vld [vmem:[%s290 + $0x2b0] sm:$0xff]
        %v495 = vld [vmem:[%s290 + $0x2b8] sm:$0xf]
        %v496 = vld [vmem:[%s290 + $0x2bc] sm:$0xff]
        %v497 = vld [vmem:[%s290 + $0x2c4] sm:$0xff]
        %v498 = vld [vmem:[%s290 + $0x2cc] sm:$0xff]
        %v499 = vld [vmem:[%s290 + $0x2d4] sm:$0xf]
        %v500 = vld [vmem:[%s290 + $0x2d8] sm:$0xff]
        %v501 = vld [vmem:[%s290 + $0x2e0] sm:$0xff]
        %v502 = vld [vmem:[%s290 + $0x2e8] sm:$0xff]
        %v503 = vld [vmem:[%s290 + $0x2f0] sm:$0xf]
        %v504 = vld [vmem:[%s290 + $0x2f4] sm:$0xff]
        %v505 = vld [vmem:[%s290 + $0x2fc] sm:$0xff]
        %v506 = vld [vmem:[%s290 + $0x304] sm:$0xff]
        %v507 = vld [vmem:[%s290 + $0x30c] sm:$0xf]
        %v508 = vld [vmem:[%s290 + $0x310] sm:$0xff]
        %v509 = vld [vmem:[%s290 + $0x318] sm:$0xff]
        %v510 = vld [vmem:[%s290 + $0x320] sm:$0xff]
        %v511 = vld [vmem:[%s290 + $0x328] sm:$0xf]
        %v512 = vld [vmem:[%s290 + $0x32c] sm:$0xff]
        %v513 = vld [vmem:[%s290 + $0x334] sm:$0xff]
        %v514 = vld [vmem:[%s290 + $0x33c] sm:$0xff]
        %v515 = vld [vmem:[%s290 + $0x344] sm:$0xf]
        %v516 = vld [vmem:[%s290 + $0x348] sm:$0xff]
        %v517 = vld [vmem:[%s290 + $0x350] sm:$0xff]
        %v518 = vld [vmem:[%s290 + $0x358] sm:$0xff]
        %v519 = vld [vmem:[%s290 + $0x360] sm:$0xf]
        %v520 = vld [vmem:[%s290 + $0x364] sm:$0xff]
        %v521 = vld [vmem:[%s290 + $0x36c] sm:$0xff]
        %v522 = vld [vmem:[%s290 + $0x374] sm:$0xff]
        %v523 = vld [vmem:[%s290 + $0x37c] sm:$0xf]
        %v524 = vld [vmem:[%s290 + $0x380] sm:$0xff]
        %v525 = vld [vmem:[%s290 + $0x388] sm:$0xff]
        %v526 = vld [vmem:[%s290 + $0x390] sm:$0xff]
        %v527 = vld [vmem:[%s290 + $0x398] sm:$0xf]
        %v528 = vld [vmem:[%s290 + $0x39c] sm:$0xff]
        %v529 = vld [vmem:[%s290 + $0x3a4] sm:$0xff]
        %v530 = vld [vmem:[%s290 + $0x3ac] sm:$0xff]
        %v531 = vld [vmem:[%s290 + $0x3b4] sm:$0xf]
        %v532 = vld [vmem:[%s290 + $0x3b8] sm:$0xff]
        %v533 = vld [vmem:[%s290 + $0x3c0] sm:$0xff]
        %v534 = vld [vmem:[%s290 + $0x3c8] sm:$0xff]
        %v535 = vld [vmem:[%s290 + $0x3d0] sm:$0xf]
        %v536 = vld [vmem:[%s290 + $0x3d4] sm:$0xff]
        %v537 = vld [vmem:[%s290 + $0x3dc] sm:$0xff]
        %v538 = vld [vmem:[%s290 + $0x3e4] sm:$0xff]
        %v539 = vld [vmem:[%s290 + $0x3ec] sm:$0xf]
        %v540 = vld [vmem:[%s290 + $0x3f0] sm:$0xff]
        %v541 = vld [vmem:[%s290 + $0x3f8] sm:$0xff]
        %v542 = vld [vmem:[%s290 + $0x400] sm:$0xff]
        %v543 = vld [vmem:[%s290 + $0x408] sm:$0xf]
        %v544 = vld [vmem:[%s290 + $0x40c] sm:$0xff]
        %v545 = vld [vmem:[%s290 + $0x414] sm:$0xff]
        %v546 = vld [vmem:[%s290 + $0x41c] sm:$0xff]
        %v547 = vld [vmem:[%s290 + $0x424] sm:$0xf]
        %v548 = vld [vmem:[%s290 + $0x428] sm:$0xff]
        %v549 = vld [vmem:[%s290 + $0x430] sm:$0xff]
        %v550 = vld [vmem:[%s290 + $0x438] sm:$0xff]
        %v551 = vld [vmem:[%s290 + $0x440] sm:$0xf]
        %v552 = vld [vmem:[%s290 + $0x444] sm:$0xff]
        %v553 = vld [vmem:[%s290 + $0x44c] sm:$0xff]
        %v554 = vld [vmem:[%s290 + $0x454] sm:$0xff]
        %v555 = vld [vmem:[%s290 + $0x45c] sm:$0xf]
        %v556 = vld [vmem:[%s290 + $0x460] sm:$0xff]
        %v557 = vld [vmem:[%s290 + $0x468] sm:$0xff]
        %v558 = vld [vmem:[%s290 + $0x470] sm:$0xff]
        %v559 = vld [vmem:[%s290 + $0x478] sm:$0xf]
        %v560 = vld [vmem:[%s290 + $0x47c] sm:$0xff]
        %v561 = vld [vmem:[%s290 + $0x484] sm:$0xff]
        %v562 = vld [vmem:[%s290 + $0x48c] sm:$0xff]
        %v563 = vld [vmem:[%s290 + $0x494] sm:$0xf]
        %v564 = vld [vmem:[%s290 + $0x498] sm:$0xff]
        %v565 = vld [vmem:[%s290 + $0x4a0] sm:$0xff]
        %v566 = vld [vmem:[%s290 + $0x4a8] sm:$0xff]
        %v567 = vld [vmem:[%s290 + $0x4b0] sm:$0xf]
        %v568 = vld [vmem:[%s290 + $0x4b4] sm:$0xff]
        %v569 = vld [vmem:[%s290 + $0x4bc] sm:$0xff]
        %v570 = vld [vmem:[%s290 + $0x4c4] sm:$0xff]
        %v571 = vld [vmem:[%s290 + $0x4cc] sm:$0xf]
        %v572 = vld [vmem:[%s290 + $0x4d0] sm:$0xff]
        %v573 = vld [vmem:[%s290 + $0x4d8] sm:$0xff]
        %v574 = vld [vmem:[%s290 + $0x4e0] sm:$0xff]
        %v575 = vld [vmem:[%s290 + $0x4e8] sm:$0xf]
        %v576 = vld [vmem:[%s290 + $0x4ec] sm:$0xff]
        %v577 = vld [vmem:[%s290 + $0x4f4] sm:$0xff]
        %v578 = vld [vmem:[%s290 + $0x4fc] sm:$0xff]
        %v579 = vld [vmem:[%s290 + $0x504] sm:$0xf]
        %v580 = vld [vmem:[%s290 + $0x508] sm:$0xff]
        %v581 = vld [vmem:[%s290 + $0x510] sm:$0xff]
        %v582 = vld [vmem:[%s290 + $0x518] sm:$0xff]
        %v583 = vld [vmem:[%s290 + $0x520] sm:$0xf]
        %v584 = vld [vmem:[%s290 + $0x524] sm:$0xff]
        %v585 = vld [vmem:[%s290 + $0x52c] sm:$0xff]
        %v586 = vld [vmem:[%s290 + $0x534] sm:$0xff]
        %v587 = vld [vmem:[%s290 + $0x53c] sm:$0xf]
        %v588 = vld [vmem:[%s290 + $0x540] sm:$0xff]
        %v589 = vld [vmem:[%s290 + $0x548] sm:$0xff]
        %v590 = vld [vmem:[%s290 + $0x550] sm:$0xff]
        %v591 = vld [vmem:[%s290 + $0x558] sm:$0xf]
        %v592 = vld [vmem:[%s290 + $0x55c] sm:$0xff]
        %v593 = vld [vmem:[%s290 + $0x564] sm:$0xff]
        %v594 = vld [vmem:[%s290 + $0x56c] sm:$0xff]
        %v595 = vld [vmem:[%s290 + $0x574] sm:$0xf]
        %v596 = vld [vmem:[%s290 + $0x578] sm:$0xff]
        %v597 = vld [vmem:[%s290 + $0x580] sm:$0xff]
        %v598 = vld [vmem:[%s290 + $0x588] sm:$0xff]
        %v599 = vld [vmem:[%s290 + $0x590] sm:$0xf]
        %v600 = vld [vmem:[%s290 + $0x594] sm:$0xff]
        %v601 = vld [vmem:[%s290 + $0x59c] sm:$0xff]
        %v602 = vld [vmem:[%s290 + $0x5a4] sm:$0xff]
        %v603 = vld [vmem:[%s290 + $0x5ac] sm:$0xf]
        %v604 = vld [vmem:[%s290 + $0x5b0] sm:$0xff]
        %v605 = vld [vmem:[%s290 + $0x5b8] sm:$0xff]
        %v606 = vld [vmem:[%s290 + $0x5c0] sm:$0xff]
        %v607 = vld [vmem:[%s290 + $0x5c8] sm:$0xf]
        %v608 = vld [vmem:[%s290 + $0x5cc] sm:$0xff]
        %v609 = vld [vmem:[%s290 + $0x5d4] sm:$0xff]
        %v610 = vld [vmem:[%s290 + $0x5dc] sm:$0xff]
        %v611 = vld [vmem:[%s290 + $0x5e4] sm:$0xf]
        %v612 = vld [vmem:[%s290 + $0x5e8] sm:$0xff]
        %v613 = vld [vmem:[%s290 + $0x5f0] sm:$0xff]
        %v614 = vld [vmem:[%s290 + $0x5f8] sm:$0xff]
        %v615 = vld [vmem:[%s290 + $0x600] sm:$0xf]
        %v616 = vld [vmem:[%s290 + $0x604] sm:$0xff]
        %v617 = vld [vmem:[%s290 + $0x60c] sm:$0xff]
        %v618 = vld [vmem:[%s290 + $0x614] sm:$0xff]
        %v619 = vld [vmem:[%s290 + $0x61c] sm:$0xf]
        %v620 = vld [vmem:[%s290 + $0x620] sm:$0xff]
        %v621 = vld [vmem:[%s290 + $0x628] sm:$0xff]
        %v622 = vld [vmem:[%s290 + $0x630] sm:$0xff]
        %v623 = vld [vmem:[%s290 + $0x638] sm:$0xf]
        %v624 = vld [vmem:[%s290 + $0x63c] sm:$0xff]
        %v625 = vld [vmem:[%s290 + $0x644] sm:$0xff]
        %v626 = vld [vmem:[%s290 + $0x64c] sm:$0xff]
        %v627 = vld [vmem:[%s290 + $0x654] sm:$0xf]
        %v628 = vld [vmem:[%s290 + $0x658] sm:$0xff]
        %v629 = vld [vmem:[%s290 + $0x660] sm:$0xff]
        %v630 = vld [vmem:[%s290 + $0x668] sm:$0xff]
        %v631 = vld [vmem:[%s290 + $0x670] sm:$0xf]
        %v632 = vld [vmem:[%s290 + $0x674] sm:$0xff]
        %v633 = vld [vmem:[%s290 + $0x67c] sm:$0xff]
        %v634 = vld [vmem:[%s290 + $0x684] sm:$0xff]
        %v635 = vld [vmem:[%s290 + $0x68c] sm:$0xf]
        %v636 = vld [vmem:[%s290 + $0x690] sm:$0xff]
        %v637 = vld [vmem:[%s290 + $0x698] sm:$0xff]
        %v638 = vld [vmem:[%s290 + $0x6a0] sm:$0xff]
        %v639 = vld [vmem:[%s290 + $0x6a8] sm:$0xf]
        %v640 = vld [vmem:[%s290 + $0x6ac] sm:$0xff]
        %v641 = vld [vmem:[%s290 + $0x6b4] sm:$0xff]
        %v642 = vld [vmem:[%s290 + $0x6bc] sm:$0xff]
        %v643 = vld [vmem:[%s290 + $0x6c4] sm:$0xf]
        %v644 = vld [vmem:[%s290 + $0x6c8] sm:$0xff]
        %v645 = vld [vmem:[%s290 + $0x6d0] sm:$0xff]
        %v646 = vld [vmem:[%s290 + $0x6d8] sm:$0xff]
        %v647 = vld [vmem:[%s290 + $0x6e0] sm:$0xf]
        %v648 = vld [vmem:[%s290 + $0x6e4] sm:$0xff]
        %v649 = vld [vmem:[%s290 + $0x6ec] sm:$0xff]
        %v650 = vld [vmem:[%s290 + $0x6f4] sm:$0xff]
        %v651 = vld [vmem:[%s290 + $0x6fc] sm:$0xf]
        %v652 = vld [vmem:[%s290 + $0x700] sm:$0xff]
        %v653 = vld [vmem:[%s290 + $0x708] sm:$0xff]
        %v654 = vld [vmem:[%s290 + $0x710] sm:$0xff]
        %v655 = vld [vmem:[%s290 + $0x718] sm:$0xf]
        %v656 = vld [vmem:[%s290 + $0x71c] sm:$0xff]
        %v657 = vld [vmem:[%s290 + $0x724] sm:$0xff]
        %v658 = vld [vmem:[%s290 + $0x72c] sm:$0xff]
        %v659 = vld [vmem:[%s290 + $0x734] sm:$0xf]
        %v660 = vld [vmem:[%s290 + $0x738] sm:$0xff]
        %v661 = vld [vmem:[%s290 + $0x740] sm:$0xff]
        %v662 = vld [vmem:[%s290 + $0x748] sm:$0xff]
        %v663 = vld [vmem:[%s290 + $0x750] sm:$0xf]
        %v664 = vld [vmem:[%s290 + $0x754] sm:$0xff]
        %v665 = vld [vmem:[%s290 + $0x75c] sm:$0xff]
        %v666 = vld [vmem:[%s290 + $0x764] sm:$0xff]
        %v667 = vld [vmem:[%s290 + $0x76c] sm:$0xf]
        %v668 = vld [vmem:[%s290 + $0x770] sm:$0xff]
        %v669 = vld [vmem:[%s290 + $0x778] sm:$0xff]
        %v670 = vld [vmem:[%s290 + $0x780] sm:$0xff]
        %v671 = vld [vmem:[%s290 + $0x788] sm:$0xf]
        %v672 = vld [vmem:[%s290 + $0x78c] sm:$0xff]
        %v673 = vld [vmem:[%s290 + $0x794] sm:$0xff]
        %v674 = vld [vmem:[%s290 + $0x79c] sm:$0xff]
        %v675 = vld [vmem:[%s290 + $0x7a4] sm:$0xf]
        %v676 = vld [vmem:[%s290 + $0x7a8] sm:$0xff]
        %v677 = vld [vmem:[%s290 + $0x7b0] sm:$0xff]
        %v678 = vld [vmem:[%s290 + $0x7b8] sm:$0xff]
        %v679 = vld [vmem:[%s290 + $0x7c0] sm:$0xf]
        %v680 = vld [vmem:[%s290 + $0x7c4] sm:$0xff]
        %v681 = vld [vmem:[%s290 + $0x7cc] sm:$0xff]
        %v682 = vld [vmem:[%s290 + $0x7d4] sm:$0xff]
        %v683 = vld [vmem:[%s290 + $0x7dc] sm:$0xf]
        %v684 = vld [vmem:[%s290 + $0x7e0] sm:$0xff]
        %v685 = vld [vmem:[%s290 + $0x7e8] sm:$0xff]
        %v686 = vld [vmem:[%s290 + $0x7f0] sm:$0xff]
        %v687 = vld [vmem:[%s290 + $0x7f8] sm:$0xf]
        %v688 = vld [vmem:[%s290 + $0x7fc] sm:$0xff]
        %v689 = vld [vmem:[%s290 + $0x804] sm:$0xff]
        %v690 = vld [vmem:[%s290 + $0x80c] sm:$0xff]
        %v691 = vld [vmem:[%s290 + $0x814] sm:$0xf]
        %v692 = vld [vmem:[%s290 + $0x818] sm:$0xff]
        %v693 = vld [vmem:[%s290 + $0x820] sm:$0xff]
        %v694 = vld [vmem:[%s290 + $0x828] sm:$0xff]
        %v695 = vld [vmem:[%s290 + $0x830] sm:$0xf]
        %v696 = vld [vmem:[%s290 + $0x834] sm:$0xff]
        %v697 = vld [vmem:[%s290 + $0x83c] sm:$0xff]
        %v698 = vld [vmem:[%s290 + $0x844] sm:$0xff]
        %v699 = vld [vmem:[%s290 + $0x84c] sm:$0xf]
        %v700 = vld [vmem:[%s290 + $0x850] sm:$0xff]
        %v701 = vld [vmem:[%s290 + $0x858] sm:$0xff]
        %v702 = vld [vmem:[%s290 + $0x860] sm:$0xff]
        %v703 = vld [vmem:[%s290 + $0x868] sm:$0xf]
        %v704 = vld [vmem:[%s290 + $0x86c] sm:$0xff]
        %v705 = vld [vmem:[%s290 + $0x874] sm:$0xff]
        %v706 = vld [vmem:[%s290 + $0x87c] sm:$0xff]
        %v707 = vld [vmem:[%s290 + $0x884] sm:$0xf]
        %v708 = vld [vmem:[%s290 + $0x888] sm:$0xff]
        %v709 = vld [vmem:[%s290 + $0x890] sm:$0xff]
        %v710 = vld [vmem:[%s290 + $0x898] sm:$0xff]
        %v711 = vld [vmem:[%s290 + $0x8a0] sm:$0xf]
        %v712 = vld [vmem:[%s290 + $0x8a4] sm:$0xff]
        %v713 = vld [vmem:[%s290 + $0x8ac] sm:$0xff]
        %v714 = vld [vmem:[%s290 + $0x8b4] sm:$0xff]
        %v715 = vld [vmem:[%s290 + $0x8bc] sm:$0xf]
        %v716 = vld [vmem:[%s290 + $0x8c0] sm:$0xff]
        %v717 = vld [vmem:[%s290 + $0x8c8] sm:$0xff]
        %v718 = vld [vmem:[%s290 + $0x8d0] sm:$0xff]
        %v719 = vld [vmem:[%s290 + $0x8d8] sm:$0xf]
        %v720 = vld [vmem:[%s290 + $0x8dc] sm:$0xff]
        %v721 = vld [vmem:[%s290 + $0x8e4] sm:$0xff]
        %v722 = vld [vmem:[%s290 + $0x8ec] sm:$0xff]
        %v723 = vld [vmem:[%s290 + $0x8f4] sm:$0xf]
        %v724 = vld [vmem:[%s290 + $0x8f8] sm:$0xff]
        %v725 = vld [vmem:[%s290 + $0x900] sm:$0xff]
        %v726 = vld [vmem:[%s290 + $0x908] sm:$0xff]
        %v727 = vld [vmem:[%s290 + $0x910] sm:$0xf]
        %v728 = vld [vmem:[%s290 + $0x914] sm:$0xff]
        %v729 = vld [vmem:[%s290 + $0x91c] sm:$0xff]
        %v730 = vld [vmem:[%s290 + $0x924] sm:$0xff]
        %v731 = vld [vmem:[%s290 + $0x92c] sm:$0xf]
        %v732 = vld [vmem:[%s290 + $0x930] sm:$0xff]
        %v733 = vld [vmem:[%s290 + $0x938] sm:$0xff]
        %v734 = vld [vmem:[%s290 + $0x940] sm:$0xff]
        %v735 = vld [vmem:[%s290 + $0x948] sm:$0xf]
        %v736 = vld [vmem:[%s290 + $0x94c] sm:$0xff]
        %v737 = vld [vmem:[%s290 + $0x954] sm:$0xff]
        %v738 = vld [vmem:[%s290 + $0x95c] sm:$0xff]
        %v739 = vld [vmem:[%s290 + $0x964] sm:$0xf]
        %v740 = vld [vmem:[%s290 + $0x968] sm:$0xff]
        %v741 = vld [vmem:[%s290 + $0x970] sm:$0xff]
        %v742 = vld [vmem:[%s290 + $0x978] sm:$0xff]
        %v743 = vld [vmem:[%s290 + $0x980] sm:$0xf]
        %v744 = vld [vmem:[%s290 + $0x984] sm:$0xff]
        %v745 = vld [vmem:[%s290 + $0x98c] sm:$0xff]
        %v746 = vld [vmem:[%s290 + $0x994] sm:$0xff]
        %v747 = vld [vmem:[%s290 + $0x99c] sm:$0xf]
        %v748 = vld [vmem:[%s290 + $0x9a0] sm:$0xff]
        %v749 = vld [vmem:[%s290 + $0x9a8] sm:$0xff]
        %v750 = vld [vmem:[%s290 + $0x9b0] sm:$0xff]
        %v751 = vld [vmem:[%s290 + $0x9b8] sm:$0xf]
        %v752 = vld [vmem:[%s290 + $0x9bc] sm:$0xff]
        %v753 = vld [vmem:[%s290 + $0x9c4] sm:$0xff]
        %v754 = vld [vmem:[%s290 + $0x9cc] sm:$0xff]
        %v755 = vld [vmem:[%s290 + $0x9d4] sm:$0xf]
        %v756 = vld [vmem:[%s290 + $0x9d8] sm:$0xff]
        %v757 = vld [vmem:[%s290 + $0x9e0] sm:$0xff]
        %v758 = vld [vmem:[%s290 + $0x9e8] sm:$0xff]
        %v759 = vld [vmem:[%s290 + $0x9f0] sm:$0xf]
        %v760 = vld [vmem:[%s290 + $0x9f4] sm:$0xff]
        %v761 = vld [vmem:[%s290 + $0x9fc] sm:$0xff]
        %v762 = vld [vmem:[%s290 + $0xa04] sm:$0xff]
        %v763 = vld [vmem:[%s290 + $0xa0c] sm:$0xf]
        %v764 = vld [vmem:[%s290 + $0xa10] sm:$0xff]
        %v765 = vld [vmem:[%s290 + $0xa18] sm:$0xff]
        %v766 = vld [vmem:[%s290 + $0xa20] sm:$0xff]
        %v767 = vld [vmem:[%s290 + $0xa28] sm:$0xf]
        %v768 = vld [vmem:[%s290 + $0xa2c] sm:$0xff]
        %v769 = vld [vmem:[%s290 + $0xa34] sm:$0xff]
        %v770 = vld [vmem:[%s290 + $0xa3c] sm:$0xff]
        %v771 = vld [vmem:[%s290 + $0xa44] sm:$0xf]
        %v772 = vld [vmem:[%s290 + $0xa48] sm:$0xff]
        %v773 = vld [vmem:[%s290 + $0xa50] sm:$0xff]
        %v774 = vld [vmem:[%s290 + $0xa58] sm:$0xff]
        %v775 = vld [vmem:[%s290 + $0xa60] sm:$0xf]
        %v776 = vld [vmem:[%s290 + $0xa64] sm:$0xff]
        %v777 = vld [vmem:[%s290 + $0xa6c] sm:$0xff]
        %v778 = vld [vmem:[%s290 + $0xa74] sm:$0xff]
        %v779 = vld [vmem:[%s290 + $0xa7c] sm:$0xf]
        %v780 = vld [vmem:[%s290 + $0xa80] sm:$0xff]
        %v781 = vld [vmem:[%s290 + $0xa88] sm:$0xff]
        %v782 = vld [vmem:[%s290 + $0xa90] sm:$0xff]
        %v783 = vld [vmem:[%s290 + $0xa98] sm:$0xf]
        %v784 = vld [vmem:[%s290 + $0xa9c] sm:$0xff]
        %v785 = vld [vmem:[%s290 + $0xaa4] sm:$0xff]
        %v786 = vld [vmem:[%s290 + $0xaac] sm:$0xff]
        %v787 = vld [vmem:[%s290 + $0xab4] sm:$0xf]
        %v788 = vld [vmem:[%s290 + $0xab8] sm:$0xff]
        %v789 = vld [vmem:[%s290 + $0xac0] sm:$0xff]
        %v790 = vld [vmem:[%s290 + $0xac8] sm:$0xff]
        %v791 = vld [vmem:[%s290 + $0xad0] sm:$0xf]
        %v792 = vld [vmem:[%s290 + $0xad4] sm:$0xff]
        %v793 = vld [vmem:[%s290 + $0xadc] sm:$0xff]
        %v794 = vld [vmem:[%s290 + $0xae4] sm:$0xff]
        %v795 = vld [vmem:[%s290 + $0xaec] sm:$0xf]
        %v796 = vld [vmem:[%s290 + $0xaf0] sm:$0xff]
        %v797 = vld [vmem:[%s290 + $0xaf8] sm:$0xff]
        %v798 = vld [vmem:[%s290 + $0xb00] sm:$0xff]
        %v799 = vld [vmem:[%s290 + $0xb08] sm:$0xf]
        %v800 = vld [vmem:[%s290 + $0xb0c] sm:$0xff]
        %v801 = vld [vmem:[%s290 + $0xb14] sm:$0xff]
        %v802 = vld [vmem:[%s290 + $0xb1c] sm:$0xff]
        %v803 = vld [vmem:[%s290 + $0xb24] sm:$0xf]
        %v804 = vld [vmem:[%s290 + $0xb28] sm:$0xff]
        %v805 = vld [vmem:[%s290 + $0xb30] sm:$0xff]
        %v806 = vld [vmem:[%s290 + $0xb38] sm:$0xff]
        %v807 = vld [vmem:[%s290 + $0xb40] sm:$0xf]
        %v808 = vld [vmem:[%s290 + $0xb44] sm:$0xff]
        %v809 = vld [vmem:[%s290 + $0xb4c] sm:$0xff]
        %v810 = vld [vmem:[%s290 + $0xb54] sm:$0xff]
        %v811 = vld [vmem:[%s290 + $0xb5c] sm:$0xf]
        %v812 = vld [vmem:[%s290 + $0xb60] sm:$0xff]
        %v813 = vld [vmem:[%s290 + $0xb68] sm:$0xff]
        %v814 = vld [vmem:[%s290 + $0xb70] sm:$0xff]
        %v815 = vld [vmem:[%s290 + $0xb78] sm:$0xf]
        %v816 = vld [vmem:[%s290 + $0xb7c] sm:$0xff]
        %v817 = vld [vmem:[%s290 + $0xb84] sm:$0xff]
        %v818 = vld [vmem:[%s290 + $0xb8c] sm:$0xff]
        %v819 = vld [vmem:[%s290 + $0xb94] sm:$0xf]
        %v820 = vld [vmem:[%s290 + $0xb98] sm:$0xff]
        %v821 = vld [vmem:[%s290 + $0xba0] sm:$0xff]
        %v822 = vld [vmem:[%s290 + $0xba8] sm:$0xff]
        %v823 = vld [vmem:[%s290 + $0xbb0] sm:$0xf]
        %v824 = vld [vmem:[%s290 + $0xbb4] sm:$0xff]
        %v825 = vld [vmem:[%s290 + $0xbbc] sm:$0xff]
        %v826 = vld [vmem:[%s290 + $0xbc4] sm:$0xff]
        %v827 = vld [vmem:[%s290 + $0xbcc] sm:$0xf]
        %v828 = vld [vmem:[%s290 + $0xbd0] sm:$0xff]
        %v829 = vld [vmem:[%s290 + $0xbd8] sm:$0xff]
        %v830 = vld [vmem:[%s290 + $0xbe0] sm:$0xff]
        %v831 = vld [vmem:[%s290 + $0xbe8] sm:$0xf]
        %v832 = vld [vmem:[%s290 + $0xbec] sm:$0xff]
        %v833 = vld [vmem:[%s290 + $0xbf4] sm:$0xff]
        %v834 = vld [vmem:[%s290 + $0xbfc] sm:$0xff]
        %v835 = vld [vmem:[%s290 + $0xc04] sm:$0xf]
        %v836 = vld [vmem:[%s290 + $0xc08] sm:$0xff]
        %v837 = vld [vmem:[%s290 + $0xc10] sm:$0xff]
        %v838 = vld [vmem:[%s290 + $0xc18] sm:$0xff]
        %v839 = vld [vmem:[%s290 + $0xc20] sm:$0xf]
        %v840 = vld [vmem:[%s290 + $0xc24] sm:$0xff]
        %v841 = vld [vmem:[%s290 + $0xc2c] sm:$0xff]
        %v842 = vld [vmem:[%s290 + $0xc34] sm:$0xff]
        %v843 = vld [vmem:[%s290 + $0xc3c] sm:$0xf]
        %v844 = vld [vmem:[%s290 + $0xc40] sm:$0xff]
        %v845 = vld [vmem:[%s290 + $0xc48] sm:$0xff]
        %v846 = vld [vmem:[%s290 + $0xc50] sm:$0xff]
        %v847 = vld [vmem:[%s290 + $0xc58] sm:$0xf]
        %v848 = vld [vmem:[%s290 + $0xc5c] sm:$0xff]
        %v849 = vld [vmem:[%s290 + $0xc64] sm:$0xff]
        %v850 = vld [vmem:[%s290 + $0xc6c] sm:$0xff]
        %v851 = vld [vmem:[%s290 + $0xc74] sm:$0xf]
        %v852 = vld [vmem:[%s290 + $0xc78] sm:$0xff]
        %v853 = vld [vmem:[%s290 + $0xc80] sm:$0xff]
        %v854 = vld [vmem:[%s290 + $0xc88] sm:$0xff]
        %v855 = vld [vmem:[%s290 + $0xc90] sm:$0xf]
        %v856 = vld [vmem:[%s290 + $0xc94] sm:$0xff]
        %v857 = vld [vmem:[%s290 + $0xc9c] sm:$0xff]
        %v858 = vld [vmem:[%s290 + $0xca4] sm:$0xff]
        %v859 = vld [vmem:[%s290 + $0xcac] sm:$0xf]
        %v860 = vld [vmem:[%s290 + $0xcb0] sm:$0xff]
        %v861 = vld [vmem:[%s290 + $0xcb8] sm:$0xff]
        %v862 = vld [vmem:[%s290 + $0xcc0] sm:$0xff]
        %v863 = vld [vmem:[%s290 + $0xcc8] sm:$0xf]
        %v864 = vld [vmem:[%s290 + $0xccc] sm:$0xff]
        %v865 = vld [vmem:[%s290 + $0xcd4] sm:$0xff]
        %v866 = vld [vmem:[%s290 + $0xcdc] sm:$0xff]
        %v867 = vld [vmem:[%s290 + $0xce4] sm:$0xf]
        %v868 = vld [vmem:[%s290 + $0xce8] sm:$0xff]
        %v869 = vld [vmem:[%s290 + $0xcf0] sm:$0xff]
        %v870 = vld [vmem:[%s290 + $0xcf8] sm:$0xff]
        %v871 = vld [vmem:[%s290 + $0xd00] sm:$0xf]
        %v872 = vld [vmem:[%s290 + $0xd04] sm:$0xff]
        %v873 = vld [vmem:[%s290 + $0xd0c] sm:$0xff]
        %v874 = vld [vmem:[%s290 + $0xd14] sm:$0xff]
        %v875 = vld [vmem:[%s290 + $0xd1c] sm:$0xf]
        %v876 = vld [vmem:[%s290 + $0xd20] sm:$0xff]
        %v877 = vld [vmem:[%s290 + $0xd28] sm:$0xff]
        %v878 = vld [vmem:[%s290 + $0xd30] sm:$0xff]
        %v879 = vld [vmem:[%s290 + $0xd38] sm:$0xf]
        %v880 = vld [vmem:[%s290 + $0xd3c] sm:$0xff]
        %v881 = vld [vmem:[%s290 + $0xd44] sm:$0xff]
        %v882 = vld [vmem:[%s290 + $0xd4c] sm:$0xff]
        %v883 = vld [vmem:[%s290 + $0xd54] sm:$0xf]
        %v884 = vld [vmem:[%s290 + $0xd58] sm:$0xff]
        %v885 = vld [vmem:[%s290 + $0xd60] sm:$0xff]
        %v886 = vld [vmem:[%s290 + $0xd68] sm:$0xff]
        %v887 = vld [vmem:[%s290 + $0xd70] sm:$0xf]
        %v888 = vld [vmem:[%s290 + $0xd74] sm:$0xff]
        %v889 = vld [vmem:[%s290 + $0xd7c] sm:$0xff]
        %v890 = vld [vmem:[%s290 + $0xd84] sm:$0xff]
        %v891 = vld [vmem:[%s290 + $0xd8c] sm:$0xf]
        %v892 = vld [vmem:[%s290 + $0xd90] sm:$0xff]
        %v893 = vld [vmem:[%s290 + $0xd98] sm:$0xff]
        %v894 = vld [vmem:[%s290 + $0xda0] sm:$0xff]
        %v895 = vld [vmem:[%s290 + $0xda8] sm:$0xf]
        %v896 = vld [vmem:[%s290 + $0xdac] sm:$0xff]
        %v897 = vld [vmem:[%s290 + $0xdb4] sm:$0xff]
        %v898 = vld [vmem:[%s290 + $0xdbc] sm:$0xff]
        %v899 = vld [vmem:[%s290 + $0xdc4] sm:$0xf]
        %v900 = vld [vmem:[%s290 + $0xdc8] sm:$0xff]
        %v901 = vld [vmem:[%s290 + $0xdd0] sm:$0xff]
        %v902 = vld [vmem:[%s290 + $0xdd8] sm:$0xff]
        %v903 = vld [vmem:[%s290 + $0xde0] sm:$0xf]
        %v904 = vld [vmem:[%s290 + $0xde4] sm:$0xff]
        %v905 = vld [vmem:[%s290 + $0xdec] sm:$0xff]
        %v906 = vld [vmem:[%s290 + $0xdf4] sm:$0xff]
        %v907 = vld [vmem:[%s290 + $0xdfc] sm:$0xf]
        %v908 = vld [vmem:[%s290 + $0xe00] sm:$0xff]
        %v909 = vld [vmem:[%s290 + $0xe08] sm:$0xff]
        %v910 = vld [vmem:[%s290 + $0xe10] sm:$0xff]
        %v911 = vld [vmem:[%s290 + $0xe18] sm:$0xf]
        %v912 = vld [vmem:[%s290 + $0xe1c] sm:$0xff]
        %v913 = vld [vmem:[%s290 + $0xe24] sm:$0xff]
        %v914 = vld [vmem:[%s290 + $0xe2c] sm:$0xff]
        %v915 = vld [vmem:[%s290 + $0xe34] sm:$0xf]
        %v916 = vld [vmem:[%s290 + $0xe38] sm:$0xff]
        %v917 = vld [vmem:[%s290 + $0xe40] sm:$0xff]
        %v918 = vld [vmem:[%s290 + $0xe48] sm:$0xff]
        %v919 = vld [vmem:[%s290 + $0xe50] sm:$0xf]
        %v920 = vld [vmem:[%s290 + $0xe54] sm:$0xff]
        %v921 = vld [vmem:[%s290 + $0xe5c] sm:$0xff]
        %v922 = vld [vmem:[%s290 + $0xe64] sm:$0xff]
        %v923 = vld [vmem:[%s290 + $0xe6c] sm:$0xf]
        %v924 = vld [vmem:[%s290 + $0xe70] sm:$0xff]
        %v925 = vld [vmem:[%s290 + $0xe78] sm:$0xff]
        %v926 = vld [vmem:[%s290 + $0xe80] sm:$0xff]
        %v927 = vld [vmem:[%s290 + $0xe88] sm:$0xf]
        %v928 = vld [vmem:[%s290 + $0xe8c] sm:$0xff]
        %v929 = vld [vmem:[%s290 + $0xe94] sm:$0xff]
        %v930 = vld [vmem:[%s290 + $0xe9c] sm:$0xff]
        %v931 = vld [vmem:[%s290 + $0xea4] sm:$0xf]
        %v932 = vld [vmem:[%s290 + $0xea8] sm:$0xff]
        %v933 = vld [vmem:[%s290 + $0xeb0] sm:$0xff]
        %v934 = vld [vmem:[%s290 + $0xeb8] sm:$0xff]
        %v935 = vld [vmem:[%s290 + $0xec0] sm:$0xf]
        %v936 = vld [vmem:[%s290 + $0xec4] sm:$0xff]
        %v937 = vld [vmem:[%s290 + $0xecc] sm:$0xff]
        %v938 = vld [vmem:[%s290 + $0xed4] sm:$0xff]
        %v939 = vld [vmem:[%s290 + $0xedc] sm:$0xf]
        %v940 = vld [vmem:[%s290 + $0xee0] sm:$0xff]
        %v941 = vld [vmem:[%s290 + $0xee8] sm:$0xff]
        %v942 = vld [vmem:[%s290 + $0xef0] sm:$0xff]
        %v943 = vld [vmem:[%s290 + $0xef8] sm:$0xf]
        %v944 = vld [vmem:[%s290 + $0xefc] sm:$0xff]
        %v945 = vld [vmem:[%s290 + $0xf04] sm:$0xff]
        %v946 = vld [vmem:[%s290 + $0xf0c] sm:$0xff]
        %v947 = vld [vmem:[%s290 + $0xf14] sm:$0xf]
        %v948 = vld [vmem:[%s290 + $0xf18] sm:$0xff]
        %v949 = vld [vmem:[%s290 + $0xf20] sm:$0xff]
        %v950 = vld [vmem:[%s290 + $0xf28] sm:$0xff]
        %v951 = vld [vmem:[%s290 + $0xf30] sm:$0xf]
        %v952 = vld [vmem:[%s290 + $0xf34] sm:$0xff]
        %v953 = vld [vmem:[%s290 + $0xf3c] sm:$0xff]
        %v954 = vld [vmem:[%s290 + $0xf44] sm:$0xff]
        %v955 = vld [vmem:[%s290 + $0xf4c] sm:$0xf]
        %v956 = vld [vmem:[%s290 + $0xf50] sm:$0xff]
        %v957 = vld [vmem:[%s290 + $0xf58] sm:$0xff]
        %v958 = vld [vmem:[%s290 + $0xf60] sm:$0xff]
        %v959 = vld [vmem:[%s290 + $0xf68] sm:$0xf]
        %v960 = vld [vmem:[%s290 + $0xf6c] sm:$0xff]
        %v961 = vld [vmem:[%s290 + $0xf74] sm:$0xff]
        %v962 = vld [vmem:[%s290 + $0xf7c] sm:$0xff]
        %v963 = vld [vmem:[%s290 + $0xf84] sm:$0xf]
        %v964 = vld [vmem:[%s290 + $0xf88] sm:$0xff]
        %v965 = vld [vmem:[%s290 + $0xf90] sm:$0xff]
        %v966 = vld [vmem:[%s290 + $0xf98] sm:$0xff]
        %v967 = vld [vmem:[%s290 + $0xfa0] sm:$0xf]
        %v968 = vld [vmem:[%s290 + $0xfa4] sm:$0xff]
        %v969 = vld [vmem:[%s290 + $0xfac] sm:$0xff]
        %v970 = vld [vmem:[%s290 + $0xfb4] sm:$0xff]
        %v971 = vld [vmem:[%s290 + $0xfbc] sm:$0xf]
        %v972 = vld [vmem:[%s290 + $0xfc0] sm:$0xff]
        %v973 = vld [vmem:[%s290 + $0xfc8] sm:$0xff]
        %v974 = vld [vmem:[%s290 + $0xfd0] sm:$0xff]
        %v975 = vld [vmem:[%s290 + $0xfd8] sm:$0xf]
        %v976 = vld [vmem:[%s290 + $0xfdc] sm:$0xff]
        %v977 = vld [vmem:[%s290 + $0xfe4] sm:$0xff]
        %v978 = vld [vmem:[%s290 + $0xfec] sm:$0xff]
        %v979 = vld [vmem:[%s290 + $0xff4] sm:$0xf]
        %v980 = vld [vmem:[%s290 + $0xff8] sm:$0xff]
        %v981 = vld [vmem:[%s290 + $0x1000] sm:$0xff]
        %v982 = vld [vmem:[%s290 + $0x1008] sm:$0xff]
        %v983 = vld [vmem:[%s290 + $0x1010] sm:$0xf]
        %v984 = vld [vmem:[%s290 + $0x1014] sm:$0xff]
        %v985 = vld [vmem:[%s290 + $0x101c] sm:$0xff]
        %v986 = vld [vmem:[%s290 + $0x1024] sm:$0xff]
        %v987 = vld [vmem:[%s290 + $0x102c] sm:$0xf]
        %v988 = vld [vmem:[%s290 + $0x1030] sm:$0xff]
        %v989 = vld [vmem:[%s290 + $0x1038] sm:$0xff]
        %v990 = vld [vmem:[%s290 + $0x1040] sm:$0xff]
        %v991 = vld [vmem:[%s290 + $0x1048] sm:$0xf]
        %v992 = vld [vmem:[%s290 + $0x104c] sm:$0xff]
        %v993 = vld [vmem:[%s290 + $0x1054] sm:$0xff]
        %v994 = vld [vmem:[%s290 + $0x105c] sm:$0xff]
        %v995 = vld [vmem:[%s290 + $0x1064] sm:$0xf]
        %v996 = vld [vmem:[%s290 + $0x1068] sm:$0xff]
        %v997 = vld [vmem:[%s290 + $0x1070] sm:$0xff]
        %v998 = vld [vmem:[%s290 + $0x1078] sm:$0xff]
        %v999 = vld [vmem:[%s290 + $0x1080] sm:$0xf]
        %v1000 = vld [vmem:[%s290 + $0x1084] sm:$0xff]
        %v1001 = vld [vmem:[%s290 + $0x108c] sm:$0xff]
        %v1002 = vld [vmem:[%s290 + $0x1094] sm:$0xff]
        %v1003 = vld [vmem:[%s290 + $0x109c] sm:$0xf]
        %v1004 = vld [vmem:[%s290 + $0x10a0] sm:$0xff]
        %v1005 = vld [vmem:[%s290 + $0x10a8] sm:$0xff]
        %v1006 = vld [vmem:[%s290 + $0x10b0] sm:$0xff]
        %v1007 = vld [vmem:[%s290 + $0x10b8] sm:$0xf]
        %v1008 = vld [vmem:[%s290 + $0x10bc] sm:$0xff]
        %v1009 = vld [vmem:[%s290 + $0x10c4] sm:$0xff]
        %v1010 = vld [vmem:[%s290 + $0x10cc] sm:$0xff]
        %v1011 = vld [vmem:[%s290 + $0x10d4] sm:$0xf]
        %v1012 = vld [vmem:[%s290 + $0x10d8] sm:$0xff]
        %v1013 = vld [vmem:[%s290 + $0x10e0] sm:$0xff]
        %v1014 = vld [vmem:[%s290 + $0x10e8] sm:$0xff]
        %v1015 = vld [vmem:[%s290 + $0x10f0] sm:$0xf]
        %v1016 = vld [vmem:[%s290 + $0x10f4] sm:$0xff]
        %v1017 = vld [vmem:[%s290 + $0x10fc] sm:$0xff]
        %v1018 = vld [vmem:[%s290 + $0x1104] sm:$0xff]
        %v1019 = vld [vmem:[%s290 + $0x110c] sm:$0xf]
        %v1020 = vld [vmem:[%s290 + $0x1110] sm:$0xff]
        %v1021 = vld [vmem:[%s290 + $0x1118] sm:$0xff]
        %v1022 = vld [vmem:[%s290 + $0x1120] sm:$0xff]
        %v1023 = vld [vmem:[%s290 + $0x1128] sm:$0xf]
        %v1024 = vld [vmem:[%s290 + $0x112c] sm:$0xff]
        %v1025 = vld [vmem:[%s290 + $0x1134] sm:$0xff]
        %v1026 = vld [vmem:[%s290 + $0x113c] sm:$0xff]
        %v1027 = vld [vmem:[%s290 + $0x1144] sm:$0xf]
        %v1028 = vld [vmem:[%s290 + $0x1148] sm:$0xff]
        %v1029 = vld [vmem:[%s290 + $0x1150] sm:$0xff]
        %v1030 = vld [vmem:[%s290 + $0x1158] sm:$0xff]
        %v1031 = vld [vmem:[%s290 + $0x1160] sm:$0xf]
        %v1032 = vld [vmem:[%s290 + $0x1164] sm:$0xff]
        %v1033 = vld [vmem:[%s290 + $0x116c] sm:$0xff]
        %v1034 = vld [vmem:[%s290 + $0x1174] sm:$0xff]
        %v1035 = vld [vmem:[%s290 + $0x117c] sm:$0xf]
        %v1036 = vld [vmem:[%s290 + $0x1180] sm:$0xff]
        %v1037 = vld [vmem:[%s290 + $0x1188] sm:$0xff]
        %v1038 = vld [vmem:[%s290 + $0x1190] sm:$0xff]
        %v1039 = vld [vmem:[%s290 + $0x1198] sm:$0xf]
        %v1040 = vld [vmem:[%s290 + $0x119c] sm:$0xff]
        %v1041 = vld [vmem:[%s290 + $0x11a4] sm:$0xff]
        %v1042 = vld [vmem:[%s290 + $0x11ac] sm:$0xff]
        %v1043 = vld [vmem:[%s290 + $0x11b4] sm:$0xf]
        %v1044 = vld [vmem:[%s290 + $0x11b8] sm:$0xff]
        %v1045 = vld [vmem:[%s290 + $0x11c0] sm:$0xff]
        %v1046 = vld [vmem:[%s290 + $0x11c8] sm:$0xff]
        %v1047 = vld [vmem:[%s290 + $0x11d0] sm:$0xf]
        %v1048 = vld [vmem:[%s290 + $0x11d4] sm:$0xff]
        %v1049 = vld [vmem:[%s290 + $0x11dc] sm:$0xff]
        %v1050 = vld [vmem:[%s290 + $0x11e4] sm:$0xff]
        %v1051 = vld [vmem:[%s290 + $0x11ec] sm:$0xf]
        %v1052 = vld [vmem:[%s290 + $0x11f0] sm:$0xff]
        %v1053 = vld [vmem:[%s290 + $0x11f8] sm:$0xff]
        %v1054 = vld [vmem:[%s290 + $0x1200] sm:$0xff]
        %v1055 = vld [vmem:[%s290 + $0x1208] sm:$0xf]
        %v1056 = vld [vmem:[%s290 + $0x120c] sm:$0xff]
        %v1057 = vld [vmem:[%s290 + $0x1214] sm:$0xff]
        %v1058 = vld [vmem:[%s290 + $0x121c] sm:$0xff]
        %v1059 = vld [vmem:[%s290 + $0x1224] sm:$0xf]
        %v1060 = vld [vmem:[%s290 + $0x1228] sm:$0xff]
        %v1061 = vld [vmem:[%s290 + $0x1230] sm:$0xff]
        %v1062 = vld [vmem:[%s290 + $0x1238] sm:$0xff]
        %v1063 = vld [vmem:[%s290 + $0x1240] sm:$0xf]
        %v1064 = vld [vmem:[%s290 + $0x1244] sm:$0xff]
        %v1065 = vld [vmem:[%s290 + $0x124c] sm:$0xff]
        %v1066 = vld [vmem:[%s290 + $0x1254] sm:$0xff]
        %v1067 = vld [vmem:[%s290 + $0x125c] sm:$0xf]
        %v1068 = vld [vmem:[%s290 + $0x1260] sm:$0xff]
        %v1069 = vld [vmem:[%s290 + $0x1268] sm:$0xff]
        %v1070 = vld [vmem:[%s290 + $0x1270] sm:$0xff]
        %v1071 = vld [vmem:[%s290 + $0x1278] sm:$0xf]
        %v1072 = vld [vmem:[%s290 + $0x127c] sm:$0xff]
        %v1073 = vld [vmem:[%s290 + $0x1284] sm:$0xff]
        %v1074 = vld [vmem:[%s290 + $0x128c] sm:$0xff]
        %v1075 = vld [vmem:[%s290 + $0x1294] sm:$0xf]
        %v1076 = vld [vmem:[%s290 + $0x1298] sm:$0xff]
        %v1077 = vld [vmem:[%s290 + $0x12a0] sm:$0xff]
        %v1078 = vld [vmem:[%s290 + $0x12a8] sm:$0xff]
        %v1079 = vld [vmem:[%s290 + $0x12b0] sm:$0xf]
        %v1080 = vld [vmem:[%s290 + $0x12b4] sm:$0xff]
        %v1081 = vld [vmem:[%s290 + $0x12bc] sm:$0xff]
        %v1082 = vld [vmem:[%s290 + $0x12c4] sm:$0xff]
        %v1083 = vld [vmem:[%s290 + $0x12cc] sm:$0xf]
        %v1084 = vld [vmem:[%s290 + $0x12d0] sm:$0xff]
        %v1085 = vld [vmem:[%s290 + $0x12d8] sm:$0xff]
        %v1086 = vld [vmem:[%s290 + $0x12e0] sm:$0xff]
        %v1087 = vld [vmem:[%s290 + $0x12e8] sm:$0xf]
        %v1088 = vld [vmem:[%s290 + $0x12ec] sm:$0xff]
        %v1089 = vld [vmem:[%s290 + $0x12f4] sm:$0xff]
        %v1090 = vld [vmem:[%s290 + $0x12fc] sm:$0xff]
        %v1091 = vld [vmem:[%s290 + $0x1304] sm:$0xf]
        %v1092 = vld [vmem:[%s290 + $0x1308] sm:$0xff]
        %v1093 = vld [vmem:[%s290 + $0x1310] sm:$0xff]
        %v1094 = vld [vmem:[%s290 + $0x1318] sm:$0xff]
        %v1095 = vld [vmem:[%s290 + $0x1320] sm:$0xf]
        %v1096 = vld [vmem:[%s290 + $0x1324] sm:$0xff]
        %v1097 = vld [vmem:[%s290 + $0x132c] sm:$0xff]
        %v1098 = vld [vmem:[%s290 + $0x1334] sm:$0xff]
        %v1099 = vld [vmem:[%s290 + $0x133c] sm:$0xf]
        %v1100 = vld [vmem:[%s290 + $0x1340] sm:$0xff]
        %v1101 = vld [vmem:[%s290 + $0x1348] sm:$0xff]
        %v1102 = vld [vmem:[%s290 + $0x1350] sm:$0xff]
        %v1103 = vld [vmem:[%s290 + $0x1358] sm:$0xf]
        %v1104 = vld [vmem:[%s290 + $0x135c] sm:$0xff]
        %v1105 = vld [vmem:[%s290 + $0x1364] sm:$0xff]
        %v1106 = vld [vmem:[%s290 + $0x136c] sm:$0xff]
        %v1107 = vld [vmem:[%s290 + $0x1374] sm:$0xf]
        %v1108 = vld [vmem:[%s290 + $0x1378] sm:$0xff]
        %v1109 = vld [vmem:[%s290 + $0x1380] sm:$0xff]
        %v1110 = vld [vmem:[%s290 + $0x1388] sm:$0xff]
        %v1111 = vld [vmem:[%s290 + $0x1390] sm:$0xf]
        %v1112 = vld [vmem:[%s290 + $0x1394] sm:$0xff]
        %v1113 = vld [vmem:[%s290 + $0x139c] sm:$0xff]
        %v1114 = vld [vmem:[%s290 + $0x13a4] sm:$0xff]
        %v1115 = vld [vmem:[%s290 + $0x13ac] sm:$0xf]
        %v1116 = vld [vmem:[%s290 + $0x13b0] sm:$0xff]
        %v1117 = vld [vmem:[%s290 + $0x13b8] sm:$0xff]
        %v1118 = vld [vmem:[%s290 + $0x13c0] sm:$0xff]
        %v1119 = vld [vmem:[%s290 + $0x13c8] sm:$0xf]
        %v1120 = vld [vmem:[%s290 + $0x13cc] sm:$0xff]
        %v1121 = vld [vmem:[%s290 + $0x13d4] sm:$0xff]
        %v1122 = vld [vmem:[%s290 + $0x13dc] sm:$0xff]
        %v1123 = vld [vmem:[%s290 + $0x13e4] sm:$0xf]
        %v1124 = vld [vmem:[%s290 + $0x13e8] sm:$0xff]
        %v1125 = vld [vmem:[%s290 + $0x13f0] sm:$0xff]
        %v1126 = vld [vmem:[%s290 + $0x13f8] sm:$0xff]
        %v1127 = vld [vmem:[%s290 + $0x1400] sm:$0xf]
        %v1128 = vld [vmem:[%s290 + $0x1404] sm:$0xff]
        %v1129 = vld [vmem:[%s290 + $0x140c] sm:$0xff]
        %v1130 = vld [vmem:[%s290 + $0x1414] sm:$0xff]
        %v1131 = vld [vmem:[%s290 + $0x141c] sm:$0xf]
        %v1132 = vld [vmem:[%s290 + $0x1420] sm:$0xff]
        %v1133 = vld [vmem:[%s290 + $0x1428] sm:$0xff]
        %v1134 = vld [vmem:[%s290 + $0x1430] sm:$0xff]
        %v1135 = vld [vmem:[%s290 + $0x1438] sm:$0xf]
        %v1136 = vld [vmem:[%s290 + $0x143c] sm:$0xff]
        %v1137 = vld [vmem:[%s290 + $0x1444] sm:$0xff]
        %v1138 = vld [vmem:[%s290 + $0x144c] sm:$0xff]
        %v1139 = vld [vmem:[%s290 + $0x1454] sm:$0xf]
        %v1140 = vld [vmem:[%s290 + $0x1458] sm:$0xff]
        %v1141 = vld [vmem:[%s290 + $0x1460] sm:$0xff]
        %v1142 = vld [vmem:[%s290 + $0x1468] sm:$0xff]
        %v1143 = vld [vmem:[%s290 + $0x1470] sm:$0xf]
        %v1144 = vld [vmem:[%s290 + $0x1474] sm:$0xff]
        %v1145 = vld [vmem:[%s290 + $0x147c] sm:$0xff]
        %v1146 = vld [vmem:[%s290 + $0x1484] sm:$0xff]
        %v1147 = vld [vmem:[%s290 + $0x148c] sm:$0xf]
        %v1148 = vld [vmem:[%s290 + $0x1490] sm:$0xff]
        %v1149 = vld [vmem:[%s290 + $0x1498] sm:$0xff]
        %v1150 = vld [vmem:[%s290 + $0x14a0] sm:$0xff]
        %v1151 = vld [vmem:[%s290 + $0x14a8] sm:$0xf]
        %v1152 = vld [vmem:[%s290 + $0x14ac] sm:$0xff]
        %v1153 = vld [vmem:[%s290 + $0x14b4] sm:$0xff]
        %v1154 = vld [vmem:[%s290 + $0x14bc] sm:$0xff]
        %v1155 = vld [vmem:[%s290 + $0x14c4] sm:$0xf]
        %v1156 = vld [vmem:[%s290 + $0x14c8] sm:$0xff]
        %v1157 = vld [vmem:[%s290 + $0x14d0] sm:$0xff]
        %v1158 = vld [vmem:[%s290 + $0x14d8] sm:$0xff]
        %v1159 = vld [vmem:[%s290 + $0x14e0] sm:$0xf]
        %v1160 = vld [vmem:[%s290 + $0x14e4] sm:$0xff]
        %v1161 = vld [vmem:[%s290 + $0x14ec] sm:$0xff]
        %v1162 = vld [vmem:[%s290 + $0x14f4] sm:$0xff]
        %v1163 = vld [vmem:[%s290 + $0x14fc] sm:$0xf]
        %v1164 = vld [vmem:[%s290 + $0x1500] sm:$0xff]
        %v1165 = vld [vmem:[%s290 + $0x1508] sm:$0xff]
        %v1166 = vld [vmem:[%s290 + $0x1510] sm:$0xff]
        %v1167 = vld [vmem:[%s290 + $0x1518] sm:$0xf]
        %v1168 = vld [vmem:[%s290 + $0x151c] sm:$0xff]
        %v1169 = vld [vmem:[%s290 + $0x1524] sm:$0xff]
        %v1170 = vld [vmem:[%s290 + $0x152c] sm:$0xff]
        %v1171 = vld [vmem:[%s290 + $0x1534] sm:$0xf]
        %v1172 = vld [vmem:[%s290 + $0x1538] sm:$0xff]
        %v1173 = vld [vmem:[%s290 + $0x1540] sm:$0xff]
        %v1174 = vld [vmem:[%s290 + $0x1548] sm:$0xff]
        %v1175 = vld [vmem:[%s290 + $0x1550] sm:$0xf]
        %v1176 = vld [vmem:[%s290 + $0x1554] sm:$0xff]
        %v1177 = vld [vmem:[%s290 + $0x155c] sm:$0xff]
        %v1178 = vld [vmem:[%s290 + $0x1564] sm:$0xff]
        %v1179 = vld [vmem:[%s290 + $0x156c] sm:$0xf]
        %v1180 = vld [vmem:[%s290 + $0x1570] sm:$0xff]
        %v1181 = vld [vmem:[%s290 + $0x1578] sm:$0xff]
        %v1182 = vld [vmem:[%s290 + $0x1580] sm:$0xff]
        %v1183 = vld [vmem:[%s290 + $0x1588] sm:$0xf]
        %v1184 = vld [vmem:[%s290 + $0x158c] sm:$0xff]
        %v1185 = vld [vmem:[%s290 + $0x1594] sm:$0xff]
        %v1186 = vld [vmem:[%s290 + $0x159c] sm:$0xff]
        %v1187 = vld [vmem:[%s290 + $0x15a4] sm:$0xf]
        %v1188 = vld [vmem:[%s290 + $0x15a8] sm:$0xff]
        %v1189 = vld [vmem:[%s290 + $0x15b0] sm:$0xff]
        %v1190 = vld [vmem:[%s290 + $0x15b8] sm:$0xff]
        %v1191 = vld [vmem:[%s290 + $0x15c0] sm:$0xf]
        %v1192 = vld [vmem:[%s290 + $0x15c4] sm:$0xff]
        %v1193 = vld [vmem:[%s290 + $0x15cc] sm:$0xff]
        %v1194 = vld [vmem:[%s290 + $0x15d4] sm:$0xff]
        %v1195 = vld [vmem:[%s290 + $0x15dc] sm:$0xf]
        %v1196 = vld [vmem:[%s290 + $0x15e0] sm:$0xff]
        %v1197 = vld [vmem:[%s290 + $0x15e8] sm:$0xff]
        %v1198 = vld [vmem:[%s290 + $0x15f0] sm:$0xff]
        %v1199 = vld [vmem:[%s290 + $0x15f8] sm:$0xf]
        %v1200 = vld [vmem:[%s290 + $0x15fc] sm:$0xff]
        %v1201 = vld [vmem:[%s290 + $0x1604] sm:$0xff]
        %v1202 = vld [vmem:[%s290 + $0x160c] sm:$0xff]
        %v1203 = vld [vmem:[%s290 + $0x1614] sm:$0xf]
        %v1204 = vld [vmem:[%s290 + $0x1618] sm:$0xff]
        %v1205 = vld [vmem:[%s290 + $0x1620] sm:$0xff]
        %v1206 = vld [vmem:[%s290 + $0x1628] sm:$0xff]
        %v1207 = vld [vmem:[%s290 + $0x1630] sm:$0xf]
        %v1208 = vld [vmem:[%s290 + $0x1634] sm:$0xff]
        %v1209 = vld [vmem:[%s290 + $0x163c] sm:$0xff]
        %v1210 = vld [vmem:[%s290 + $0x1644] sm:$0xff]
        %v1211 = vld [vmem:[%s290 + $0x164c] sm:$0xf]
        %v1212 = vld [vmem:[%s290 + $0x1650] sm:$0xff]
        %v1213 = vld [vmem:[%s290 + $0x1658] sm:$0xff]
        %v1214 = vld [vmem:[%s290 + $0x1660] sm:$0xff]
        %v1215 = vld [vmem:[%s290 + $0x1668] sm:$0xf]
        %v1216 = vld [vmem:[%s290 + $0x166c] sm:$0xff]
        %v1217 = vld [vmem:[%s290 + $0x1674] sm:$0xff]
        %v1218 = vld [vmem:[%s290 + $0x167c] sm:$0xff]
        %v1219 = vld [vmem:[%s290 + $0x1684] sm:$0xf]
        %v1220 = vld [vmem:[%s290 + $0x1688] sm:$0xff]
        %v1221 = vld [vmem:[%s290 + $0x1690] sm:$0xff]
        %v1222 = vld [vmem:[%s290 + $0x1698] sm:$0xff]
        %v1223 = vld [vmem:[%s290 + $0x16a0] sm:$0xf]
        %v1224 = vld [vmem:[%s290 + $0x16a4] sm:$0xff]
        %v1225 = vld [vmem:[%s290 + $0x16ac] sm:$0xff]
        %v1226 = vld [vmem:[%s290 + $0x16b4] sm:$0xff]
        %v1227 = vld [vmem:[%s290 + $0x16bc] sm:$0xf]
        %v1228 = vld [vmem:[%s290 + $0x16c0] sm:$0xff]
        %v1229 = vld [vmem:[%s290 + $0x16c8] sm:$0xff]
        %v1230 = vld [vmem:[%s290 + $0x16d0] sm:$0xff]
        %v1231 = vld [vmem:[%s290 + $0x16d8] sm:$0xf]
        %v1232 = vld [vmem:[%s290 + $0x16dc] sm:$0xff]
        %v1233 = vld [vmem:[%s290 + $0x16e4] sm:$0xff]
        %v1234 = vld [vmem:[%s290 + $0x16ec] sm:$0xff]
        %v1235 = vld [vmem:[%s290 + $0x16f4] sm:$0xf]
        %v1236 = vld [vmem:[%s290 + $0x16f8] sm:$0xff]
        %v1237 = vld [vmem:[%s290 + $0x1700] sm:$0xff]
        %v1238 = vld [vmem:[%s290 + $0x1708] sm:$0xff]
        %v1239 = vld [vmem:[%s290 + $0x1710] sm:$0xf]
        %v1240 = vld [vmem:[%s290 + $0x1714] sm:$0xff]
        %v1241 = vld [vmem:[%s290 + $0x171c] sm:$0xff]
        %v1242 = vld [vmem:[%s290 + $0x1724] sm:$0xff]
        %v1243 = vld [vmem:[%s290 + $0x172c] sm:$0xf]
        %v1244 = vld [vmem:[%s290 + $0x1730] sm:$0xff]
        %v1245 = vld [vmem:[%s290 + $0x1738] sm:$0xff]
        %v1246 = vld [vmem:[%s290 + $0x1740] sm:$0xff]
        %v1247 = vld [vmem:[%s290 + $0x1748] sm:$0xf]
        %v1248 = vld [vmem:[%s290 + $0x174c] sm:$0xff]
        %v1249 = vld [vmem:[%s290 + $0x1754] sm:$0xff]
        %v1250 = vld [vmem:[%s290 + $0x175c] sm:$0xff]
        %v1251 = vld [vmem:[%s290 + $0x1764] sm:$0xf]
        %v1252 = vld [vmem:[%s290 + $0x1768] sm:$0xff]
        %v1253 = vld [vmem:[%s290 + $0x1770] sm:$0xff]
        %v1254 = vld [vmem:[%s290 + $0x1778] sm:$0xff]
        %v1255 = vld [vmem:[%s290 + $0x1780] sm:$0xf]
        %v1256 = vld [vmem:[%s290 + $0x1784] sm:$0xff]
        %v1257 = vld [vmem:[%s290 + $0x178c] sm:$0xff]
        %v1258 = vld [vmem:[%s290 + $0x1794] sm:$0xff]
        %v1259 = vld [vmem:[%s290 + $0x179c] sm:$0xf]
        %v1260 = vld [vmem:[%s290 + $0x17a0] sm:$0xff]
        %v1261 = vld [vmem:[%s290 + $0x17a8] sm:$0xff]
        %v1262 = vld [vmem:[%s290 + $0x17b0] sm:$0xff]
        %v1263 = vld [vmem:[%s290 + $0x17b8] sm:$0xf]
        %v1264 = vld [vmem:[%s290 + $0x17bc] sm:$0xff]
        %v1265 = vld [vmem:[%s290 + $0x17c4] sm:$0xff]
        %v1266 = vld [vmem:[%s290 + $0x17cc] sm:$0xff]
        %v1267 = vld [vmem:[%s290 + $0x17d4] sm:$0xf]
        %v1268 = vld [vmem:[%s290 + $0x17d8] sm:$0xff]
        %v1269 = vld [vmem:[%s290 + $0x17e0] sm:$0xff]
        %v1270 = vld [vmem:[%s290 + $0x17e8] sm:$0xff]
        %v1271 = vld [vmem:[%s290 + $0x17f0] sm:$0xf]
        %v1272 = vld [vmem:[%s290 + $0x17f4] sm:$0xff]
        %v1273 = vld [vmem:[%s290 + $0x17fc] sm:$0xff]
        %v1274 = vld [vmem:[%s290 + $0x1804] sm:$0xff]
        %v1275 = vld [vmem:[%s290 + $0x180c] sm:$0xf]
        %v1276 = vld [vmem:[%s290 + $0x1810] sm:$0xff]
        %v1277 = vld [vmem:[%s290 + $0x1818] sm:$0xff]
        %v1278 = vld [vmem:[%s290 + $0x1820] sm:$0xff]
        %v1279 = vld [vmem:[%s290 + $0x1828] sm:$0xf]
        %v1280 = vld [vmem:[%s290 + $0x182c] sm:$0xff]
        %v1281 = vld [vmem:[%s290 + $0x1834] sm:$0xff]
        %v1282 = vld [vmem:[%s290 + $0x183c] sm:$0xff]
        %v1283 = vld [vmem:[%s290 + $0x1844] sm:$0xf]
        %v1284 = vld [vmem:[%s290 + $0x1848] sm:$0xff]
        %v1285 = vld [vmem:[%s290 + $0x1850] sm:$0xff]
        %v1286 = vld [vmem:[%s290 + $0x1858] sm:$0xff]
        %v1287 = vld [vmem:[%s290 + $0x1860] sm:$0xf]
        %v1288 = vld [vmem:[%s290 + $0x1864] sm:$0xff]
        %v1289 = vld [vmem:[%s290 + $0x186c] sm:$0xff]
        %v1290 = vld [vmem:[%s290 + $0x1874] sm:$0xff]
        %v1291 = vld [vmem:[%s290 + $0x187c] sm:$0xf]
        %v2188 = vunpack.c.l.b16 %v396
        %v2189 = vunpack.c.h.b16 %v396
        %v2190 = vunpack.c.l.b16 %v397
        %v2191 = vunpack.c.h.b16 %v397
        %v2192 = vunpack.c.l.b16 %v398
        %v2193 = vunpack.c.h.b16 %v398
        %v2194 = vunpack.c.l.b16 %v399
        %v2195 = vunpack.c.l.b16 %v400
        %v2196 = vunpack.c.h.b16 %v400
        %v2197 = vunpack.c.l.b16 %v401
        %v2198 = vunpack.c.h.b16 %v401
        %v2199 = vunpack.c.l.b16 %v402
        %v2200 = vunpack.c.h.b16 %v402
        %v2201 = vunpack.c.l.b16 %v403
        %v2202 = vunpack.c.l.b16 %v404
        %v2203 = vunpack.c.h.b16 %v404
        %v2204 = vunpack.c.l.b16 %v405
        %v2205 = vunpack.c.h.b16 %v405
        %v2206 = vunpack.c.l.b16 %v406
        %v2207 = vunpack.c.h.b16 %v406
        %v2208 = vunpack.c.l.b16 %v407
        %v2209 = vunpack.c.l.b16 %v408
        %v2210 = vunpack.c.h.b16 %v408
        %v2211 = vunpack.c.l.b16 %v409
        %v2212 = vunpack.c.h.b16 %v409
        %v2213 = vunpack.c.l.b16 %v410
        %v2214 = vunpack.c.h.b16 %v410
        %v2215 = vunpack.c.l.b16 %v411
        %v2216 = vunpack.c.l.b16 %v412
        %v2217 = vunpack.c.h.b16 %v412
        %v2218 = vunpack.c.l.b16 %v413
        %v2219 = vunpack.c.h.b16 %v413
        %v2220 = vunpack.c.l.b16 %v414
        %v2221 = vunpack.c.h.b16 %v414
        %v2222 = vunpack.c.l.b16 %v415
        %v2223 = vunpack.c.l.b16 %v416
        %v2224 = vunpack.c.h.b16 %v416
        %v2225 = vunpack.c.l.b16 %v417
        %v2226 = vunpack.c.h.b16 %v417
        %v2227 = vunpack.c.l.b16 %v418
        %v2228 = vunpack.c.h.b16 %v418
        %v2229 = vunpack.c.l.b16 %v419
        %v2230 = vunpack.c.l.b16 %v420
        %v2231 = vunpack.c.h.b16 %v420
        %v2232 = vunpack.c.l.b16 %v421
        %v2233 = vunpack.c.h.b16 %v421
        %v2234 = vunpack.c.l.b16 %v422
        %v2235 = vunpack.c.h.b16 %v422
        %v2236 = vunpack.c.l.b16 %v423
        %v2237 = vunpack.c.l.b16 %v424
        %v2238 = vunpack.c.h.b16 %v424
        %v2239 = vunpack.c.l.b16 %v425
        %v2240 = vunpack.c.h.b16 %v425
        %v2241 = vunpack.c.l.b16 %v426
        %v2242 = vunpack.c.h.b16 %v426
        %v2243 = vunpack.c.l.b16 %v427
        %v2244 = vunpack.c.l.b16 %v428
        %v2245 = vunpack.c.h.b16 %v428
        %v2246 = vunpack.c.l.b16 %v429
        %v2247 = vunpack.c.h.b16 %v429
        %v2248 = vunpack.c.l.b16 %v430
        %v2249 = vunpack.c.h.b16 %v430
        %v2250 = vunpack.c.l.b16 %v431
        %v2251 = vunpack.c.l.b16 %v432
        %v2252 = vunpack.c.h.b16 %v432
        %v2253 = vunpack.c.l.b16 %v433
        %v2254 = vunpack.c.h.b16 %v433
        %v2255 = vunpack.c.l.b16 %v434
        %v2256 = vunpack.c.h.b16 %v434
        %v2257 = vunpack.c.l.b16 %v435
        %v2258 = vunpack.c.l.b16 %v436
        %v2259 = vunpack.c.h.b16 %v436
        %v2260 = vunpack.c.l.b16 %v437
        %v2261 = vunpack.c.h.b16 %v437
        %v2262 = vunpack.c.l.b16 %v438
        %v2263 = vunpack.c.h.b16 %v438
        %v2264 = vunpack.c.l.b16 %v439
        %v2265 = vunpack.c.l.b16 %v440
        %v2266 = vunpack.c.h.b16 %v440
        %v2267 = vunpack.c.l.b16 %v441
        %v2268 = vunpack.c.h.b16 %v441
        %v2269 = vunpack.c.l.b16 %v442
        %v2270 = vunpack.c.h.b16 %v442
        %v2271 = vunpack.c.l.b16 %v443
        %v2272 = vunpack.c.l.b16 %v444
        %v2273 = vunpack.c.h.b16 %v444
        %v2274 = vunpack.c.l.b16 %v445
        %v2275 = vunpack.c.h.b16 %v445
        %v2276 = vunpack.c.l.b16 %v446
        %v2277 = vunpack.c.h.b16 %v446
        %v2278 = vunpack.c.l.b16 %v447
        %v2279 = vunpack.c.l.b16 %v448
        %v2280 = vunpack.c.h.b16 %v448
        %v2281 = vunpack.c.l.b16 %v449
        %v2282 = vunpack.c.h.b16 %v449
        %v2283 = vunpack.c.l.b16 %v450
        %v2284 = vunpack.c.h.b16 %v450
        %v2285 = vunpack.c.l.b16 %v451
        %v2286 = vunpack.c.l.b16 %v452
        %v2287 = vunpack.c.h.b16 %v452
        %v2288 = vunpack.c.l.b16 %v453
        %v2289 = vunpack.c.h.b16 %v453
        %v2290 = vunpack.c.l.b16 %v454
        %v2291 = vunpack.c.h.b16 %v454
        %v2292 = vunpack.c.l.b16 %v455
        %v2293 = vunpack.c.l.b16 %v456
        %v2294 = vunpack.c.h.b16 %v456
        %v2295 = vunpack.c.l.b16 %v457
        %v2296 = vunpack.c.h.b16 %v457
        %v2297 = vunpack.c.l.b16 %v458
        %v2298 = vunpack.c.h.b16 %v458
        %v2299 = vunpack.c.l.b16 %v459
        %v2300 = vunpack.c.l.b16 %v460
        %v2301 = vunpack.c.h.b16 %v460
        %v2302 = vunpack.c.l.b16 %v461
        %v2303 = vunpack.c.h.b16 %v461
        %v2304 = vunpack.c.l.b16 %v462
        %v2305 = vunpack.c.h.b16 %v462
        %v2306 = vunpack.c.l.b16 %v463
        %v2307 = vunpack.c.l.b16 %v464
        %v2308 = vunpack.c.h.b16 %v464
        %v2309 = vunpack.c.l.b16 %v465
        %v2310 = vunpack.c.h.b16 %v465
        %v2311 = vunpack.c.l.b16 %v466
        %v2312 = vunpack.c.h.b16 %v466
        %v2313 = vunpack.c.l.b16 %v467
        %v2314 = vunpack.c.l.b16 %v468
        %v2315 = vunpack.c.h.b16 %v468
        %v2316 = vunpack.c.l.b16 %v469
        %v2317 = vunpack.c.h.b16 %v469
        %v2318 = vunpack.c.l.b16 %v470
        %v2319 = vunpack.c.h.b16 %v470
        %v2320 = vunpack.c.l.b16 %v471
        %v2321 = vunpack.c.l.b16 %v472
        %v2322 = vunpack.c.h.b16 %v472
        %v2323 = vunpack.c.l.b16 %v473
        %v2324 = vunpack.c.h.b16 %v473
        %v2325 = vunpack.c.l.b16 %v474
        %v2326 = vunpack.c.h.b16 %v474
        %v2327 = vunpack.c.l.b16 %v475
        %v2328 = vunpack.c.l.b16 %v476
        %v2329 = vunpack.c.h.b16 %v476
        %v2330 = vunpack.c.l.b16 %v477
        %v2331 = vunpack.c.h.b16 %v477
        %v2332 = vunpack.c.l.b16 %v478
        %v2333 = vunpack.c.h.b16 %v478
        %v2334 = vunpack.c.l.b16 %v479
        %v2335 = vunpack.c.l.b16 %v480
        %v2336 = vunpack.c.h.b16 %v480
        %v2337 = vunpack.c.l.b16 %v481
        %v2338 = vunpack.c.h.b16 %v481
        %v2339 = vunpack.c.l.b16 %v482
        %v2340 = vunpack.c.h.b16 %v482
        %v2341 = vunpack.c.l.b16 %v483
        %v2342 = vunpack.c.l.b16 %v484
        %v2343 = vunpack.c.h.b16 %v484
        %v2344 = vunpack.c.l.b16 %v485
        %v2345 = vunpack.c.h.b16 %v485
        %v2346 = vunpack.c.l.b16 %v486
        %v2347 = vunpack.c.h.b16 %v486
        %v2348 = vunpack.c.l.b16 %v487
        %v2349 = vunpack.c.l.b16 %v488
        %v2350 = vunpack.c.h.b16 %v488
        %v2351 = vunpack.c.l.b16 %v489
        %v2352 = vunpack.c.h.b16 %v489
        %v2353 = vunpack.c.l.b16 %v490
        %v2354 = vunpack.c.h.b16 %v490
        %v2355 = vunpack.c.l.b16 %v491
        %v2356 = vunpack.c.l.b16 %v492
        %v2357 = vunpack.c.h.b16 %v492
        %v2358 = vunpack.c.l.b16 %v493
        %v2359 = vunpack.c.h.b16 %v493
        %v2360 = vunpack.c.l.b16 %v494
        %v2361 = vunpack.c.h.b16 %v494
        %v2362 = vunpack.c.l.b16 %v495
        %v2363 = vunpack.c.l.b16 %v496
        %v2364 = vunpack.c.h.b16 %v496
        %v2365 = vunpack.c.l.b16 %v497
        %v2366 = vunpack.c.h.b16 %v497
        %v2367 = vunpack.c.l.b16 %v498
        %v2368 = vunpack.c.h.b16 %v498
        %v2369 = vunpack.c.l.b16 %v499
        %v2370 = vunpack.c.l.b16 %v500
        %v2371 = vunpack.c.h.b16 %v500
        %v2372 = vunpack.c.l.b16 %v501
        %v2373 = vunpack.c.h.b16 %v501
        %v2374 = vunpack.c.l.b16 %v502
        %v2375 = vunpack.c.h.b16 %v502
        %v2376 = vunpack.c.l.b16 %v503
        %v2377 = vunpack.c.l.b16 %v504
        %v2378 = vunpack.c.h.b16 %v504
        %v2379 = vunpack.c.l.b16 %v505
        %v2380 = vunpack.c.h.b16 %v505
        %v2381 = vunpack.c.l.b16 %v506
        %v2382 = vunpack.c.h.b16 %v506
        %v2383 = vunpack.c.l.b16 %v507
        %v2384 = vunpack.c.l.b16 %v508
        %v2385 = vunpack.c.h.b16 %v508
        %v2386 = vunpack.c.l.b16 %v509
        %v2387 = vunpack.c.h.b16 %v509
        %v2388 = vunpack.c.l.b16 %v510
        %v2389 = vunpack.c.h.b16 %v510
        %v2390 = vunpack.c.l.b16 %v511
        %v2391 = vunpack.c.l.b16 %v512
        %v2392 = vunpack.c.h.b16 %v512
        %v2393 = vunpack.c.l.b16 %v513
        %v2394 = vunpack.c.h.b16 %v513
        %v2395 = vunpack.c.l.b16 %v514
        %v2396 = vunpack.c.h.b16 %v514
        %v2397 = vunpack.c.l.b16 %v515
        %v2398 = vunpack.c.l.b16 %v516
        %v2399 = vunpack.c.h.b16 %v516
        %v2400 = vunpack.c.l.b16 %v517
        %v2401 = vunpack.c.h.b16 %v517
        %v2402 = vunpack.c.l.b16 %v518
        %v2403 = vunpack.c.h.b16 %v518
        %v2404 = vunpack.c.l.b16 %v519
        %v2405 = vunpack.c.l.b16 %v520
        %v2406 = vunpack.c.h.b16 %v520
        %v2407 = vunpack.c.l.b16 %v521
        %v2408 = vunpack.c.h.b16 %v521
        %v2409 = vunpack.c.l.b16 %v522
        %v2410 = vunpack.c.h.b16 %v522
        %v2411 = vunpack.c.l.b16 %v523
        %v2412 = vunpack.c.l.b16 %v524
        %v2413 = vunpack.c.h.b16 %v524
        %v2414 = vunpack.c.l.b16 %v525
        %v2415 = vunpack.c.h.b16 %v525
        %v2416 = vunpack.c.l.b16 %v526
        %v2417 = vunpack.c.h.b16 %v526
        %v2418 = vunpack.c.l.b16 %v527
        %v2419 = vunpack.c.l.b16 %v528
        %v2420 = vunpack.c.h.b16 %v528
        %v2421 = vunpack.c.l.b16 %v529
        %v2422 = vunpack.c.h.b16 %v529
        %v2423 = vunpack.c.l.b16 %v530
        %v2424 = vunpack.c.h.b16 %v530
        %v2425 = vunpack.c.l.b16 %v531
        %v2426 = vunpack.c.l.b16 %v532
        %v2427 = vunpack.c.h.b16 %v532
        %v2428 = vunpack.c.l.b16 %v533
        %v2429 = vunpack.c.h.b16 %v533
        %v2430 = vunpack.c.l.b16 %v534
        %v2431 = vunpack.c.h.b16 %v534
        %v2432 = vunpack.c.l.b16 %v535
        %v2433 = vunpack.c.l.b16 %v536
        %v2434 = vunpack.c.h.b16 %v536
        %v2435 = vunpack.c.l.b16 %v537
        %v2436 = vunpack.c.h.b16 %v537
        %v2437 = vunpack.c.l.b16 %v538
        %v2438 = vunpack.c.h.b16 %v538
        %v2439 = vunpack.c.l.b16 %v539
        %v2440 = vunpack.c.l.b16 %v540
        %v2441 = vunpack.c.h.b16 %v540
        %v2442 = vunpack.c.l.b16 %v541
        %v2443 = vunpack.c.h.b16 %v541
        %v2444 = vunpack.c.l.b16 %v542
        %v2445 = vunpack.c.h.b16 %v542
        %v2446 = vunpack.c.l.b16 %v543
        %v2447 = vunpack.c.l.b16 %v544
        %v2448 = vunpack.c.h.b16 %v544
        %v2449 = vunpack.c.l.b16 %v545
        %v2450 = vunpack.c.h.b16 %v545
        %v2451 = vunpack.c.l.b16 %v546
        %v2452 = vunpack.c.h.b16 %v546
        %v2453 = vunpack.c.l.b16 %v547
        %v2454 = vunpack.c.l.b16 %v548
        %v2455 = vunpack.c.h.b16 %v548
        %v2456 = vunpack.c.l.b16 %v549
        %v2457 = vunpack.c.h.b16 %v549
        %v2458 = vunpack.c.l.b16 %v550
        %v2459 = vunpack.c.h.b16 %v550
        %v2460 = vunpack.c.l.b16 %v551
        %v2461 = vunpack.c.l.b16 %v552
        %v2462 = vunpack.c.h.b16 %v552
        %v2463 = vunpack.c.l.b16 %v553
        %v2464 = vunpack.c.h.b16 %v553
        %v2465 = vunpack.c.l.b16 %v554
        %v2466 = vunpack.c.h.b16 %v554
        %v2467 = vunpack.c.l.b16 %v555
        %v2468 = vunpack.c.l.b16 %v556
        %v2469 = vunpack.c.h.b16 %v556
        %v2470 = vunpack.c.l.b16 %v557
        %v2471 = vunpack.c.h.b16 %v557
        %v2472 = vunpack.c.l.b16 %v558
        %v2473 = vunpack.c.h.b16 %v558
        %v2474 = vunpack.c.l.b16 %v559
        %v2475 = vunpack.c.l.b16 %v560
        %v2476 = vunpack.c.h.b16 %v560
        %v2477 = vunpack.c.l.b16 %v561
        %v2478 = vunpack.c.h.b16 %v561
        %v2479 = vunpack.c.l.b16 %v562
        %v2480 = vunpack.c.h.b16 %v562
        %v2481 = vunpack.c.l.b16 %v563
        %v2482 = vunpack.c.l.b16 %v564
        %v2483 = vunpack.c.h.b16 %v564
        %v2484 = vunpack.c.l.b16 %v565
        %v2485 = vunpack.c.h.b16 %v565
        %v2486 = vunpack.c.l.b16 %v566
        %v2487 = vunpack.c.h.b16 %v566
        %v2488 = vunpack.c.l.b16 %v567
        %v2489 = vunpack.c.l.b16 %v568
        %v2490 = vunpack.c.h.b16 %v568
        %v2491 = vunpack.c.l.b16 %v569
        %v2492 = vunpack.c.h.b16 %v569
        %v2493 = vunpack.c.l.b16 %v570
        %v2494 = vunpack.c.h.b16 %v570
        %v2495 = vunpack.c.l.b16 %v571
        %v2496 = vunpack.c.l.b16 %v572
        %v2497 = vunpack.c.h.b16 %v572
        %v2498 = vunpack.c.l.b16 %v573
        %v2499 = vunpack.c.h.b16 %v573
        %v2500 = vunpack.c.l.b16 %v574
        %v2501 = vunpack.c.h.b16 %v574
        %v2502 = vunpack.c.l.b16 %v575
        %v2503 = vunpack.c.l.b16 %v576
        %v2504 = vunpack.c.h.b16 %v576
        %v2505 = vunpack.c.l.b16 %v577
        %v2506 = vunpack.c.h.b16 %v577
        %v2507 = vunpack.c.l.b16 %v578
        %v2508 = vunpack.c.h.b16 %v578
        %v2509 = vunpack.c.l.b16 %v579
        %v2510 = vunpack.c.l.b16 %v580
        %v2511 = vunpack.c.h.b16 %v580
        %v2512 = vunpack.c.l.b16 %v581
        %v2513 = vunpack.c.h.b16 %v581
        %v2514 = vunpack.c.l.b16 %v582
        %v2515 = vunpack.c.h.b16 %v582
        %v2516 = vunpack.c.l.b16 %v583
        %v2517 = vunpack.c.l.b16 %v584
        %v2518 = vunpack.c.h.b16 %v584
        %v2519 = vunpack.c.l.b16 %v585
        %v2520 = vunpack.c.h.b16 %v585
        %v2521 = vunpack.c.l.b16 %v586
        %v2522 = vunpack.c.h.b16 %v586
        %v2523 = vunpack.c.l.b16 %v587
        %v2524 = vunpack.c.l.b16 %v588
        %v2525 = vunpack.c.h.b16 %v588
        %v2526 = vunpack.c.l.b16 %v589
        %v2527 = vunpack.c.h.b16 %v589
        %v2528 = vunpack.c.l.b16 %v590
        %v2529 = vunpack.c.h.b16 %v590
        %v2530 = vunpack.c.l.b16 %v591
        %v2531 = vunpack.c.l.b16 %v592
        %v2532 = vunpack.c.h.b16 %v592
        %v2533 = vunpack.c.l.b16 %v593
        %v2534 = vunpack.c.h.b16 %v593
        %v2535 = vunpack.c.l.b16 %v594
        %v2536 = vunpack.c.h.b16 %v594
        %v2537 = vunpack.c.l.b16 %v595
        %v2538 = vunpack.c.l.b16 %v596
        %v2539 = vunpack.c.h.b16 %v596
        %v2540 = vunpack.c.l.b16 %v597
        %v2541 = vunpack.c.h.b16 %v597
        %v2542 = vunpack.c.l.b16 %v598
        %v2543 = vunpack.c.h.b16 %v598
        %v2544 = vunpack.c.l.b16 %v599
        %v2545 = vunpack.c.l.b16 %v600
        %v2546 = vunpack.c.h.b16 %v600
        %v2547 = vunpack.c.l.b16 %v601
        %v2548 = vunpack.c.h.b16 %v601
        %v2549 = vunpack.c.l.b16 %v602
        %v2550 = vunpack.c.h.b16 %v602
        %v2551 = vunpack.c.l.b16 %v603
        %v2552 = vunpack.c.l.b16 %v604
        %v2553 = vunpack.c.h.b16 %v604
        %v2554 = vunpack.c.l.b16 %v605
        %v2555 = vunpack.c.h.b16 %v605
        %v2556 = vunpack.c.l.b16 %v606
        %v2557 = vunpack.c.h.b16 %v606
        %v2558 = vunpack.c.l.b16 %v607
        %v2559 = vunpack.c.l.b16 %v608
        %v2560 = vunpack.c.h.b16 %v608
        %v2561 = vunpack.c.l.b16 %v609
        %v2562 = vunpack.c.h.b16 %v609
        %v2563 = vunpack.c.l.b16 %v610
        %v2564 = vunpack.c.h.b16 %v610
        %v2565 = vunpack.c.l.b16 %v611
        %v2566 = vunpack.c.l.b16 %v612
        %v2567 = vunpack.c.h.b16 %v612
        %v2568 = vunpack.c.l.b16 %v613
        %v2569 = vunpack.c.h.b16 %v613
        %v2570 = vunpack.c.l.b16 %v614
        %v2571 = vunpack.c.h.b16 %v614
        %v2572 = vunpack.c.l.b16 %v615
        %v2573 = vunpack.c.l.b16 %v616
        %v2574 = vunpack.c.h.b16 %v616
        %v2575 = vunpack.c.l.b16 %v617
        %v2576 = vunpack.c.h.b16 %v617
        %v2577 = vunpack.c.l.b16 %v618
        %v2578 = vunpack.c.h.b16 %v618
        %v2579 = vunpack.c.l.b16 %v619
        %v2580 = vunpack.c.l.b16 %v620
        %v2581 = vunpack.c.h.b16 %v620
        %v2582 = vunpack.c.l.b16 %v621
        %v2583 = vunpack.c.h.b16 %v621
        %v2584 = vunpack.c.l.b16 %v622
        %v2585 = vunpack.c.h.b16 %v622
        %v2586 = vunpack.c.l.b16 %v623
        %v2587 = vunpack.c.l.b16 %v624
        %v2588 = vunpack.c.h.b16 %v624
        %v2589 = vunpack.c.l.b16 %v625
        %v2590 = vunpack.c.h.b16 %v625
        %v2591 = vunpack.c.l.b16 %v626
        %v2592 = vunpack.c.h.b16 %v626
        %v2593 = vunpack.c.l.b16 %v627
        %v2594 = vunpack.c.l.b16 %v628
        %v2595 = vunpack.c.h.b16 %v628
        %v2596 = vunpack.c.l.b16 %v629
        %v2597 = vunpack.c.h.b16 %v629
        %v2598 = vunpack.c.l.b16 %v630
        %v2599 = vunpack.c.h.b16 %v630
        %v2600 = vunpack.c.l.b16 %v631
        %v2601 = vunpack.c.l.b16 %v632
        %v2602 = vunpack.c.h.b16 %v632
        %v2603 = vunpack.c.l.b16 %v633
        %v2604 = vunpack.c.h.b16 %v633
        %v2605 = vunpack.c.l.b16 %v634
        %v2606 = vunpack.c.h.b16 %v634
        %v2607 = vunpack.c.l.b16 %v635
        %v2608 = vunpack.c.l.b16 %v636
        %v2609 = vunpack.c.h.b16 %v636
        %v2610 = vunpack.c.l.b16 %v637
        %v2611 = vunpack.c.h.b16 %v637
        %v2612 = vunpack.c.l.b16 %v638
        %v2613 = vunpack.c.h.b16 %v638
        %v2614 = vunpack.c.l.b16 %v639
        %v2615 = vunpack.c.l.b16 %v640
        %v2616 = vunpack.c.h.b16 %v640
        %v2617 = vunpack.c.l.b16 %v641
        %v2618 = vunpack.c.h.b16 %v641
        %v2619 = vunpack.c.l.b16 %v642
        %v2620 = vunpack.c.h.b16 %v642
        %v2621 = vunpack.c.l.b16 %v643
        %v2622 = vunpack.c.l.b16 %v644
        %v2623 = vunpack.c.h.b16 %v644
        %v2624 = vunpack.c.l.b16 %v645
        %v2625 = vunpack.c.h.b16 %v645
        %v2626 = vunpack.c.l.b16 %v646
        %v2627 = vunpack.c.h.b16 %v646
        %v2628 = vunpack.c.l.b16 %v647
        %v2629 = vunpack.c.l.b16 %v648
        %v2630 = vunpack.c.h.b16 %v648
        %v2631 = vunpack.c.l.b16 %v649
        %v2632 = vunpack.c.h.b16 %v649
        %v2633 = vunpack.c.l.b16 %v650
        %v2634 = vunpack.c.h.b16 %v650
        %v2635 = vunpack.c.l.b16 %v651
        %v2636 = vunpack.c.l.b16 %v652
        %v2637 = vunpack.c.h.b16 %v652
        %v2638 = vunpack.c.l.b16 %v653
        %v2639 = vunpack.c.h.b16 %v653
        %v2640 = vunpack.c.l.b16 %v654
        %v2641 = vunpack.c.h.b16 %v654
        %v2642 = vunpack.c.l.b16 %v655
        %v2643 = vunpack.c.l.b16 %v656
        %v2644 = vunpack.c.h.b16 %v656
        %v2645 = vunpack.c.l.b16 %v657
        %v2646 = vunpack.c.h.b16 %v657
        %v2647 = vunpack.c.l.b16 %v658
        %v2648 = vunpack.c.h.b16 %v658
        %v2649 = vunpack.c.l.b16 %v659
        %v2650 = vunpack.c.l.b16 %v660
        %v2651 = vunpack.c.h.b16 %v660
        %v2652 = vunpack.c.l.b16 %v661
        %v2653 = vunpack.c.h.b16 %v661
        %v2654 = vunpack.c.l.b16 %v662
        %v2655 = vunpack.c.h.b16 %v662
        %v2656 = vunpack.c.l.b16 %v663
        %v2657 = vunpack.c.l.b16 %v664
        %v2658 = vunpack.c.h.b16 %v664
        %v2659 = vunpack.c.l.b16 %v665
        %v2660 = vunpack.c.h.b16 %v665
        %v2661 = vunpack.c.l.b16 %v666
        %v2662 = vunpack.c.h.b16 %v666
        %v2663 = vunpack.c.l.b16 %v667
        %v2664 = vunpack.c.l.b16 %v668
        %v2665 = vunpack.c.h.b16 %v668
        %v2666 = vunpack.c.l.b16 %v669
        %v2667 = vunpack.c.h.b16 %v669
        %v2668 = vunpack.c.l.b16 %v670
        %v2669 = vunpack.c.h.b16 %v670
        %v2670 = vunpack.c.l.b16 %v671
        %v2671 = vunpack.c.l.b16 %v672
        %v2672 = vunpack.c.h.b16 %v672
        %v2673 = vunpack.c.l.b16 %v673
        %v2674 = vunpack.c.h.b16 %v673
        %v2675 = vunpack.c.l.b16 %v674
        %v2676 = vunpack.c.h.b16 %v674
        %v2677 = vunpack.c.l.b16 %v675
        %v2678 = vunpack.c.l.b16 %v676
        %v2679 = vunpack.c.h.b16 %v676
        %v2680 = vunpack.c.l.b16 %v677
        %v2681 = vunpack.c.h.b16 %v677
        %v2682 = vunpack.c.l.b16 %v678
        %v2683 = vunpack.c.h.b16 %v678
        %v2684 = vunpack.c.l.b16 %v679
        %v2685 = vunpack.c.l.b16 %v680
        %v2686 = vunpack.c.h.b16 %v680
        %v2687 = vunpack.c.l.b16 %v681
        %v2688 = vunpack.c.h.b16 %v681
        %v2689 = vunpack.c.l.b16 %v682
        %v2690 = vunpack.c.h.b16 %v682
        %v2691 = vunpack.c.l.b16 %v683
        %v2692 = vunpack.c.l.b16 %v684
        %v2693 = vunpack.c.h.b16 %v684
        %v2694 = vunpack.c.l.b16 %v685
        %v2695 = vunpack.c.h.b16 %v685
        %v2696 = vunpack.c.l.b16 %v686
        %v2697 = vunpack.c.h.b16 %v686
        %v2698 = vunpack.c.l.b16 %v687
        %v2699 = vunpack.c.l.b16 %v688
        %v2700 = vunpack.c.h.b16 %v688
        %v2701 = vunpack.c.l.b16 %v689
        %v2702 = vunpack.c.h.b16 %v689
        %v2703 = vunpack.c.l.b16 %v690
        %v2704 = vunpack.c.h.b16 %v690
        %v2705 = vunpack.c.l.b16 %v691
        %v2706 = vunpack.c.l.b16 %v692
        %v2707 = vunpack.c.h.b16 %v692
        %v2708 = vunpack.c.l.b16 %v693
        %v2709 = vunpack.c.h.b16 %v693
        %v2710 = vunpack.c.l.b16 %v694
        %v2711 = vunpack.c.h.b16 %v694
        %v2712 = vunpack.c.l.b16 %v695
        %v2713 = vunpack.c.l.b16 %v696
        %v2714 = vunpack.c.h.b16 %v696
        %v2715 = vunpack.c.l.b16 %v697
        %v2716 = vunpack.c.h.b16 %v697
        %v2717 = vunpack.c.l.b16 %v698
        %v2718 = vunpack.c.h.b16 %v698
        %v2719 = vunpack.c.l.b16 %v699
        %v2720 = vunpack.c.l.b16 %v700
        %v2721 = vunpack.c.h.b16 %v700
        %v2722 = vunpack.c.l.b16 %v701
        %v2723 = vunpack.c.h.b16 %v701
        %v2724 = vunpack.c.l.b16 %v702
        %v2725 = vunpack.c.h.b16 %v702
        %v2726 = vunpack.c.l.b16 %v703
        %v2727 = vunpack.c.l.b16 %v704
        %v2728 = vunpack.c.h.b16 %v704
        %v2729 = vunpack.c.l.b16 %v705
        %v2730 = vunpack.c.h.b16 %v705
        %v2731 = vunpack.c.l.b16 %v706
        %v2732 = vunpack.c.h.b16 %v706
        %v2733 = vunpack.c.l.b16 %v707
        %v2734 = vunpack.c.l.b16 %v708
        %v2735 = vunpack.c.h.b16 %v708
        %v2736 = vunpack.c.l.b16 %v709
        %v2737 = vunpack.c.h.b16 %v709
        %v2738 = vunpack.c.l.b16 %v710
        %v2739 = vunpack.c.h.b16 %v710
        %v2740 = vunpack.c.l.b16 %v711
        %v2741 = vunpack.c.l.b16 %v712
        %v2742 = vunpack.c.h.b16 %v712
        %v2743 = vunpack.c.l.b16 %v713
        %v2744 = vunpack.c.h.b16 %v713
        %v2745 = vunpack.c.l.b16 %v714
        %v2746 = vunpack.c.h.b16 %v714
        %v2747 = vunpack.c.l.b16 %v715
        %v2748 = vunpack.c.l.b16 %v716
        %v2749 = vunpack.c.h.b16 %v716
        %v2750 = vunpack.c.l.b16 %v717
        %v2751 = vunpack.c.h.b16 %v717
        %v2752 = vunpack.c.l.b16 %v718
        %v2753 = vunpack.c.h.b16 %v718
        %v2754 = vunpack.c.l.b16 %v719
        %v2755 = vunpack.c.l.b16 %v720
        %v2756 = vunpack.c.h.b16 %v720
        %v2757 = vunpack.c.l.b16 %v721
        %v2758 = vunpack.c.h.b16 %v721
        %v2759 = vunpack.c.l.b16 %v722
        %v2760 = vunpack.c.h.b16 %v722
        %v2761 = vunpack.c.l.b16 %v723
        %v2762 = vunpack.c.l.b16 %v724
        %v2763 = vunpack.c.h.b16 %v724
        %v2764 = vunpack.c.l.b16 %v725
        %v2765 = vunpack.c.h.b16 %v725
        %v2766 = vunpack.c.l.b16 %v726
        %v2767 = vunpack.c.h.b16 %v726
        %v2768 = vunpack.c.l.b16 %v727
        %v2769 = vunpack.c.l.b16 %v728
        %v2770 = vunpack.c.h.b16 %v728
        %v2771 = vunpack.c.l.b16 %v729
        %v2772 = vunpack.c.h.b16 %v729
        %v2773 = vunpack.c.l.b16 %v730
        %v2774 = vunpack.c.h.b16 %v730
        %v2775 = vunpack.c.l.b16 %v731
        %v2776 = vunpack.c.l.b16 %v732
        %v2777 = vunpack.c.h.b16 %v732
        %v2778 = vunpack.c.l.b16 %v733
        %v2779 = vunpack.c.h.b16 %v733
        %v2780 = vunpack.c.l.b16 %v734
        %v2781 = vunpack.c.h.b16 %v734
        %v2782 = vunpack.c.l.b16 %v735
        %v2783 = vunpack.c.l.b16 %v736
        %v2784 = vunpack.c.h.b16 %v736
        %v2785 = vunpack.c.l.b16 %v737
        %v2786 = vunpack.c.h.b16 %v737
        %v2787 = vunpack.c.l.b16 %v738
        %v2788 = vunpack.c.h.b16 %v738
        %v2789 = vunpack.c.l.b16 %v739
        %v2790 = vunpack.c.l.b16 %v740
        %v2791 = vunpack.c.h.b16 %v740
        %v2792 = vunpack.c.l.b16 %v741
        %v2793 = vunpack.c.h.b16 %v741
        %v2794 = vunpack.c.l.b16 %v742
        %v2795 = vunpack.c.h.b16 %v742
        %v2796 = vunpack.c.l.b16 %v743
        %v2797 = vunpack.c.l.b16 %v744
        %v2798 = vunpack.c.h.b16 %v744
        %v2799 = vunpack.c.l.b16 %v745
        %v2800 = vunpack.c.h.b16 %v745
        %v2801 = vunpack.c.l.b16 %v746
        %v2802 = vunpack.c.h.b16 %v746
        %v2803 = vunpack.c.l.b16 %v747
        %v2804 = vunpack.c.l.b16 %v748
        %v2805 = vunpack.c.h.b16 %v748
        %v2806 = vunpack.c.l.b16 %v749
        %v2807 = vunpack.c.h.b16 %v749
        %v2808 = vunpack.c.l.b16 %v750
        %v2809 = vunpack.c.h.b16 %v750
        %v2810 = vunpack.c.l.b16 %v751
        %v2811 = vunpack.c.l.b16 %v752
        %v2812 = vunpack.c.h.b16 %v752
        %v2813 = vunpack.c.l.b16 %v753
        %v2814 = vunpack.c.h.b16 %v753
        %v2815 = vunpack.c.l.b16 %v754
        %v2816 = vunpack.c.h.b16 %v754
        %v2817 = vunpack.c.l.b16 %v755
        %v2818 = vunpack.c.l.b16 %v756
        %v2819 = vunpack.c.h.b16 %v756
        %v2820 = vunpack.c.l.b16 %v757
        %v2821 = vunpack.c.h.b16 %v757
        %v2822 = vunpack.c.l.b16 %v758
        %v2823 = vunpack.c.h.b16 %v758
        %v2824 = vunpack.c.l.b16 %v759
        %v2825 = vunpack.c.l.b16 %v760
        %v2826 = vunpack.c.h.b16 %v760
        %v2827 = vunpack.c.l.b16 %v761
        %v2828 = vunpack.c.h.b16 %v761
        %v2829 = vunpack.c.l.b16 %v762
        %v2830 = vunpack.c.h.b16 %v762
        %v2831 = vunpack.c.l.b16 %v763
        %v2832 = vunpack.c.l.b16 %v764
        %v2833 = vunpack.c.h.b16 %v764
        %v2834 = vunpack.c.l.b16 %v765
        %v2835 = vunpack.c.h.b16 %v765
        %v2836 = vunpack.c.l.b16 %v766
        %v2837 = vunpack.c.h.b16 %v766
        %v2838 = vunpack.c.l.b16 %v767
        %v2839 = vunpack.c.l.b16 %v768
        %v2840 = vunpack.c.h.b16 %v768
        %v2841 = vunpack.c.l.b16 %v769
        %v2842 = vunpack.c.h.b16 %v769
        %v2843 = vunpack.c.l.b16 %v770
        %v2844 = vunpack.c.h.b16 %v770
        %v2845 = vunpack.c.l.b16 %v771
        %v2846 = vunpack.c.l.b16 %v772
        %v2847 = vunpack.c.h.b16 %v772
        %v2848 = vunpack.c.l.b16 %v773
        %v2849 = vunpack.c.h.b16 %v773
        %v2850 = vunpack.c.l.b16 %v774
        %v2851 = vunpack.c.h.b16 %v774
        %v2852 = vunpack.c.l.b16 %v775
        %v2853 = vunpack.c.l.b16 %v776
        %v2854 = vunpack.c.h.b16 %v776
        %v2855 = vunpack.c.l.b16 %v777
        %v2856 = vunpack.c.h.b16 %v777
        %v2857 = vunpack.c.l.b16 %v778
        %v2858 = vunpack.c.h.b16 %v778
        %v2859 = vunpack.c.l.b16 %v779
        %v2860 = vunpack.c.l.b16 %v780
        %v2861 = vunpack.c.h.b16 %v780
        %v2862 = vunpack.c.l.b16 %v781
        %v2863 = vunpack.c.h.b16 %v781
        %v2864 = vunpack.c.l.b16 %v782
        %v2865 = vunpack.c.h.b16 %v782
        %v2866 = vunpack.c.l.b16 %v783
        %v2867 = vunpack.c.l.b16 %v784
        %v2868 = vunpack.c.h.b16 %v784
        %v2869 = vunpack.c.l.b16 %v785
        %v2870 = vunpack.c.h.b16 %v785
        %v2871 = vunpack.c.l.b16 %v786
        %v2872 = vunpack.c.h.b16 %v786
        %v2873 = vunpack.c.l.b16 %v787
        %v2874 = vunpack.c.l.b16 %v788
        %v2875 = vunpack.c.h.b16 %v788
        %v2876 = vunpack.c.l.b16 %v789
        %v2877 = vunpack.c.h.b16 %v789
        %v2878 = vunpack.c.l.b16 %v790
        %v2879 = vunpack.c.h.b16 %v790
        %v2880 = vunpack.c.l.b16 %v791
        %v2881 = vunpack.c.l.b16 %v792
        %v2882 = vunpack.c.h.b16 %v792
        %v2883 = vunpack.c.l.b16 %v793
        %v2884 = vunpack.c.h.b16 %v793
        %v2885 = vunpack.c.l.b16 %v794
        %v2886 = vunpack.c.h.b16 %v794
        %v2887 = vunpack.c.l.b16 %v795
        %v2888 = vunpack.c.l.b16 %v796
        %v2889 = vunpack.c.h.b16 %v796
        %v2890 = vunpack.c.l.b16 %v797
        %v2891 = vunpack.c.h.b16 %v797
        %v2892 = vunpack.c.l.b16 %v798
        %v2893 = vunpack.c.h.b16 %v798
        %v2894 = vunpack.c.l.b16 %v799
        %v2895 = vunpack.c.l.b16 %v800
        %v2896 = vunpack.c.h.b16 %v800
        %v2897 = vunpack.c.l.b16 %v801
        %v2898 = vunpack.c.h.b16 %v801
        %v2899 = vunpack.c.l.b16 %v802
        %v2900 = vunpack.c.h.b16 %v802
        %v2901 = vunpack.c.l.b16 %v803
        %v2902 = vunpack.c.l.b16 %v804
        %v2903 = vunpack.c.h.b16 %v804
        %v2904 = vunpack.c.l.b16 %v805
        %v2905 = vunpack.c.h.b16 %v805
        %v2906 = vunpack.c.l.b16 %v806
        %v2907 = vunpack.c.h.b16 %v806
        %v2908 = vunpack.c.l.b16 %v807
        %v2909 = vunpack.c.l.b16 %v808
        %v2910 = vunpack.c.h.b16 %v808
        %v2911 = vunpack.c.l.b16 %v809
        %v2912 = vunpack.c.h.b16 %v809
        %v2913 = vunpack.c.l.b16 %v810
        %v2914 = vunpack.c.h.b16 %v810
        %v2915 = vunpack.c.l.b16 %v811
        %v2916 = vunpack.c.l.b16 %v812
        %v2917 = vunpack.c.h.b16 %v812
        %v2918 = vunpack.c.l.b16 %v813
        %v2919 = vunpack.c.h.b16 %v813
        %v2920 = vunpack.c.l.b16 %v814
        %v2921 = vunpack.c.h.b16 %v814
        %v2922 = vunpack.c.l.b16 %v815
        %v2923 = vunpack.c.l.b16 %v816
        %v2924 = vunpack.c.h.b16 %v816
        %v2925 = vunpack.c.l.b16 %v817
        %v2926 = vunpack.c.h.b16 %v817
        %v2927 = vunpack.c.l.b16 %v818
        %v2928 = vunpack.c.h.b16 %v818
        %v2929 = vunpack.c.l.b16 %v819
        %v2930 = vunpack.c.l.b16 %v820
        %v2931 = vunpack.c.h.b16 %v820
        %v2932 = vunpack.c.l.b16 %v821
        %v2933 = vunpack.c.h.b16 %v821
        %v2934 = vunpack.c.l.b16 %v822
        %v2935 = vunpack.c.h.b16 %v822
        %v2936 = vunpack.c.l.b16 %v823
        %v2937 = vunpack.c.l.b16 %v824
        %v2938 = vunpack.c.h.b16 %v824
        %v2939 = vunpack.c.l.b16 %v825
        %v2940 = vunpack.c.h.b16 %v825
        %v2941 = vunpack.c.l.b16 %v826
        %v2942 = vunpack.c.h.b16 %v826
        %v2943 = vunpack.c.l.b16 %v827
        %v2944 = vunpack.c.l.b16 %v828
        %v2945 = vunpack.c.h.b16 %v828
        %v2946 = vunpack.c.l.b16 %v829
        %v2947 = vunpack.c.h.b16 %v829
        %v2948 = vunpack.c.l.b16 %v830
        %v2949 = vunpack.c.h.b16 %v830
        %v2950 = vunpack.c.l.b16 %v831
        %v2951 = vunpack.c.l.b16 %v832
        %v2952 = vunpack.c.h.b16 %v832
        %v2953 = vunpack.c.l.b16 %v833
        %v2954 = vunpack.c.h.b16 %v833
        %v2955 = vunpack.c.l.b16 %v834
        %v2956 = vunpack.c.h.b16 %v834
        %v2957 = vunpack.c.l.b16 %v835
        %v2958 = vunpack.c.l.b16 %v836
        %v2959 = vunpack.c.h.b16 %v836
        %v2960 = vunpack.c.l.b16 %v837
        %v2961 = vunpack.c.h.b16 %v837
        %v2962 = vunpack.c.l.b16 %v838
        %v2963 = vunpack.c.h.b16 %v838
        %v2964 = vunpack.c.l.b16 %v839
        %v2965 = vunpack.c.l.b16 %v840
        %v2966 = vunpack.c.h.b16 %v840
        %v2967 = vunpack.c.l.b16 %v841
        %v2968 = vunpack.c.h.b16 %v841
        %v2969 = vunpack.c.l.b16 %v842
        %v2970 = vunpack.c.h.b16 %v842
        %v2971 = vunpack.c.l.b16 %v843
        %v2972 = vunpack.c.l.b16 %v844
        %v2973 = vunpack.c.h.b16 %v844
        %v2974 = vunpack.c.l.b16 %v845
        %v2975 = vunpack.c.h.b16 %v845
        %v2976 = vunpack.c.l.b16 %v846
        %v2977 = vunpack.c.h.b16 %v846
        %v2978 = vunpack.c.l.b16 %v847
        %v2979 = vunpack.c.l.b16 %v848
        %v2980 = vunpack.c.h.b16 %v848
        %v2981 = vunpack.c.l.b16 %v849
        %v2982 = vunpack.c.h.b16 %v849
        %v2983 = vunpack.c.l.b16 %v850
        %v2984 = vunpack.c.h.b16 %v850
        %v2985 = vunpack.c.l.b16 %v851
        %v2986 = vunpack.c.l.b16 %v852
        %v2987 = vunpack.c.h.b16 %v852
        %v2988 = vunpack.c.l.b16 %v853
        %v2989 = vunpack.c.h.b16 %v853
        %v2990 = vunpack.c.l.b16 %v854
        %v2991 = vunpack.c.h.b16 %v854
        %v2992 = vunpack.c.l.b16 %v855
        %v2993 = vunpack.c.l.b16 %v856
        %v2994 = vunpack.c.h.b16 %v856
        %v2995 = vunpack.c.l.b16 %v857
        %v2996 = vunpack.c.h.b16 %v857
        %v2997 = vunpack.c.l.b16 %v858
        %v2998 = vunpack.c.h.b16 %v858
        %v2999 = vunpack.c.l.b16 %v859
        %v3000 = vunpack.c.l.b16 %v860
        %v3001 = vunpack.c.h.b16 %v860
        %v3002 = vunpack.c.l.b16 %v861
        %v3003 = vunpack.c.h.b16 %v861
        %v3004 = vunpack.c.l.b16 %v862
        %v3005 = vunpack.c.h.b16 %v862
        %v3006 = vunpack.c.l.b16 %v863
        %v3007 = vunpack.c.l.b16 %v864
        %v3008 = vunpack.c.h.b16 %v864
        %v3009 = vunpack.c.l.b16 %v865
        %v3010 = vunpack.c.h.b16 %v865
        %v3011 = vunpack.c.l.b16 %v866
        %v3012 = vunpack.c.h.b16 %v866
        %v3013 = vunpack.c.l.b16 %v867
        %v3014 = vunpack.c.l.b16 %v868
        %v3015 = vunpack.c.h.b16 %v868
        %v3016 = vunpack.c.l.b16 %v869
        %v3017 = vunpack.c.h.b16 %v869
        %v3018 = vunpack.c.l.b16 %v870
        %v3019 = vunpack.c.h.b16 %v870
        %v3020 = vunpack.c.l.b16 %v871
        %v3021 = vunpack.c.l.b16 %v872
        %v3022 = vunpack.c.h.b16 %v872
        %v3023 = vunpack.c.l.b16 %v873
        %v3024 = vunpack.c.h.b16 %v873
        %v3025 = vunpack.c.l.b16 %v874
        %v3026 = vunpack.c.h.b16 %v874
        %v3027 = vunpack.c.l.b16 %v875
        %v3028 = vunpack.c.l.b16 %v876
        %v3029 = vunpack.c.h.b16 %v876
        %v3030 = vunpack.c.l.b16 %v877
        %v3031 = vunpack.c.h.b16 %v877
        %v3032 = vunpack.c.l.b16 %v878
        %v3033 = vunpack.c.h.b16 %v878
        %v3034 = vunpack.c.l.b16 %v879
        %v3035 = vunpack.c.l.b16 %v880
        %v3036 = vunpack.c.h.b16 %v880
        %v3037 = vunpack.c.l.b16 %v881
        %v3038 = vunpack.c.h.b16 %v881
        %v3039 = vunpack.c.l.b16 %v882
        %v3040 = vunpack.c.h.b16 %v882
        %v3041 = vunpack.c.l.b16 %v883
        %v3042 = vunpack.c.l.b16 %v884
        %v3043 = vunpack.c.h.b16 %v884
        %v3044 = vunpack.c.l.b16 %v885
        %v3045 = vunpack.c.h.b16 %v885
        %v3046 = vunpack.c.l.b16 %v886
        %v3047 = vunpack.c.h.b16 %v886
        %v3048 = vunpack.c.l.b16 %v887
        %v3049 = vunpack.c.l.b16 %v888
        %v3050 = vunpack.c.h.b16 %v888
        %v3051 = vunpack.c.l.b16 %v889
        %v3052 = vunpack.c.h.b16 %v889
        %v3053 = vunpack.c.l.b16 %v890
        %v3054 = vunpack.c.h.b16 %v890
        %v3055 = vunpack.c.l.b16 %v891
        %v3056 = vunpack.c.l.b16 %v892
        %v3057 = vunpack.c.h.b16 %v892
        %v3058 = vunpack.c.l.b16 %v893
        %v3059 = vunpack.c.h.b16 %v893
        %v3060 = vunpack.c.l.b16 %v894
        %v3061 = vunpack.c.h.b16 %v894
        %v3062 = vunpack.c.l.b16 %v895
        %v3063 = vunpack.c.l.b16 %v896
        %v3064 = vunpack.c.h.b16 %v896
        %v3065 = vunpack.c.l.b16 %v897
        %v3066 = vunpack.c.h.b16 %v897
        %v3067 = vunpack.c.l.b16 %v898
        %v3068 = vunpack.c.h.b16 %v898
        %v3069 = vunpack.c.l.b16 %v899
        %v3070 = vunpack.c.l.b16 %v900
        %v3071 = vunpack.c.h.b16 %v900
        %v3072 = vunpack.c.l.b16 %v901
        %v3073 = vunpack.c.h.b16 %v901
        %v3074 = vunpack.c.l.b16 %v902
        %v3075 = vunpack.c.h.b16 %v902
        %v3076 = vunpack.c.l.b16 %v903
        %v3077 = vunpack.c.l.b16 %v904
        %v3078 = vunpack.c.h.b16 %v904
        %v3079 = vunpack.c.l.b16 %v905
        %v3080 = vunpack.c.h.b16 %v905
        %v3081 = vunpack.c.l.b16 %v906
        %v3082 = vunpack.c.h.b16 %v906
        %v3083 = vunpack.c.l.b16 %v907
        %v3084 = vunpack.c.l.b16 %v908
        %v3085 = vunpack.c.h.b16 %v908
        %v3086 = vunpack.c.l.b16 %v909
        %v3087 = vunpack.c.h.b16 %v909
        %v3088 = vunpack.c.l.b16 %v910
        %v3089 = vunpack.c.h.b16 %v910
        %v3090 = vunpack.c.l.b16 %v911
        %v3091 = vunpack.c.l.b16 %v912
        %v3092 = vunpack.c.h.b16 %v912
        %v3093 = vunpack.c.l.b16 %v913
        %v3094 = vunpack.c.h.b16 %v913
        %v3095 = vunpack.c.l.b16 %v914
        %v3096 = vunpack.c.h.b16 %v914
        %v3097 = vunpack.c.l.b16 %v915
        %v3098 = vunpack.c.l.b16 %v916
        %v3099 = vunpack.c.h.b16 %v916
        %v3100 = vunpack.c.l.b16 %v917
        %v3101 = vunpack.c.h.b16 %v917
        %v3102 = vunpack.c.l.b16 %v918
        %v3103 = vunpack.c.h.b16 %v918
        %v3104 = vunpack.c.l.b16 %v919
        %v3105 = vunpack.c.l.b16 %v920
        %v3106 = vunpack.c.h.b16 %v920
        %v3107 = vunpack.c.l.b16 %v921
        %v3108 = vunpack.c.h.b16 %v921
        %v3109 = vunpack.c.l.b16 %v922
        %v3110 = vunpack.c.h.b16 %v922
        %v3111 = vunpack.c.l.b16 %v923
        %v3112 = vunpack.c.l.b16 %v924
        %v3113 = vunpack.c.h.b16 %v924
        %v3114 = vunpack.c.l.b16 %v925
        %v3115 = vunpack.c.h.b16 %v925
        %v3116 = vunpack.c.l.b16 %v926
        %v3117 = vunpack.c.h.b16 %v926
        %v3118 = vunpack.c.l.b16 %v927
        %v3119 = vunpack.c.l.b16 %v928
        %v3120 = vunpack.c.h.b16 %v928
        %v3121 = vunpack.c.l.b16 %v929
        %v3122 = vunpack.c.h.b16 %v929
        %v3123 = vunpack.c.l.b16 %v930
        %v3124 = vunpack.c.h.b16 %v930
        %v3125 = vunpack.c.l.b16 %v931
        %v3126 = vunpack.c.l.b16 %v932
        %v3127 = vunpack.c.h.b16 %v932
        %v3128 = vunpack.c.l.b16 %v933
        %v3129 = vunpack.c.h.b16 %v933
        %v3130 = vunpack.c.l.b16 %v934
        %v3131 = vunpack.c.h.b16 %v934
        %v3132 = vunpack.c.l.b16 %v935
        %v3133 = vunpack.c.l.b16 %v936
        %v3134 = vunpack.c.h.b16 %v936
        %v3135 = vunpack.c.l.b16 %v937
        %v3136 = vunpack.c.h.b16 %v937
        %v3137 = vunpack.c.l.b16 %v938
        %v3138 = vunpack.c.h.b16 %v938
        %v3139 = vunpack.c.l.b16 %v939
        %v3140 = vunpack.c.l.b16 %v940
        %v3141 = vunpack.c.h.b16 %v940
        %v3142 = vunpack.c.l.b16 %v941
        %v3143 = vunpack.c.h.b16 %v941
        %v3144 = vunpack.c.l.b16 %v942
        %v3145 = vunpack.c.h.b16 %v942
        %v3146 = vunpack.c.l.b16 %v943
        %v3147 = vunpack.c.l.b16 %v944
        %v3148 = vunpack.c.h.b16 %v944
        %v3149 = vunpack.c.l.b16 %v945
        %v3150 = vunpack.c.h.b16 %v945
        %v3151 = vunpack.c.l.b16 %v946
        %v3152 = vunpack.c.h.b16 %v946
        %v3153 = vunpack.c.l.b16 %v947
        %v3154 = vunpack.c.l.b16 %v948
        %v3155 = vunpack.c.h.b16 %v948
        %v3156 = vunpack.c.l.b16 %v949
        %v3157 = vunpack.c.h.b16 %v949
        %v3158 = vunpack.c.l.b16 %v950
        %v3159 = vunpack.c.h.b16 %v950
        %v3160 = vunpack.c.l.b16 %v951
        %v3161 = vunpack.c.l.b16 %v952
        %v3162 = vunpack.c.h.b16 %v952
        %v3163 = vunpack.c.l.b16 %v953
        %v3164 = vunpack.c.h.b16 %v953
        %v3165 = vunpack.c.l.b16 %v954
        %v3166 = vunpack.c.h.b16 %v954
        %v3167 = vunpack.c.l.b16 %v955
        %v3168 = vunpack.c.l.b16 %v956
        %v3169 = vunpack.c.h.b16 %v956
        %v3170 = vunpack.c.l.b16 %v957
        %v3171 = vunpack.c.h.b16 %v957
        %v3172 = vunpack.c.l.b16 %v958
        %v3173 = vunpack.c.h.b16 %v958
        %v3174 = vunpack.c.l.b16 %v959
        %v3175 = vunpack.c.l.b16 %v960
        %v3176 = vunpack.c.h.b16 %v960
        %v3177 = vunpack.c.l.b16 %v961
        %v3178 = vunpack.c.h.b16 %v961
        %v3179 = vunpack.c.l.b16 %v962
        %v3180 = vunpack.c.h.b16 %v962
        %v3181 = vunpack.c.l.b16 %v963
        %v3182 = vunpack.c.l.b16 %v964
        %v3183 = vunpack.c.h.b16 %v964
        %v3184 = vunpack.c.l.b16 %v965
        %v3185 = vunpack.c.h.b16 %v965
        %v3186 = vunpack.c.l.b16 %v966
        %v3187 = vunpack.c.h.b16 %v966
        %v3188 = vunpack.c.l.b16 %v967
        %v3189 = vunpack.c.l.b16 %v968
        %v3190 = vunpack.c.h.b16 %v968
        %v3191 = vunpack.c.l.b16 %v969
        %v3192 = vunpack.c.h.b16 %v969
        %v3193 = vunpack.c.l.b16 %v970
        %v3194 = vunpack.c.h.b16 %v970
        %v3195 = vunpack.c.l.b16 %v971
        %v3196 = vunpack.c.l.b16 %v972
        %v3197 = vunpack.c.h.b16 %v972
        %v3198 = vunpack.c.l.b16 %v973
        %v3199 = vunpack.c.h.b16 %v973
        %v3200 = vunpack.c.l.b16 %v974
        %v3201 = vunpack.c.h.b16 %v974
        %v3202 = vunpack.c.l.b16 %v975
        %v3203 = vunpack.c.l.b16 %v976
        %v3204 = vunpack.c.h.b16 %v976
        %v3205 = vunpack.c.l.b16 %v977
        %v3206 = vunpack.c.h.b16 %v977
        %v3207 = vunpack.c.l.b16 %v978
        %v3208 = vunpack.c.h.b16 %v978
        %v3209 = vunpack.c.l.b16 %v979
        %v3210 = vunpack.c.l.b16 %v980
        %v3211 = vunpack.c.h.b16 %v980
        %v3212 = vunpack.c.l.b16 %v981
        %v3213 = vunpack.c.h.b16 %v981
        %v3214 = vunpack.c.l.b16 %v982
        %v3215 = vunpack.c.h.b16 %v982
        %v3216 = vunpack.c.l.b16 %v983
        %v3217 = vunpack.c.l.b16 %v984
        %v3218 = vunpack.c.h.b16 %v984
        %v3219 = vunpack.c.l.b16 %v985
        %v3220 = vunpack.c.h.b16 %v985
        %v3221 = vunpack.c.l.b16 %v986
        %v3222 = vunpack.c.h.b16 %v986
        %v3223 = vunpack.c.l.b16 %v987
        %v3224 = vunpack.c.l.b16 %v988
        %v3225 = vunpack.c.h.b16 %v988
        %v3226 = vunpack.c.l.b16 %v989
        %v3227 = vunpack.c.h.b16 %v989
        %v3228 = vunpack.c.l.b16 %v990
        %v3229 = vunpack.c.h.b16 %v990
        %v3230 = vunpack.c.l.b16 %v991
        %v3231 = vunpack.c.l.b16 %v992
        %v3232 = vunpack.c.h.b16 %v992
        %v3233 = vunpack.c.l.b16 %v993
        %v3234 = vunpack.c.h.b16 %v993
        %v3235 = vunpack.c.l.b16 %v994
        %v3236 = vunpack.c.h.b16 %v994
        %v3237 = vunpack.c.l.b16 %v995
        %v3238 = vunpack.c.l.b16 %v996
        %v3239 = vunpack.c.h.b16 %v996
        %v3240 = vunpack.c.l.b16 %v997
        %v3241 = vunpack.c.h.b16 %v997
        %v3242 = vunpack.c.l.b16 %v998
        %v3243 = vunpack.c.h.b16 %v998
        %v3244 = vunpack.c.l.b16 %v999
        %v3245 = vunpack.c.l.b16 %v1000
        %v3246 = vunpack.c.h.b16 %v1000
        %v3247 = vunpack.c.l.b16 %v1001
        %v3248 = vunpack.c.h.b16 %v1001
        %v3249 = vunpack.c.l.b16 %v1002
        %v3250 = vunpack.c.h.b16 %v1002
        %v3251 = vunpack.c.l.b16 %v1003
        %v3252 = vunpack.c.l.b16 %v1004
        %v3253 = vunpack.c.h.b16 %v1004
        %v3254 = vunpack.c.l.b16 %v1005
        %v3255 = vunpack.c.h.b16 %v1005
        %v3256 = vunpack.c.l.b16 %v1006
        %v3257 = vunpack.c.h.b16 %v1006
        %v3258 = vunpack.c.l.b16 %v1007
        %v3259 = vunpack.c.l.b16 %v1008
        %v3260 = vunpack.c.h.b16 %v1008
        %v3261 = vunpack.c.l.b16 %v1009
        %v3262 = vunpack.c.h.b16 %v1009
        %v3263 = vunpack.c.l.b16 %v1010
        %v3264 = vunpack.c.h.b16 %v1010
        %v3265 = vunpack.c.l.b16 %v1011
        %v3266 = vunpack.c.l.b16 %v1012
        %v3267 = vunpack.c.h.b16 %v1012
        %v3268 = vunpack.c.l.b16 %v1013
        %v3269 = vunpack.c.h.b16 %v1013
        %v3270 = vunpack.c.l.b16 %v1014
        %v3271 = vunpack.c.h.b16 %v1014
        %v3272 = vunpack.c.l.b16 %v1015
        %v3273 = vunpack.c.l.b16 %v1016
        %v3274 = vunpack.c.h.b16 %v1016
        %v3275 = vunpack.c.l.b16 %v1017
        %v3276 = vunpack.c.h.b16 %v1017
        %v3277 = vunpack.c.l.b16 %v1018
        %v3278 = vunpack.c.h.b16 %v1018
        %v3279 = vunpack.c.l.b16 %v1019
        %v3280 = vunpack.c.l.b16 %v1020
        %v3281 = vunpack.c.h.b16 %v1020
        %v3282 = vunpack.c.l.b16 %v1021
        %v3283 = vunpack.c.h.b16 %v1021
        %v3284 = vunpack.c.l.b16 %v1022
        %v3285 = vunpack.c.h.b16 %v1022
        %v3286 = vunpack.c.l.b16 %v1023
        %v3287 = vunpack.c.l.b16 %v1024
        %v3288 = vunpack.c.h.b16 %v1024
        %v3289 = vunpack.c.l.b16 %v1025
        %v3290 = vunpack.c.h.b16 %v1025
        %v3291 = vunpack.c.l.b16 %v1026
        %v3292 = vunpack.c.h.b16 %v1026
        %v3293 = vunpack.c.l.b16 %v1027
        %v3294 = vunpack.c.l.b16 %v1028
        %v3295 = vunpack.c.h.b16 %v1028
        %v3296 = vunpack.c.l.b16 %v1029
        %v3297 = vunpack.c.h.b16 %v1029
        %v3298 = vunpack.c.l.b16 %v1030
        %v3299 = vunpack.c.h.b16 %v1030
        %v3300 = vunpack.c.l.b16 %v1031
        %v3301 = vunpack.c.l.b16 %v1032
        %v3302 = vunpack.c.h.b16 %v1032
        %v3303 = vunpack.c.l.b16 %v1033
        %v3304 = vunpack.c.h.b16 %v1033
        %v3305 = vunpack.c.l.b16 %v1034
        %v3306 = vunpack.c.h.b16 %v1034
        %v3307 = vunpack.c.l.b16 %v1035
        %v3308 = vunpack.c.l.b16 %v1036
        %v3309 = vunpack.c.h.b16 %v1036
        %v3310 = vunpack.c.l.b16 %v1037
        %v3311 = vunpack.c.h.b16 %v1037
        %v3312 = vunpack.c.l.b16 %v1038
        %v3313 = vunpack.c.h.b16 %v1038
        %v3314 = vunpack.c.l.b16 %v1039
        %v3315 = vunpack.c.l.b16 %v1040
        %v3316 = vunpack.c.h.b16 %v1040
        %v3317 = vunpack.c.l.b16 %v1041
        %v3318 = vunpack.c.h.b16 %v1041
        %v3319 = vunpack.c.l.b16 %v1042
        %v3320 = vunpack.c.h.b16 %v1042
        %v3321 = vunpack.c.l.b16 %v1043
        %v3322 = vunpack.c.l.b16 %v1044
        %v3323 = vunpack.c.h.b16 %v1044
        %v3324 = vunpack.c.l.b16 %v1045
        %v3325 = vunpack.c.h.b16 %v1045
        %v3326 = vunpack.c.l.b16 %v1046
        %v3327 = vunpack.c.h.b16 %v1046
        %v3328 = vunpack.c.l.b16 %v1047
        %v3329 = vunpack.c.l.b16 %v1048
        %v3330 = vunpack.c.h.b16 %v1048
        %v3331 = vunpack.c.l.b16 %v1049
        %v3332 = vunpack.c.h.b16 %v1049
        %v3333 = vunpack.c.l.b16 %v1050
        %v3334 = vunpack.c.h.b16 %v1050
        %v3335 = vunpack.c.l.b16 %v1051
        %v3336 = vunpack.c.l.b16 %v1052
        %v3337 = vunpack.c.h.b16 %v1052
        %v3338 = vunpack.c.l.b16 %v1053
        %v3339 = vunpack.c.h.b16 %v1053
        %v3340 = vunpack.c.l.b16 %v1054
        %v3341 = vunpack.c.h.b16 %v1054
        %v3342 = vunpack.c.l.b16 %v1055
        %v3343 = vunpack.c.l.b16 %v1056
        %v3344 = vunpack.c.h.b16 %v1056
        %v3345 = vunpack.c.l.b16 %v1057
        %v3346 = vunpack.c.h.b16 %v1057
        %v3347 = vunpack.c.l.b16 %v1058
        %v3348 = vunpack.c.h.b16 %v1058
        %v3349 = vunpack.c.l.b16 %v1059
        %v3350 = vunpack.c.l.b16 %v1060
        %v3351 = vunpack.c.h.b16 %v1060
        %v3352 = vunpack.c.l.b16 %v1061
        %v3353 = vunpack.c.h.b16 %v1061
        %v3354 = vunpack.c.l.b16 %v1062
        %v3355 = vunpack.c.h.b16 %v1062
        %v3356 = vunpack.c.l.b16 %v1063
        %v3357 = vunpack.c.l.b16 %v1064
        %v3358 = vunpack.c.h.b16 %v1064
        %v3359 = vunpack.c.l.b16 %v1065
        %v3360 = vunpack.c.h.b16 %v1065
        %v3361 = vunpack.c.l.b16 %v1066
        %v3362 = vunpack.c.h.b16 %v1066
        %v3363 = vunpack.c.l.b16 %v1067
        %v3364 = vunpack.c.l.b16 %v1068
        %v3365 = vunpack.c.h.b16 %v1068
        %v3366 = vunpack.c.l.b16 %v1069
        %v3367 = vunpack.c.h.b16 %v1069
        %v3368 = vunpack.c.l.b16 %v1070
        %v3369 = vunpack.c.h.b16 %v1070
        %v3370 = vunpack.c.l.b16 %v1071
        %v3371 = vunpack.c.l.b16 %v1072
        %v3372 = vunpack.c.h.b16 %v1072
        %v3373 = vunpack.c.l.b16 %v1073
        %v3374 = vunpack.c.h.b16 %v1073
        %v3375 = vunpack.c.l.b16 %v1074
        %v3376 = vunpack.c.h.b16 %v1074
        %v3377 = vunpack.c.l.b16 %v1075
        %v3378 = vunpack.c.l.b16 %v1076
        %v3379 = vunpack.c.h.b16 %v1076
        %v3380 = vunpack.c.l.b16 %v1077
        %v3381 = vunpack.c.h.b16 %v1077
        %v3382 = vunpack.c.l.b16 %v1078
        %v3383 = vunpack.c.h.b16 %v1078
        %v3384 = vunpack.c.l.b16 %v1079
        %v3385 = vunpack.c.l.b16 %v1080
        %v3386 = vunpack.c.h.b16 %v1080
        %v3387 = vunpack.c.l.b16 %v1081
        %v3388 = vunpack.c.h.b16 %v1081
        %v3389 = vunpack.c.l.b16 %v1082
        %v3390 = vunpack.c.h.b16 %v1082
        %v3391 = vunpack.c.l.b16 %v1083
        %v3392 = vunpack.c.l.b16 %v1084
        %v3393 = vunpack.c.h.b16 %v1084
        %v3394 = vunpack.c.l.b16 %v1085
        %v3395 = vunpack.c.h.b16 %v1085
        %v3396 = vunpack.c.l.b16 %v1086
        %v3397 = vunpack.c.h.b16 %v1086
        %v3398 = vunpack.c.l.b16 %v1087
        %v3399 = vunpack.c.l.b16 %v1088
        %v3400 = vunpack.c.h.b16 %v1088
        %v3401 = vunpack.c.l.b16 %v1089
        %v3402 = vunpack.c.h.b16 %v1089
        %v3403 = vunpack.c.l.b16 %v1090
        %v3404 = vunpack.c.h.b16 %v1090
        %v3405 = vunpack.c.l.b16 %v1091
        %v3406 = vunpack.c.l.b16 %v1092
        %v3407 = vunpack.c.h.b16 %v1092
        %v3408 = vunpack.c.l.b16 %v1093
        %v3409 = vunpack.c.h.b16 %v1093
        %v3410 = vunpack.c.l.b16 %v1094
        %v3411 = vunpack.c.h.b16 %v1094
        %v3412 = vunpack.c.l.b16 %v1095
        %v3413 = vunpack.c.l.b16 %v1096
        %v3414 = vunpack.c.h.b16 %v1096
        %v3415 = vunpack.c.l.b16 %v1097
        %v3416 = vunpack.c.h.b16 %v1097
        %v3417 = vunpack.c.l.b16 %v1098
        %v3418 = vunpack.c.h.b16 %v1098
        %v3419 = vunpack.c.l.b16 %v1099
        %v3420 = vunpack.c.l.b16 %v1100
        %v3421 = vunpack.c.h.b16 %v1100
        %v3422 = vunpack.c.l.b16 %v1101
        %v3423 = vunpack.c.h.b16 %v1101
        %v3424 = vunpack.c.l.b16 %v1102
        %v3425 = vunpack.c.h.b16 %v1102
        %v3426 = vunpack.c.l.b16 %v1103
        %v3427 = vunpack.c.l.b16 %v1104
        %v3428 = vunpack.c.h.b16 %v1104
        %v3429 = vunpack.c.l.b16 %v1105
        %v3430 = vunpack.c.h.b16 %v1105
        %v3431 = vunpack.c.l.b16 %v1106
        %v3432 = vunpack.c.h.b16 %v1106
        %v3433 = vunpack.c.l.b16 %v1107
        %v3434 = vunpack.c.l.b16 %v1108
        %v3435 = vunpack.c.h.b16 %v1108
        %v3436 = vunpack.c.l.b16 %v1109
        %v3437 = vunpack.c.h.b16 %v1109
        %v3438 = vunpack.c.l.b16 %v1110
        %v3439 = vunpack.c.h.b16 %v1110
        %v3440 = vunpack.c.l.b16 %v1111
        %v3441 = vunpack.c.l.b16 %v1112
        %v3442 = vunpack.c.h.b16 %v1112
        %v3443 = vunpack.c.l.b16 %v1113
        %v3444 = vunpack.c.h.b16 %v1113
        %v3445 = vunpack.c.l.b16 %v1114
        %v3446 = vunpack.c.h.b16 %v1114
        %v3447 = vunpack.c.l.b16 %v1115
        %v3448 = vunpack.c.l.b16 %v1116
        %v3449 = vunpack.c.h.b16 %v1116
        %v3450 = vunpack.c.l.b16 %v1117
        %v3451 = vunpack.c.h.b16 %v1117
        %v3452 = vunpack.c.l.b16 %v1118
        %v3453 = vunpack.c.h.b16 %v1118
        %v3454 = vunpack.c.l.b16 %v1119
        %v3455 = vunpack.c.l.b16 %v1120
        %v3456 = vunpack.c.h.b16 %v1120
        %v3457 = vunpack.c.l.b16 %v1121
        %v3458 = vunpack.c.h.b16 %v1121
        %v3459 = vunpack.c.l.b16 %v1122
        %v3460 = vunpack.c.h.b16 %v1122
        %v3461 = vunpack.c.l.b16 %v1123
        %v3462 = vunpack.c.l.b16 %v1124
        %v3463 = vunpack.c.h.b16 %v1124
        %v3464 = vunpack.c.l.b16 %v1125
        %v3465 = vunpack.c.h.b16 %v1125
        %v3466 = vunpack.c.l.b16 %v1126
        %v3467 = vunpack.c.h.b16 %v1126
        %v3468 = vunpack.c.l.b16 %v1127
        %v3469 = vunpack.c.l.b16 %v1128
        %v3470 = vunpack.c.h.b16 %v1128
        %v3471 = vunpack.c.l.b16 %v1129
        %v3472 = vunpack.c.h.b16 %v1129
        %v3473 = vunpack.c.l.b16 %v1130
        %v3474 = vunpack.c.h.b16 %v1130
        %v3475 = vunpack.c.l.b16 %v1131
        %v3476 = vunpack.c.l.b16 %v1132
        %v3477 = vunpack.c.h.b16 %v1132
        %v3478 = vunpack.c.l.b16 %v1133
        %v3479 = vunpack.c.h.b16 %v1133
        %v3480 = vunpack.c.l.b16 %v1134
        %v3481 = vunpack.c.h.b16 %v1134
        %v3482 = vunpack.c.l.b16 %v1135
        %v3483 = vunpack.c.l.b16 %v1136
        %v3484 = vunpack.c.h.b16 %v1136
        %v3485 = vunpack.c.l.b16 %v1137
        %v3486 = vunpack.c.h.b16 %v1137
        %v3487 = vunpack.c.l.b16 %v1138
        %v3488 = vunpack.c.h.b16 %v1138
        %v3489 = vunpack.c.l.b16 %v1139
        %v3490 = vunpack.c.l.b16 %v1140
        %v3491 = vunpack.c.h.b16 %v1140
        %v3492 = vunpack.c.l.b16 %v1141
        %v3493 = vunpack.c.h.b16 %v1141
        %v3494 = vunpack.c.l.b16 %v1142
        %v3495 = vunpack.c.h.b16 %v1142
        %v3496 = vunpack.c.l.b16 %v1143
        %v3497 = vunpack.c.l.b16 %v1144
        %v3498 = vunpack.c.h.b16 %v1144
        %v3499 = vunpack.c.l.b16 %v1145
        %v3500 = vunpack.c.h.b16 %v1145
        %v3501 = vunpack.c.l.b16 %v1146
        %v3502 = vunpack.c.h.b16 %v1146
        %v3503 = vunpack.c.l.b16 %v1147
        %v3504 = vunpack.c.l.b16 %v1148
        %v3505 = vunpack.c.h.b16 %v1148
        %v3506 = vunpack.c.l.b16 %v1149
        %v3507 = vunpack.c.h.b16 %v1149
        %v3508 = vunpack.c.l.b16 %v1150
        %v3509 = vunpack.c.h.b16 %v1150
        %v3510 = vunpack.c.l.b16 %v1151
        %v3511 = vunpack.c.l.b16 %v1152
        %v3512 = vunpack.c.h.b16 %v1152
        %v3513 = vunpack.c.l.b16 %v1153
        %v3514 = vunpack.c.h.b16 %v1153
        %v3515 = vunpack.c.l.b16 %v1154
        %v3516 = vunpack.c.h.b16 %v1154
        %v3517 = vunpack.c.l.b16 %v1155
        %v3518 = vunpack.c.l.b16 %v1156
        %v3519 = vunpack.c.h.b16 %v1156
        %v3520 = vunpack.c.l.b16 %v1157
        %v3521 = vunpack.c.h.b16 %v1157
        %v3522 = vunpack.c.l.b16 %v1158
        %v3523 = vunpack.c.h.b16 %v1158
        %v3524 = vunpack.c.l.b16 %v1159
        %v3525 = vunpack.c.l.b16 %v1160
        %v3526 = vunpack.c.h.b16 %v1160
        %v3527 = vunpack.c.l.b16 %v1161
        %v3528 = vunpack.c.h.b16 %v1161
        %v3529 = vunpack.c.l.b16 %v1162
        %v3530 = vunpack.c.h.b16 %v1162
        %v3531 = vunpack.c.l.b16 %v1163
        %v3532 = vunpack.c.l.b16 %v1164
        %v3533 = vunpack.c.h.b16 %v1164
        %v3534 = vunpack.c.l.b16 %v1165
        %v3535 = vunpack.c.h.b16 %v1165
        %v3536 = vunpack.c.l.b16 %v1166
        %v3537 = vunpack.c.h.b16 %v1166
        %v3538 = vunpack.c.l.b16 %v1167
        %v3539 = vunpack.c.l.b16 %v1168
        %v3540 = vunpack.c.h.b16 %v1168
        %v3541 = vunpack.c.l.b16 %v1169
        %v3542 = vunpack.c.h.b16 %v1169
        %v3543 = vunpack.c.l.b16 %v1170
        %v3544 = vunpack.c.h.b16 %v1170
        %v3545 = vunpack.c.l.b16 %v1171
        %v3546 = vunpack.c.l.b16 %v1172
        %v3547 = vunpack.c.h.b16 %v1172
        %v3548 = vunpack.c.l.b16 %v1173
        %v3549 = vunpack.c.h.b16 %v1173
        %v3550 = vunpack.c.l.b16 %v1174
        %v3551 = vunpack.c.h.b16 %v1174
        %v3552 = vunpack.c.l.b16 %v1175
        %v3553 = vunpack.c.l.b16 %v1176
        %v3554 = vunpack.c.h.b16 %v1176
        %v3555 = vunpack.c.l.b16 %v1177
        %v3556 = vunpack.c.h.b16 %v1177
        %v3557 = vunpack.c.l.b16 %v1178
        %v3558 = vunpack.c.h.b16 %v1178
        %v3559 = vunpack.c.l.b16 %v1179
        %v3560 = vunpack.c.l.b16 %v1180
        %v3561 = vunpack.c.h.b16 %v1180
        %v3562 = vunpack.c.l.b16 %v1181
        %v3563 = vunpack.c.h.b16 %v1181
        %v3564 = vunpack.c.l.b16 %v1182
        %v3565 = vunpack.c.h.b16 %v1182
        %v3566 = vunpack.c.l.b16 %v1183
        %v3567 = vunpack.c.l.b16 %v1184
        %v3568 = vunpack.c.h.b16 %v1184
        %v3569 = vunpack.c.l.b16 %v1185
        %v3570 = vunpack.c.h.b16 %v1185
        %v3571 = vunpack.c.l.b16 %v1186
        %v3572 = vunpack.c.h.b16 %v1186
        %v3573 = vunpack.c.l.b16 %v1187
        %v3574 = vunpack.c.l.b16 %v1188
        %v3575 = vunpack.c.h.b16 %v1188
        %v3576 = vunpack.c.l.b16 %v1189
        %v3577 = vunpack.c.h.b16 %v1189
        %v3578 = vunpack.c.l.b16 %v1190
        %v3579 = vunpack.c.h.b16 %v1190
        %v3580 = vunpack.c.l.b16 %v1191
        %v3581 = vunpack.c.l.b16 %v1192
        %v3582 = vunpack.c.h.b16 %v1192
        %v3583 = vunpack.c.l.b16 %v1193
        %v3584 = vunpack.c.h.b16 %v1193
        %v3585 = vunpack.c.l.b16 %v1194
        %v3586 = vunpack.c.h.b16 %v1194
        %v3587 = vunpack.c.l.b16 %v1195
        %v3588 = vunpack.c.l.b16 %v1196
        %v3589 = vunpack.c.h.b16 %v1196
        %v3590 = vunpack.c.l.b16 %v1197
        %v3591 = vunpack.c.h.b16 %v1197
        %v3592 = vunpack.c.l.b16 %v1198
        %v3593 = vunpack.c.h.b16 %v1198
        %v3594 = vunpack.c.l.b16 %v1199
        %v3595 = vunpack.c.l.b16 %v1200
        %v3596 = vunpack.c.h.b16 %v1200
        %v3597 = vunpack.c.l.b16 %v1201
        %v3598 = vunpack.c.h.b16 %v1201
        %v3599 = vunpack.c.l.b16 %v1202
        %v3600 = vunpack.c.h.b16 %v1202
        %v3601 = vunpack.c.l.b16 %v1203
        %v3602 = vunpack.c.l.b16 %v1204
        %v3603 = vunpack.c.h.b16 %v1204
        %v3604 = vunpack.c.l.b16 %v1205
        %v3605 = vunpack.c.h.b16 %v1205
        %v3606 = vunpack.c.l.b16 %v1206
        %v3607 = vunpack.c.h.b16 %v1206
        %v3608 = vunpack.c.l.b16 %v1207
        %v3609 = vunpack.c.l.b16 %v1208
        %v3610 = vunpack.c.h.b16 %v1208
        %v3611 = vunpack.c.l.b16 %v1209
        %v3612 = vunpack.c.h.b16 %v1209
        %v3613 = vunpack.c.l.b16 %v1210
        %v3614 = vunpack.c.h.b16 %v1210
        %v3615 = vunpack.c.l.b16 %v1211
        %v3616 = vunpack.c.l.b16 %v1212
        %v3617 = vunpack.c.h.b16 %v1212
        %v3618 = vunpack.c.l.b16 %v1213
        %v3619 = vunpack.c.h.b16 %v1213
        %v3620 = vunpack.c.l.b16 %v1214
        %v3621 = vunpack.c.h.b16 %v1214
        %v3622 = vunpack.c.l.b16 %v1215
        %v3623 = vunpack.c.l.b16 %v1216
        %v3624 = vunpack.c.h.b16 %v1216
        %v3625 = vunpack.c.l.b16 %v1217
        %v3626 = vunpack.c.h.b16 %v1217
        %v3627 = vunpack.c.l.b16 %v1218
        %v3628 = vunpack.c.h.b16 %v1218
        %v3629 = vunpack.c.l.b16 %v1219
        %v3630 = vunpack.c.l.b16 %v1220
        %v3631 = vunpack.c.h.b16 %v1220
        %v3632 = vunpack.c.l.b16 %v1221
        %v3633 = vunpack.c.h.b16 %v1221
        %v3634 = vunpack.c.l.b16 %v1222
        %v3635 = vunpack.c.h.b16 %v1222
        %v3636 = vunpack.c.l.b16 %v1223
        %v3637 = vunpack.c.l.b16 %v1224
        %v3638 = vunpack.c.h.b16 %v1224
        %v3639 = vunpack.c.l.b16 %v1225
        %v3640 = vunpack.c.h.b16 %v1225
        %v3641 = vunpack.c.l.b16 %v1226
        %v3642 = vunpack.c.h.b16 %v1226
        %v3643 = vunpack.c.l.b16 %v1227
        %v3644 = vunpack.c.l.b16 %v1228
        %v3645 = vunpack.c.h.b16 %v1228
        %v3646 = vunpack.c.l.b16 %v1229
        %v3647 = vunpack.c.h.b16 %v1229
        %v3648 = vunpack.c.l.b16 %v1230
        %v3649 = vunpack.c.h.b16 %v1230
        %v3650 = vunpack.c.l.b16 %v1231
        %v3651 = vunpack.c.l.b16 %v1232
        %v3652 = vunpack.c.h.b16 %v1232
        %v3653 = vunpack.c.l.b16 %v1233
        %v3654 = vunpack.c.h.b16 %v1233
        %v3655 = vunpack.c.l.b16 %v1234
        %v3656 = vunpack.c.h.b16 %v1234
        %v3657 = vunpack.c.l.b16 %v1235
        %v3658 = vunpack.c.l.b16 %v1236
        %v3659 = vunpack.c.h.b16 %v1236
        %v3660 = vunpack.c.l.b16 %v1237
        %v3661 = vunpack.c.h.b16 %v1237
        %v3662 = vunpack.c.l.b16 %v1238
        %v3663 = vunpack.c.h.b16 %v1238
        %v3664 = vunpack.c.l.b16 %v1239
        %v3665 = vunpack.c.l.b16 %v1240
        %v3666 = vunpack.c.h.b16 %v1240
        %v3667 = vunpack.c.l.b16 %v1241
        %v3668 = vunpack.c.h.b16 %v1241
        %v3669 = vunpack.c.l.b16 %v1242
        %v3670 = vunpack.c.h.b16 %v1242
        %v3671 = vunpack.c.l.b16 %v1243
        %v3672 = vunpack.c.l.b16 %v1244
        %v3673 = vunpack.c.h.b16 %v1244
        %v3674 = vunpack.c.l.b16 %v1245
        %v3675 = vunpack.c.h.b16 %v1245
        %v3676 = vunpack.c.l.b16 %v1246
        %v3677 = vunpack.c.h.b16 %v1246
        %v3678 = vunpack.c.l.b16 %v1247
        %v3679 = vunpack.c.l.b16 %v1248
        %v3680 = vunpack.c.h.b16 %v1248
        %v3681 = vunpack.c.l.b16 %v1249
        %v3682 = vunpack.c.h.b16 %v1249
        %v3683 = vunpack.c.l.b16 %v1250
        %v3684 = vunpack.c.h.b16 %v1250
        %v3685 = vunpack.c.l.b16 %v1251
        %v3686 = vunpack.c.l.b16 %v1252
        %v3687 = vunpack.c.h.b16 %v1252
        %v3688 = vunpack.c.l.b16 %v1253
        %v3689 = vunpack.c.h.b16 %v1253
        %v3690 = vunpack.c.l.b16 %v1254
        %v3691 = vunpack.c.h.b16 %v1254
        %v3692 = vunpack.c.l.b16 %v1255
        %v3693 = vunpack.c.l.b16 %v1256
        %v3694 = vunpack.c.h.b16 %v1256
        %v3695 = vunpack.c.l.b16 %v1257
        %v3696 = vunpack.c.h.b16 %v1257
        %v3697 = vunpack.c.l.b16 %v1258
        %v3698 = vunpack.c.h.b16 %v1258
        %v3699 = vunpack.c.l.b16 %v1259
        %v3700 = vunpack.c.l.b16 %v1260
        %v3701 = vunpack.c.h.b16 %v1260
        %v3702 = vunpack.c.l.b16 %v1261
        %v3703 = vunpack.c.h.b16 %v1261
        %v3704 = vunpack.c.l.b16 %v1262
        %v3705 = vunpack.c.h.b16 %v1262
        %v3706 = vunpack.c.l.b16 %v1263
        %v3707 = vunpack.c.l.b16 %v1264
        %v3708 = vunpack.c.h.b16 %v1264
        %v3709 = vunpack.c.l.b16 %v1265
        %v3710 = vunpack.c.h.b16 %v1265
        %v3711 = vunpack.c.l.b16 %v1266
        %v3712 = vunpack.c.h.b16 %v1266
        %v3713 = vunpack.c.l.b16 %v1267
        %v3714 = vunpack.c.l.b16 %v1268
        %v3715 = vunpack.c.h.b16 %v1268
        %v3716 = vunpack.c.l.b16 %v1269
        %v3717 = vunpack.c.h.b16 %v1269
        %v3718 = vunpack.c.l.b16 %v1270
        %v3719 = vunpack.c.h.b16 %v1270
        %v3720 = vunpack.c.l.b16 %v1271
        %v3721 = vunpack.c.l.b16 %v1272
        %v3722 = vunpack.c.h.b16 %v1272
        %v3723 = vunpack.c.l.b16 %v1273
        %v3724 = vunpack.c.h.b16 %v1273
        %v3725 = vunpack.c.l.b16 %v1274
        %v3726 = vunpack.c.h.b16 %v1274
        %v3727 = vunpack.c.l.b16 %v1275
        %v3728 = vunpack.c.l.b16 %v1276
        %v3729 = vunpack.c.h.b16 %v1276
        %v3730 = vunpack.c.l.b16 %v1277
        %v3731 = vunpack.c.h.b16 %v1277
        %v3732 = vunpack.c.l.b16 %v1278
        %v3733 = vunpack.c.h.b16 %v1278
        %v3734 = vunpack.c.l.b16 %v1279
        %v3735 = vunpack.c.l.b16 %v1280
        %v3736 = vunpack.c.h.b16 %v1280
        %v3737 = vunpack.c.l.b16 %v1281
        %v3738 = vunpack.c.h.b16 %v1281
        %v3739 = vunpack.c.l.b16 %v1282
        %v3740 = vunpack.c.h.b16 %v1282
        %v3741 = vunpack.c.l.b16 %v1283
        %v3742 = vunpack.c.l.b16 %v1284
        %v3743 = vunpack.c.h.b16 %v1284
        %v3744 = vunpack.c.l.b16 %v1285
        %v3745 = vunpack.c.h.b16 %v1285
        %v3746 = vunpack.c.l.b16 %v1286
        %v3747 = vunpack.c.h.b16 %v1286
        %v3748 = vunpack.c.l.b16 %v1287
        %v3749 = vunpack.c.l.b16 %v1288
        %v3750 = vunpack.c.h.b16 %v1288
        %v3751 = vunpack.c.l.b16 %v1289
        %v3752 = vunpack.c.h.b16 %v1289
        %v3753 = vunpack.c.l.b16 %v1290
        %v3754 = vunpack.c.h.b16 %v1290
        %v3755 = vunpack.c.l.b16 %v1291
        %v3756 = vpack.c.b16 %v2195, %v2188
        %v3757 = vpack.c.b16 %v2196, %v2189
        %v3758 = vpack.c.b16 %v2197, %v2190
        %v3759 = vpack.c.b16 %v2198, %v2191
        %v3760 = vpack.c.b16 %v2199, %v2192
        %v3761 = vpack.c.b16 %v2200, %v2193
        %v3762 = vpack.c.b16 %v2201, %v2194
        %v3763 = vpack.c.b16 %v2209, %v2202
        %v3764 = vpack.c.b16 %v2210, %v2203
        %v3765 = vpack.c.b16 %v2211, %v2204
        %v3766 = vpack.c.b16 %v2212, %v2205
        %v3767 = vpack.c.b16 %v2213, %v2206
        %v3768 = vpack.c.b16 %v2214, %v2207
        %v3769 = vpack.c.b16 %v2215, %v2208
        %v3770 = vpack.c.b16 %v2223, %v2216
        %v3771 = vpack.c.b16 %v2224, %v2217
        %v3772 = vpack.c.b16 %v2225, %v2218
        %v3773 = vpack.c.b16 %v2226, %v2219
        %v3774 = vpack.c.b16 %v2227, %v2220
        %v3775 = vpack.c.b16 %v2228, %v2221
        %v3776 = vpack.c.b16 %v2229, %v2222
        %v3777 = vpack.c.b16 %v2237, %v2230
        %v3778 = vpack.c.b16 %v2238, %v2231
        %v3779 = vpack.c.b16 %v2239, %v2232
        %v3780 = vpack.c.b16 %v2240, %v2233
        %v3781 = vpack.c.b16 %v2241, %v2234
        %v3782 = vpack.c.b16 %v2242, %v2235
        %v3783 = vpack.c.b16 %v2243, %v2236
        %v3784 = vpack.c.b16 %v2251, %v2244
        %v3785 = vpack.c.b16 %v2252, %v2245
        %v3786 = vpack.c.b16 %v2253, %v2246
        %v3787 = vpack.c.b16 %v2254, %v2247
        %v3788 = vpack.c.b16 %v2255, %v2248
        %v3789 = vpack.c.b16 %v2256, %v2249
        %v3790 = vpack.c.b16 %v2257, %v2250
        %v3791 = vpack.c.b16 %v2265, %v2258
        %v3792 = vpack.c.b16 %v2266, %v2259
        %v3793 = vpack.c.b16 %v2267, %v2260
        %v3794 = vpack.c.b16 %v2268, %v2261
        %v3795 = vpack.c.b16 %v2269, %v2262
        %v3796 = vpack.c.b16 %v2270, %v2263
        %v3797 = vpack.c.b16 %v2271, %v2264
        %v3798 = vpack.c.b16 %v2279, %v2272
        %v3799 = vpack.c.b16 %v2280, %v2273
        %v3800 = vpack.c.b16 %v2281, %v2274
        %v3801 = vpack.c.b16 %v2282, %v2275
        %v3802 = vpack.c.b16 %v2283, %v2276
        %v3803 = vpack.c.b16 %v2284, %v2277
        %v3804 = vpack.c.b16 %v2285, %v2278
        %v3805 = vpack.c.b16 %v2293, %v2286
        %v3806 = vpack.c.b16 %v2294, %v2287
        %v3807 = vpack.c.b16 %v2295, %v2288
        %v3808 = vpack.c.b16 %v2296, %v2289
        %v3809 = vpack.c.b16 %v2297, %v2290
        %v3810 = vpack.c.b16 %v2298, %v2291
        %v3811 = vpack.c.b16 %v2299, %v2292
        %v3812 = vpack.c.b16 %v2307, %v2300
        %v3813 = vpack.c.b16 %v2308, %v2301
        %v3814 = vpack.c.b16 %v2309, %v2302
        %v3815 = vpack.c.b16 %v2310, %v2303
        %v3816 = vpack.c.b16 %v2311, %v2304
        %v3817 = vpack.c.b16 %v2312, %v2305
        %v3818 = vpack.c.b16 %v2313, %v2306
        %v3819 = vpack.c.b16 %v2321, %v2314
        %v3820 = vpack.c.b16 %v2322, %v2315
        %v3821 = vpack.c.b16 %v2323, %v2316
        %v3822 = vpack.c.b16 %v2324, %v2317
        %v3823 = vpack.c.b16 %v2325, %v2318
        %v3824 = vpack.c.b16 %v2326, %v2319
        %v3825 = vpack.c.b16 %v2327, %v2320
        %v3826 = vpack.c.b16 %v2335, %v2328
        %v3827 = vpack.c.b16 %v2336, %v2329
        %v3828 = vpack.c.b16 %v2337, %v2330
        %v3829 = vpack.c.b16 %v2338, %v2331
        %v3830 = vpack.c.b16 %v2339, %v2332
        %v3831 = vpack.c.b16 %v2340, %v2333
        %v3832 = vpack.c.b16 %v2341, %v2334
        %v3833 = vpack.c.b16 %v2349, %v2342
        %v3834 = vpack.c.b16 %v2350, %v2343
        %v3835 = vpack.c.b16 %v2351, %v2344
        %v3836 = vpack.c.b16 %v2352, %v2345
        %v3837 = vpack.c.b16 %v2353, %v2346
        %v3838 = vpack.c.b16 %v2354, %v2347
        %v3839 = vpack.c.b16 %v2355, %v2348
        %v3840 = vpack.c.b16 %v2363, %v2356
        %v3841 = vpack.c.b16 %v2364, %v2357
        %v3842 = vpack.c.b16 %v2365, %v2358
        %v3843 = vpack.c.b16 %v2366, %v2359
        %v3844 = vpack.c.b16 %v2367, %v2360
        %v3845 = vpack.c.b16 %v2368, %v2361
        %v3846 = vpack.c.b16 %v2369, %v2362
        %v3847 = vpack.c.b16 %v2377, %v2370
        %v3848 = vpack.c.b16 %v2378, %v2371
        %v3849 = vpack.c.b16 %v2379, %v2372
        %v3850 = vpack.c.b16 %v2380, %v2373
        %v3851 = vpack.c.b16 %v2381, %v2374
        %v3852 = vpack.c.b16 %v2382, %v2375
        %v3853 = vpack.c.b16 %v2383, %v2376
        %v3854 = vpack.c.b16 %v2391, %v2384
        %v3855 = vpack.c.b16 %v2392, %v2385
        %v3856 = vpack.c.b16 %v2393, %v2386
        %v3857 = vpack.c.b16 %v2394, %v2387
        %v3858 = vpack.c.b16 %v2395, %v2388
        %v3859 = vpack.c.b16 %v2396, %v2389
        %v3860 = vpack.c.b16 %v2397, %v2390
        %v3861 = vpack.c.b16 %v2405, %v2398
        %v3862 = vpack.c.b16 %v2406, %v2399
        %v3863 = vpack.c.b16 %v2407, %v2400
        %v3864 = vpack.c.b16 %v2408, %v2401
        %v3865 = vpack.c.b16 %v2409, %v2402
        %v3866 = vpack.c.b16 %v2410, %v2403
        %v3867 = vpack.c.b16 %v2411, %v2404
        %v3868 = vpack.c.b16 %v2419, %v2412
        %v3869 = vpack.c.b16 %v2420, %v2413
        %v3870 = vpack.c.b16 %v2421, %v2414
        %v3871 = vpack.c.b16 %v2422, %v2415
        %v3872 = vpack.c.b16 %v2423, %v2416
        %v3873 = vpack.c.b16 %v2424, %v2417
        %v3874 = vpack.c.b16 %v2425, %v2418
        %v3875 = vpack.c.b16 %v2433, %v2426
        %v3876 = vpack.c.b16 %v2434, %v2427
        %v3877 = vpack.c.b16 %v2435, %v2428
        %v3878 = vpack.c.b16 %v2436, %v2429
        %v3879 = vpack.c.b16 %v2437, %v2430
        %v3880 = vpack.c.b16 %v2438, %v2431
        %v3881 = vpack.c.b16 %v2439, %v2432
        %v3882 = vpack.c.b16 %v2447, %v2440
        %v3883 = vpack.c.b16 %v2448, %v2441
        %v3884 = vpack.c.b16 %v2449, %v2442
        %v3885 = vpack.c.b16 %v2450, %v2443
        %v3886 = vpack.c.b16 %v2451, %v2444
        %v3887 = vpack.c.b16 %v2452, %v2445
        %v3888 = vpack.c.b16 %v2453, %v2446
        %v3889 = vpack.c.b16 %v2461, %v2454
        %v3890 = vpack.c.b16 %v2462, %v2455
        %v3891 = vpack.c.b16 %v2463, %v2456
        %v3892 = vpack.c.b16 %v2464, %v2457
        %v3893 = vpack.c.b16 %v2465, %v2458
        %v3894 = vpack.c.b16 %v2466, %v2459
        %v3895 = vpack.c.b16 %v2467, %v2460
        %v3896 = vpack.c.b16 %v2475, %v2468
        %v3897 = vpack.c.b16 %v2476, %v2469
        %v3898 = vpack.c.b16 %v2477, %v2470
        %v3899 = vpack.c.b16 %v2478, %v2471
        %v3900 = vpack.c.b16 %v2479, %v2472
        %v3901 = vpack.c.b16 %v2480, %v2473
        %v3902 = vpack.c.b16 %v2481, %v2474
        %v3903 = vpack.c.b16 %v2489, %v2482
        %v3904 = vpack.c.b16 %v2490, %v2483
        %v3905 = vpack.c.b16 %v2491, %v2484
        %v3906 = vpack.c.b16 %v2492, %v2485
        %v3907 = vpack.c.b16 %v2493, %v2486
        %v3908 = vpack.c.b16 %v2494, %v2487
        %v3909 = vpack.c.b16 %v2495, %v2488
        %v3910 = vpack.c.b16 %v2503, %v2496
        %v3911 = vpack.c.b16 %v2504, %v2497
        %v3912 = vpack.c.b16 %v2505, %v2498
        %v3913 = vpack.c.b16 %v2506, %v2499
        %v3914 = vpack.c.b16 %v2507, %v2500
        %v3915 = vpack.c.b16 %v2508, %v2501
        %v3916 = vpack.c.b16 %v2509, %v2502
        %v3917 = vpack.c.b16 %v2517, %v2510
        %v3918 = vpack.c.b16 %v2518, %v2511
        %v3919 = vpack.c.b16 %v2519, %v2512
        %v3920 = vpack.c.b16 %v2520, %v2513
        %v3921 = vpack.c.b16 %v2521, %v2514
        %v3922 = vpack.c.b16 %v2522, %v2515
        %v3923 = vpack.c.b16 %v2523, %v2516
        %v3924 = vpack.c.b16 %v2531, %v2524
        %v3925 = vpack.c.b16 %v2532, %v2525
        %v3926 = vpack.c.b16 %v2533, %v2526
        %v3927 = vpack.c.b16 %v2534, %v2527
        %v3928 = vpack.c.b16 %v2535, %v2528
        %v3929 = vpack.c.b16 %v2536, %v2529
        %v3930 = vpack.c.b16 %v2537, %v2530
        %v3931 = vpack.c.b16 %v2545, %v2538
        %v3932 = vpack.c.b16 %v2546, %v2539
        %v3933 = vpack.c.b16 %v2547, %v2540
        %v3934 = vpack.c.b16 %v2548, %v2541
        %v3935 = vpack.c.b16 %v2549, %v2542
        %v3936 = vpack.c.b16 %v2550, %v2543
        %v3937 = vpack.c.b16 %v2551, %v2544
        %v3938 = vpack.c.b16 %v2559, %v2552
        %v3939 = vpack.c.b16 %v2560, %v2553
        %v3940 = vpack.c.b16 %v2561, %v2554
        %v3941 = vpack.c.b16 %v2562, %v2555
        %v3942 = vpack.c.b16 %v2563, %v2556
        %v3943 = vpack.c.b16 %v2564, %v2557
        %v3944 = vpack.c.b16 %v2565, %v2558
        %v3945 = vpack.c.b16 %v2573, %v2566
        %v3946 = vpack.c.b16 %v2574, %v2567
        %v3947 = vpack.c.b16 %v2575, %v2568
        %v3948 = vpack.c.b16 %v2576, %v2569
        %v3949 = vpack.c.b16 %v2577, %v2570
        %v3950 = vpack.c.b16 %v2578, %v2571
        %v3951 = vpack.c.b16 %v2579, %v2572
        %v3952 = vpack.c.b16 %v2587, %v2580
        %v3953 = vpack.c.b16 %v2588, %v2581
        %v3954 = vpack.c.b16 %v2589, %v2582
        %v3955 = vpack.c.b16 %v2590, %v2583
        %v3956 = vpack.c.b16 %v2591, %v2584
        %v3957 = vpack.c.b16 %v2592, %v2585
        %v3958 = vpack.c.b16 %v2593, %v2586
        %v3959 = vpack.c.b16 %v2601, %v2594
        %v3960 = vpack.c.b16 %v2602, %v2595
        %v3961 = vpack.c.b16 %v2603, %v2596
        %v3962 = vpack.c.b16 %v2604, %v2597
        %v3963 = vpack.c.b16 %v2605, %v2598
        %v3964 = vpack.c.b16 %v2606, %v2599
        %v3965 = vpack.c.b16 %v2607, %v2600
        %v3966 = vpack.c.b16 %v2615, %v2608
        %v3967 = vpack.c.b16 %v2616, %v2609
        %v3968 = vpack.c.b16 %v2617, %v2610
        %v3969 = vpack.c.b16 %v2618, %v2611
        %v3970 = vpack.c.b16 %v2619, %v2612
        %v3971 = vpack.c.b16 %v2620, %v2613
        %v3972 = vpack.c.b16 %v2621, %v2614
        %v3973 = vpack.c.b16 %v2629, %v2622
        %v3974 = vpack.c.b16 %v2630, %v2623
        %v3975 = vpack.c.b16 %v2631, %v2624
        %v3976 = vpack.c.b16 %v2632, %v2625
        %v3977 = vpack.c.b16 %v2633, %v2626
        %v3978 = vpack.c.b16 %v2634, %v2627
        %v3979 = vpack.c.b16 %v2635, %v2628
        %v3980 = vpack.c.b16 %v2643, %v2636
        %v3981 = vpack.c.b16 %v2644, %v2637
        %v3982 = vpack.c.b16 %v2645, %v2638
        %v3983 = vpack.c.b16 %v2646, %v2639
        %v3984 = vpack.c.b16 %v2647, %v2640
        %v3985 = vpack.c.b16 %v2648, %v2641
        %v3986 = vpack.c.b16 %v2649, %v2642
        %v3987 = vpack.c.b16 %v2657, %v2650
        %v3988 = vpack.c.b16 %v2658, %v2651
        %v3989 = vpack.c.b16 %v2659, %v2652
        %v3990 = vpack.c.b16 %v2660, %v2653
        %v3991 = vpack.c.b16 %v2661, %v2654
        %v3992 = vpack.c.b16 %v2662, %v2655
        %v3993 = vpack.c.b16 %v2663, %v2656
        %v3994 = vpack.c.b16 %v2671, %v2664
        %v3995 = vpack.c.b16 %v2672, %v2665
        %v3996 = vpack.c.b16 %v2673, %v2666
        %v3997 = vpack.c.b16 %v2674, %v2667
        %v3998 = vpack.c.b16 %v2675, %v2668
        %v3999 = vpack.c.b16 %v2676, %v2669
        %v4000 = vpack.c.b16 %v2677, %v2670
        %v4001 = vpack.c.b16 %v2685, %v2678
        %v4002 = vpack.c.b16 %v2686, %v2679
        %v4003 = vpack.c.b16 %v2687, %v2680
        %v4004 = vpack.c.b16 %v2688, %v2681
        %v4005 = vpack.c.b16 %v2689, %v2682
        %v4006 = vpack.c.b16 %v2690, %v2683
        %v4007 = vpack.c.b16 %v2691, %v2684
        %v4008 = vpack.c.b16 %v2699, %v2692
        %v4009 = vpack.c.b16 %v2700, %v2693
        %v4010 = vpack.c.b16 %v2701, %v2694
        %v4011 = vpack.c.b16 %v2702, %v2695
        %v4012 = vpack.c.b16 %v2703, %v2696
        %v4013 = vpack.c.b16 %v2704, %v2697
        %v4014 = vpack.c.b16 %v2705, %v2698
        %v4015 = vpack.c.b16 %v2713, %v2706
        %v4016 = vpack.c.b16 %v2714, %v2707
        %v4017 = vpack.c.b16 %v2715, %v2708
        %v4018 = vpack.c.b16 %v2716, %v2709
        %v4019 = vpack.c.b16 %v2717, %v2710
        %v4020 = vpack.c.b16 %v2718, %v2711
        %v4021 = vpack.c.b16 %v2719, %v2712
        %v4022 = vpack.c.b16 %v2727, %v2720
        %v4023 = vpack.c.b16 %v2728, %v2721
        %v4024 = vpack.c.b16 %v2729, %v2722
        %v4025 = vpack.c.b16 %v2730, %v2723
        %v4026 = vpack.c.b16 %v2731, %v2724
        %v4027 = vpack.c.b16 %v2732, %v2725
        %v4028 = vpack.c.b16 %v2733, %v2726
        %v4029 = vpack.c.b16 %v2741, %v2734
        %v4030 = vpack.c.b16 %v2742, %v2735
        %v4031 = vpack.c.b16 %v2743, %v2736
        %v4032 = vpack.c.b16 %v2744, %v2737
        %v4033 = vpack.c.b16 %v2745, %v2738
        %v4034 = vpack.c.b16 %v2746, %v2739
        %v4035 = vpack.c.b16 %v2747, %v2740
        %v4036 = vpack.c.b16 %v2755, %v2748
        %v4037 = vpack.c.b16 %v2756, %v2749
        %v4038 = vpack.c.b16 %v2757, %v2750
        %v4039 = vpack.c.b16 %v2758, %v2751
        %v4040 = vpack.c.b16 %v2759, %v2752
        %v4041 = vpack.c.b16 %v2760, %v2753
        %v4042 = vpack.c.b16 %v2761, %v2754
        %v4043 = vpack.c.b16 %v2769, %v2762
        %v4044 = vpack.c.b16 %v2770, %v2763
        %v4045 = vpack.c.b16 %v2771, %v2764
        %v4046 = vpack.c.b16 %v2772, %v2765
        %v4047 = vpack.c.b16 %v2773, %v2766
        %v4048 = vpack.c.b16 %v2774, %v2767
        %v4049 = vpack.c.b16 %v2775, %v2768
        %v4050 = vpack.c.b16 %v2783, %v2776
        %v4051 = vpack.c.b16 %v2784, %v2777
        %v4052 = vpack.c.b16 %v2785, %v2778
        %v4053 = vpack.c.b16 %v2786, %v2779
        %v4054 = vpack.c.b16 %v2787, %v2780
        %v4055 = vpack.c.b16 %v2788, %v2781
        %v4056 = vpack.c.b16 %v2789, %v2782
        %v4057 = vpack.c.b16 %v2797, %v2790
        %v4058 = vpack.c.b16 %v2798, %v2791
        %v4059 = vpack.c.b16 %v2799, %v2792
        %v4060 = vpack.c.b16 %v2800, %v2793
        %v4061 = vpack.c.b16 %v2801, %v2794
        %v4062 = vpack.c.b16 %v2802, %v2795
        %v4063 = vpack.c.b16 %v2803, %v2796
        %v4064 = vpack.c.b16 %v2811, %v2804
        %v4065 = vpack.c.b16 %v2812, %v2805
        %v4066 = vpack.c.b16 %v2813, %v2806
        %v4067 = vpack.c.b16 %v2814, %v2807
        %v4068 = vpack.c.b16 %v2815, %v2808
        %v4069 = vpack.c.b16 %v2816, %v2809
        %v4070 = vpack.c.b16 %v2817, %v2810
        %v4071 = vpack.c.b16 %v2825, %v2818
        %v4072 = vpack.c.b16 %v2826, %v2819
        %v4073 = vpack.c.b16 %v2827, %v2820
        %v4074 = vpack.c.b16 %v2828, %v2821
        %v4075 = vpack.c.b16 %v2829, %v2822
        %v4076 = vpack.c.b16 %v2830, %v2823
        %v4077 = vpack.c.b16 %v2831, %v2824
        %v4078 = vpack.c.b16 %v2839, %v2832
        %v4079 = vpack.c.b16 %v2840, %v2833
        %v4080 = vpack.c.b16 %v2841, %v2834
        %v4081 = vpack.c.b16 %v2842, %v2835
        %v4082 = vpack.c.b16 %v2843, %v2836
        %v4083 = vpack.c.b16 %v2844, %v2837
        %v4084 = vpack.c.b16 %v2845, %v2838
        %v4085 = vpack.c.b16 %v2853, %v2846
        %v4086 = vpack.c.b16 %v2854, %v2847
        %v4087 = vpack.c.b16 %v2855, %v2848
        %v4088 = vpack.c.b16 %v2856, %v2849
        %v4089 = vpack.c.b16 %v2857, %v2850
        %v4090 = vpack.c.b16 %v2858, %v2851
        %v4091 = vpack.c.b16 %v2859, %v2852
        %v4092 = vpack.c.b16 %v2867, %v2860
        %v4093 = vpack.c.b16 %v2868, %v2861
        %v4094 = vpack.c.b16 %v2869, %v2862
        %v4095 = vpack.c.b16 %v2870, %v2863
        %v4096 = vpack.c.b16 %v2871, %v2864
        %v4097 = vpack.c.b16 %v2872, %v2865
        %v4098 = vpack.c.b16 %v2873, %v2866
        %v4099 = vpack.c.b16 %v2881, %v2874
        %v4100 = vpack.c.b16 %v2882, %v2875
        %v4101 = vpack.c.b16 %v2883, %v2876
        %v4102 = vpack.c.b16 %v2884, %v2877
        %v4103 = vpack.c.b16 %v2885, %v2878
        %v4104 = vpack.c.b16 %v2886, %v2879
        %v4105 = vpack.c.b16 %v2887, %v2880
        %v4106 = vpack.c.b16 %v2895, %v2888
        %v4107 = vpack.c.b16 %v2896, %v2889
        %v4108 = vpack.c.b16 %v2897, %v2890
        %v4109 = vpack.c.b16 %v2898, %v2891
        %v4110 = vpack.c.b16 %v2899, %v2892
        %v4111 = vpack.c.b16 %v2900, %v2893
        %v4112 = vpack.c.b16 %v2901, %v2894
        %v4113 = vpack.c.b16 %v2909, %v2902
        %v4114 = vpack.c.b16 %v2910, %v2903
        %v4115 = vpack.c.b16 %v2911, %v2904
        %v4116 = vpack.c.b16 %v2912, %v2905
        %v4117 = vpack.c.b16 %v2913, %v2906
        %v4118 = vpack.c.b16 %v2914, %v2907
        %v4119 = vpack.c.b16 %v2915, %v2908
        %v4120 = vpack.c.b16 %v2923, %v2916
        %v4121 = vpack.c.b16 %v2924, %v2917
        %v4122 = vpack.c.b16 %v2925, %v2918
        %v4123 = vpack.c.b16 %v2926, %v2919
        %v4124 = vpack.c.b16 %v2927, %v2920
        %v4125 = vpack.c.b16 %v2928, %v2921
        %v4126 = vpack.c.b16 %v2929, %v2922
        %v4127 = vpack.c.b16 %v2937, %v2930
        %v4128 = vpack.c.b16 %v2938, %v2931
        %v4129 = vpack.c.b16 %v2939, %v2932
        %v4130 = vpack.c.b16 %v2940, %v2933
        %v4131 = vpack.c.b16 %v2941, %v2934
        %v4132 = vpack.c.b16 %v2942, %v2935
        %v4133 = vpack.c.b16 %v2943, %v2936
        %v4134 = vpack.c.b16 %v2951, %v2944
        %v4135 = vpack.c.b16 %v2952, %v2945
        %v4136 = vpack.c.b16 %v2953, %v2946
        %v4137 = vpack.c.b16 %v2954, %v2947
        %v4138 = vpack.c.b16 %v2955, %v2948
        %v4139 = vpack.c.b16 %v2956, %v2949
        %v4140 = vpack.c.b16 %v2957, %v2950
        %v4141 = vpack.c.b16 %v2965, %v2958
        %v4142 = vpack.c.b16 %v2966, %v2959
        %v4143 = vpack.c.b16 %v2967, %v2960
        %v4144 = vpack.c.b16 %v2968, %v2961
        %v4145 = vpack.c.b16 %v2969, %v2962
        %v4146 = vpack.c.b16 %v2970, %v2963
        %v4147 = vpack.c.b16 %v2971, %v2964
        %v4148 = vpack.c.b16 %v2979, %v2972
        %v4149 = vpack.c.b16 %v2980, %v2973
        %v4150 = vpack.c.b16 %v2981, %v2974
        %v4151 = vpack.c.b16 %v2982, %v2975
        %v4152 = vpack.c.b16 %v2983, %v2976
        %v4153 = vpack.c.b16 %v2984, %v2977
        %v4154 = vpack.c.b16 %v2985, %v2978
        %v4155 = vpack.c.b16 %v2993, %v2986
        %v4156 = vpack.c.b16 %v2994, %v2987
        %v4157 = vpack.c.b16 %v2995, %v2988
        %v4158 = vpack.c.b16 %v2996, %v2989
        %v4159 = vpack.c.b16 %v2997, %v2990
        %v4160 = vpack.c.b16 %v2998, %v2991
        %v4161 = vpack.c.b16 %v2999, %v2992
        %v4162 = vpack.c.b16 %v3007, %v3000
        %v4163 = vpack.c.b16 %v3008, %v3001
        %v4164 = vpack.c.b16 %v3009, %v3002
        %v4165 = vpack.c.b16 %v3010, %v3003
        %v4166 = vpack.c.b16 %v3011, %v3004
        %v4167 = vpack.c.b16 %v3012, %v3005
        %v4168 = vpack.c.b16 %v3013, %v3006
        %v4169 = vpack.c.b16 %v3021, %v3014
        %v4170 = vpack.c.b16 %v3022, %v3015
        %v4171 = vpack.c.b16 %v3023, %v3016
        %v4172 = vpack.c.b16 %v3024, %v3017
        %v4173 = vpack.c.b16 %v3025, %v3018
        %v4174 = vpack.c.b16 %v3026, %v3019
        %v4175 = vpack.c.b16 %v3027, %v3020
        %v4176 = vpack.c.b16 %v3035, %v3028
        %v4177 = vpack.c.b16 %v3036, %v3029
        %v4178 = vpack.c.b16 %v3037, %v3030
        %v4179 = vpack.c.b16 %v3038, %v3031
        %v4180 = vpack.c.b16 %v3039, %v3032
        %v4181 = vpack.c.b16 %v3040, %v3033
        %v4182 = vpack.c.b16 %v3041, %v3034
        %v4183 = vpack.c.b16 %v3049, %v3042
        %v4184 = vpack.c.b16 %v3050, %v3043
        %v4185 = vpack.c.b16 %v3051, %v3044
        %v4186 = vpack.c.b16 %v3052, %v3045
        %v4187 = vpack.c.b16 %v3053, %v3046
        %v4188 = vpack.c.b16 %v3054, %v3047
        %v4189 = vpack.c.b16 %v3055, %v3048
        %v4190 = vpack.c.b16 %v3063, %v3056
        %v4191 = vpack.c.b16 %v3064, %v3057
        %v4192 = vpack.c.b16 %v3065, %v3058
        %v4193 = vpack.c.b16 %v3066, %v3059
        %v4194 = vpack.c.b16 %v3067, %v3060
        %v4195 = vpack.c.b16 %v3068, %v3061
        %v4196 = vpack.c.b16 %v3069, %v3062
        %v4197 = vpack.c.b16 %v3077, %v3070
        %v4198 = vpack.c.b16 %v3078, %v3071
        %v4199 = vpack.c.b16 %v3079, %v3072
        %v4200 = vpack.c.b16 %v3080, %v3073
        %v4201 = vpack.c.b16 %v3081, %v3074
        %v4202 = vpack.c.b16 %v3082, %v3075
        %v4203 = vpack.c.b16 %v3083, %v3076
        %v4204 = vpack.c.b16 %v3091, %v3084
        %v4205 = vpack.c.b16 %v3092, %v3085
        %v4206 = vpack.c.b16 %v3093, %v3086
        %v4207 = vpack.c.b16 %v3094, %v3087
        %v4208 = vpack.c.b16 %v3095, %v3088
        %v4209 = vpack.c.b16 %v3096, %v3089
        %v4210 = vpack.c.b16 %v3097, %v3090
        %v4211 = vpack.c.b16 %v3105, %v3098
        %v4212 = vpack.c.b16 %v3106, %v3099
        %v4213 = vpack.c.b16 %v3107, %v3100
        %v4214 = vpack.c.b16 %v3108, %v3101
        %v4215 = vpack.c.b16 %v3109, %v3102
        %v4216 = vpack.c.b16 %v3110, %v3103
        %v4217 = vpack.c.b16 %v3111, %v3104
        %v4218 = vpack.c.b16 %v3119, %v3112
        %v4219 = vpack.c.b16 %v3120, %v3113
        %v4220 = vpack.c.b16 %v3121, %v3114
        %v4221 = vpack.c.b16 %v3122, %v3115
        %v4222 = vpack.c.b16 %v3123, %v3116
        %v4223 = vpack.c.b16 %v3124, %v3117
        %v4224 = vpack.c.b16 %v3125, %v3118
        %v4225 = vpack.c.b16 %v3133, %v3126
        %v4226 = vpack.c.b16 %v3134, %v3127
        %v4227 = vpack.c.b16 %v3135, %v3128
        %v4228 = vpack.c.b16 %v3136, %v3129
        %v4229 = vpack.c.b16 %v3137, %v3130
        %v4230 = vpack.c.b16 %v3138, %v3131
        %v4231 = vpack.c.b16 %v3139, %v3132
        %v4232 = vpack.c.b16 %v3147, %v3140
        %v4233 = vpack.c.b16 %v3148, %v3141
        %v4234 = vpack.c.b16 %v3149, %v3142
        %v4235 = vpack.c.b16 %v3150, %v3143
        %v4236 = vpack.c.b16 %v3151, %v3144
        %v4237 = vpack.c.b16 %v3152, %v3145
        %v4238 = vpack.c.b16 %v3153, %v3146
        %v4239 = vpack.c.b16 %v3161, %v3154
        %v4240 = vpack.c.b16 %v3162, %v3155
        %v4241 = vpack.c.b16 %v3163, %v3156
        %v4242 = vpack.c.b16 %v3164, %v3157
        %v4243 = vpack.c.b16 %v3165, %v3158
        %v4244 = vpack.c.b16 %v3166, %v3159
        %v4245 = vpack.c.b16 %v3167, %v3160
        %v4246 = vpack.c.b16 %v3175, %v3168
        %v4247 = vpack.c.b16 %v3176, %v3169
        %v4248 = vpack.c.b16 %v3177, %v3170
        %v4249 = vpack.c.b16 %v3178, %v3171
        %v4250 = vpack.c.b16 %v3179, %v3172
        %v4251 = vpack.c.b16 %v3180, %v3173
        %v4252 = vpack.c.b16 %v3181, %v3174
        %v4253 = vpack.c.b16 %v3189, %v3182
        %v4254 = vpack.c.b16 %v3190, %v3183
        %v4255 = vpack.c.b16 %v3191, %v3184
        %v4256 = vpack.c.b16 %v3192, %v3185
        %v4257 = vpack.c.b16 %v3193, %v3186
        %v4258 = vpack.c.b16 %v3194, %v3187
        %v4259 = vpack.c.b16 %v3195, %v3188
        %v4260 = vpack.c.b16 %v3203, %v3196
        %v4261 = vpack.c.b16 %v3204, %v3197
        %v4262 = vpack.c.b16 %v3205, %v3198
        %v4263 = vpack.c.b16 %v3206, %v3199
        %v4264 = vpack.c.b16 %v3207, %v3200
        %v4265 = vpack.c.b16 %v3208, %v3201
        %v4266 = vpack.c.b16 %v3209, %v3202
        %v4267 = vpack.c.b16 %v3217, %v3210
        %v4268 = vpack.c.b16 %v3218, %v3211
        %v4269 = vpack.c.b16 %v3219, %v3212
        %v4270 = vpack.c.b16 %v3220, %v3213
        %v4271 = vpack.c.b16 %v3221, %v3214
        %v4272 = vpack.c.b16 %v3222, %v3215
        %v4273 = vpack.c.b16 %v3223, %v3216
        %v4274 = vpack.c.b16 %v3231, %v3224
        %v4275 = vpack.c.b16 %v3232, %v3225
        %v4276 = vpack.c.b16 %v3233, %v3226
        %v4277 = vpack.c.b16 %v3234, %v3227
        %v4278 = vpack.c.b16 %v3235, %v3228
        %v4279 = vpack.c.b16 %v3236, %v3229
        %v4280 = vpack.c.b16 %v3237, %v3230
        %v4281 = vpack.c.b16 %v3245, %v3238
        %v4282 = vpack.c.b16 %v3246, %v3239
        %v4283 = vpack.c.b16 %v3247, %v3240
        %v4284 = vpack.c.b16 %v3248, %v3241
        %v4285 = vpack.c.b16 %v3249, %v3242
        %v4286 = vpack.c.b16 %v3250, %v3243
        %v4287 = vpack.c.b16 %v3251, %v3244
        %v4288 = vpack.c.b16 %v3259, %v3252
        %v4289 = vpack.c.b16 %v3260, %v3253
        %v4290 = vpack.c.b16 %v3261, %v3254
        %v4291 = vpack.c.b16 %v3262, %v3255
        %v4292 = vpack.c.b16 %v3263, %v3256
        %v4293 = vpack.c.b16 %v3264, %v3257
        %v4294 = vpack.c.b16 %v3265, %v3258
        %v4295 = vpack.c.b16 %v3273, %v3266
        %v4296 = vpack.c.b16 %v3274, %v3267
        %v4297 = vpack.c.b16 %v3275, %v3268
        %v4298 = vpack.c.b16 %v3276, %v3269
        %v4299 = vpack.c.b16 %v3277, %v3270
        %v4300 = vpack.c.b16 %v3278, %v3271
        %v4301 = vpack.c.b16 %v3279, %v3272
        %v4302 = vpack.c.b16 %v3287, %v3280
        %v4303 = vpack.c.b16 %v3288, %v3281
        %v4304 = vpack.c.b16 %v3289, %v3282
        %v4305 = vpack.c.b16 %v3290, %v3283
        %v4306 = vpack.c.b16 %v3291, %v3284
        %v4307 = vpack.c.b16 %v3292, %v3285
        %v4308 = vpack.c.b16 %v3293, %v3286
        %v4309 = vpack.c.b16 %v3301, %v3294
        %v4310 = vpack.c.b16 %v3302, %v3295
        %v4311 = vpack.c.b16 %v3303, %v3296
        %v4312 = vpack.c.b16 %v3304, %v3297
        %v4313 = vpack.c.b16 %v3305, %v3298
        %v4314 = vpack.c.b16 %v3306, %v3299
        %v4315 = vpack.c.b16 %v3307, %v3300
        %v4316 = vpack.c.b16 %v3315, %v3308
        %v4317 = vpack.c.b16 %v3316, %v3309
        %v4318 = vpack.c.b16 %v3317, %v3310
        %v4319 = vpack.c.b16 %v3318, %v3311
        %v4320 = vpack.c.b16 %v3319, %v3312
        %v4321 = vpack.c.b16 %v3320, %v3313
        %v4322 = vpack.c.b16 %v3321, %v3314
        %v4323 = vpack.c.b16 %v3329, %v3322
        %v4324 = vpack.c.b16 %v3330, %v3323
        %v4325 = vpack.c.b16 %v3331, %v3324
        %v4326 = vpack.c.b16 %v3332, %v3325
        %v4327 = vpack.c.b16 %v3333, %v3326
        %v4328 = vpack.c.b16 %v3334, %v3327
        %v4329 = vpack.c.b16 %v3335, %v3328
        %v4330 = vpack.c.b16 %v3343, %v3336
        %v4331 = vpack.c.b16 %v3344, %v3337
        %v4332 = vpack.c.b16 %v3345, %v3338
        %v4333 = vpack.c.b16 %v3346, %v3339
        %v4334 = vpack.c.b16 %v3347, %v3340
        %v4335 = vpack.c.b16 %v3348, %v3341
        %v4336 = vpack.c.b16 %v3349, %v3342
        %v4337 = vpack.c.b16 %v3357, %v3350
        %v4338 = vpack.c.b16 %v3358, %v3351
        %v4339 = vpack.c.b16 %v3359, %v3352
        %v4340 = vpack.c.b16 %v3360, %v3353
        %v4341 = vpack.c.b16 %v3361, %v3354
        %v4342 = vpack.c.b16 %v3362, %v3355
        %v4343 = vpack.c.b16 %v3363, %v3356
        %v4344 = vpack.c.b16 %v3371, %v3364
        %v4345 = vpack.c.b16 %v3372, %v3365
        %v4346 = vpack.c.b16 %v3373, %v3366
        %v4347 = vpack.c.b16 %v3374, %v3367
        %v4348 = vpack.c.b16 %v3375, %v3368
        %v4349 = vpack.c.b16 %v3376, %v3369
        %v4350 = vpack.c.b16 %v3377, %v3370
        %v4351 = vpack.c.b16 %v3385, %v3378
        %v4352 = vpack.c.b16 %v3386, %v3379
        %v4353 = vpack.c.b16 %v3387, %v3380
        %v4354 = vpack.c.b16 %v3388, %v3381
        %v4355 = vpack.c.b16 %v3389, %v3382
        %v4356 = vpack.c.b16 %v3390, %v3383
        %v4357 = vpack.c.b16 %v3391, %v3384
        %v4358 = vpack.c.b16 %v3399, %v3392
        %v4359 = vpack.c.b16 %v3400, %v3393
        %v4360 = vpack.c.b16 %v3401, %v3394
        %v4361 = vpack.c.b16 %v3402, %v3395
        %v4362 = vpack.c.b16 %v3403, %v3396
        %v4363 = vpack.c.b16 %v3404, %v3397
        %v4364 = vpack.c.b16 %v3405, %v3398
        %v4365 = vpack.c.b16 %v3413, %v3406
        %v4366 = vpack.c.b16 %v3414, %v3407
        %v4367 = vpack.c.b16 %v3415, %v3408
        %v4368 = vpack.c.b16 %v3416, %v3409
        %v4369 = vpack.c.b16 %v3417, %v3410
        %v4370 = vpack.c.b16 %v3418, %v3411
        %v4371 = vpack.c.b16 %v3419, %v3412
        %v4372 = vpack.c.b16 %v3427, %v3420
        %v4373 = vpack.c.b16 %v3428, %v3421
        %v4374 = vpack.c.b16 %v3429, %v3422
        %v4375 = vpack.c.b16 %v3430, %v3423
        %v4376 = vpack.c.b16 %v3431, %v3424
        %v4377 = vpack.c.b16 %v3432, %v3425
        %v4378 = vpack.c.b16 %v3433, %v3426
        %v4379 = vpack.c.b16 %v3441, %v3434
        %v4380 = vpack.c.b16 %v3442, %v3435
        %v4381 = vpack.c.b16 %v3443, %v3436
        %v4382 = vpack.c.b16 %v3444, %v3437
        %v4383 = vpack.c.b16 %v3445, %v3438
        %v4384 = vpack.c.b16 %v3446, %v3439
        %v4385 = vpack.c.b16 %v3447, %v3440
        %v4386 = vpack.c.b16 %v3455, %v3448
        %v4387 = vpack.c.b16 %v3456, %v3449
        %v4388 = vpack.c.b16 %v3457, %v3450
        %v4389 = vpack.c.b16 %v3458, %v3451
        %v4390 = vpack.c.b16 %v3459, %v3452
        %v4391 = vpack.c.b16 %v3460, %v3453
        %v4392 = vpack.c.b16 %v3461, %v3454
        %v4393 = vpack.c.b16 %v3469, %v3462
        %v4394 = vpack.c.b16 %v3470, %v3463
        %v4395 = vpack.c.b16 %v3471, %v3464
        %v4396 = vpack.c.b16 %v3472, %v3465
        %v4397 = vpack.c.b16 %v3473, %v3466
        %v4398 = vpack.c.b16 %v3474, %v3467
        %v4399 = vpack.c.b16 %v3475, %v3468
        %v4400 = vpack.c.b16 %v3483, %v3476
        %v4401 = vpack.c.b16 %v3484, %v3477
        %v4402 = vpack.c.b16 %v3485, %v3478
        %v4403 = vpack.c.b16 %v3486, %v3479
        %v4404 = vpack.c.b16 %v3487, %v3480
        %v4405 = vpack.c.b16 %v3488, %v3481
        %v4406 = vpack.c.b16 %v3489, %v3482
        %v4407 = vpack.c.b16 %v3497, %v3490
        %v4408 = vpack.c.b16 %v3498, %v3491
        %v4409 = vpack.c.b16 %v3499, %v3492
        %v4410 = vpack.c.b16 %v3500, %v3493
        %v4411 = vpack.c.b16 %v3501, %v3494
        %v4412 = vpack.c.b16 %v3502, %v3495
        %v4413 = vpack.c.b16 %v3503, %v3496
        %v4414 = vpack.c.b16 %v3511, %v3504
        %v4415 = vpack.c.b16 %v3512, %v3505
        %v4416 = vpack.c.b16 %v3513, %v3506
        %v4417 = vpack.c.b16 %v3514, %v3507
        %v4418 = vpack.c.b16 %v3515, %v3508
        %v4419 = vpack.c.b16 %v3516, %v3509
        %v4420 = vpack.c.b16 %v3517, %v3510
        %v4421 = vpack.c.b16 %v3525, %v3518
        %v4422 = vpack.c.b16 %v3526, %v3519
        %v4423 = vpack.c.b16 %v3527, %v3520
        %v4424 = vpack.c.b16 %v3528, %v3521
        %v4425 = vpack.c.b16 %v3529, %v3522
        %v4426 = vpack.c.b16 %v3530, %v3523
        %v4427 = vpack.c.b16 %v3531, %v3524
        %v4428 = vpack.c.b16 %v3539, %v3532
        %v4429 = vpack.c.b16 %v3540, %v3533
        %v4430 = vpack.c.b16 %v3541, %v3534
        %v4431 = vpack.c.b16 %v3542, %v3535
        %v4432 = vpack.c.b16 %v3543, %v3536
        %v4433 = vpack.c.b16 %v3544, %v3537
        %v4434 = vpack.c.b16 %v3545, %v3538
        %v4435 = vpack.c.b16 %v3553, %v3546
        %v4436 = vpack.c.b16 %v3554, %v3547
        %v4437 = vpack.c.b16 %v3555, %v3548
        %v4438 = vpack.c.b16 %v3556, %v3549
        %v4439 = vpack.c.b16 %v3557, %v3550
        %v4440 = vpack.c.b16 %v3558, %v3551
        %v4441 = vpack.c.b16 %v3559, %v3552
        %v4442 = vpack.c.b16 %v3567, %v3560
        %v4443 = vpack.c.b16 %v3568, %v3561
        %v4444 = vpack.c.b16 %v3569, %v3562
        %v4445 = vpack.c.b16 %v3570, %v3563
        %v4446 = vpack.c.b16 %v3571, %v3564
        %v4447 = vpack.c.b16 %v3572, %v3565
        %v4448 = vpack.c.b16 %v3573, %v3566
        %v4449 = vpack.c.b16 %v3581, %v3574
        %v4450 = vpack.c.b16 %v3582, %v3575
        %v4451 = vpack.c.b16 %v3583, %v3576
        %v4452 = vpack.c.b16 %v3584, %v3577
        %v4453 = vpack.c.b16 %v3585, %v3578
        %v4454 = vpack.c.b16 %v3586, %v3579
        %v4455 = vpack.c.b16 %v3587, %v3580
        %v4456 = vpack.c.b16 %v3595, %v3588
        %v4457 = vpack.c.b16 %v3596, %v3589
        %v4458 = vpack.c.b16 %v3597, %v3590
        %v4459 = vpack.c.b16 %v3598, %v3591
        %v4460 = vpack.c.b16 %v3599, %v3592
        %v4461 = vpack.c.b16 %v3600, %v3593
        %v4462 = vpack.c.b16 %v3601, %v3594
        %v4463 = vpack.c.b16 %v3609, %v3602
        %v4464 = vpack.c.b16 %v3610, %v3603
        %v4465 = vpack.c.b16 %v3611, %v3604
        %v4466 = vpack.c.b16 %v3612, %v3605
        %v4467 = vpack.c.b16 %v3613, %v3606
        %v4468 = vpack.c.b16 %v3614, %v3607
        %v4469 = vpack.c.b16 %v3615, %v3608
        %v4470 = vpack.c.b16 %v3623, %v3616
        %v4471 = vpack.c.b16 %v3624, %v3617
        %v4472 = vpack.c.b16 %v3625, %v3618
        %v4473 = vpack.c.b16 %v3626, %v3619
        %v4474 = vpack.c.b16 %v3627, %v3620
        %v4475 = vpack.c.b16 %v3628, %v3621
        %v4476 = vpack.c.b16 %v3629, %v3622
        %v4477 = vpack.c.b16 %v3637, %v3630
        %v4478 = vpack.c.b16 %v3638, %v3631
        %v4479 = vpack.c.b16 %v3639, %v3632
        %v4480 = vpack.c.b16 %v3640, %v3633
        %v4481 = vpack.c.b16 %v3641, %v3634
        %v4482 = vpack.c.b16 %v3642, %v3635
        %v4483 = vpack.c.b16 %v3643, %v3636
        %v4484 = vpack.c.b16 %v3651, %v3644
        %v4485 = vpack.c.b16 %v3652, %v3645
        %v4486 = vpack.c.b16 %v3653, %v3646
        %v4487 = vpack.c.b16 %v3654, %v3647
        %v4488 = vpack.c.b16 %v3655, %v3648
        %v4489 = vpack.c.b16 %v3656, %v3649
        %v4490 = vpack.c.b16 %v3657, %v3650
        %v4491 = vpack.c.b16 %v3665, %v3658
        %v4492 = vpack.c.b16 %v3666, %v3659
        %v4493 = vpack.c.b16 %v3667, %v3660
        %v4494 = vpack.c.b16 %v3668, %v3661
        %v4495 = vpack.c.b16 %v3669, %v3662
        %v4496 = vpack.c.b16 %v3670, %v3663
        %v4497 = vpack.c.b16 %v3671, %v3664
        %v4498 = vpack.c.b16 %v3679, %v3672
        %v4499 = vpack.c.b16 %v3680, %v3673
        %v4500 = vpack.c.b16 %v3681, %v3674
        %v4501 = vpack.c.b16 %v3682, %v3675
        %v4502 = vpack.c.b16 %v3683, %v3676
        %v4503 = vpack.c.b16 %v3684, %v3677
        %v4504 = vpack.c.b16 %v3685, %v3678
        %v4505 = vpack.c.b16 %v3693, %v3686
        %v4506 = vpack.c.b16 %v3694, %v3687
        %v4507 = vpack.c.b16 %v3695, %v3688
        %v4508 = vpack.c.b16 %v3696, %v3689
        %v4509 = vpack.c.b16 %v3697, %v3690
        %v4510 = vpack.c.b16 %v3698, %v3691
        %v4511 = vpack.c.b16 %v3699, %v3692
        %v4512 = vpack.c.b16 %v3707, %v3700
        %v4513 = vpack.c.b16 %v3708, %v3701
        %v4514 = vpack.c.b16 %v3709, %v3702
        %v4515 = vpack.c.b16 %v3710, %v3703
        %v4516 = vpack.c.b16 %v3711, %v3704
        %v4517 = vpack.c.b16 %v3712, %v3705
        %v4518 = vpack.c.b16 %v3713, %v3706
        %v4519 = vpack.c.b16 %v3721, %v3714
        %v4520 = vpack.c.b16 %v3722, %v3715
        %v4521 = vpack.c.b16 %v3723, %v3716
        %v4522 = vpack.c.b16 %v3724, %v3717
        %v4523 = vpack.c.b16 %v3725, %v3718
        %v4524 = vpack.c.b16 %v3726, %v3719
        %v4525 = vpack.c.b16 %v3727, %v3720
        %v4526 = vpack.c.b16 %v3735, %v3728
        %v4527 = vpack.c.b16 %v3736, %v3729
        %v4528 = vpack.c.b16 %v3737, %v3730
        %v4529 = vpack.c.b16 %v3738, %v3731
        %v4530 = vpack.c.b16 %v3739, %v3732
        %v4531 = vpack.c.b16 %v3740, %v3733
        %v4532 = vpack.c.b16 %v3741, %v3734
        %v4533 = vpack.c.b16 %v3749, %v3742
        %v4534 = vpack.c.b16 %v3750, %v3743
        %v4535 = vpack.c.b16 %v3751, %v3744
        %v4536 = vpack.c.b16 %v3752, %v3745
        %v4537 = vpack.c.b16 %v3753, %v3746
        %v4538 = vpack.c.b16 %v3754, %v3747
        %v4539 = vpack.c.b16 %v3755, %v3748
        %5324 = vmatprep.subr.bf16.mxu0 %v3757
        %5325 = vmatpush1.bf16.msra.mxu0 %v3756
        %5326 = vmatprep.subr.bf16.mxu0 %v3764
        %5327 = vmatpush1.bf16.msra.mxu0 %v3763
        %5328 = vmatprep.subr.bf16.mxu0 %v3771
        %5329 = vmatpush1.bf16.msra.mxu0 %v3770
        %5330 = vmatprep.subr.bf16.mxu0 %v3778
        %5331 = vmatpush1.bf16.msra.mxu0 %v3777
        %5332 = vmatprep.subr.bf16.mxu0 %v3785
        %5333 = vmatpush1.bf16.msra.mxu0 %v3784
        %5334 = vmatprep.subr.bf16.mxu0 %v3792
        %5335 = vmatpush1.bf16.msra.mxu0 %v3791
        %5336 = vmatprep.subr.bf16.mxu0 %v3799
        %5337 = vmatpush1.bf16.msra.mxu0 %v3798
        %5338 = vmatprep.subr.bf16.mxu0 %v3806
        %5339 = vmatpush1.bf16.msra.mxu0 %v3805
        %5340 = vmatprep.subr.bf16.mxu0 %v3813
        %5341 = vmatpush1.bf16.msra.mxu0 %v3812
        %5342 = vmatprep.subr.bf16.mxu0 %v3820
        %5343 = vmatpush1.bf16.msra.mxu0 %v3819
        %5344 = vmatprep.subr.bf16.mxu0 %v3827
        %5345 = vmatpush1.bf16.msra.mxu0 %v3826
        %5346 = vmatprep.subr.bf16.mxu0 %v3834
        %5347 = vmatpush1.bf16.msra.mxu0 %v3833
        %5348 = vmatprep.subr.bf16.mxu0 %v3841
        %5349 = vmatpush1.bf16.msra.mxu0 %v3840
        %5350 = vmatprep.subr.bf16.mxu0 %v3848
        %5351 = vmatpush1.bf16.msra.mxu0 %v3847
        %5352 = vmatprep.subr.bf16.mxu0 %v3855
        %5353 = vmatpush1.bf16.msra.mxu0 %v3854
        %5354 = vmatprep.subr.bf16.mxu0 %v3862
        %5355 = vmatpush1.bf16.msra.mxu0 %v3861
        %5356 = vmatprep.mubr.bf16.mxu0 %v383
        %5357 = vmatmul.mubr.bf16.gmra.mrb[0].mxu0 %v382
        %v5358 = vpop.f32.mrb[0].mxu0
        %v5359 = vadd.f32 0.0, %v5358
        %v5360 = vpop.f32.mrb[0].mxu0
        %v5361 = vadd.f32 0.0, %v5360
        %v5362 = vpop.f32.mrb[0].mxu0
        %v5363 = vpop.f32.mrb[0].mxu0
        %5364 = vdwg.mxu0
        %5365 = vmatprep.subr.bf16.mxu0 %v3869
        %5366 = vmatpush1.bf16.msra.mxu0 %v3868
        %5367 = vmatprep.subr.bf16.mxu0 %v3876
        %5368 = vmatpush1.bf16.msra.mxu0 %v3875
        %5369 = vmatprep.subr.bf16.mxu0 %v3883
        %5370 = vmatpush1.bf16.msra.mxu0 %v3882
        %5371 = vmatprep.subr.bf16.mxu0 %v3890
        %5372 = vmatpush1.bf16.msra.mxu0 %v3889
        %5373 = vmatprep.subr.bf16.mxu0 %v3897
        %5374 = vmatpush1.bf16.msra.mxu0 %v3896
        %5375 = vmatprep.subr.bf16.mxu0 %v3904
        %5376 = vmatpush1.bf16.msra.mxu0 %v3903
        %5377 = vmatprep.subr.bf16.mxu0 %v3911
        %5378 = vmatpush1.bf16.msra.mxu0 %v3910
        %5379 = vmatprep.subr.bf16.mxu0 %v3918
        %5380 = vmatpush1.bf16.msra.mxu0 %v3917
        %5381 = vmatprep.subr.bf16.mxu0 %v3925
        %5382 = vmatpush1.bf16.msra.mxu0 %v3924
        %5383 = vmatprep.subr.bf16.mxu0 %v3932
        %5384 = vmatpush1.bf16.msra.mxu0 %v3931
        %5385 = vmatprep.subr.bf16.mxu0 %v3939
        %5386 = vmatpush1.bf16.msra.mxu0 %v3938
        %5387 = vmatprep.subr.bf16.mxu0 %v3946
        %5388 = vmatpush1.bf16.msra.mxu0 %v3945
        %5389 = vmatprep.subr.bf16.mxu0 %v3953
        %5390 = vmatpush1.bf16.msra.mxu0 %v3952
        %5391 = vmatprep.subr.bf16.mxu0 %v3960
        %5392 = vmatpush1.bf16.msra.mxu0 %v3959
        %5393 = vmatprep.subr.bf16.mxu0 %v3967
        %5394 = vmatpush1.bf16.msra.mxu0 %v3966
        %5395 = vmatprep.subr.bf16.mxu0 %v3974
        %5396 = vmatpush1.bf16.msra.mxu0 %v3973
        %5397 = vmatprep.mubr.bf16.mxu0 %v385
        %5398 = vmatmul.mubr.bf16.gmra.mrb[0].mxu0 %v384
        %v5399 = vpop.f32.mrb[0].mxu0
        %v5400 = vadd.f32 %v5359, %v5399
        %v5401 = vpop.f32.mrb[0].mxu0
        %v5402 = vadd.f32 %v5361, %v5401
        %v5403 = vpop.f32.mrb[0].mxu0
        %v5404 = vpop.f32.mrb[0].mxu0
        %5405 = vdwg.mxu0
        %5406 = vmatprep.subr.bf16.mxu0 %v3981
        %5407 = vmatpush1.bf16.msra.mxu0 %v3980
        %5408 = vmatprep.subr.bf16.mxu0 %v3988
        %5409 = vmatpush1.bf16.msra.mxu0 %v3987
        %5410 = vmatprep.subr.bf16.mxu0 %v3995
        %5411 = vmatpush1.bf16.msra.mxu0 %v3994
        %5412 = vmatprep.subr.bf16.mxu0 %v4002
        %5413 = vmatpush1.bf16.msra.mxu0 %v4001
        %5414 = vmatprep.subr.bf16.mxu0 %v4009
        %5415 = vmatpush1.bf16.msra.mxu0 %v4008
        %5416 = vmatprep.subr.bf16.mxu0 %v4016
        %5417 = vmatpush1.bf16.msra.mxu0 %v4015
        %5418 = vmatprep.subr.bf16.mxu0 %v4023
        %5419 = vmatpush1.bf16.msra.mxu0 %v4022
        %5420 = vmatprep.subr.bf16.mxu0 %v4030
        %5421 = vmatpush1.bf16.msra.mxu0 %v4029
        %5422 = vmatprep.subr.bf16.mxu0 %v4037
        %5423 = vmatpush1.bf16.msra.mxu0 %v4036
        %5424 = vmatprep.subr.bf16.mxu0 %v4044
        %5425 = vmatpush1.bf16.msra.mxu0 %v4043
        %5426 = vmatprep.subr.bf16.mxu0 %v4051
        %5427 = vmatpush1.bf16.msra.mxu0 %v4050
        %5428 = vmatprep.subr.bf16.mxu0 %v4058
        %5429 = vmatpush1.bf16.msra.mxu0 %v4057
        %5430 = vmatprep.subr.bf16.mxu0 %v4065
        %5431 = vmatpush1.bf16.msra.mxu0 %v4064
        %5432 = vmatprep.subr.bf16.mxu0 %v4072
        %5433 = vmatpush1.bf16.msra.mxu0 %v4071
        %5434 = vmatprep.subr.bf16.mxu0 %v4079
        %5435 = vmatpush1.bf16.msra.mxu0 %v4078
        %5436 = vmatprep.subr.bf16.mxu0 %v4086
        %5437 = vmatpush1.bf16.msra.mxu0 %v4085
        %5438 = vmatprep.mubr.bf16.mxu0 %v387
        %5439 = vmatmul.mubr.bf16.gmra.mrb[0].mxu0 %v386
        %v5440 = vpop.f32.mrb[0].mxu0
        %v5441 = vadd.f32 %v5400, %v5440
        %v5442 = vpop.f32.mrb[0].mxu0
        %v5443 = vadd.f32 %v5402, %v5442
        %v5444 = vpop.f32.mrb[0].mxu0
        %v5445 = vpop.f32.mrb[0].mxu0
        %5446 = vdwg.mxu0
        %5447 = vmatprep.subr.bf16.mxu0 %v4093
        %5448 = vmatpush1.bf16.msra.mxu0 %v4092
        %5449 = vmatprep.subr.bf16.mxu0 %v4100
        %5450 = vmatpush1.bf16.msra.mxu0 %v4099
        %5451 = vmatprep.subr.bf16.mxu0 %v4107
        %5452 = vmatpush1.bf16.msra.mxu0 %v4106
        %5453 = vmatprep.subr.bf16.mxu0 %v4114
        %5454 = vmatpush1.bf16.msra.mxu0 %v4113
        %5455 = vmatprep.subr.bf16.mxu0 %v4121
        %5456 = vmatpush1.bf16.msra.mxu0 %v4120
        %5457 = vmatprep.subr.bf16.mxu0 %v4128
        %5458 = vmatpush1.bf16.msra.mxu0 %v4127
        %5459 = vmatprep.subr.bf16.mxu0 %v4135
        %5460 = vmatpush1.bf16.msra.mxu0 %v4134
        %5461 = vmatprep.subr.bf16.mxu0 %v4142
        %5462 = vmatpush1.bf16.msra.mxu0 %v4141
        %5463 = vmatprep.subr.bf16.mxu0 %v4149
        %5464 = vmatpush1.bf16.msra.mxu0 %v4148
        %5465 = vmatprep.subr.bf16.mxu0 %v4156
        %5466 = vmatpush1.bf16.msra.mxu0 %v4155
        %5467 = vmatprep.subr.bf16.mxu0 %v4163
        %5468 = vmatpush1.bf16.msra.mxu0 %v4162
        %5469 = vmatprep.subr.bf16.mxu0 %v4170
        %5470 = vmatpush1.bf16.msra.mxu0 %v4169
        %5471 = vmatprep.subr.bf16.mxu0 %v4177
        %5472 = vmatpush1.bf16.msra.mxu0 %v4176
        %5473 = vmatprep.subr.bf16.mxu0 %v4184
        %5474 = vmatpush1.bf16.msra.mxu0 %v4183
        %5475 = vmatprep.subr.bf16.mxu0 %v4191
        %5476 = vmatpush1.bf16.msra.mxu0 %v4190
        %5477 = vmatprep.subr.bf16.mxu0 %v4198
        %5478 = vmatpush1.bf16.msra.mxu0 %v4197
        %5479 = vmatprep.mubr.bf16.mxu0 %v389
        %5480 = vmatmul.mubr.bf16.gmra.mrb[0].mxu0 %v388
        %v5481 = vpop.f32.mrb[0].mxu0
        %v5482 = vadd.f32 %v5441, %v5481
        %v5483 = vpop.f32.mrb[0].mxu0
        %v5484 = vadd.f32 %v5443, %v5483
        %v5485 = vpop.f32.mrb[0].mxu0
        %v5486 = vpop.f32.mrb[0].mxu0
        %5487 = vdwg.mxu0
        %5488 = vmatprep.subr.bf16.mxu0 %v4205
        %5489 = vmatpush1.bf16.msra.mxu0 %v4204
        %5490 = vmatprep.subr.bf16.mxu0 %v4212
        %5491 = vmatpush1.bf16.msra.mxu0 %v4211
        %5492 = vmatprep.subr.bf16.mxu0 %v4219
        %5493 = vmatpush1.bf16.msra.mxu0 %v4218
        %5494 = vmatprep.subr.bf16.mxu0 %v4226
        %5495 = vmatpush1.bf16.msra.mxu0 %v4225
        %5496 = vmatprep.subr.bf16.mxu0 %v4233
        %5497 = vmatpush1.bf16.msra.mxu0 %v4232
        %5498 = vmatprep.subr.bf16.mxu0 %v4240
        %5499 = vmatpush1.bf16.msra.mxu0 %v4239
        %5500 = vmatprep.subr.bf16.mxu0 %v4247
        %5501 = vmatpush1.bf16.msra.mxu0 %v4246
        %5502 = vmatprep.subr.bf16.mxu0 %v4254
        %5503 = vmatpush1.bf16.msra.mxu0 %v4253
        %5504 = vmatprep.subr.bf16.mxu0 %v4261
        %5505 = vmatpush1.bf16.msra.mxu0 %v4260
        %5506 = vmatprep.subr.bf16.mxu0 %v4268
        %5507 = vmatpush1.bf16.msra.mxu0 %v4267
        %5508 = vmatprep.subr.bf16.mxu0 %v4275
        %5509 = vmatpush1.bf16.msra.mxu0 %v4274
        %5510 = vmatprep.subr.bf16.mxu0 %v4282
        %5511 = vmatpush1.bf16.msra.mxu0 %v4281
        %5512 = vmatprep.subr.bf16.mxu0 %v4289
        %5513 = vmatpush1.bf16.msra.mxu0 %v4288
        %5514 = vmatprep.subr.bf16.mxu0 %v4296
        %5515 = vmatpush1.bf16.msra.mxu0 %v4295
        %5516 = vmatprep.subr.bf16.mxu0 %v4303
        %5517 = vmatpush1.bf16.msra.mxu0 %v4302
        %5518 = vmatprep.subr.bf16.mxu0 %v4310
        %5519 = vmatpush1.bf16.msra.mxu0 %v4309
        %5520 = vmatprep.mubr.bf16.mxu0 %v391
        %5521 = vmatmul.mubr.bf16.gmra.mrb[0].mxu0 %v390
        %v5522 = vpop.f32.mrb[0].mxu0
        %v5523 = vadd.f32 %v5482, %v5522
        %v5524 = vpop.f32.mrb[0].mxu0
        %v5525 = vadd.f32 %v5484, %v5524
        %v5526 = vpop.f32.mrb[0].mxu0
        %v5527 = vpop.f32.mrb[0].mxu0
        %5528 = vdwg.mxu0
        %5529 = vmatprep.subr.bf16.mxu0 %v4317
        %5530 = vmatpush1.bf16.msra.mxu0 %v4316
        %5531 = vmatprep.subr.bf16.mxu0 %v4324
        %5532 = vmatpush1.bf16.msra.mxu0 %v4323
        %5533 = vmatprep.subr.bf16.mxu0 %v4331
        %5534 = vmatpush1.bf16.msra.mxu0 %v4330
        %5535 = vmatprep.subr.bf16.mxu0 %v4338
        %5536 = vmatpush1.bf16.msra.mxu0 %v4337
        %5537 = vmatprep.subr.bf16.mxu0 %v4345
        %5538 = vmatpush1.bf16.msra.mxu0 %v4344
        %5539 = vmatprep.subr.bf16.mxu0 %v4352
        %5540 = vmatpush1.bf16.msra.mxu0 %v4351
        %5541 = vmatprep.subr.bf16.mxu0 %v4359
        %5542 = vmatpush1.bf16.msra.mxu0 %v4358
        %5543 = vmatprep.subr.bf16.mxu0 %v4366
        %5544 = vmatpush1.bf16.msra.mxu0 %v4365
        %5545 = vmatprep.subr.bf16.mxu0 %v4373
        %5546 = vmatpush1.bf16.msra.mxu0 %v4372
        %5547 = vmatprep.subr.bf16.mxu0 %v4380
        %5548 = vmatpush1.bf16.msra.mxu0 %v4379
        %5549 = vmatprep.subr.bf16.mxu0 %v4387
        %5550 = vmatpush1.bf16.msra.mxu0 %v4386
        %5551 = vmatprep.subr.bf16.mxu0 %v4394
        %5552 = vmatpush1.bf16.msra.mxu0 %v4393
        %5553 = vmatprep.subr.bf16.mxu0 %v4401
        %5554 = vmatpush1.bf16.msra.mxu0 %v4400
        %5555 = vmatprep.subr.bf16.mxu0 %v4408
        %5556 = vmatpush1.bf16.msra.mxu0 %v4407
        %5557 = vmatprep.subr.bf16.mxu0 %v4415
        %5558 = vmatpush1.bf16.msra.mxu0 %v4414
        %5559 = vmatprep.subr.bf16.mxu0 %v4422
        %5560 = vmatpush1.bf16.msra.mxu0 %v4421
        %5561 = vmatprep.mubr.bf16.mxu0 %v393
        %5562 = vmatmul.mubr.bf16.gmra.mrb[0].mxu0 %v392
        %v5563 = vpop.f32.mrb[0].mxu0
        %v5564 = vadd.f32 %v5523, %v5563
        %v5565 = vpop.f32.mrb[0].mxu0
        %v5566 = vadd.f32 %v5525, %v5565
        %v5567 = vpop.f32.mrb[0].mxu0
        %v5568 = vpop.f32.mrb[0].mxu0
        %5569 = vdwg.mxu0
        %5570 = vmatprep.subr.bf16.mxu0 %v4429
        %5571 = vmatpush1.bf16.msra.mxu0 %v4428
        %5572 = vmatprep.subr.bf16.mxu0 %v4436
        %5573 = vmatpush1.bf16.msra.mxu0 %v4435
        %5574 = vmatprep.subr.bf16.mxu0 %v4443
        %5575 = vmatpush1.bf16.msra.mxu0 %v4442
        %5576 = vmatprep.subr.bf16.mxu0 %v4450
        %5577 = vmatpush1.bf16.msra.mxu0 %v4449
        %5578 = vmatprep.subr.bf16.mxu0 %v4457
        %5579 = vmatpush1.bf16.msra.mxu0 %v4456
        %5580 = vmatprep.subr.bf16.mxu0 %v4464
        %5581 = vmatpush1.bf16.msra.mxu0 %v4463
        %5582 = vmatprep.subr.bf16.mxu0 %v4471
        %5583 = vmatpush1.bf16.msra.mxu0 %v4470
        %5584 = vmatprep.subr.bf16.mxu0 %v4478
        %5585 = vmatpush1.bf16.msra.mxu0 %v4477
        %5586 = vmatprep.subr.bf16.mxu0 %v4485
        %5587 = vmatpush1.bf16.msra.mxu0 %v4484
        %5588 = vmatprep.subr.bf16.mxu0 %v4492
        %5589 = vmatpush1.bf16.msra.mxu0 %v4491
        %5590 = vmatprep.subr.bf16.mxu0 %v4499
        %5591 = vmatpush1.bf16.msra.mxu0 %v4498
        %5592 = vmatprep.subr.bf16.mxu0 %v4506
        %5593 = vmatpush1.bf16.msra.mxu0 %v4505
        %5594 = vmatprep.subr.bf16.mxu0 %v4513
        %5595 = vmatpush1.bf16.msra.mxu0 %v4512
        %5596 = vmatprep.subr.bf16.mxu0 %v4520
        %5597 = vmatpush1.bf16.msra.mxu0 %v4519
        %5598 = vmatprep.subr.bf16.mxu0 %v4527
        %5599 = vmatpush1.bf16.msra.mxu0 %v4526
        %5600 = vmatprep.subr.bf16.mxu0 %v4534
        %5601 = vmatpush1.bf16.msra.mxu0 %v4533
        %5602 = vmatprep.mubr.bf16.mxu0 %v395
        %5603 = vmatmul.mubr.bf16.gmra.mrb[0].mxu0 %v394
        %v5604 = vpop.f32.mrb[0].mxu0
        %v5605 = vadd.f32 %v5564, %v5604
        %v5606 = vpop.f32.mrb[0].mxu0
        %v5607 = vadd.f32 %v5566, %v5606
        %v5608 = vpop.f32.mrb[0].mxu0
        %v5609 = vpop.f32.mrb[0].mxu0
        %5610 = vdwg.mxu0
        %5611 = vmatprep.subr.bf16.mxu0 %v3759
        %5612 = vmatpush1.bf16.msra.mxu0 %v3758
        %5613 = vmatprep.subr.bf16.mxu0 %v3766
        %5614 = vmatpush1.bf16.msra.mxu0 %v3765
        %5615 = vmatprep.subr.bf16.mxu0 %v3773
        %5616 = vmatpush1.bf16.msra.mxu0 %v3772
        %5617 = vmatprep.subr.bf16.mxu0 %v3780
        %5618 = vmatpush1.bf16.msra.mxu0 %v3779
        %5619 = vmatprep.subr.bf16.mxu0 %v3787
        %5620 = vmatpush1.bf16.msra.mxu0 %v3786
        %5621 = vmatprep.subr.bf16.mxu0 %v3794
        %5622 = vmatpush1.bf16.msra.mxu0 %v3793
        %5623 = vmatprep.subr.bf16.mxu0 %v3801
        %5624 = vmatpush1.bf16.msra.mxu0 %v3800
        %5625 = vmatprep.subr.bf16.mxu0 %v3808
        %5626 = vmatpush1.bf16.msra.mxu0 %v3807
        %5627 = vmatprep.subr.bf16.mxu0 %v3815
        %5628 = vmatpush1.bf16.msra.mxu0 %v3814
        %5629 = vmatprep.subr.bf16.mxu0 %v3822
        %5630 = vmatpush1.bf16.msra.mxu0 %v3821
        %5631 = vmatprep.subr.bf16.mxu0 %v3829
        %5632 = vmatpush1.bf16.msra.mxu0 %v3828
        %5633 = vmatprep.subr.bf16.mxu0 %v3836
        %5634 = vmatpush1.bf16.msra.mxu0 %v3835
        %5635 = vmatprep.subr.bf16.mxu0 %v3843
        %5636 = vmatpush1.bf16.msra.mxu0 %v3842
        %5637 = vmatprep.subr.bf16.mxu0 %v3850
        %5638 = vmatpush1.bf16.msra.mxu0 %v3849
        %5639 = vmatprep.subr.bf16.mxu0 %v3857
        %5640 = vmatpush1.bf16.msra.mxu0 %v3856
        %5641 = vmatprep.subr.bf16.mxu0 %v3864
        %5642 = vmatpush1.bf16.msra.mxu0 %v3863
        %5643 = vmatprep.mubr.bf16.mxu0 %v383
        %5644 = vmatmul.mubr.bf16.gmra.mrb[0].mxu0 %v382
        %v5645 = vpop.f32.mrb[0].mxu0
        %v5646 = vadd.f32 0.0, %v5645
        %v5647 = vpop.f32.mrb[0].mxu0
        %v5648 = vadd.f32 0.0, %v5647
        %v5649 = vpop.f32.mrb[0].mxu0
        %v5650 = vpop.f32.mrb[0].mxu0
        %5651 = vdwg.mxu0
        %5652 = vmatprep.subr.bf16.mxu0 %v3871
        %5653 = vmatpush1.bf16.msra.mxu0 %v3870
        %5654 = vmatprep.subr.bf16.mxu0 %v3878
        %5655 = vmatpush1.bf16.msra.mxu0 %v3877
        %5656 = vmatprep.subr.bf16.mxu0 %v3885
        %5657 = vmatpush1.bf16.msra.mxu0 %v3884
        %5658 = vmatprep.subr.bf16.mxu0 %v3892
        %5659 = vmatpush1.bf16.msra.mxu0 %v3891
        %5660 = vmatprep.subr.bf16.mxu0 %v3899
        %5661 = vmatpush1.bf16.msra.mxu0 %v3898
        %5662 = vmatprep.subr.bf16.mxu0 %v3906
        %5663 = vmatpush1.bf16.msra.mxu0 %v3905
        %5664 = vmatprep.subr.bf16.mxu0 %v3913
        %5665 = vmatpush1.bf16.msra.mxu0 %v3912
        %5666 = vmatprep.subr.bf16.mxu0 %v3920
        %5667 = vmatpush1.bf16.msra.mxu0 %v3919
        %5668 = vmatprep.subr.bf16.mxu0 %v3927
        %5669 = vmatpush1.bf16.msra.mxu0 %v3926
        %5670 = vmatprep.subr.bf16.mxu0 %v3934
        %5671 = vmatpush1.bf16.msra.mxu0 %v3933
        %5672 = vmatprep.subr.bf16.mxu0 %v3941
        %5673 = vmatpush1.bf16.msra.mxu0 %v3940
        %5674 = vmatprep.subr.bf16.mxu0 %v3948
        %5675 = vmatpush1.bf16.msra.mxu0 %v3947
        %5676 = vmatprep.subr.bf16.mxu0 %v3955
        %5677 = vmatpush1.bf16.msra.mxu0 %v3954
        %5678 = vmatprep.subr.bf16.mxu0 %v3962
        %5679 = vmatpush1.bf16.msra.mxu0 %v3961
        %5680 = vmatprep.subr.bf16.mxu0 %v3969
        %5681 = vmatpush1.bf16.msra.mxu0 %v3968
        %5682 = vmatprep.subr.bf16.mxu0 %v3976
        %5683 = vmatpush1.bf16.msra.mxu0 %v3975
        %5684 = vmatprep.mubr.bf16.mxu0 %v385
        %5685 = vmatmul.mubr.bf16.gmra.mrb[0].mxu0 %v384
        %v5686 = vpop.f32.mrb[0].mxu0
        %v5687 = vadd.f32 %v5646, %v5686
        %v5688 = vpop.f32.mrb[0].mxu0
        %v5689 = vadd.f32 %v5648, %v5688
        %v5690 = vpop.f32.mrb[0].mxu0
        %v5691 = vpop.f32.mrb[0].mxu0
        %5692 = vdwg.mxu0
        %5693 = vmatprep.subr.bf16.mxu0 %v3983
        %5694 = vmatpush1.bf16.msra.mxu0 %v3982
        %5695 = vmatprep.subr.bf16.mxu0 %v3990
        %5696 = vmatpush1.bf16.msra.mxu0 %v3989
        %5697 = vmatprep.subr.bf16.mxu0 %v3997
        %5698 = vmatpush1.bf16.msra.mxu0 %v3996
        %5699 = vmatprep.subr.bf16.mxu0 %v4004
        %5700 = vmatpush1.bf16.msra.mxu0 %v4003
        %5701 = vmatprep.subr.bf16.mxu0 %v4011
        %5702 = vmatpush1.bf16.msra.mxu0 %v4010
        %5703 = vmatprep.subr.bf16.mxu0 %v4018
        %5704 = vmatpush1.bf16.msra.mxu0 %v4017
        %5705 = vmatprep.subr.bf16.mxu0 %v4025
        %5706 = vmatpush1.bf16.msra.mxu0 %v4024
        %5707 = vmatprep.subr.bf16.mxu0 %v4032
        %5708 = vmatpush1.bf16.msra.mxu0 %v4031
        %5709 = vmatprep.subr.bf16.mxu0 %v4039
        %5710 = vmatpush1.bf16.msra.mxu0 %v4038
        %5711 = vmatprep.subr.bf16.mxu0 %v4046
        %5712 = vmatpush1.bf16.msra.mxu0 %v4045
        %5713 = vmatprep.subr.bf16.mxu0 %v4053
        %5714 = vmatpush1.bf16.msra.mxu0 %v4052
        %5715 = vmatprep.subr.bf16.mxu0 %v4060
        %5716 = vmatpush1.bf16.msra.mxu0 %v4059
        %5717 = vmatprep.subr.bf16.mxu0 %v4067
        %5718 = vmatpush1.bf16.msra.mxu0 %v4066
        %5719 = vmatprep.subr.bf16.mxu0 %v4074
        %5720 = vmatpush1.bf16.msra.mxu0 %v4073
        %5721 = vmatprep.subr.bf16.mxu0 %v4081
        %5722 = vmatpush1.bf16.msra.mxu0 %v4080
        %5723 = vmatprep.subr.bf16.mxu0 %v4088
        %5724 = vmatpush1.bf16.msra.mxu0 %v4087
        %5725 = vmatprep.mubr.bf16.mxu0 %v387
        %5726 = vmatmul.mubr.bf16.gmra.mrb[0].mxu0 %v386
        %v5727 = vpop.f32.mrb[0].mxu0
        %v5728 = vadd.f32 %v5687, %v5727
        %v5729 = vpop.f32.mrb[0].mxu0
        %v5730 = vadd.f32 %v5689, %v5729
        %v5731 = vpop.f32.mrb[0].mxu0
        %v5732 = vpop.f32.mrb[0].mxu0
        %5733 = vdwg.mxu0
        %5734 = vmatprep.subr.bf16.mxu0 %v4095
        %5735 = vmatpush1.bf16.msra.mxu0 %v4094
        %5736 = vmatprep.subr.bf16.mxu0 %v4102
        %5737 = vmatpush1.bf16.msra.mxu0 %v4101
        %5738 = vmatprep.subr.bf16.mxu0 %v4109
        %5739 = vmatpush1.bf16.msra.mxu0 %v4108
        %5740 = vmatprep.subr.bf16.mxu0 %v4116
        %5741 = vmatpush1.bf16.msra.mxu0 %v4115
        %5742 = vmatprep.subr.bf16.mxu0 %v4123
        %5743 = vmatpush1.bf16.msra.mxu0 %v4122
        %5744 = vmatprep.subr.bf16.mxu0 %v4130
        %5745 = vmatpush1.bf16.msra.mxu0 %v4129
        %5746 = vmatprep.subr.bf16.mxu0 %v4137
        %5747 = vmatpush1.bf16.msra.mxu0 %v4136
        %5748 = vmatprep.subr.bf16.mxu0 %v4144
        %5749 = vmatpush1.bf16.msra.mxu0 %v4143
        %5750 = vmatprep.subr.bf16.mxu0 %v4151
        %5751 = vmatpush1.bf16.msra.mxu0 %v4150
        %5752 = vmatprep.subr.bf16.mxu0 %v4158
        %5753 = vmatpush1.bf16.msra.mxu0 %v4157
        %5754 = vmatprep.subr.bf16.mxu0 %v4165
        %5755 = vmatpush1.bf16.msra.mxu0 %v4164
        %5756 = vmatprep.subr.bf16.mxu0 %v4172
        %5757 = vmatpush1.bf16.msra.mxu0 %v4171
        %5758 = vmatprep.subr.bf16.mxu0 %v4179
        %5759 = vmatpush1.bf16.msra.mxu0 %v4178
        %5760 = vmatprep.subr.bf16.mxu0 %v4186
        %5761 = vmatpush1.bf16.msra.mxu0 %v4185
        %5762 = vmatprep.subr.bf16.mxu0 %v4193
        %5763 = vmatpush1.bf16.msra.mxu0 %v4192
        %5764 = vmatprep.subr.bf16.mxu0 %v4200
        %5765 = vmatpush1.bf16.msra.mxu0 %v4199
        %5766 = vmatprep.mubr.bf16.mxu0 %v389
        %5767 = vmatmul.mubr.bf16.gmra.mrb[0].mxu0 %v388
        %v5768 = vpop.f32.mrb[0].mxu0
        %v5769 = vadd.f32 %v5728, %v5768
        %v5770 = vpop.f32.mrb[0].mxu0
        %v5771 = vadd.f32 %v5730, %v5770
        %v5772 = vpop.f32.mrb[0].mxu0
        %v5773 = vpop.f32.mrb[0].mxu0
        %5774 = vdwg.mxu0
        %5775 = vmatprep.subr.bf16.mxu0 %v4207
        %5776 = vmatpush1.bf16.msra.mxu0 %v4206
        %5777 = vmatprep.subr.bf16.mxu0 %v4214
        %5778 = vmatpush1.bf16.msra.mxu0 %v4213
        %5779 = vmatprep.subr.bf16.mxu0 %v4221
        %5780 = vmatpush1.bf16.msra.mxu0 %v4220
        %5781 = vmatprep.subr.bf16.mxu0 %v4228
        %5782 = vmatpush1.bf16.msra.mxu0 %v4227
        %5783 = vmatprep.subr.bf16.mxu0 %v4235
        %5784 = vmatpush1.bf16.msra.mxu0 %v4234
        %5785 = vmatprep.subr.bf16.mxu0 %v4242
        %5786 = vmatpush1.bf16.msra.mxu0 %v4241
        %5787 = vmatprep.subr.bf16.mxu0 %v4249
        %5788 = vmatpush1.bf16.msra.mxu0 %v4248
        %5789 = vmatprep.subr.bf16.mxu0 %v4256
        %5790 = vmatpush1.bf16.msra.mxu0 %v4255
        %5791 = vmatprep.subr.bf16.mxu0 %v4263
        %5792 = vmatpush1.bf16.msra.mxu0 %v4262
        %5793 = vmatprep.subr.bf16.mxu0 %v4270
        %5794 = vmatpush1.bf16.msra.mxu0 %v4269
        %5795 = vmatprep.subr.bf16.mxu0 %v4277
        %5796 = vmatpush1.bf16.msra.mxu0 %v4276
        %5797 = vmatprep.subr.bf16.mxu0 %v4284
        %5798 = vmatpush1.bf16.msra.mxu0 %v4283
        %5799 = vmatprep.subr.bf16.mxu0 %v4291
        %5800 = vmatpush1.bf16.msra.mxu0 %v4290
        %5801 = vmatprep.subr.bf16.mxu0 %v4298
        %5802 = vmatpush1.bf16.msra.mxu0 %v4297
        %5803 = vmatprep.subr.bf16.mxu0 %v4305
        %5804 = vmatpush1.bf16.msra.mxu0 %v4304
        %5805 = vmatprep.subr.bf16.mxu0 %v4312
        %5806 = vmatpush1.bf16.msra.mxu0 %v4311
        %5807 = vmatprep.mubr.bf16.mxu0 %v391
        %5808 = vmatmul.mubr.bf16.gmra.mrb[0].mxu0 %v390
        %v5809 = vpop.f32.mrb[0].mxu0
        %v5810 = vadd.f32 %v5769, %v5809
        %v5811 = vpop.f32.mrb[0].mxu0
        %v5812 = vadd.f32 %v5771, %v5811
        %v5813 = vpop.f32.mrb[0].mxu0
        %v5814 = vpop.f32.mrb[0].mxu0
        %5815 = vdwg.mxu0
        %5816 = vmatprep.subr.bf16.mxu0 %v4319
        %5817 = vmatpush1.bf16.msra.mxu0 %v4318
        %5818 = vmatprep.subr.bf16.mxu0 %v4326
        %5819 = vmatpush1.bf16.msra.mxu0 %v4325
        %5820 = vmatprep.subr.bf16.mxu0 %v4333
        %5821 = vmatpush1.bf16.msra.mxu0 %v4332
        %5822 = vmatprep.subr.bf16.mxu0 %v4340
        %5823 = vmatpush1.bf16.msra.mxu0 %v4339
        %5824 = vmatprep.subr.bf16.mxu0 %v4347
        %5825 = vmatpush1.bf16.msra.mxu0 %v4346
        %5826 = vmatprep.subr.bf16.mxu0 %v4354
        %5827 = vmatpush1.bf16.msra.mxu0 %v4353
        %5828 = vmatprep.subr.bf16.mxu0 %v4361
        %5829 = vmatpush1.bf16.msra.mxu0 %v4360
        %5830 = vmatprep.subr.bf16.mxu0 %v4368
        %5831 = vmatpush1.bf16.msra.mxu0 %v4367
        %5832 = vmatprep.subr.bf16.mxu0 %v4375
        %5833 = vmatpush1.bf16.msra.mxu0 %v4374
        %5834 = vmatprep.subr.bf16.mxu0 %v4382
        %5835 = vmatpush1.bf16.msra.mxu0 %v4381
        %5836 = vmatprep.subr.bf16.mxu0 %v4389
        %5837 = vmatpush1.bf16.msra.mxu0 %v4388
        %5838 = vmatprep.subr.bf16.mxu0 %v4396
        %5839 = vmatpush1.bf16.msra.mxu0 %v4395
        %5840 = vmatprep.subr.bf16.mxu0 %v4403
        %5841 = vmatpush1.bf16.msra.mxu0 %v4402
        %5842 = vmatprep.subr.bf16.mxu0 %v4410
        %5843 = vmatpush1.bf16.msra.mxu0 %v4409
        %5844 = vmatprep.subr.bf16.mxu0 %v4417
        %5845 = vmatpush1.bf16.msra.mxu0 %v4416
        %5846 = vmatprep.subr.bf16.mxu0 %v4424
        %5847 = vmatpush1.bf16.msra.mxu0 %v4423
        %5848 = vmatprep.mubr.bf16.mxu0 %v393
        %5849 = vmatmul.mubr.bf16.gmra.mrb[0].mxu0 %v392
        %v5850 = vpop.f32.mrb[0].mxu0
        %v5851 = vadd.f32 %v5810, %v5850
        %v5852 = vpop.f32.mrb[0].mxu0
        %v5853 = vadd.f32 %v5812, %v5852
        %v5854 = vpop.f32.mrb[0].mxu0
        %v5855 = vpop.f32.mrb[0].mxu0
        %5856 = vdwg.mxu0
        %5857 = vmatprep.subr.bf16.mxu0 %v4431
        %5858 = vmatpush1.bf16.msra.mxu0 %v4430
        %5859 = vmatprep.subr.bf16.mxu0 %v4438
        %5860 = vmatpush1.bf16.msra.mxu0 %v4437
        %5861 = vmatprep.subr.bf16.mxu0 %v4445
        %5862 = vmatpush1.bf16.msra.mxu0 %v4444
        %5863 = vmatprep.subr.bf16.mxu0 %v4452
        %5864 = vmatpush1.bf16.msra.mxu0 %v4451
        %5865 = vmatprep.subr.bf16.mxu0 %v4459
        %5866 = vmatpush1.bf16.msra.mxu0 %v4458
        %5867 = vmatprep.subr.bf16.mxu0 %v4466
        %5868 = vmatpush1.bf16.msra.mxu0 %v4465
        %5869 = vmatprep.subr.bf16.mxu0 %v4473
        %5870 = vmatpush1.bf16.msra.mxu0 %v4472
        %5871 = vmatprep.subr.bf16.mxu0 %v4480
        %5872 = vmatpush1.bf16.msra.mxu0 %v4479
        %5873 = vmatprep.subr.bf16.mxu0 %v4487
        %5874 = vmatpush1.bf16.msra.mxu0 %v4486
        %5875 = vmatprep.subr.bf16.mxu0 %v4494
        %5876 = vmatpush1.bf16.msra.mxu0 %v4493
        %5877 = vmatprep.subr.bf16.mxu0 %v4501
        %5878 = vmatpush1.bf16.msra.mxu0 %v4500
        %5879 = vmatprep.subr.bf16.mxu0 %v4508
        %5880 = vmatpush1.bf16.msra.mxu0 %v4507
        %5881 = vmatprep.subr.bf16.mxu0 %v4515
        %5882 = vmatpush1.bf16.msra.mxu0 %v4514
        %5883 = vmatprep.subr.bf16.mxu0 %v4522
        %5884 = vmatpush1.bf16.msra.mxu0 %v4521
        %5885 = vmatprep.subr.bf16.mxu0 %v4529
        %5886 = vmatpush1.bf16.msra.mxu0 %v4528
        %5887 = vmatprep.subr.bf16.mxu0 %v4536
        %5888 = vmatpush1.bf16.msra.mxu0 %v4535
        %5889 = vmatprep.mubr.bf16.mxu0 %v395
        %5890 = vmatmul.mubr.bf16.gmra.mrb[0].mxu0 %v394
        %v5891 = vpop.f32.mrb[0].mxu0
        %v5892 = vadd.f32 %v5851, %v5891
        %v5893 = vpop.f32.mrb[0].mxu0
        %v5894 = vadd.f32 %v5853, %v5893
        %v5895 = vpop.f32.mrb[0].mxu0
        %v5896 = vpop.f32.mrb[0].mxu0
        %5897 = vdwg.mxu0
        %5898 = vmatprep.subr.bf16.mxu0 %v3761
        %5899 = vmatpush1.bf16.msra.mxu0 %v3760
        %5900 = vmatprep.subr.bf16.mxu0 %v3768
        %5901 = vmatpush1.bf16.msra.mxu0 %v3767
        %5902 = vmatprep.subr.bf16.mxu0 %v3775
        %5903 = vmatpush1.bf16.msra.mxu0 %v3774
        %5904 = vmatprep.subr.bf16.mxu0 %v3782
        %5905 = vmatpush1.bf16.msra.mxu0 %v3781
        %5906 = vmatprep.subr.bf16.mxu0 %v3789
        %5907 = vmatpush1.bf16.msra.mxu0 %v3788
        %5908 = vmatprep.subr.bf16.mxu0 %v3796
        %5909 = vmatpush1.bf16.msra.mxu0 %v3795
        %5910 = vmatprep.subr.bf16.mxu0 %v3803
        %5911 = vmatpush1.bf16.msra.mxu0 %v3802
        %5912 = vmatprep.subr.bf16.mxu0 %v3810
        %5913 = vmatpush1.bf16.msra.mxu0 %v3809
        %5914 = vmatprep.subr.bf16.mxu0 %v3817
        %5915 = vmatpush1.bf16.msra.mxu0 %v3816
        %5916 = vmatprep.subr.bf16.mxu0 %v3824
        %5917 = vmatpush1.bf16.msra.mxu0 %v3823
        %5918 = vmatprep.subr.bf16.mxu0 %v3831
        %5919 = vmatpush1.bf16.msra.mxu0 %v3830
        %5920 = vmatprep.subr.bf16.mxu0 %v3838
        %5921 = vmatpush1.bf16.msra.mxu0 %v3837
        %5922 = vmatprep.subr.bf16.mxu0 %v3845
        %5923 = vmatpush1.bf16.msra.mxu0 %v3844
        %5924 = vmatprep.subr.bf16.mxu0 %v3852
        %5925 = vmatpush1.bf16.msra.mxu0 %v3851
        %5926 = vmatprep.subr.bf16.mxu0 %v3859
        %5927 = vmatpush1.bf16.msra.mxu0 %v3858
        %5928 = vmatprep.subr.bf16.mxu0 %v3866
        %5929 = vmatpush1.bf16.msra.mxu0 %v3865
        %5930 = vmatprep.mubr.bf16.mxu0 %v383
        %5931 = vmatmul.mubr.bf16.gmra.mrb[0].mxu0 %v382
        %v5932 = vpop.f32.mrb[0].mxu0
        %v5933 = vadd.f32 0.0, %v5932
        %v5934 = vpop.f32.mrb[0].mxu0
        %v5935 = vadd.f32 0.0, %v5934
        %v5936 = vpop.f32.mrb[0].mxu0
        %v5937 = vpop.f32.mrb[0].mxu0
        %5938 = vdwg.mxu0
        %5939 = vmatprep.subr.bf16.mxu0 %v3873
        %5940 = vmatpush1.bf16.msra.mxu0 %v3872
        %5941 = vmatprep.subr.bf16.mxu0 %v3880
        %5942 = vmatpush1.bf16.msra.mxu0 %v3879
        %5943 = vmatprep.subr.bf16.mxu0 %v3887
        %5944 = vmatpush1.bf16.msra.mxu0 %v3886
        %5945 = vmatprep.subr.bf16.mxu0 %v3894
        %5946 = vmatpush1.bf16.msra.mxu0 %v3893
        %5947 = vmatprep.subr.bf16.mxu0 %v3901
        %5948 = vmatpush1.bf16.msra.mxu0 %v3900
        %5949 = vmatprep.subr.bf16.mxu0 %v3908
        %5950 = vmatpush1.bf16.msra.mxu0 %v3907
        %5951 = vmatprep.subr.bf16.mxu0 %v3915
        %5952 = vmatpush1.bf16.msra.mxu0 %v3914
        %5953 = vmatprep.subr.bf16.mxu0 %v3922
        %5954 = vmatpush1.bf16.msra.mxu0 %v3921
        %5955 = vmatprep.subr.bf16.mxu0 %v3929
        %5956 = vmatpush1.bf16.msra.mxu0 %v3928
        %5957 = vmatprep.subr.bf16.mxu0 %v3936
        %5958 = vmatpush1.bf16.msra.mxu0 %v3935
        %5959 = vmatprep.subr.bf16.mxu0 %v3943
        %5960 = vmatpush1.bf16.msra.mxu0 %v3942
        %5961 = vmatprep.subr.bf16.mxu0 %v3950
        %5962 = vmatpush1.bf16.msra.mxu0 %v3949
        %5963 = vmatprep.subr.bf16.mxu0 %v3957
        %5964 = vmatpush1.bf16.msra.mxu0 %v3956
        %5965 = vmatprep.subr.bf16.mxu0 %v3964
        %5966 = vmatpush1.bf16.msra.mxu0 %v3963
        %5967 = vmatprep.subr.bf16.mxu0 %v3971
        %5968 = vmatpush1.bf16.msra.mxu0 %v3970
        %5969 = vmatprep.subr.bf16.mxu0 %v3978
        %5970 = vmatpush1.bf16.msra.mxu0 %v3977
        %5971 = vmatprep.mubr.bf16.mxu0 %v385
        %5972 = vmatmul.mubr.bf16.gmra.mrb[0].mxu0 %v384
        %v5973 = vpop.f32.mrb[0].mxu0
        %v5974 = vadd.f32 %v5933, %v5973
        %v5975 = vpop.f32.mrb[0].mxu0
        %v5976 = vadd.f32 %v5935, %v5975
        %v5977 = vpop.f32.mrb[0].mxu0
        %v5978 = vpop.f32.mrb[0].mxu0
        %5979 = vdwg.mxu0
        %5980 = vmatprep.subr.bf16.mxu0 %v3985
        %5981 = vmatpush1.bf16.msra.mxu0 %v3984
        %5982 = vmatprep.subr.bf16.mxu0 %v3992
        %5983 = vmatpush1.bf16.msra.mxu0 %v3991
        %5984 = vmatprep.subr.bf16.mxu0 %v3999
        %5985 = vmatpush1.bf16.msra.mxu0 %v3998
        %5986 = vmatprep.subr.bf16.mxu0 %v4006
        %5987 = vmatpush1.bf16.msra.mxu0 %v4005
        %5988 = vmatprep.subr.bf16.mxu0 %v4013
        %5989 = vmatpush1.bf16.msra.mxu0 %v4012
        %5990 = vmatprep.subr.bf16.mxu0 %v4020
        %5991 = vmatpush1.bf16.msra.mxu0 %v4019
        %5992 = vmatprep.subr.bf16.mxu0 %v4027
        %5993 = vmatpush1.bf16.msra.mxu0 %v4026
        %5994 = vmatprep.subr.bf16.mxu0 %v4034
        %5995 = vmatpush1.bf16.msra.mxu0 %v4033
        %5996 = vmatprep.subr.bf16.mxu0 %v4041
        %5997 = vmatpush1.bf16.msra.mxu0 %v4040
        %5998 = vmatprep.subr.bf16.mxu0 %v4048
        %5999 = vmatpush1.bf16.msra.mxu0 %v4047
        %6000 = vmatprep.subr.bf16.mxu0 %v4055
        %6001 = vmatpush1.bf16.msra.mxu0 %v4054
        %6002 = vmatprep.subr.bf16.mxu0 %v4062
        %6003 = vmatpush1.bf16.msra.mxu0 %v4061
        %6004 = vmatprep.subr.bf16.mxu0 %v4069
        %6005 = vmatpush1.bf16.msra.mxu0 %v4068
        %6006 = vmatprep.subr.bf16.mxu0 %v4076
        %6007 = vmatpush1.bf16.msra.mxu0 %v4075
        %6008 = vmatprep.subr.bf16.mxu0 %v4083
        %6009 = vmatpush1.bf16.msra.mxu0 %v4082
        %6010 = vmatprep.subr.bf16.mxu0 %v4090
        %6011 = vmatpush1.bf16.msra.mxu0 %v4089
        %6012 = vmatprep.mubr.bf16.mxu0 %v387
        %6013 = vmatmul.mubr.bf16.gmra.mrb[0].mxu0 %v386
        %v6014 = vpop.f32.mrb[0].mxu0
        %v6015 = vadd.f32 %v5974, %v6014
        %v6016 = vpop.f32.mrb[0].mxu0
        %v6017 = vadd.f32 %v5976, %v6016
        %v6018 = vpop.f32.mrb[0].mxu0
        %v6019 = vpop.f32.mrb[0].mxu0
        %6020 = vdwg.mxu0
        %6021 = vmatprep.subr.bf16.mxu0 %v4097
        %6022 = vmatpush1.bf16.msra.mxu0 %v4096
        %6023 = vmatprep.subr.bf16.mxu0 %v4104
        %6024 = vmatpush1.bf16.msra.mxu0 %v4103
        %6025 = vmatprep.subr.bf16.mxu0 %v4111
        %6026 = vmatpush1.bf16.msra.mxu0 %v4110
        %6027 = vmatprep.subr.bf16.mxu0 %v4118
        %6028 = vmatpush1.bf16.msra.mxu0 %v4117
        %6029 = vmatprep.subr.bf16.mxu0 %v4125
        %6030 = vmatpush1.bf16.msra.mxu0 %v4124
        %6031 = vmatprep.subr.bf16.mxu0 %v4132
        %6032 = vmatpush1.bf16.msra.mxu0 %v4131
        %6033 = vmatprep.subr.bf16.mxu0 %v4139
        %6034 = vmatpush1.bf16.msra.mxu0 %v4138
        %6035 = vmatprep.subr.bf16.mxu0 %v4146
        %6036 = vmatpush1.bf16.msra.mxu0 %v4145
        %6037 = vmatprep.subr.bf16.mxu0 %v4153
        %6038 = vmatpush1.bf16.msra.mxu0 %v4152
        %6039 = vmatprep.subr.bf16.mxu0 %v4160
        %6040 = vmatpush1.bf16.msra.mxu0 %v4159
        %6041 = vmatprep.subr.bf16.mxu0 %v4167
        %6042 = vmatpush1.bf16.msra.mxu0 %v4166
        %6043 = vmatprep.subr.bf16.mxu0 %v4174
        %6044 = vmatpush1.bf16.msra.mxu0 %v4173
        %6045 = vmatprep.subr.bf16.mxu0 %v4181
        %6046 = vmatpush1.bf16.msra.mxu0 %v4180
        %6047 = vmatprep.subr.bf16.mxu0 %v4188
        %6048 = vmatpush1.bf16.msra.mxu0 %v4187
        %6049 = vmatprep.subr.bf16.mxu0 %v4195
        %6050 = vmatpush1.bf16.msra.mxu0 %v4194
        %6051 = vmatprep.subr.bf16.mxu0 %v4202
        %6052 = vmatpush1.bf16.msra.mxu0 %v4201
        %6053 = vmatprep.mubr.bf16.mxu0 %v389
        %6054 = vmatmul.mubr.bf16.gmra.mrb[0].mxu0 %v388
        %v6055 = vpop.f32.mrb[0].mxu0
        %v6056 = vadd.f32 %v6015, %v6055
        %v6057 = vpop.f32.mrb[0].mxu0
        %v6058 = vadd.f32 %v6017, %v6057
        %v6059 = vpop.f32.mrb[0].mxu0
        %v6060 = vpop.f32.mrb[0].mxu0
        %6061 = vdwg.mxu0
        %6062 = vmatprep.subr.bf16.mxu0 %v4209
        %6063 = vmatpush1.bf16.msra.mxu0 %v4208
        %6064 = vmatprep.subr.bf16.mxu0 %v4216
        %6065 = vmatpush1.bf16.msra.mxu0 %v4215
        %6066 = vmatprep.subr.bf16.mxu0 %v4223
        %6067 = vmatpush1.bf16.msra.mxu0 %v4222
        %6068 = vmatprep.subr.bf16.mxu0 %v4230
        %6069 = vmatpush1.bf16.msra.mxu0 %v4229
        %6070 = vmatprep.subr.bf16.mxu0 %v4237
        %6071 = vmatpush1.bf16.msra.mxu0 %v4236
        %6072 = vmatprep.subr.bf16.mxu0 %v4244
        %6073 = vmatpush1.bf16.msra.mxu0 %v4243
        %6074 = vmatprep.subr.bf16.mxu0 %v4251
        %6075 = vmatpush1.bf16.msra.mxu0 %v4250
        %6076 = vmatprep.subr.bf16.mxu0 %v4258
        %6077 = vmatpush1.bf16.msra.mxu0 %v4257
        %6078 = vmatprep.subr.bf16.mxu0 %v4265
        %6079 = vmatpush1.bf16.msra.mxu0 %v4264
        %6080 = vmatprep.subr.bf16.mxu0 %v4272
        %6081 = vmatpush1.bf16.msra.mxu0 %v4271
        %6082 = vmatprep.subr.bf16.mxu0 %v4279
        %6083 = vmatpush1.bf16.msra.mxu0 %v4278
        %6084 = vmatprep.subr.bf16.mxu0 %v4286
        %6085 = vmatpush1.bf16.msra.mxu0 %v4285
        %6086 = vmatprep.subr.bf16.mxu0 %v4293
        %6087 = vmatpush1.bf16.msra.mxu0 %v4292
        %6088 = vmatprep.subr.bf16.mxu0 %v4300
        %6089 = vmatpush1.bf16.msra.mxu0 %v4299
        %6090 = vmatprep.subr.bf16.mxu0 %v4307
        %6091 = vmatpush1.bf16.msra.mxu0 %v4306
        %6092 = vmatprep.subr.bf16.mxu0 %v4314
        %6093 = vmatpush1.bf16.msra.mxu0 %v4313
        %6094 = vmatprep.mubr.bf16.mxu0 %v391
        %6095 = vmatmul.mubr.bf16.gmra.mrb[0].mxu0 %v390
        %v6096 = vpop.f32.mrb[0].mxu0
        %v6097 = vadd.f32 %v6056, %v6096
        %v6098 = vpop.f32.mrb[0].mxu0
        %v6099 = vadd.f32 %v6058, %v6098
        %v6100 = vpop.f32.mrb[0].mxu0
        %v6101 = vpop.f32.mrb[0].mxu0
        %6102 = vdwg.mxu0
        %6103 = vmatprep.subr.bf16.mxu0 %v4321
        %6104 = vmatpush1.bf16.msra.mxu0 %v4320
        %6105 = vmatprep.subr.bf16.mxu0 %v4328
        %6106 = vmatpush1.bf16.msra.mxu0 %v4327
        %6107 = vmatprep.subr.bf16.mxu0 %v4335
        %6108 = vmatpush1.bf16.msra.mxu0 %v4334
        %6109 = vmatprep.subr.bf16.mxu0 %v4342
        %6110 = vmatpush1.bf16.msra.mxu0 %v4341
        %6111 = vmatprep.subr.bf16.mxu0 %v4349
        %6112 = vmatpush1.bf16.msra.mxu0 %v4348
        %6113 = vmatprep.subr.bf16.mxu0 %v4356
        %6114 = vmatpush1.bf16.msra.mxu0 %v4355
        %6115 = vmatprep.subr.bf16.mxu0 %v4363
        %6116 = vmatpush1.bf16.msra.mxu0 %v4362
        %6117 = vmatprep.subr.bf16.mxu0 %v4370
        %6118 = vmatpush1.bf16.msra.mxu0 %v4369
        %6119 = vmatprep.subr.bf16.mxu0 %v4377
        %6120 = vmatpush1.bf16.msra.mxu0 %v4376
        %6121 = vmatprep.subr.bf16.mxu0 %v4384
        %6122 = vmatpush1.bf16.msra.mxu0 %v4383
        %6123 = vmatprep.subr.bf16.mxu0 %v4391
        %6124 = vmatpush1.bf16.msra.mxu0 %v4390
        %6125 = vmatprep.subr.bf16.mxu0 %v4398
        %6126 = vmatpush1.bf16.msra.mxu0 %v4397
        %6127 = vmatprep.subr.bf16.mxu0 %v4405
        %6128 = vmatpush1.bf16.msra.mxu0 %v4404
        %6129 = vmatprep.subr.bf16.mxu0 %v4412
        %6130 = vmatpush1.bf16.msra.mxu0 %v4411
        %6131 = vmatprep.subr.bf16.mxu0 %v4419
        %6132 = vmatpush1.bf16.msra.mxu0 %v4418
        %6133 = vmatprep.subr.bf16.mxu0 %v4426
        %6134 = vmatpush1.bf16.msra.mxu0 %v4425
        %6135 = vmatprep.mubr.bf16.mxu0 %v393
        %6136 = vmatmul.mubr.bf16.gmra.mrb[0].mxu0 %v392
        %v6137 = vpop.f32.mrb[0].mxu0
        %v6138 = vadd.f32 %v6097, %v6137
        %v6139 = vpop.f32.mrb[0].mxu0
        %v6140 = vadd.f32 %v6099, %v6139
        %v6141 = vpop.f32.mrb[0].mxu0
        %v6142 = vpop.f32.mrb[0].mxu0
        %6143 = vdwg.mxu0
        %6144 = vmatprep.subr.bf16.mxu0 %v4433
        %6145 = vmatpush1.bf16.msra.mxu0 %v4432
        %6146 = vmatprep.subr.bf16.mxu0 %v4440
        %6147 = vmatpush1.bf16.msra.mxu0 %v4439
        %6148 = vmatprep.subr.bf16.mxu0 %v4447
        %6149 = vmatpush1.bf16.msra.mxu0 %v4446
        %6150 = vmatprep.subr.bf16.mxu0 %v4454
        %6151 = vmatpush1.bf16.msra.mxu0 %v4453
        %6152 = vmatprep.subr.bf16.mxu0 %v4461
        %6153 = vmatpush1.bf16.msra.mxu0 %v4460
        %6154 = vmatprep.subr.bf16.mxu0 %v4468
        %6155 = vmatpush1.bf16.msra.mxu0 %v4467
        %6156 = vmatprep.subr.bf16.mxu0 %v4475
        %6157 = vmatpush1.bf16.msra.mxu0 %v4474
        %6158 = vmatprep.subr.bf16.mxu0 %v4482
        %6159 = vmatpush1.bf16.msra.mxu0 %v4481
        %6160 = vmatprep.subr.bf16.mxu0 %v4489
        %6161 = vmatpush1.bf16.msra.mxu0 %v4488
        %6162 = vmatprep.subr.bf16.mxu0 %v4496
        %6163 = vmatpush1.bf16.msra.mxu0 %v4495
        %6164 = vmatprep.subr.bf16.mxu0 %v4503
        %6165 = vmatpush1.bf16.msra.mxu0 %v4502
        %6166 = vmatprep.subr.bf16.mxu0 %v4510
        %6167 = vmatpush1.bf16.msra.mxu0 %v4509
        %6168 = vmatprep.subr.bf16.mxu0 %v4517
        %6169 = vmatpush1.bf16.msra.mxu0 %v4516
        %6170 = vmatprep.subr.bf16.mxu0 %v4524
        %6171 = vmatpush1.bf16.msra.mxu0 %v4523
        %6172 = vmatprep.subr.bf16.mxu0 %v4531
        %6173 = vmatpush1.bf16.msra.mxu0 %v4530
        %6174 = vmatprep.subr.bf16.mxu0 %v4538
        %6175 = vmatpush1.bf16.msra.mxu0 %v4537
        %6176 = vmatprep.mubr.bf16.mxu0 %v395
        %6177 = vmatmul.mubr.bf16.gmra.mrb[0].mxu0 %v394
        %v6178 = vpop.f32.mrb[0].mxu0
        %v6179 = vadd.f32 %v6138, %v6178
        %v6180 = vpop.f32.mrb[0].mxu0
        %v6181 = vadd.f32 %v6140, %v6180
        %v6182 = vpop.f32.mrb[0].mxu0
        %v6183 = vpop.f32.mrb[0].mxu0
        %6184 = vdwg.mxu0
        %6185 = vmatprep.subr.bf16.mxu0 0
        %6186 = vmatpush1.bf16.msra.mxu0 %v3762
        %6187 = vmatprep.subr.bf16.mxu0 0
        %6188 = vmatpush1.bf16.msra.mxu0 %v3769
        %6189 = vmatprep.subr.bf16.mxu0 0
        %6190 = vmatpush1.bf16.msra.mxu0 %v3776
        %6191 = vmatprep.subr.bf16.mxu0 0
        %6192 = vmatpush1.bf16.msra.mxu0 %v3783
        %6193 = vmatprep.subr.bf16.mxu0 0
        %6194 = vmatpush1.bf16.msra.mxu0 %v3790
        %6195 = vmatprep.subr.bf16.mxu0 0
        %6196 = vmatpush1.bf16.msra.mxu0 %v3797
        %6197 = vmatprep.subr.bf16.mxu0 0
        %6198 = vmatpush1.bf16.msra.mxu0 %v3804
        %6199 = vmatprep.subr.bf16.mxu0 0
        %6200 = vmatpush1.bf16.msra.mxu0 %v3811
        %6201 = vmatprep.subr.bf16.mxu0 0
        %6202 = vmatpush1.bf16.msra.mxu0 %v3818
        %6203 = vmatprep.subr.bf16.mxu0 0
        %6204 = vmatpush1.bf16.msra.mxu0 %v3825
        %6205 = vmatprep.subr.bf16.mxu0 0
        %6206 = vmatpush1.bf16.msra.mxu0 %v3832
        %6207 = vmatprep.subr.bf16.mxu0 0
        %6208 = vmatpush1.bf16.msra.mxu0 %v3839
        %6209 = vmatprep.subr.bf16.mxu0 0
        %6210 = vmatpush1.bf16.msra.mxu0 %v3846
        %6211 = vmatprep.subr.bf16.mxu0 0
        %6212 = vmatpush1.bf16.msra.mxu0 %v3853
        %6213 = vmatprep.subr.bf16.mxu0 0
        %6214 = vmatpush1.bf16.msra.mxu0 %v3860
        %6215 = vmatprep.subr.bf16.mxu0 0
        %6216 = vmatpush1.bf16.msra.mxu0 %v3867
        %6217 = vmatprep.mubr.bf16.mxu0 %v383
        %6218 = vmatmul.mubr.bf16.gmra.mrb[0].mxu0 %v382
        %v6219 = vpop.f32.mrb[0].mxu0
        %v6220 = vadd.f32 0.0, %v6219
        %v6221 = vpop.f32.mrb[0].mxu0
        %v6222 = vpop.f32.mrb[0].mxu0
        %v6223 = vpop.f32.mrb[0].mxu0
        %6224 = vdwg.mxu0
        %6225 = vmatprep.subr.bf16.mxu0 0
        %6226 = vmatpush1.bf16.msra.mxu0 %v3874
        %6227 = vmatprep.subr.bf16.mxu0 0
        %6228 = vmatpush1.bf16.msra.mxu0 %v3881
        %6229 = vmatprep.subr.bf16.mxu0 0
        %6230 = vmatpush1.bf16.msra.mxu0 %v3888
        %6231 = vmatprep.subr.bf16.mxu0 0
        %6232 = vmatpush1.bf16.msra.mxu0 %v3895
        %6233 = vmatprep.subr.bf16.mxu0 0
        %6234 = vmatpush1.bf16.msra.mxu0 %v3902
        %6235 = vmatprep.subr.bf16.mxu0 0
        %6236 = vmatpush1.bf16.msra.mxu0 %v3909
        %6237 = vmatprep.subr.bf16.mxu0 0
        %6238 = vmatpush1.bf16.msra.mxu0 %v3916
        %6239 = vmatprep.subr.bf16.mxu0 0
        %6240 = vmatpush1.bf16.msra.mxu0 %v3923
        %6241 = vmatprep.subr.bf16.mxu0 0
        %6242 = vmatpush1.bf16.msra.mxu0 %v3930
        %6243 = vmatprep.subr.bf16.mxu0 0
        %6244 = vmatpush1.bf16.msra.mxu0 %v3937
        %6245 = vmatprep.subr.bf16.mxu0 0
        %6246 = vmatpush1.bf16.msra.mxu0 %v3944
        %6247 = vmatprep.subr.bf16.mxu0 0
        %6248 = vmatpush1.bf16.msra.mxu0 %v3951
        %6249 = vmatprep.subr.bf16.mxu0 0
        %6250 = vmatpush1.bf16.msra.mxu0 %v3958
        %6251 = vmatprep.subr.bf16.mxu0 0
        %6252 = vmatpush1.bf16.msra.mxu0 %v3965
        %6253 = vmatprep.subr.bf16.mxu0 0
        %6254 = vmatpush1.bf16.msra.mxu0 %v3972
        %6255 = vmatprep.subr.bf16.mxu0 0
        %6256 = vmatpush1.bf16.msra.mxu0 %v3979
        %6257 = vmatprep.mubr.bf16.mxu0 %v385
        %6258 = vmatmul.mubr.bf16.gmra.mrb[0].mxu0 %v384
        %v6259 = vpop.f32.mrb[0].mxu0
        %v6260 = vadd.f32 %v6220, %v6259
        %v6261 = vpop.f32.mrb[0].mxu0
        %v6262 = vpop.f32.mrb[0].mxu0
        %v6263 = vpop.f32.mrb[0].mxu0
        %6264 = vdwg.mxu0
        %6265 = vmatprep.subr.bf16.mxu0 0
        %6266 = vmatpush1.bf16.msra.mxu0 %v3986
        %6267 = vmatprep.subr.bf16.mxu0 0
        %6268 = vmatpush1.bf16.msra.mxu0 %v3993
        %6269 = vmatprep.subr.bf16.mxu0 0
        %6270 = vmatpush1.bf16.msra.mxu0 %v4000
        %6271 = vmatprep.subr.bf16.mxu0 0
        %6272 = vmatpush1.bf16.msra.mxu0 %v4007
        %6273 = vmatprep.subr.bf16.mxu0 0
        %6274 = vmatpush1.bf16.msra.mxu0 %v4014
        %6275 = vmatprep.subr.bf16.mxu0 0
        %6276 = vmatpush1.bf16.msra.mxu0 %v4021
        %6277 = vmatprep.subr.bf16.mxu0 0
        %6278 = vmatpush1.bf16.msra.mxu0 %v4028
        %6279 = vmatprep.subr.bf16.mxu0 0
        %6280 = vmatpush1.bf16.msra.mxu0 %v4035
        %6281 = vmatprep.subr.bf16.mxu0 0
        %6282 = vmatpush1.bf16.msra.mxu0 %v4042
        %6283 = vmatprep.subr.bf16.mxu0 0
        %6284 = vmatpush1.bf16.msra.mxu0 %v4049
        %6285 = vmatprep.subr.bf16.mxu0 0
        %6286 = vmatpush1.bf16.msra.mxu0 %v4056
        %6287 = vmatprep.subr.bf16.mxu0 0
        %6288 = vmatpush1.bf16.msra.mxu0 %v4063
        %6289 = vmatprep.subr.bf16.mxu0 0
        %6290 = vmatpush1.bf16.msra.mxu0 %v4070
        %6291 = vmatprep.subr.bf16.mxu0 0
        %6292 = vmatpush1.bf16.msra.mxu0 %v4077
        %6293 = vmatprep.subr.bf16.mxu0 0
        %6294 = vmatpush1.bf16.msra.mxu0 %v4084
        %6295 = vmatprep.subr.bf16.mxu0 0
        %6296 = vmatpush1.bf16.msra.mxu0 %v4091
        %6297 = vmatprep.mubr.bf16.mxu0 %v387
        %6298 = vmatmul.mubr.bf16.gmra.mrb[0].mxu0 %v386
        %v6299 = vpop.f32.mrb[0].mxu0
        %v6300 = vadd.f32 %v6260, %v6299
        %v6301 = vpop.f32.mrb[0].mxu0
        %v6302 = vpop.f32.mrb[0].mxu0
        %v6303 = vpop.f32.mrb[0].mxu0
        %6304 = vdwg.mxu0
        %6305 = vmatprep.subr.bf16.mxu0 0
        %6306 = vmatpush1.bf16.msra.mxu0 %v4098
        %6307 = vmatprep.subr.bf16.mxu0 0
        %6308 = vmatpush1.bf16.msra.mxu0 %v4105
        %6309 = vmatprep.subr.bf16.mxu0 0
        %6310 = vmatpush1.bf16.msra.mxu0 %v4112
        %6311 = vmatprep.subr.bf16.mxu0 0
        %6312 = vmatpush1.bf16.msra.mxu0 %v4119
        %6313 = vmatprep.subr.bf16.mxu0 0
        %6314 = vmatpush1.bf16.msra.mxu0 %v4126
        %6315 = vmatprep.subr.bf16.mxu0 0
        %6316 = vmatpush1.bf16.msra.mxu0 %v4133
        %6317 = vmatprep.subr.bf16.mxu0 0
        %6318 = vmatpush1.bf16.msra.mxu0 %v4140
        %6319 = vmatprep.subr.bf16.mxu0 0
        %6320 = vmatpush1.bf16.msra.mxu0 %v4147
        %6321 = vmatprep.subr.bf16.mxu0 0
        %6322 = vmatpush1.bf16.msra.mxu0 %v4154
        %6323 = vmatprep.subr.bf16.mxu0 0
        %6324 = vmatpush1.bf16.msra.mxu0 %v4161
        %6325 = vmatprep.subr.bf16.mxu0 0
        %6326 = vmatpush1.bf16.msra.mxu0 %v4168
        %6327 = vmatprep.subr.bf16.mxu0 0
        %6328 = vmatpush1.bf16.msra.mxu0 %v4175
        %6329 = vmatprep.subr.bf16.mxu0 0
        %6330 = vmatpush1.bf16.msra.mxu0 %v4182
        %6331 = vmatprep.subr.bf16.mxu0 0
        %6332 = vmatpush1.bf16.msra.mxu0 %v4189
        %6333 = vmatprep.subr.bf16.mxu0 0
        %6334 = vmatpush1.bf16.msra.mxu0 %v4196
        %6335 = vmatprep.subr.bf16.mxu0 0
        %6336 = vmatpush1.bf16.msra.mxu0 %v4203
        %6337 = vmatprep.mubr.bf16.mxu0 %v389
        %6338 = vmatmul.mubr.bf16.gmra.mrb[0].mxu0 %v388
        %v6339 = vpop.f32.mrb[0].mxu0
        %v6340 = vadd.f32 %v6300, %v6339
        %v6341 = vpop.f32.mrb[0].mxu0
        %v6342 = vpop.f32.mrb[0].mxu0
        %v6343 = vpop.f32.mrb[0].mxu0
        %6344 = vdwg.mxu0
        %6345 = vmatprep.subr.bf16.mxu0 0
        %6346 = vmatpush1.bf16.msra.mxu0 %v4210
        %6347 = vmatprep.subr.bf16.mxu0 0
        %6348 = vmatpush1.bf16.msra.mxu0 %v4217
        %6349 = vmatprep.subr.bf16.mxu0 0
        %6350 = vmatpush1.bf16.msra.mxu0 %v4224
        %6351 = vmatprep.subr.bf16.mxu0 0
        %6352 = vmatpush1.bf16.msra.mxu0 %v4231
        %6353 = vmatprep.subr.bf16.mxu0 0
        %6354 = vmatpush1.bf16.msra.mxu0 %v4238
        %6355 = vmatprep.subr.bf16.mxu0 0
        %6356 = vmatpush1.bf16.msra.mxu0 %v4245
        %6357 = vmatprep.subr.bf16.mxu0 0
        %6358 = vmatpush1.bf16.msra.mxu0 %v4252
        %6359 = vmatprep.subr.bf16.mxu0 0
        %6360 = vmatpush1.bf16.msra.mxu0 %v4259
        %6361 = vmatprep.subr.bf16.mxu0 0
        %6362 = vmatpush1.bf16.msra.mxu0 %v4266
        %6363 = vmatprep.subr.bf16.mxu0 0
        %6364 = vmatpush1.bf16.msra.mxu0 %v4273
        %6365 = vmatprep.subr.bf16.mxu0 0
        %6366 = vmatpush1.bf16.msra.mxu0 %v4280
        %6367 = vmatprep.subr.bf16.mxu0 0
        %6368 = vmatpush1.bf16.msra.mxu0 %v4287
        %6369 = vmatprep.subr.bf16.mxu0 0
        %6370 = vmatpush1.bf16.msra.mxu0 %v4294
        %6371 = vmatprep.subr.bf16.mxu0 0
        %6372 = vmatpush1.bf16.msra.mxu0 %v4301
        %6373 = vmatprep.subr.bf16.mxu0 0
        %6374 = vmatpush1.bf16.msra.mxu0 %v4308
        %6375 = vmatprep.subr.bf16.mxu0 0
        %6376 = vmatpush1.bf16.msra.mxu0 %v4315
        %6377 = vmatprep.mubr.bf16.mxu0 %v391
        %6378 = vmatmul.mubr.bf16.gmra.mrb[0].mxu0 %v390
        %v6379 = vpop.f32.mrb[0].mxu0
        %v6380 = vadd.f32 %v6340, %v6379
        %v6381 = vpop.f32.mrb[0].mxu0
        %v6382 = vpop.f32.mrb[0].mxu0
        %v6383 = vpop.f32.mrb[0].mxu0
        %6384 = vdwg.mxu0
        %6385 = vmatprep.subr.bf16.mxu0 0
        %6386 = vmatpush1.bf16.msra.mxu0 %v4322
        %6387 = vmatprep.subr.bf16.mxu0 0
        %6388 = vmatpush1.bf16.msra.mxu0 %v4329
        %6389 = vmatprep.subr.bf16.mxu0 0
        %6390 = vmatpush1.bf16.msra.mxu0 %v4336
        %6391 = vmatprep.subr.bf16.mxu0 0
        %6392 = vmatpush1.bf16.msra.mxu0 %v4343
        %6393 = vmatprep.subr.bf16.mxu0 0
        %6394 = vmatpush1.bf16.msra.mxu0 %v4350
        %6395 = vmatprep.subr.bf16.mxu0 0
        %6396 = vmatpush1.bf16.msra.mxu0 %v4357
        %6397 = vmatprep.subr.bf16.mxu0 0
        %6398 = vmatpush1.bf16.msra.mxu0 %v4364
        %6399 = vmatprep.subr.bf16.mxu0 0
        %6400 = vmatpush1.bf16.msra.mxu0 %v4371
        %6401 = vmatprep.subr.bf16.mxu0 0
        %6402 = vmatpush1.bf16.msra.mxu0 %v4378
        %6403 = vmatprep.subr.bf16.mxu0 0
        %6404 = vmatpush1.bf16.msra.mxu0 %v4385
        %6405 = vmatprep.subr.bf16.mxu0 0
        %6406 = vmatpush1.bf16.msra.mxu0 %v4392
        %6407 = vmatprep.subr.bf16.mxu0 0
        %6408 = vmatpush1.bf16.msra.mxu0 %v4399
        %6409 = vmatprep.subr.bf16.mxu0 0
        %6410 = vmatpush1.bf16.msra.mxu0 %v4406
        %6411 = vmatprep.subr.bf16.mxu0 0
        %6412 = vmatpush1.bf16.msra.mxu0 %v4413
        %6413 = vmatprep.subr.bf16.mxu0 0
        %6414 = vmatpush1.bf16.msra.mxu0 %v4420
        %6415 = vmatprep.subr.bf16.mxu0 0
        %6416 = vmatpush1.bf16.msra.mxu0 %v4427
        %6417 = vmatprep.mubr.bf16.mxu0 %v393
        %6418 = vmatmul.mubr.bf16.gmra.mrb[0].mxu0 %v392
        %v6419 = vpop.f32.mrb[0].mxu0
        %v6420 = vadd.f32 %v6380, %v6419
        %v6421 = vpop.f32.mrb[0].mxu0
        %v6422 = vpop.f32.mrb[0].mxu0
        %v6423 = vpop.f32.mrb[0].mxu0
        %6424 = vdwg.mxu0
        %6425 = vmatprep.subr.bf16.mxu0 0
        %6426 = vmatpush1.bf16.msra.mxu0 %v4434
        %6427 = vmatprep.subr.bf16.mxu0 0
        %6428 = vmatpush1.bf16.msra.mxu0 %v4441
        %6429 = vmatprep.subr.bf16.mxu0 0
        %6430 = vmatpush1.bf16.msra.mxu0 %v4448
        %6431 = vmatprep.subr.bf16.mxu0 0
        %6432 = vmatpush1.bf16.msra.mxu0 %v4455
        %6433 = vmatprep.subr.bf16.mxu0 0
        %6434 = vmatpush1.bf16.msra.mxu0 %v4462
        %6435 = vmatprep.subr.bf16.mxu0 0
        %6436 = vmatpush1.bf16.msra.mxu0 %v4469
        %6437 = vmatprep.subr.bf16.mxu0 0
        %6438 = vmatpush1.bf16.msra.mxu0 %v4476
        %6439 = vmatprep.subr.bf16.mxu0 0
        %6440 = vmatpush1.bf16.msra.mxu0 %v4483
        %6441 = vmatprep.subr.bf16.mxu0 0
        %6442 = vmatpush1.bf16.msra.mxu0 %v4490
        %6443 = vmatprep.subr.bf16.mxu0 0
        %6444 = vmatpush1.bf16.msra.mxu0 %v4497
        %6445 = vmatprep.subr.bf16.mxu0 0
        %6446 = vmatpush1.bf16.msra.mxu0 %v4504
        %6447 = vmatprep.subr.bf16.mxu0 0
        %6448 = vmatpush1.bf16.msra.mxu0 %v4511
        %6449 = vmatprep.subr.bf16.mxu0 0
        %6450 = vmatpush1.bf16.msra.mxu0 %v4518
        %6451 = vmatprep.subr.bf16.mxu0 0
        %6452 = vmatpush1.bf16.msra.mxu0 %v4525
        %6453 = vmatprep.subr.bf16.mxu0 0
        %6454 = vmatpush1.bf16.msra.mxu0 %v4532
        %6455 = vmatprep.subr.bf16.mxu0 0
        %6456 = vmatpush1.bf16.msra.mxu0 %v4539
        %6457 = vmatprep.mubr.bf16.mxu0 %v395
        %6458 = vmatmul.mubr.bf16.gmra.mrb[0].mxu0 %v394
        %v6459 = vpop.f32.mrb[0].mxu0
        %v6460 = vadd.f32 %v6420, %v6459
        %v6461 = vpop.f32.mrb[0].mxu0
        %v6462 = vpop.f32.mrb[0].mxu0
        %v6463 = vpop.f32.mrb[0].mxu0
        %6464 = vdwg.mxu0
        %v6472 = vcombine.low %v5605, %v5607
        %v6473 = vcombine.low %v5892, %v5894
        %v6475 = vunpack.c.l.s4 1983009808
        %v6476 = vunpack.c.0.s8 %v6475
        %v6477 = vlaneseq
        %v6478 = vshrl.u32 %v6477, 7
        %v6479 = vsub.s32 %v6476, %v6478
        %v6480 = vrot.slane %v6472, %v6479
        %v6482 = vunpack.c.l.s4 1983009808
        %v6483 = vunpack.c.0.s8 %v6482
        %v6484 = vlaneseq
        %v6485 = vshrl.u32 %v6484, 7
        %v6486 = vsub.s32 %v6483, %v6485
        %v6487 = vrot.slane %v6473, %v6486
        %v6488 = vcombine.low %v6480, %v6487
        %v6489 = vcombine.low %v6179, %v6181
        %v6491 = vunpack.c.l.s4 1983009808
        %v6492 = vunpack.c.0.s8 %v6491
        %v6493 = vlaneseq
        %v6494 = vshrl.u32 %v6493, 7
        %v6495 = vsub.s32 %v6492, %v6494
        %v6496 = vrot.slane %v6489, %v6495
        %v6498 = vunpack.c.l.s4 1983009808
        %v6499 = vunpack.c.0.s8 %v6498
        %v6500 = vlaneseq
        %v6501 = vshrl.u32 %v6500, 7
        %v6502 = vsub.s32 %v6499, %v6501
        %v6503 = vrot.slane %v6460, %v6502
        %v6504 = vcombine.low %v6496, %v6503
        %v6507 = vadd.f32 %v299, %v6488
        %v6508 = vadd.f32 %v300, %v6504
        %6509 = vst [vmem:[#allocation2] sm:$0xff] %v6507
        %6510 = vst [vmem:[#allocation2 + $0x8] sm:$0x3f] %v6508
        %p6511 = scmp.eq.s32.totalorder %s19, 3
        // Predicated region
        $region53: #{net_forward.5} parent=47 // pred_check
          %p6512 = pneg %p6511
        $region54: #{net_forward.5} parent=47 // pred_check_branch
          %6514 = sbr.rel (%p6512) target = $region56
        $region55: #{net_forward.5} parent=47 // pred_region
          %v6515 = vld [vmem:[#allocation2] sm:$0xff]
          %v6516 = vld [vmem:[#allocation2 + $0x8] sm:$0x3f]
          %v6517 = vld [vmem:[%s2] sm:$0xff]
          %v6519 = vlaneseq
          %v6520 = vshrl.u32 %v6519, 7
          %v6521 = vsub.s32 0, %v6520
          %v6522 = vrot.slane %v6517, %v6521
          %v6523 = vlaneseq
          %v6524 = vshrl.u32 %v6523, 7
          %v6525 = vsub.s32 1, %v6524
          %v6526 = vrot.slane %v6517, %v6525
          %v6527 = vlaneseq
          %v6528 = vshrl.u32 %v6527, 7
          %v6529 = vsub.s32 2, %v6528
          %v6530 = vrot.slane %v6517, %v6529
          %v6531 = vlaneseq
          %v6532 = vshrl.u32 %v6531, 7
          %v6533 = vsub.s32 3, %v6532
          %v6534 = vrot.slane %v6517, %v6533
          %v6535 = vlaneseq
          %v6536 = vshrl.u32 %v6535, 7
          %v6537 = vsub.s32 4, %v6536
          %v6538 = vrot.slane %v6517, %v6537
          %v6539 = vlaneseq
          %v6540 = vshrl.u32 %v6539, 7
          %v6541 = vsub.s32 5, %v6540
          %v6542 = vrot.slane %v6517, %v6541
          %v6543 = vlaneseq
          %v6544 = vshrl.u32 %v6543, 7
          %v6545 = vsub.s32 6, %v6544
          %v6546 = vrot.slane %v6517, %v6545
          %v6547 = vcombine.low %v6522, %v6526
          %v6548 = vcombine.low %v6530, %v6534
          %v6550 = vunpack.c.l.s4 1983009808
          %v6551 = vunpack.c.0.s8 %v6550
          %v6552 = vlaneseq
          %v6553 = vshrl.u32 %v6552, 7
          %v6554 = vsub.s32 %v6551, %v6553
          %v6555 = vrot.slane %v6547, %v6554
          %v6557 = vunpack.c.l.s4 1983009808
          %v6558 = vunpack.c.0.s8 %v6557
          %v6559 = vlaneseq
          %v6560 = vshrl.u32 %v6559, 7
          %v6561 = vsub.s32 %v6558, %v6560
          %v6562 = vrot.slane %v6548, %v6561
          %v6563 = vcombine.low %v6555, %v6562
          %v6564 = vcombine.low %v6538, %v6542
          %v6566 = vunpack.c.l.s4 1983009808
          %v6567 = vunpack.c.0.s8 %v6566
          %v6568 = vlaneseq
          %v6569 = vshrl.u32 %v6568, 7
          %v6570 = vsub.s32 %v6567, %v6569
          %v6571 = vrot.slane %v6564, %v6570
          %v6573 = vunpack.c.l.s4 1983009808
          %v6574 = vunpack.c.0.s8 %v6573
          %v6575 = vlaneseq
          %v6576 = vshrl.u32 %v6575, 7
          %v6577 = vsub.s32 %v6574, %v6576
          %v6578 = vrot.slane %v6546, %v6577
          %v6579 = vcombine.low %v6571, %v6578
          %v6582 = vadd.f32 %v6515, %v6563
          %v6583 = vadd.f32 %v6516, %v6579
          %v6584 = vmax.f32 %v6582, 0.0
          %v6585 = vmax.f32 %v6583, 0.0
          %v6588 = vcombine.high %v6584, %v6584
          %v6590 = vunpack.c.l.s4 1983009808
          %v6591 = vunpack.c.0.s8 %v6590
          %v6592 = vlaneseq
          %v6593 = vshrl.u32 %v6592, 7
          %v6594 = vsub.s32 %v6591, %v6593
          %v6595 = vrot.slane %v6584, %v6594
          %v6597 = vunpack.c.l.s4 1983009808
          %v6598 = vunpack.c.0.s8 %v6597
          %v6599 = vlaneseq
          %v6600 = vshrl.u32 %v6599, 7
          %v6601 = vsub.s32 %v6598, %v6600
          %v6602 = vrot.slane %v6588, %v6601
          %v6603 = vcombine.high %v6595, %v6595
          %v6604 = vcombine.high %v6602, %v6602
          %v6605 = vcombine.high %v6585, %v6585
          %v6607 = vunpack.c.l.s4 1983009808
          %v6608 = vunpack.c.0.s8 %v6607
          %v6609 = vlaneseq
          %v6610 = vshrl.u32 %v6609, 7
          %v6611 = vsub.s32 %v6608, %v6610
          %v6612 = vrot.slane %v6585, %v6611
          %v6614 = vunpack.c.l.s4 1983009808
          %v6615 = vunpack.c.0.s8 %v6614
          %v6616 = vlaneseq
          %v6617 = vshrl.u32 %v6616, 7
          %v6618 = vsub.s32 %v6615, %v6617
          %v6619 = vrot.slane %v6605, %v6618
          %v6620 = vcombine.high %v6612, %v6612
          %v6628 = vpack.c.bf16 %v6595, %v6595
          %v6629 = vpack.c.bf16 %v6603, %v6603
          %v6630 = vpack.c.bf16 %v6602, %v6602
          %v6631 = vpack.c.bf16 %v6604, %v6604
          %v6632 = vpack.c.bf16 %v6612, %v6612
          %v6633 = vpack.c.bf16 %v6620, %v6620
          %v6634 = vpack.c.bf16 %v6619, %v6619
          %v6635 = vld [vmem:[%s3] sm:$0xf]
          %v6636 = vld [vmem:[%s3 + $0x4] sm:$0xf]
          %v6637 = vld [vmem:[%s3 + $0x8] sm:$0xf]
          %v6638 = vld [vmem:[%s3 + $0xc] sm:$0xf]
          %v6639 = vld [vmem:[%s3 + $0x10] sm:$0xf]
          %v6640 = vld [vmem:[%s3 + $0x14] sm:$0xf]
          %v6641 = vld [vmem:[%s3 + $0x18] sm:$0xf]
          %v6642 = vld [vmem:[%s3 + $0x1c] sm:$0xf]
          %v6643 = vld [vmem:[%s3 + $0x20] sm:$0xf]
          %v6644 = vld [vmem:[%s3 + $0x24] sm:$0xf]
          %v6645 = vld [vmem:[%s3 + $0x28] sm:$0xf]
          %v6646 = vld [vmem:[%s3 + $0x2c] sm:$0xf]
          %v6647 = vld [vmem:[%s3 + $0x30] sm:$0xf]
          %v6648 = vld [vmem:[%s3 + $0x34] sm:$0xf]
          %v6649 = vld [vmem:[%s3 + $0x38] sm:$0xf]
          %v6650 = vld [vmem:[%s3 + $0x3c] sm:$0xf]
          %v6651 = vld [vmem:[%s3 + $0x40] sm:$0xf]
          %v6652 = vld [vmem:[%s3 + $0x44] sm:$0xf]
          %v6653 = vld [vmem:[%s3 + $0x48] sm:$0xf]
          %v6654 = vld [vmem:[%s3 + $0x4c] sm:$0xf]
          %v6655 = vld [vmem:[%s3 + $0x50] sm:$0xf]
          %v6656 = vld [vmem:[%s3 + $0x54] sm:$0xf]
          %v6657 = vld [vmem:[%s3 + $0x58] sm:$0xf]
          %v6658 = vld [vmem:[%s3 + $0x5c] sm:$0xf]
          %v6659 = vld [vmem:[%s3 + $0x60] sm:$0xf]
          %v6660 = vld [vmem:[%s3 + $0x64] sm:$0xf]
          %v6661 = vld [vmem:[%s3 + $0x68] sm:$0xf]
          %v6662 = vld [vmem:[%s3 + $0x6c] sm:$0xf]
          %v6663 = vld [vmem:[%s3 + $0x70] sm:$0xf]
          %v6664 = vld [vmem:[%s3 + $0x74] sm:$0xf]
          %v6665 = vld [vmem:[%s3 + $0x78] sm:$0xf]
          %v6666 = vld [vmem:[%s3 + $0x7c] sm:$0xf]
          %v6667 = vld [vmem:[%s3 + $0x80] sm:$0xf]
          %v6668 = vld [vmem:[%s3 + $0x84] sm:$0xf]
          %v6669 = vld [vmem:[%s3 + $0x88] sm:$0xf]
          %v6670 = vld [vmem:[%s3 + $0x8c] sm:$0xf]
          %v6671 = vld [vmem:[%s3 + $0x90] sm:$0xf]
          %v6672 = vld [vmem:[%s3 + $0x94] sm:$0xf]
          %v6673 = vld [vmem:[%s3 + $0x98] sm:$0xf]
          %v6674 = vld [vmem:[%s3 + $0x9c] sm:$0xf]
          %v6675 = vld [vmem:[%s3 + $0xa0] sm:$0xf]
          %v6676 = vld [vmem:[%s3 + $0xa4] sm:$0xf]
          %v6677 = vld [vmem:[%s3 + $0xa8] sm:$0xf]
          %v6678 = vld [vmem:[%s3 + $0xac] sm:$0xf]
          %v6679 = vld [vmem:[%s3 + $0xb0] sm:$0xf]
          %v6680 = vld [vmem:[%s3 + $0xb4] sm:$0xf]
          %v6681 = vld [vmem:[%s3 + $0xb8] sm:$0xf]
          %v6682 = vld [vmem:[%s3 + $0xbc] sm:$0xf]
          %v6683 = vld [vmem:[%s3 + $0xc0] sm:$0xf]
          %v6684 = vld [vmem:[%s3 + $0xc4] sm:$0xf]
          %v6685 = vld [vmem:[%s3 + $0xc8] sm:$0xf]
          %v6686 = vld [vmem:[%s3 + $0xcc] sm:$0xf]
          %v6687 = vld [vmem:[%s3 + $0xd0] sm:$0xf]
          %v6688 = vld [vmem:[%s3 + $0xd4] sm:$0xf]
          %v6689 = vld [vmem:[%s3 + $0xd8] sm:$0xf]
          %v6690 = vld [vmem:[%s3 + $0xdc] sm:$0xf]
          %v6691 = vld [vmem:[%s3 + $0xe0] sm:$0xf]
          %v6692 = vld [vmem:[%s3 + $0xe4] sm:$0xf]
          %v6693 = vld [vmem:[%s3 + $0xe8] sm:$0xf]
          %v6694 = vld [vmem:[%s3 + $0xec] sm:$0xf]
          %v6695 = vld [vmem:[%s3 + $0xf0] sm:$0xf]
          %v6696 = vld [vmem:[%s3 + $0xf4] sm:$0xf]
          %v6697 = vld [vmem:[%s3 + $0xf8] sm:$0xf]
          %v6698 = vld [vmem:[%s3 + $0xfc] sm:$0xf]
          %v6699 = vld [vmem:[%s3 + $0x100] sm:$0xf]
          %v6700 = vld [vmem:[%s3 + $0x104] sm:$0xf]
          %v6701 = vld [vmem:[%s3 + $0x108] sm:$0xf]
          %v6702 = vld [vmem:[%s3 + $0x10c] sm:$0xf]
          %v6703 = vld [vmem:[%s3 + $0x110] sm:$0xf]
          %v6704 = vld [vmem:[%s3 + $0x114] sm:$0xf]
          %v6705 = vld [vmem:[%s3 + $0x118] sm:$0xf]
          %v6706 = vld [vmem:[%s3 + $0x11c] sm:$0xf]
          %v6707 = vld [vmem:[%s3 + $0x120] sm:$0xf]
          %v6708 = vld [vmem:[%s3 + $0x124] sm:$0xf]
          %v6709 = vld [vmem:[%s3 + $0x128] sm:$0xf]
          %v6710 = vld [vmem:[%s3 + $0x12c] sm:$0xf]
          %v6711 = vld [vmem:[%s3 + $0x130] sm:$0xf]
          %v6712 = vld [vmem:[%s3 + $0x134] sm:$0xf]
          %v6713 = vld [vmem:[%s3 + $0x138] sm:$0xf]
          %v6714 = vld [vmem:[%s3 + $0x13c] sm:$0xf]
          %v6715 = vld [vmem:[%s3 + $0x140] sm:$0xf]
          %v6716 = vld [vmem:[%s3 + $0x144] sm:$0xf]
          %v6717 = vld [vmem:[%s3 + $0x148] sm:$0xf]
          %v6718 = vld [vmem:[%s3 + $0x14c] sm:$0xf]
          %v6719 = vld [vmem:[%s3 + $0x150] sm:$0xf]
          %v6720 = vld [vmem:[%s3 + $0x154] sm:$0xf]
          %v6721 = vld [vmem:[%s3 + $0x158] sm:$0xf]
          %v6722 = vld [vmem:[%s3 + $0x15c] sm:$0xf]
          %v6723 = vld [vmem:[%s3 + $0x160] sm:$0xf]
          %v6724 = vld [vmem:[%s3 + $0x164] sm:$0xf]
          %v6725 = vld [vmem:[%s3 + $0x168] sm:$0xf]
          %v6726 = vld [vmem:[%s3 + $0x16c] sm:$0xf]
          %v6727 = vld [vmem:[%s3 + $0x170] sm:$0xf]
          %v6728 = vld [vmem:[%s3 + $0x174] sm:$0xf]
          %v6729 = vld [vmem:[%s3 + $0x178] sm:$0xf]
          %v6730 = vld [vmem:[%s3 + $0x17c] sm:$0xf]
          %v6731 = vld [vmem:[%s3 + $0x180] sm:$0xf]
          %v6732 = vld [vmem:[%s3 + $0x184] sm:$0xf]
          %v6733 = vld [vmem:[%s3 + $0x188] sm:$0xf]
          %v6734 = vld [vmem:[%s3 + $0x18c] sm:$0xf]
          %v6735 = vld [vmem:[%s3 + $0x190] sm:$0xf]
          %v6736 = vld [vmem:[%s3 + $0x194] sm:$0xf]
          %v6737 = vld [vmem:[%s3 + $0x198] sm:$0xf]
          %v6738 = vld [vmem:[%s3 + $0x19c] sm:$0xf]
          %v6739 = vld [vmem:[%s3 + $0x1a0] sm:$0xf]
          %v6740 = vld [vmem:[%s3 + $0x1a4] sm:$0xf]
          %v6741 = vld [vmem:[%s3 + $0x1a8] sm:$0xf]
          %v6742 = vld [vmem:[%s3 + $0x1ac] sm:$0xf]
          %v6743 = vld [vmem:[%s3 + $0x1b0] sm:$0xf]
          %v6744 = vld [vmem:[%s3 + $0x1b4] sm:$0xf]
          %v6745 = vld [vmem:[%s3 + $0x1b8] sm:$0xf]
          %v6746 = vld [vmem:[%s3 + $0x1bc] sm:$0xf]
          %v6747 = vld [vmem:[%s4] sm:$0x1]
          %v6749 = vlaneseq
          %v6750 = vshrl.u32 %v6749, 7
          %v6751 = vsub.s32 0, %v6750
          %v6752 = vrot.slane %v6747, %v6751
          %v6866 = vunpack.c.l.b16 %v6635
          %v6867 = vunpack.c.l.b16 %v6636
          %v6868 = vunpack.c.l.b16 %v6637
          %v6869 = vunpack.c.l.b16 %v6638
          %v6870 = vunpack.c.l.b16 %v6639
          %v6871 = vunpack.c.l.b16 %v6640
          %v6872 = vunpack.c.l.b16 %v6641
          %v6873 = vunpack.c.l.b16 %v6642
          %v6874 = vunpack.c.l.b16 %v6643
          %v6875 = vunpack.c.l.b16 %v6644
          %v6876 = vunpack.c.l.b16 %v6645
          %v6877 = vunpack.c.l.b16 %v6646
          %v6878 = vunpack.c.l.b16 %v6647
          %v6879 = vunpack.c.l.b16 %v6648
          %v6880 = vunpack.c.l.b16 %v6649
          %v6881 = vunpack.c.l.b16 %v6650
          %v6882 = vunpack.c.l.b16 %v6651
          %v6883 = vunpack.c.l.b16 %v6652
          %v6884 = vunpack.c.l.b16 %v6653
          %v6885 = vunpack.c.l.b16 %v6654
          %v6886 = vunpack.c.l.b16 %v6655
          %v6887 = vunpack.c.l.b16 %v6656
          %v6888 = vunpack.c.l.b16 %v6657
          %v6889 = vunpack.c.l.b16 %v6658
          %v6890 = vunpack.c.l.b16 %v6659
          %v6891 = vunpack.c.l.b16 %v6660
          %v6892 = vunpack.c.l.b16 %v6661
          %v6893 = vunpack.c.l.b16 %v6662
          %v6894 = vunpack.c.l.b16 %v6663
          %v6895 = vunpack.c.l.b16 %v6664
          %v6896 = vunpack.c.l.b16 %v6665
          %v6897 = vunpack.c.l.b16 %v6666
          %v6898 = vunpack.c.l.b16 %v6667
          %v6899 = vunpack.c.l.b16 %v6668
          %v6900 = vunpack.c.l.b16 %v6669
          %v6901 = vunpack.c.l.b16 %v6670
          %v6902 = vunpack.c.l.b16 %v6671
          %v6903 = vunpack.c.l.b16 %v6672
          %v6904 = vunpack.c.l.b16 %v6673
          %v6905 = vunpack.c.l.b16 %v6674
          %v6906 = vunpack.c.l.b16 %v6675
          %v6907 = vunpack.c.l.b16 %v6676
          %v6908 = vunpack.c.l.b16 %v6677
          %v6909 = vunpack.c.l.b16 %v6678
          %v6910 = vunpack.c.l.b16 %v6679
          %v6911 = vunpack.c.l.b16 %v6680
          %v6912 = vunpack.c.l.b16 %v6681
          %v6913 = vunpack.c.l.b16 %v6682
          %v6914 = vunpack.c.l.b16 %v6683
          %v6915 = vunpack.c.l.b16 %v6684
          %v6916 = vunpack.c.l.b16 %v6685
          %v6917 = vunpack.c.l.b16 %v6686
          %v6918 = vunpack.c.l.b16 %v6687
          %v6919 = vunpack.c.l.b16 %v6688
          %v6920 = vunpack.c.l.b16 %v6689
          %v6921 = vunpack.c.l.b16 %v6690
          %v6922 = vunpack.c.l.b16 %v6691
          %v6923 = vunpack.c.l.b16 %v6692
          %v6924 = vunpack.c.l.b16 %v6693
          %v6925 = vunpack.c.l.b16 %v6694
          %v6926 = vunpack.c.l.b16 %v6695
          %v6927 = vunpack.c.l.b16 %v6696
          %v6928 = vunpack.c.l.b16 %v6697
          %v6929 = vunpack.c.l.b16 %v6698
          %v6930 = vunpack.c.l.b16 %v6699
          %v6931 = vunpack.c.l.b16 %v6700
          %v6932 = vunpack.c.l.b16 %v6701
          %v6933 = vunpack.c.l.b16 %v6702
          %v6934 = vunpack.c.l.b16 %v6703
          %v6935 = vunpack.c.l.b16 %v6704
          %v6936 = vunpack.c.l.b16 %v6705
          %v6937 = vunpack.c.l.b16 %v6706
          %v6938 = vunpack.c.l.b16 %v6707
          %v6939 = vunpack.c.l.b16 %v6708
          %v6940 = vunpack.c.l.b16 %v6709
          %v6941 = vunpack.c.l.b16 %v6710
          %v6942 = vunpack.c.l.b16 %v6711
          %v6943 = vunpack.c.l.b16 %v6712
          %v6944 = vunpack.c.l.b16 %v6713
          %v6945 = vunpack.c.l.b16 %v6714
          %v6946 = vunpack.c.l.b16 %v6715
          %v6947 = vunpack.c.l.b16 %v6716
          %v6948 = vunpack.c.l.b16 %v6717
          %v6949 = vunpack.c.l.b16 %v6718
          %v6950 = vunpack.c.l.b16 %v6719
          %v6951 = vunpack.c.l.b16 %v6720
          %v6952 = vunpack.c.l.b16 %v6721
          %v6953 = vunpack.c.l.b16 %v6722
          %v6954 = vunpack.c.l.b16 %v6723
          %v6955 = vunpack.c.l.b16 %v6724
          %v6956 = vunpack.c.l.b16 %v6725
          %v6957 = vunpack.c.l.b16 %v6726
          %v6958 = vunpack.c.l.b16 %v6727
          %v6959 = vunpack.c.l.b16 %v6728
          %v6960 = vunpack.c.l.b16 %v6729
          %v6961 = vunpack.c.l.b16 %v6730
          %v6962 = vunpack.c.l.b16 %v6731
          %v6963 = vunpack.c.l.b16 %v6732
          %v6964 = vunpack.c.l.b16 %v6733
          %v6965 = vunpack.c.l.b16 %v6734
          %v6966 = vunpack.c.l.b16 %v6735
          %v6967 = vunpack.c.l.b16 %v6736
          %v6968 = vunpack.c.l.b16 %v6737
          %v6969 = vunpack.c.l.b16 %v6738
          %v6970 = vunpack.c.l.b16 %v6739
          %v6971 = vunpack.c.l.b16 %v6740
          %v6972 = vunpack.c.l.b16 %v6741
          %v6973 = vunpack.c.l.b16 %v6742
          %v6974 = vunpack.c.l.b16 %v6743
          %v6975 = vunpack.c.l.b16 %v6744
          %v6976 = vunpack.c.l.b16 %v6745
          %v6977 = vunpack.c.l.b16 %v6746
          %v6978 = vpack.c.b16 %v6867, %v6866
          %v6979 = vpack.c.b16 %v6869, %v6868
          %v6980 = vpack.c.b16 %v6871, %v6870
          %v6981 = vpack.c.b16 %v6873, %v6872
          %v6982 = vpack.c.b16 %v6875, %v6874
          %v6983 = vpack.c.b16 %v6877, %v6876
          %v6984 = vpack.c.b16 %v6879, %v6878
          %v6985 = vpack.c.b16 %v6881, %v6880
          %v6986 = vpack.c.b16 %v6883, %v6882
          %v6987 = vpack.c.b16 %v6885, %v6884
          %v6988 = vpack.c.b16 %v6887, %v6886
          %v6989 = vpack.c.b16 %v6889, %v6888
          %v6990 = vpack.c.b16 %v6891, %v6890
          %v6991 = vpack.c.b16 %v6893, %v6892
          %v6992 = vpack.c.b16 %v6895, %v6894
          %v6993 = vpack.c.b16 %v6897, %v6896
          %v6994 = vpack.c.b16 %v6899, %v6898
          %v6995 = vpack.c.b16 %v6901, %v6900
          %v6996 = vpack.c.b16 %v6903, %v6902
          %v6997 = vpack.c.b16 %v6905, %v6904
          %v6998 = vpack.c.b16 %v6907, %v6906
          %v6999 = vpack.c.b16 %v6909, %v6908
          %v7000 = vpack.c.b16 %v6911, %v6910
          %v7001 = vpack.c.b16 %v6913, %v6912
          %v7002 = vpack.c.b16 %v6915, %v6914
          %v7003 = vpack.c.b16 %v6917, %v6916
          %v7004 = vpack.c.b16 %v6919, %v6918
          %v7005 = vpack.c.b16 %v6921, %v6920
          %v7006 = vpack.c.b16 %v6923, %v6922
          %v7007 = vpack.c.b16 %v6925, %v6924
          %v7008 = vpack.c.b16 %v6927, %v6926
          %v7009 = vpack.c.b16 %v6929, %v6928
          %v7010 = vpack.c.b16 %v6931, %v6930
          %v7011 = vpack.c.b16 %v6933, %v6932
          %v7012 = vpack.c.b16 %v6935, %v6934
          %v7013 = vpack.c.b16 %v6937, %v6936
          %v7014 = vpack.c.b16 %v6939, %v6938
          %v7015 = vpack.c.b16 %v6941, %v6940
          %v7016 = vpack.c.b16 %v6943, %v6942
          %v7017 = vpack.c.b16 %v6945, %v6944
          %v7018 = vpack.c.b16 %v6947, %v6946
          %v7019 = vpack.c.b16 %v6949, %v6948
          %v7020 = vpack.c.b16 %v6951, %v6950
          %v7021 = vpack.c.b16 %v6953, %v6952
          %v7022 = vpack.c.b16 %v6955, %v6954
          %v7023 = vpack.c.b16 %v6957, %v6956
          %v7024 = vpack.c.b16 %v6959, %v6958
          %v7025 = vpack.c.b16 %v6961, %v6960
          %v7026 = vpack.c.b16 %v6963, %v6962
          %v7027 = vpack.c.b16 %v6965, %v6964
          %v7028 = vpack.c.b16 %v6967, %v6966
          %v7029 = vpack.c.b16 %v6969, %v6968
          %v7030 = vpack.c.b16 %v6971, %v6970
          %v7031 = vpack.c.b16 %v6973, %v6972
          %v7032 = vpack.c.b16 %v6975, %v6974
          %v7033 = vpack.c.b16 %v6977, %v6976
          %7090 = vmatprep.subr.bf16.mxu0 0
          %7091 = vmatpush1.bf16.msra.mxu0 %v6978
          %7092 = vmatprep.subr.bf16.mxu0 0
          %7093 = vmatpush1.bf16.msra.mxu0 %v6979
          %7094 = vmatprep.subr.bf16.mxu0 0
          %7095 = vmatpush1.bf16.msra.mxu0 %v6980
          %7096 = vmatprep.subr.bf16.mxu0 0
          %7097 = vmatpush1.bf16.msra.mxu0 %v6981
          %7098 = vmatprep.subr.bf16.mxu0 0
          %7099 = vmatpush1.bf16.msra.mxu0 %v6982
          %7100 = vmatprep.subr.bf16.mxu0 0
          %7101 = vmatpush1.bf16.msra.mxu0 %v6983
          %7102 = vmatprep.subr.bf16.mxu0 0
          %7103 = vmatpush1.bf16.msra.mxu0 %v6984
          %7104 = vmatprep.subr.bf16.mxu0 0
          %7105 = vmatpush1.bf16.msra.mxu0 %v6985
          %7106 = vmatprep.subr.bf16.mxu0 0
          %7107 = vmatpush1.bf16.msra.mxu0 %v6986
          %7108 = vmatprep.subr.bf16.mxu0 0
          %7109 = vmatpush1.bf16.msra.mxu0 %v6987
          %7110 = vmatprep.subr.bf16.mxu0 0
          %7111 = vmatpush1.bf16.msra.mxu0 %v6988
          %7112 = vmatprep.subr.bf16.mxu0 0
          %7113 = vmatpush1.bf16.msra.mxu0 %v6989
          %7114 = vmatprep.subr.bf16.mxu0 0
          %7115 = vmatpush1.bf16.msra.mxu0 %v6990
          %7116 = vmatprep.subr.bf16.mxu0 0
          %7117 = vmatpush1.bf16.msra.mxu0 %v6991
          %7118 = vmatprep.subr.bf16.mxu0 0
          %7119 = vmatpush1.bf16.msra.mxu0 %v6992
          %7120 = vmatprep.subr.bf16.mxu0 0
          %7121 = vmatpush1.bf16.msra.mxu0 %v6993
          %7122 = vmatprep.mubr.bf16.mxu0 %v6629
          %7123 = vmatmul.mubr.bf16.gmra.mrb[0].mxu0 %v6628
          %v7124 = vpop.f32.mrb[0].mxu0
          %v7125 = vadd.f32 %v6752, %v7124
          %v7126 = vpop.f32.mrb[0].mxu0
          %v7127 = vpop.f32.mrb[0].mxu0
          %v7128 = vpop.f32.mrb[0].mxu0
          %7129 = vdwg.mxu0
          %7130 = vmatprep.subr.bf16.mxu0 0
          %7131 = vmatpush1.bf16.msra.mxu0 %v6994
          %7132 = vmatprep.subr.bf16.mxu0 0
          %7133 = vmatpush1.bf16.msra.mxu0 %v6995
          %7134 = vmatprep.subr.bf16.mxu0 0
          %7135 = vmatpush1.bf16.msra.mxu0 %v6996
          %7136 = vmatprep.subr.bf16.mxu0 0
          %7137 = vmatpush1.bf16.msra.mxu0 %v6997
          %7138 = vmatprep.subr.bf16.mxu0 0
          %7139 = vmatpush1.bf16.msra.mxu0 %v6998
          %7140 = vmatprep.subr.bf16.mxu0 0
          %7141 = vmatpush1.bf16.msra.mxu0 %v6999
          %7142 = vmatprep.subr.bf16.mxu0 0
          %7143 = vmatpush1.bf16.msra.mxu0 %v7000
          %7144 = vmatprep.subr.bf16.mxu0 0
          %7145 = vmatpush1.bf16.msra.mxu0 %v7001
          %7146 = vmatprep.subr.bf16.mxu0 0
          %7147 = vmatpush1.bf16.msra.mxu0 %v7002
          %7148 = vmatprep.subr.bf16.mxu0 0
          %7149 = vmatpush1.bf16.msra.mxu0 %v7003
          %7150 = vmatprep.subr.bf16.mxu0 0
          %7151 = vmatpush1.bf16.msra.mxu0 %v7004
          %7152 = vmatprep.subr.bf16.mxu0 0
          %7153 = vmatpush1.bf16.msra.mxu0 %v7005
          %7154 = vmatprep.subr.bf16.mxu0 0
          %7155 = vmatpush1.bf16.msra.mxu0 %v7006
          %7156 = vmatprep.subr.bf16.mxu0 0
          %7157 = vmatpush1.bf16.msra.mxu0 %v7007
          %7158 = vmatprep.subr.bf16.mxu0 0
          %7159 = vmatpush1.bf16.msra.mxu0 %v7008
          %7160 = vmatprep.subr.bf16.mxu0 0
          %7161 = vmatpush1.bf16.msra.mxu0 %v7009
          %7162 = vmatprep.mubr.bf16.mxu0 %v6631
          %7163 = vmatmul.mubr.bf16.gmra.mrb[0].mxu0 %v6630
          %v7164 = vpop.f32.mrb[0].mxu0
          %v7165 = vadd.f32 %v7125, %v7164
          %v7166 = vpop.f32.mrb[0].mxu0
          %v7167 = vpop.f32.mrb[0].mxu0
          %v7168 = vpop.f32.mrb[0].mxu0
          %7169 = vdwg.mxu0
          %7170 = vmatprep.subr.bf16.mxu0 0
          %7171 = vmatpush1.bf16.msra.mxu0 %v7010
          %7172 = vmatprep.subr.bf16.mxu0 0
          %7173 = vmatpush1.bf16.msra.mxu0 %v7011
          %7174 = vmatprep.subr.bf16.mxu0 0
          %7175 = vmatpush1.bf16.msra.mxu0 %v7012
          %7176 = vmatprep.subr.bf16.mxu0 0
          %7177 = vmatpush1.bf16.msra.mxu0 %v7013
          %7178 = vmatprep.subr.bf16.mxu0 0
          %7179 = vmatpush1.bf16.msra.mxu0 %v7014
          %7180 = vmatprep.subr.bf16.mxu0 0
          %7181 = vmatpush1.bf16.msra.mxu0 %v7015
          %7182 = vmatprep.subr.bf16.mxu0 0
          %7183 = vmatpush1.bf16.msra.mxu0 %v7016
          %7184 = vmatprep.subr.bf16.mxu0 0
          %7185 = vmatpush1.bf16.msra.mxu0 %v7017
          %7186 = vmatprep.subr.bf16.mxu0 0
          %7187 = vmatpush1.bf16.msra.mxu0 %v7018
          %7188 = vmatprep.subr.bf16.mxu0 0
          %7189 = vmatpush1.bf16.msra.mxu0 %v7019
          %7190 = vmatprep.subr.bf16.mxu0 0
          %7191 = vmatpush1.bf16.msra.mxu0 %v7020
          %7192 = vmatprep.subr.bf16.mxu0 0
          %7193 = vmatpush1.bf16.msra.mxu0 %v7021
          %7194 = vmatprep.subr.bf16.mxu0 0
          %7195 = vmatpush1.bf16.msra.mxu0 %v7022
          %7196 = vmatprep.subr.bf16.mxu0 0
          %7197 = vmatpush1.bf16.msra.mxu0 %v7023
          %7198 = vmatprep.subr.bf16.mxu0 0
          %7199 = vmatpush1.bf16.msra.mxu0 %v7024
          %7200 = vmatprep.subr.bf16.mxu0 0
          %7201 = vmatpush1.bf16.msra.mxu0 %v7025
          %7202 = vmatprep.mubr.bf16.mxu0 %v6633
          %7203 = vmatmul.mubr.bf16.gmra.mrb[0].mxu0 %v6632
          %v7204 = vpop.f32.mrb[0].mxu0
          %v7205 = vadd.f32 %v7165, %v7204
          %v7206 = vpop.f32.mrb[0].mxu0
          %v7207 = vpop.f32.mrb[0].mxu0
          %v7208 = vpop.f32.mrb[0].mxu0
          %7209 = vdwg.mxu0
          %7210 = vmatprep.subr.bf16.mxu0 0
          %7211 = vmatpush1.bf16.msra.mxu0 %v7026
          %7212 = vmatprep.subr.bf16.mxu0 0
          %7213 = vmatpush1.bf16.msra.mxu0 %v7027
          %7214 = vmatprep.subr.bf16.mxu0 0
          %7215 = vmatpush1.bf16.msra.mxu0 %v7028
          %7216 = vmatprep.subr.bf16.mxu0 0
          %7217 = vmatpush1.bf16.msra.mxu0 %v7029
          %7218 = vmatprep.subr.bf16.mxu0 0
          %7219 = vmatpush1.bf16.msra.mxu0 %v7030
          %7220 = vmatprep.subr.bf16.mxu0 0
          %7221 = vmatpush1.bf16.msra.mxu0 %v7031
          %7222 = vmatprep.subr.bf16.mxu0 0
          %7223 = vmatpush1.bf16.msra.mxu0 %v7032
          %7224 = vmatprep.subr.bf16.mxu0 0
          %7225 = vmatpush1.bf16.msra.mxu0 %v7033
          %7226 = vmatprep.subr.bf16.mxu0 0
          %7227 = vmatpush1.bf16.msra.mxu0 0
          %7228 = vmatprep.subr.bf16.mxu0 0
          %7229 = vmatpush1.bf16.msra.mxu0 0
          %7230 = vmatprep.subr.bf16.mxu0 0
          %7231 = vmatpush1.bf16.msra.mxu0 0
          %7232 = vmatprep.subr.bf16.mxu0 0
          %7233 = vmatpush1.bf16.msra.mxu0 0
          %7234 = vmatprep.subr.bf16.mxu0 0
          %7235 = vmatpush1.bf16.msra.mxu0 0
          %7236 = vmatprep.subr.bf16.mxu0 0
          %7237 = vmatpush1.bf16.msra.mxu0 0
          %7238 = vmatprep.subr.bf16.mxu0 0
          %7239 = vmatpush1.bf16.msra.mxu0 0
          %7240 = vmatprep.subr.bf16.mxu0 0
          %7241 = vmatpush1.bf16.msra.mxu0 0
          %7242 = vmatprep.mubr.bf16.mxu0 0
          %7243 = vmatmul.mubr.bf16.gmra.mrb[0].mxu0 %v6634
          %v7244 = vpop.f32.mrb[0].mxu0
          %v7245 = vadd.f32 %v7205, %v7244
          %v7246 = vpop.f32.mrb[0].mxu0
          %v7247 = vpop.f32.mrb[0].mxu0
          %v7248 = vpop.f32.mrb[0].mxu0
          %7249 = vdwg.mxu0
          %v7250 = vmax.f32 %v7245, 0.0
          %v7251 = vld [vmem:[%s5] sm:$0xff]
          %v7252 = vld [vmem:[%s5 + $0x8] sm:$0xff]
          %v7253 = vld [vmem:[%s5 + $0x10] sm:$0xff]
          %v7254 = vld [vmem:[%s5 + $0x18] sm:$0xff]
          %v7255 = vld [vmem:[%s5 + $0x20] sm:$0xff]
          %v7256 = vld [vmem:[%s5 + $0x28] sm:$0xff]
          %v7257 = vld [vmem:[%s5 + $0x30] sm:$0xff]
          %v7258 = vld [vmem:[%s5 + $0x38] sm:$0xff]
          %v7259 = vld [vmem:[%s5 + $0x40] sm:$0xff]
          %v7260 = vld [vmem:[%s5 + $0x48] sm:$0xff]
          %v7261 = vld [vmem:[%s5 + $0x50] sm:$0xff]
          %v7262 = vld [vmem:[%s5 + $0x58] sm:$0xff]
          %v7263 = vld [vmem:[%s5 + $0x60] sm:$0xff]
          %v7264 = vld [vmem:[%s5 + $0x68] sm:$0xff]
          %v7265 = vld [vmem:[%s5 + $0x70] sm:$0xff]
          %v7266 = vld [vmem:[%s6] sm:$0x1]
          %v7268 = vlaneseq
          %v7269 = vshrl.u32 %v7268, 7
          %v7270 = vsub.s32 0, %v7269
          %v7271 = vrot.slane %v7266, %v7270
          %vm7273 = vcmask 982016
          %v7275 = vsel %vm7273, %v7250, 0
          %7277 = vmatprep.subr.mxu0 0.0
          %7278 = vmatpush1.msra.mxu0 %v7251
          %7279 = vmatprep.subr.mxu0 0.0
          %7280 = vmatpush1.msra.mxu0 %v7252
          %7281 = vmatprep.subr.mxu0 0.0
          %7282 = vmatpush1.msra.mxu0 %v7253
          %7283 = vmatprep.subr.mxu0 0.0
          %7284 = vmatpush1.msra.mxu0 %v7254
          %7285 = vmatprep.subr.mxu0 0.0
          %7286 = vmatpush1.msra.mxu0 %v7255
          %7287 = vmatprep.subr.mxu0 0.0
          %7288 = vmatpush1.msra.mxu0 %v7256
          %7289 = vmatprep.subr.mxu0 0.0
          %7290 = vmatpush1.msra.mxu0 %v7257
          %7291 = vmatprep.subr.mxu0 0.0
          %7292 = vmatpush1.msra.mxu0 %v7258
          %7293 = vmatprep.subr.mxu0 0.0
          %7294 = vmatpush1.msra.mxu0 %v7259
          %7295 = vmatprep.subr.mxu0 0.0
          %7296 = vmatpush1.msra.mxu0 %v7260
          %7297 = vmatprep.subr.mxu0 0.0
          %7298 = vmatpush1.msra.mxu0 %v7261
          %7299 = vmatprep.subr.mxu0 0.0
          %7300 = vmatpush1.msra.mxu0 %v7262
          %7301 = vmatprep.subr.mxu0 0.0
          %7302 = vmatpush1.msra.mxu0 %v7263
          %7303 = vmatprep.subr.mxu0 0.0
          %7304 = vmatpush1.msra.mxu0 %v7264
          %7305 = vmatprep.subr.mxu0 0.0
          %7306 = vmatpush1.msra.mxu0 %v7265
          %7307 = vmatprep.subr.mxu0 0.0
          %7308 = vmatpush1.msra.mxu0 0.0
          %7309 = vmatprep.subr.mxu0 0.0
          %7310 = vmatpush1.msra.mxu0 0.0
          %7311 = vmatprep.subr.mxu0 0.0
          %7312 = vmatpush1.msra.mxu0 0.0
          %7313 = vmatprep.subr.mxu0 0.0
          %7314 = vmatpush1.msra.mxu0 0.0
          %7315 = vmatprep.subr.mxu0 0.0
          %7316 = vmatpush1.msra.mxu0 0.0
          %7317 = vmatprep.subr.mxu0 0.0
          %7318 = vmatpush1.msra.mxu0 0.0
          %7319 = vmatprep.subr.mxu0 0.0
          %7320 = vmatpush1.msra.mxu0 0.0
          %7321 = vmatprep.subr.mxu0 0.0
          %7322 = vmatpush1.msra.mxu0 0.0
          %7323 = vmatprep.subr.mxu0 0.0
          %7324 = vmatpush1.msra.mxu0 0.0
          %7325 = vmatprep.subr.mxu0 0.0
          %7326 = vmatpush1.msra.mxu0 0.0
          %7327 = vmatprep.subr.mxu0 0.0
          %7328 = vmatpush1.msra.mxu0 0.0
          %7329 = vmatprep.subr.mxu0 0.0
          %7330 = vmatpush1.msra.mxu0 0.0
          %7331 = vmatprep.subr.mxu0 0.0
          %7332 = vmatpush1.msra.mxu0 0.0
          %7333 = vmatprep.subr.mxu0 0.0
          %7334 = vmatpush1.msra.mxu0 0.0
          %7335 = vmatprep.subr.mxu0 0.0
          %7336 = vmatpush1.msra.mxu0 0.0
          %7337 = vmatprep.subr.mxu0 0.0
          %7338 = vmatpush1.msra.mxu0 0.0
          %7339 = vmatprep.subr.mxu0 0.0
          %7340 = vmatpush1.msra.mxu0 0.0
          %7341 = vmatprep.mubr.f32.mxu0 0.0
          %7342 = vmatmul.mubr.f32.gmra.mrb[0].mxu0 %v7275
          %v7343 = vpop.f32.mrb[0].mxu0
          %v7344 = vadd.f32 %v7271, %v7343
          %v7345 = vpop.f32.mrb[0].mxu0
          %7346 = vdwg.mxu0
          %vm7347 = vcmask 9216
          %7348 = vst.msk [vmem:[#allocation3] sm:$0x3] %vm7347, %v7344
        $region56: #{net_forward.5} parent=47 // pred_fallthru
          _
        // Predicated region
        $region57: #{net_forward.5} parent=47 // pred_check
          %p7349 = pneg %p189
        $region58: #{net_forward.5} parent=47 // pred_check_branch
          %7351 = sbr.rel (%p7349) target = $region60
        $region59: #{net_forward.5} parent=47 // pred_region
          %s7353 = ssub.s32 32, 32
          %7354 = vsyncadd [#allocation4], %s7353
          %s7356 = sshll.u32 [#allocation3], 4
          %s7357 = int_to_ptr.vmem [resolvable:$true] %s7356
          %7359 = dma.vmem_to_hbm [thread:$0]  %s7357, 32, %s7, [#allocation4]
        $region60: #{net_forward.5} parent=47 // pred_fallthru
          _
        // Predicated region
        $region61: #{net_forward.5} parent=47 // pred_check
          %p7360 = pneg %p189
        $region62: #{net_forward.5} parent=47 // pred_check_branch
          %7362 = sbr.rel (%p7360) target = $region64
        $region63: #{net_forward.5} parent=47 // pred_region
          %7363 = dma.done [#allocation4], 32
        $region64: #{net_forward.5} parent=47 // pred_fallthru
          _
      $region48: #{net_forward.5} parent=5 // pred_fallthru
        _
      %p7364 = scmp.le.s32.totalorder 2, %s14
      // Predicated region
      $region65: #{net_forward.5} parent=5 // pred_check
        %p7365 = pneg %p7364
      $region66: #{net_forward.5} parent=5 // pred_check_branch
        %7367 = sbr.rel (%p7365) target = $region68
      $region67: #{net_forward.5} parent=5 // pred_region
        %s7368 = ssub.s32 %s14, 2
      $region68: #{net_forward.5} parent=5 // pred_fallthru
        _
    $region6: #{net_forward.5} parent=1 // loop_footer
      %s18 = sadd.s32 1, %s14
    $region7: #{net_forward.5} parent=1 // loop_footer_branch
      %13 = sbr.rel target = $region3
    $region8: #{net_forward.5} parent=1 // loop_exit
      _
    %7369 = vsyncpa [#allocation4], 1
    %s7370 = scalar_lea.sflag [#allocation4], 1
    %7371 = vsyncpa %s7370, 1

</llo_original>
